<compile_context>
chip_gen: v7x
topology: tpu7x:2x2x1
jax: 0.10.0
libtpu: 0.0.40
codegen_flags: <defaults>
</compile_context>

<pallas_src>
import functools

import jax
import jax.numpy as jnp
from jax import lax
from jax.experimental import pallas as pl
from jax.experimental.pallas import tpu as pltpu

LANE = 128


def _rup(x, m=LANE):
    return ((x + m - 1) // m) * m


def _full_spec(shape):
    nd = len(shape)
    return pl.BlockSpec(shape, lambda i, _nd=nd: (0,) * _nd)


# ----------------------------- fused Pallas kernel ----------------------------- #
def _gin_fused_kernel(
    node_in_ref, w_node_ref, b_node_ref,
    edge_in_ref, w_edge_ref, b_edge_ref,
    src_ref, dst_ref, batch_ref,
    w1s_ref, b1s_ref, w2s_ref, b2s_ref,
    wh1_ref, bh1_ref, wh2_ref, bh2_ref,
    wh3_ref, bh3_ref, wh4_ref, bh4_ref,
    out_ref, *, num_layers,
):
    f32 = jnp.float32
    bf16 = jnp.bfloat16

    def mm(a, w):  # bf16 MXU matmul, f32 accumulation (w already bf16)
        return jnp.dot(a.astype(bf16), w, preferred_element_type=f32)

    N = node_in_ref.shape[0]
    E = edge_in_ref.shape[0]
    B = out_ref.shape[0]

    # node / edge projection: [one_hot(idx) || unpacked bits] folded into ONE matmul
    h = mm(node_in_ref[...], w_node_ref[...]) + b_node_ref[...]      # [N, P2] f32
    e = mm(edge_in_ref[...], w_edge_ref[...]) + b_edge_ref[...]      # [E, P2] f32

    # structural {0,1} matrices built IN-KERNEL from index vectors (bf16 on MXU)
    src = src_ref[...]                                               # [E, 1] int32
    dst = dst_ref[...]                                               # [1, E] int32
    bat = batch_ref[...]                                             # [1, N] int32
    gather = (lax.broadcasted_iota(jnp.int32, (E, N), 1) == src).astype(bf16)   # [E,N]
    scatter = (lax.broadcasted_iota(jnp.int32, (N, E), 0) == dst).astype(bf16)  # [N,E]
    pool_m = lax.broadcasted_iota(jnp.int32, (B, N), 0) == bat                  # [B,N]
    pool = pool_m.astype(bf16)
    cnt = jnp.sum(pool_m.astype(f32), axis=1, keepdims=True)                    # [B,1]

    for layer in range(num_layers):
        w1 = w1s_ref[layer]     # [P2, P4] bf16 (BN folded)
        b1 = b1s_ref[layer]     # [1,  P4] f32
        w2 = w2s_ref[layer]     # [P4, P2] bf16 (BN folded)
        b2 = b2s_ref[layer]     # [1,  P2] f32
        # GINEConv message: relu(x_j + e_ij)   (gather as bf16 one-hot matmul)
        msg = jnp.maximum(
            jnp.dot(gather, h.astype(bf16), preferred_element_type=f32) + e, 0.0)
        # aggregate at target + self term (eps = 0): x_i + sum_j msg_j
        agg = jnp.dot(scatter, msg.astype(bf16), preferred_element_type=f32) + h
        # conv MLP: Linear+BN+ReLU, Linear+BN, outer ReLU except last layer
        hid = jnp.maximum(mm(agg, w1) + b1, 0.0)                     # [N, P4]
        h = mm(hid, w2) + b2                                         # [N, P2]
        if layer != num_layers - 1:
            h = jnp.maximum(h, 0.0)

    # global mean pool: bf16 one-hot sum then exact f32 divide by count
    pooled = jnp.dot(pool, h.astype(bf16),
                     preferred_element_type=f32) / jnp.maximum(cnt, 1.0)   # [B, P2]

    # classifier head (Dropout = identity); z never leaves VMEM/vregs
    z = jnp.maximum(mm(pooled, wh1_ref[...]) + bh1_ref[...], 0.0)    # [B, 1024]
    z = jnp.maximum(mm(z, wh2_ref[...]) + bh2_ref[...], 0.0)         # [B, 1024]
    z = jnp.maximum(mm(z, wh3_ref[...]) + bh3_ref[...], 0.0)         # [B, 512]
    out_ref[...] = (mm(z, wh4_ref[...]) + bh4_ref[...]).astype(out_ref.dtype)


# --------------------------------- parameters ---------------------------------- #
def init_params(key, hidden=32, num_layers=4, num_classes=3):
    H = hidden
    keys = iter(jax.random.split(key, 64))

    def lin(k, fin, fout):
        k1, k2 = jax.random.split(k)
        w = jax.random.normal(k1, (fin, fout), jnp.float32) / jnp.sqrt(float(fin))
        b = jax.random.normal(k2, (fout,), jnp.float32) * 0.01
        return w, b

    params = {}
    params["atom_emb"] = jax.random.normal(next(keys), (120, H), jnp.float32) * 0.1
    params["edge_emb"] = jax.random.normal(next(keys), (22, H), jnp.float32) * 0.1
    params["atom_lin"] = lin(next(keys), 56, H)
    params["edge_lin"] = lin(next(keys), 8, H)

    # BatchNorm1d eval-mode (running_mean=0, running_var=1, gamma=1, beta=0)
    bn_scale = 1.0 / jnp.sqrt(1.0 + 1e-5)
    convs = []
    for _ in range(num_layers):
        w1, b1 = lin(next(keys), 2 * H, 4 * H)
        w2, b2 = lin(next(keys), 4 * H, 2 * H)
        convs.append((w1 * bn_scale, b1 * bn_scale, w2 * bn_scale, b2 * bn_scale))
    params["convs"] = convs

    params["mlp"] = [
        lin(next(keys), 2 * H, 1024),
        lin(next(keys), 1024, 1024),
        lin(next(keys), 1024, 512),
        lin(next(keys), 512, num_classes),
    ]
    return params


def prepare_params(params, hidden=32, num_layers=4, num_classes=3):
    """Fold/pad/stack weights for the fused kernel; MXU weights in bf16."""
    H = hidden
    F2, F4 = 2 * H, 4 * H
    P2, P4, PC = _rup(F2), _rup(F4), _rup(num_classes)
    PN, PE = _rup(120 + 56), _rup(22 + 8)
    bf16 = jnp.bfloat16

    # node projection: [one_hot(atom,120) | bits(56) | 0...] @ W + b
    w_node = jnp.zeros((PN, P2), jnp.float32)
    w_node = w_node.at[:120, :H].set(params["atom_emb"])
    wa, ba = params["atom_lin"]
    w_node = w_node.at[120:120 + 56, H:2 * H].set(wa)
    b_node = jnp.zeros((1, P2), jnp.float32).at[0, H:2 * H].set(ba)

    # edge projection: [one_hot(edge,22) | bits(8) | 0...] @ W + b
    w_edge = jnp.zeros((PE, P2), jnp.float32)
    w_edge = w_edge.at[:22, :H].set(params["edge_emb"])
    we, be = params["edge_lin"]
    w_edge = w_edge.at[22:22 + 8, H:2 * H].set(we)
    b_edge = jnp.zeros((1, P2), jnp.float32).at[0, H:2 * H].set(be)

    # conv layers (BN already folded), stacked and zero-padded to lane width
    w1s = jnp.zeros((num_layers, P2, P4), jnp.float32)
    b1s = jnp.zeros((num_layers, 1, P4), jnp.float32)
    w2s = jnp.zeros((num_layers, P4, P2), jnp.float32)
    b2s = jnp.zeros((num_layers, 1, P2), jnp.float32)
    for l, (w1, b1, w2, b2) in enumerate(params["convs"]):
        w1s = w1s.at[l, :F2, :F4].set(w1)
        b1s = b1s.at[l, 0, :F4].set(b1)
        w2s = w2s.at[l, :F4, :F2].set(w2)
        b2s = b2s.at[l, 0, :F2].set(b2)

    (wm1, bm1), (wm2, bm2), (wm3, bm3), (wm4, bm4) = params["mlp"]
    wh1 = jnp.zeros((P2, wm1.shape[1]), jnp.float32).at[:F2, :].set(wm1)
    wh4 = jnp.zeros((wm4.shape[0], PC), jnp.float32).at[:, :num_classes].set(wm4)
    bh4 = jnp.zeros((1, PC), jnp.float32).at[0, :num_classes].set(bm4)

    return dict(
        w_node=w_node.astype(bf16), b_node=b_node,
        w_edge=w_edge.astype(bf16), b_edge=b_edge,
        w1s=w1s.astype(bf16), b1s=b1s, w2s=w2s.astype(bf16), b2s=b2s,
        wh1=wh1.astype(bf16), bh1=bm1.reshape(1, -1),
        wh2=wm2.astype(bf16), bh2=bm2.reshape(1, -1),
        wh3=wm3.astype(bf16), bh3=bm3.reshape(1, -1),
        wh4=wh4.astype(bf16), bh4=bh4,
    )


# ----------------------------------- forward ------------------------------------ #
def unpackbits(a):
    """np.unpackbits semantics: MSB first per byte, along last dim (bytes 0..255)."""
    a = a.astype(jnp.int32)
    shifts = jnp.arange(7, -1, -1, dtype=jnp.int32)
    bits = (a[..., None] >> shifts) & 1
    return bits.reshape(a.shape[0], -1).astype(jnp.float32)


@functools.partial(jax.jit,
                   static_argnames=("num_graphs", "hidden", "num_layers", "num_classes"))
def gin_forward(pp, x, edge_index, edge_attr, batch,
                num_graphs, hidden=32, num_layers=4, num_classes=3):
    H = hidden
    P2, P4, PC = _rup(2 * H), _rup(4 * H), _rup(num_classes)
    PN, PE = _rup(120 + 56), _rup(22 + 8)
    N, E, B = x.shape[0], edge_attr.shape[0], num_graphs
    f32, bf16 = jnp.float32, jnp.bfloat16

    # --- tiny layout-only preprocessing (integer lookups as one-hot rows, bf16) ---
    node_in = jnp.zeros((N, PN), f32)
    node_in = node_in.at[:, :120].set(jax.nn.one_hot(x[:, 0], 120, dtype=f32))
    node_in = node_in.at[:, 120:120 + 56].set(unpackbits(x[:, 1:]))
    edge_in = jnp.zeros((E, PE), f32)
    edge_in = edge_in.at[:, :22].set(jax.nn.one_hot(edge_attr[:, 0], 22, dtype=f32))
    edge_in = edge_in.at[:, 22:22 + 8].set(unpackbits(edge_attr[:, 1:]))

    # only the raw index vectors go to the kernel (structural one-hots built in-kernel)
    src = edge_index[0].astype(jnp.int32).reshape(E, 1)   # gather: column
    dst = edge_index[1].astype(jnp.int32).reshape(1, E)   # scatter: row
    bat = batch.astype(jnp.int32).reshape(1, N)           # pool:    row

    args = (node_in.astype(bf16), pp["w_node"], pp["b_node"],
            edge_in.astype(bf16), pp["w_edge"], pp["b_edge"],
            src, dst, bat,
            pp["w1s"], pp["b1s"], pp["w2s"], pp["b2s"],
            pp["wh1"], pp["bh1"], pp["wh2"], pp["bh2"],
            pp["wh3"], pp["bh3"], pp["wh4"], pp["bh4"])

    flops = 2 * (N * PN * P2 + E * PE * P2)
    flops += 2 * num_layers * (E * N * P2 + N * E * P2 + N * P2 * P4 + N * P4 * P2)
    flops += 2 * B * N * P2
    flops += 2 * B * (P2 * 1024 + 1024 * 1024 + 1024 * 512 + 512 * PC)
    bytes_accessed = sum(int(a.size) * a.dtype.itemsize for a in args) + B * PC * 4

    out = pl.pallas_call(
        functools.partial(_gin_fused_kernel, num_layers=num_layers),
        out_shape=jax.ShapeDtypeStruct((B, PC), f32),
        grid=(1,),
        in_specs=[_full_spec(a.shape) for a in args],
        out_specs=_full_spec((B, PC)),
        compiler_params=pltpu.CompilerParams(
            dimension_semantics=("arbitrary",),
            # total resident footprint ~9 MiB incl. double-buffering of the
            # single-step grid -> comfortable headroom even on v7x (64 MiB).
            vmem_limit_bytes=32 * 1024 * 1024),
        cost_estimate=pl.CostEstimate(flops=int(flops), transcendentals=0,
                                      bytes_accessed=int(bytes_accessed)),
    )(*args)
    return out[:, :num_classes]


# ------------------------------------- main -------------------------------------- #
if __name__ == "__main__":
    key = jax.random.PRNGKey(0)
    kp, k1, k2, k3, k4, k5, k6 = jax.random.split(key, 7)

    H, num_layers, num_classes = 32, 4, 3
    N, E, B = 8, 16, 2  # nodes, edges, graphs

    params = init_params(kp, H, num_layers, num_classes)
    pp = prepare_params(params, H, num_layers, num_classes)

    atom_type = jax.random.randint(k1, (N, 1), 0, 120, dtype=jnp.int32)
    atom_bytes = jax.random.randint(k2, (N, 7), 0, 256, dtype=jnp.int32)
    x = jnp.concatenate([atom_type, atom_bytes], axis=1)          # [N, 8]

    edge_type = jax.random.randint(k3, (E, 1), 0, 22, dtype=jnp.int32)
    edge_bytes = jax.random.randint(k4, (E, 1), 0, 256, dtype=jnp.int32)
    edge_attr = jnp.concatenate([edge_type, edge_bytes], axis=1)  # [E, 2]

    src = jax.random.randint(k5, (E,), 0, N, dtype=jnp.int32)
    dst = jax.random.randint(k6, (E,), 0, N, dtype=jnp.int32)
    edge_index = jnp.stack([src, dst])                            # [2, E]

    batch = jnp.array([0, 0, 0, 0, 1, 1, 1, 1], dtype=jnp.int32)  # [N]

    out = gin_forward(pp, x, edge_index, edge_attr, batch,
                      num_graphs=B, hidden=H,
                      num_layers=num_layers, num_classes=num_classes)
    out = jax.block_until_ready(out)
    assert out.shape == (B, num_classes), out.shape
    print("KERNEL_OK")
</pallas_src>

<mosaic_0001>
module attributes {stable_mosaic.version = 11 : i64} {
  func.func @_gin_fused_kernel(%arg0: i32, %arg1: memref<8x256xbf16, #tpu.memory_space<vmem>>, %arg2: memref<256x128xbf16, #tpu.memory_space<vmem>>, %arg3: memref<1x128xf32, #tpu.memory_space<vmem>>, %arg4: memref<16x128xbf16, #tpu.memory_space<vmem>>, %arg5: memref<128x128xbf16, #tpu.memory_space<vmem>>, %arg6: memref<1x128xf32, #tpu.memory_space<vmem>>, %arg7: memref<16x1xi32, #tpu.memory_space<vmem>>, %arg8: memref<1x16xi32, #tpu.memory_space<vmem>>, %arg9: memref<1x8xi32, #tpu.memory_space<vmem>>, %arg10: memref<4x128x128xbf16, #tpu.memory_space<vmem>>, %arg11: memref<4x1x128xf32, #tpu.memory_space<vmem>>, %arg12: memref<4x128x128xbf16, #tpu.memory_space<vmem>>, %arg13: memref<4x1x128xf32, #tpu.memory_space<vmem>>, %arg14: memref<128x1024xbf16, #tpu.memory_space<vmem>>, %arg15: memref<1x1024xf32, #tpu.memory_space<vmem>>, %arg16: memref<1024x1024xbf16, #tpu.memory_space<vmem>>, %arg17: memref<1x1024xf32, #tpu.memory_space<vmem>>, %arg18: memref<1024x512xbf16, #tpu.memory_space<vmem>>, %arg19: memref<1x512xf32, #tpu.memory_space<vmem>>, %arg20: memref<512x128xbf16, #tpu.memory_space<vmem>>, %arg21: memref<1x128xf32, #tpu.memory_space<vmem>>, %arg22: memref<2x128xf32, #tpu.memory_space<vmem>>) attributes {dimension_semantics = [#tpu.dimension_semantics<arbitrary>], iteration_bounds = array<i64: 1>, scalar_prefetch = 0 : i64, scratch_operands = 0 : i64, tpu.core_type = #tpu.core_type<tc>, window_params = [{pipeline_mode = #tpu.pipeline_mode<synchronous>, transform_indices = @transform_0, window_bounds = array<i64: 8, 256>}, {pipeline_mode = #tpu.pipeline_mode<synchronous>, transform_indices = @transform_1, window_bounds = array<i64: 256, 128>}, {pipeline_mode = #tpu.pipeline_mode<synchronous>, transform_indices = @transform_2, window_bounds = array<i64: 1, 128>}, {pipeline_mode = #tpu.pipeline_mode<synchronous>, transform_indices = @transform_3, window_bounds = array<i64: 16, 128>}, {pipeline_mode = #tpu.pipeline_mode<synchronous>, transform_indices = @transform_4, window_bounds = array<i64: 128, 128>}, {pipeline_mode = #tpu.pipeline_mode<synchronous>, transform_indices = @transform_5, window_bounds = array<i64: 1, 128>}, {pipeline_mode = #tpu.pipeline_mode<synchronous>, transform_indices = @transform_6, window_bounds = array<i64: 16, 1>}, {pipeline_mode = #tpu.pipeline_mode<synchronous>, transform_indices = @transform_7, window_bounds = array<i64: 1, 16>}, {pipeline_mode = #tpu.pipeline_mode<synchronous>, transform_indices = @transform_8, window_bounds = array<i64: 1, 8>}, {pipeline_mode = #tpu.pipeline_mode<synchronous>, transform_indices = @transform_9, window_bounds = array<i64: 4, 128, 128>}, {pipeline_mode = #tpu.pipeline_mode<synchronous>, transform_indices = @transform_10, window_bounds = array<i64: 4, 1, 128>}, {pipeline_mode = #tpu.pipeline_mode<synchronous>, transform_indices = @transform_11, window_bounds = array<i64: 4, 128, 128>}, {pipeline_mode = #tpu.pipeline_mode<synchronous>, transform_indices = @transform_12, window_bounds = array<i64: 4, 1, 128>}, {pipeline_mode = #tpu.pipeline_mode<synchronous>, transform_indices = @transform_13, window_bounds = array<i64: 128, 1024>}, {pipeline_mode = #tpu.pipeline_mode<synchronous>, transform_indices = @transform_14, window_bounds = array<i64: 1, 1024>}, {pipeline_mode = #tpu.pipeline_mode<synchronous>, transform_indices = @transform_15, window_bounds = array<i64: 1024, 1024>}, {pipeline_mode = #tpu.pipeline_mode<synchronous>, transform_indices = @transform_16, window_bounds = array<i64: 1, 1024>}, {pipeline_mode = #tpu.pipeline_mode<synchronous>, transform_indices = @transform_17, window_bounds = array<i64: 1024, 512>}, {pipeline_mode = #tpu.pipeline_mode<synchronous>, transform_indices = @transform_18, window_bounds = array<i64: 1, 512>}, {pipeline_mode = #tpu.pipeline_mode<synchronous>, transform_indices = @transform_19, window_bounds = array<i64: 512, 128>}, {pipeline_mode = #tpu.pipeline_mode<synchronous>, transform_indices = @transform_20, window_bounds = array<i64: 1, 128>}, {pipeline_mode = #tpu.pipeline_mode<synchronous>, transform_indices = @transform_21, window_bounds = array<i64: 2, 128>}]} {
    %c0 = arith.constant 0 : index
    %c0_0 = arith.constant 0 : index
    %0 = vector.load %arg1[%c0, %c0_0] : memref<8x256xbf16, #tpu.memory_space<vmem>>, vector<8x256xbf16>
    %c0_1 = arith.constant 0 : index
    %c0_2 = arith.constant 0 : index
    %1 = vector.load %arg2[%c0_1, %c0_2] : memref<256x128xbf16, #tpu.memory_space<vmem>>, vector<256x128xbf16>
    %cst = arith.constant dense<0.000000e+00> : vector<8x128xf32>
    %2 = tpu.matmul %0, %1, %cst {dimension_numbers = #tpu.dot_dimension_numbers<[1], [0], [0], [1], [0, 0, 1, 1], [], []>} : vector<8x256xbf16>, vector<256x128xbf16>, vector<8x128xf32> -> vector<8x128xf32>
    %c0_3 = arith.constant 0 : index
    %c0_4 = arith.constant 0 : index
    %3 = vector.load %arg3[%c0_3, %c0_4] : memref<1x128xf32, #tpu.memory_space<vmem>>, vector<1x128xf32>
    %4 = vector.broadcast %3 : vector<1x128xf32> to vector<8x128xf32>
    %5 = arith.addf %2, %4 : vector<8x128xf32>
    %c0_5 = arith.constant 0 : index
    %c0_6 = arith.constant 0 : index
    %6 = vector.load %arg4[%c0_5, %c0_6] : memref<16x128xbf16, #tpu.memory_space<vmem>>, vector<16x128xbf16>
    %c0_7 = arith.constant 0 : index
    %c0_8 = arith.constant 0 : index
    %7 = vector.load %arg5[%c0_7, %c0_8] : memref<128x128xbf16, #tpu.memory_space<vmem>>, vector<128x128xbf16>
    %cst_9 = arith.constant dense<0.000000e+00> : vector<16x128xf32>
    %8 = tpu.matmul %6, %7, %cst_9 {dimension_numbers = #tpu.dot_dimension_numbers<[1], [0], [0], [1], [0, 0, 1, 1], [], []>} : vector<16x128xbf16>, vector<128x128xbf16>, vector<16x128xf32> -> vector<16x128xf32>
    %c0_10 = arith.constant 0 : index
    %c0_11 = arith.constant 0 : index
    %9 = vector.load %arg6[%c0_10, %c0_11] : memref<1x128xf32, #tpu.memory_space<vmem>>, vector<1x128xf32>
    %10 = vector.broadcast %9 : vector<1x128xf32> to vector<16x128xf32>
    %11 = arith.addf %8, %10 : vector<16x128xf32>
    %c0_12 = arith.constant 0 : index
    %c0_13 = arith.constant 0 : index
    %12 = vector.load %arg7[%c0_12, %c0_13] : memref<16x1xi32, #tpu.memory_space<vmem>>, vector<16x1xi32>
    %c0_14 = arith.constant 0 : index
    %c0_15 = arith.constant 0 : index
    %13 = vector.load %arg8[%c0_14, %c0_15] : memref<1x16xi32, #tpu.memory_space<vmem>>, vector<1x16xi32>
    %c0_16 = arith.constant 0 : index
    %c0_17 = arith.constant 0 : index
    %14 = vector.load %arg9[%c0_16, %c0_17] : memref<1x8xi32, #tpu.memory_space<vmem>>, vector<1x8xi32>
    %15 = tpu.iota {dimensions = array<i32: 1>} : vector<16x8xi32>
    %16 = vector.broadcast %12 : vector<16x1xi32> to vector<16x8xi32>
    %17 = arith.cmpi eq, %15, %16 : vector<16x8xi32>
    %18 = arith.extui %17 : vector<16x8xi1> to vector<16x8xi32>
    %19 = arith.sitofp %18 : vector<16x8xi32> to vector<16x8xf32>
    %20 = arith.truncf %19 : vector<16x8xf32> to vector<16x8xbf16>
    %21 = tpu.iota {dimensions = array<i32: 0>} : vector<8x16xi32>
    %22 = vector.broadcast %13 : vector<1x16xi32> to vector<8x16xi32>
    %23 = arith.cmpi eq, %21, %22 : vector<8x16xi32>
    %24 = arith.extui %23 : vector<8x16xi1> to vector<8x16xi32>
    %25 = arith.sitofp %24 : vector<8x16xi32> to vector<8x16xf32>
    %26 = arith.truncf %25 : vector<8x16xf32> to vector<8x16xbf16>
    %27 = tpu.iota {dimensions = array<i32: 0>} : vector<2x8xi32>
    %28 = vector.broadcast %14 : vector<1x8xi32> to vector<2x8xi32>
    %29 = arith.cmpi eq, %27, %28 : vector<2x8xi32>
    %30 = arith.extui %29 : vector<2x8xi1> to vector<2x8xi32>
    %31 = arith.sitofp %30 : vector<2x8xi32> to vector<2x8xf32>
    %32 = arith.truncf %31 : vector<2x8xf32> to vector<2x8xbf16>
    %33 = arith.extui %29 : vector<2x8xi1> to vector<2x8xi32>
    %34 = arith.sitofp %33 : vector<2x8xi32> to vector<2x8xf32>
    %cst_18 = arith.constant dense<0.000000e+00> : vector<2xf32>
    %35 = vector.multi_reduction <add>, %34, %cst_18 [1] : vector<2x8xf32> to vector<2xf32>
    %36 = vector.shape_cast %35 : vector<2xf32> to vector<2x1xf32>
    %c0_19 = arith.constant 0 : index
    %c0_20 = arith.constant 0 : index
    %c0_21 = arith.constant 0 : index
    %37 = vector.load %arg10[%c0_19, %c0_20, %c0_21] : memref<4x128x128xbf16, #tpu.memory_space<vmem>>, vector<1x128x128xbf16>
    %38 = vector.shape_cast %37 : vector<1x128x128xbf16> to vector<128x128xbf16>
    %c0_22 = arith.constant 0 : index
    %c0_23 = arith.constant 0 : index
    %c0_24 = arith.constant 0 : index
    %39 = vector.load %arg11[%c0_22, %c0_23, %c0_24] : memref<4x1x128xf32, #tpu.memory_space<vmem>>, vector<1x1x128xf32>
    %40 = vector.shape_cast %39 : vector<1x1x128xf32> to vector<1x128xf32>
    %c0_25 = arith.constant 0 : index
    %c0_26 = arith.constant 0 : index
    %c0_27 = arith.constant 0 : index
    %41 = vector.load %arg12[%c0_25, %c0_26, %c0_27] : memref<4x128x128xbf16, #tpu.memory_space<vmem>>, vector<1x128x128xbf16>
    %42 = vector.shape_cast %41 : vector<1x128x128xbf16> to vector<128x128xbf16>
    %c0_28 = arith.constant 0 : index
    %c0_29 = arith.constant 0 : index
    %c0_30 = arith.constant 0 : index
    %43 = vector.load %arg13[%c0_28, %c0_29, %c0_30] : memref<4x1x128xf32, #tpu.memory_space<vmem>>, vector<1x1x128xf32>
    %44 = vector.shape_cast %43 : vector<1x1x128xf32> to vector<1x128xf32>
    %45 = arith.truncf %5 : vector<8x128xf32> to vector<8x128xbf16>
    %cst_31 = arith.constant dense<0.000000e+00> : vector<16x128xf32>
    %46 = tpu.matmul %20, %45, %cst_31 {dimension_numbers = #tpu.dot_dimension_numbers<[1], [0], [0], [1], [0, 0, 1, 1], [], []>} : vector<16x8xbf16>, vector<8x128xbf16>, vector<16x128xf32> -> vector<16x128xf32>
    %47 = arith.addf %46, %11 : vector<16x128xf32>
    %cst_32 = arith.constant 0.000000e+00 : f32
    %48 = vector.broadcast %cst_32 : f32 to vector<16x128xf32>
    %49 = arith.maximumf %47, %48 : vector<16x128xf32>
    %50 = arith.truncf %49 : vector<16x128xf32> to vector<16x128xbf16>
    %cst_33 = arith.constant dense<0.000000e+00> : vector<8x128xf32>
    %51 = tpu.matmul %26, %50, %cst_33 {dimension_numbers = #tpu.dot_dimension_numbers<[1], [0], [0], [1], [0, 0, 1, 1], [], []>} : vector<8x16xbf16>, vector<16x128xbf16>, vector<8x128xf32> -> vector<8x128xf32>
    %52 = arith.addf %51, %5 : vector<8x128xf32>
    %53 = arith.truncf %52 : vector<8x128xf32> to vector<8x128xbf16>
    %cst_34 = arith.constant dense<0.000000e+00> : vector<8x128xf32>
    %54 = tpu.matmul %53, %38, %cst_34 {dimension_numbers = #tpu.dot_dimension_numbers<[1], [0], [0], [1], [0, 0, 1, 1], [], []>} : vector<8x128xbf16>, vector<128x128xbf16>, vector<8x128xf32> -> vector<8x128xf32>
    %55 = vector.broadcast %40 : vector<1x128xf32> to vector<8x128xf32>
    %56 = arith.addf %54, %55 : vector<8x128xf32>
    %cst_35 = arith.constant 0.000000e+00 : f32
    %57 = vector.broadcast %cst_35 : f32 to vector<8x128xf32>
    %58 = arith.maximumf %56, %57 : vector<8x128xf32>
    %59 = arith.truncf %58 : vector<8x128xf32> to vector<8x128xbf16>
    %cst_36 = arith.constant dense<0.000000e+00> : vector<8x128xf32>
    %60 = tpu.matmul %59, %42, %cst_36 {dimension_numbers = #tpu.dot_dimension_numbers<[1], [0], [0], [1], [0, 0, 1, 1], [], []>} : vector<8x128xbf16>, vector<128x128xbf16>, vector<8x128xf32> -> vector<8x128xf32>
    %61 = vector.broadcast %44 : vector<1x128xf32> to vector<8x128xf32>
    %62 = arith.addf %60, %61 : vector<8x128xf32>
    %cst_37 = arith.constant 0.000000e+00 : f32
    %63 = vector.broadcast %cst_37 : f32 to vector<8x128xf32>
    %64 = arith.maximumf %62, %63 : vector<8x128xf32>
    %c1 = arith.constant 1 : index
    %c0_38 = arith.constant 0 : index
    %c0_39 = arith.constant 0 : index
    %65 = vector.load %arg10[%c1, %c0_38, %c0_39] : memref<4x128x128xbf16, #tpu.memory_space<vmem>>, vector<1x128x128xbf16>
    %66 = vector.shape_cast %65 : vector<1x128x128xbf16> to vector<128x128xbf16>
    %c1_40 = arith.constant 1 : index
    %c0_41 = arith.constant 0 : index
    %c0_42 = arith.constant 0 : index
    %67 = vector.load %arg11[%c1_40, %c0_41, %c0_42] : memref<4x1x128xf32, #tpu.memory_space<vmem>>, vector<1x1x128xf32>
    %68 = vector.shape_cast %67 : vector<1x1x128xf32> to vector<1x128xf32>
    %c1_43 = arith.constant 1 : index
    %c0_44 = arith.constant 0 : index
    %c0_45 = arith.constant 0 : index
    %69 = vector.load %arg12[%c1_43, %c0_44, %c0_45] : memref<4x128x128xbf16, #tpu.memory_space<vmem>>, vector<1x128x128xbf16>
    %70 = vector.shape_cast %69 : vector<1x128x128xbf16> to vector<128x128xbf16>
    %c1_46 = arith.constant 1 : index
    %c0_47 = arith.constant 0 : index
    %c0_48 = arith.constant 0 : index
    %71 = vector.load %arg13[%c1_46, %c0_47, %c0_48] : memref<4x1x128xf32, #tpu.memory_space<vmem>>, vector<1x1x128xf32>
    %72 = vector.shape_cast %71 : vector<1x1x128xf32> to vector<1x128xf32>
    %73 = arith.truncf %64 : vector<8x128xf32> to vector<8x128xbf16>
    %cst_49 = arith.constant dense<0.000000e+00> : vector<16x128xf32>
    %74 = tpu.matmul %20, %73, %cst_49 {dimension_numbers = #tpu.dot_dimension_numbers<[1], [0], [0], [1], [0, 0, 1, 1], [], []>} : vector<16x8xbf16>, vector<8x128xbf16>, vector<16x128xf32> -> vector<16x128xf32>
    %75 = arith.addf %74, %11 : vector<16x128xf32>
    %cst_50 = arith.constant 0.000000e+00 : f32
    %76 = vector.broadcast %cst_50 : f32 to vector<16x128xf32>
    %77 = arith.maximumf %75, %76 : vector<16x128xf32>
    %78 = arith.truncf %77 : vector<16x128xf32> to vector<16x128xbf16>
    %cst_51 = arith.constant dense<0.000000e+00> : vector<8x128xf32>
    %79 = tpu.matmul %26, %78, %cst_51 {dimension_numbers = #tpu.dot_dimension_numbers<[1], [0], [0], [1], [0, 0, 1, 1], [], []>} : vector<8x16xbf16>, vector<16x128xbf16>, vector<8x128xf32> -> vector<8x128xf32>
    %80 = arith.addf %79, %64 : vector<8x128xf32>
    %81 = arith.truncf %80 : vector<8x128xf32> to vector<8x128xbf16>
    %cst_52 = arith.constant dense<0.000000e+00> : vector<8x128xf32>
    %82 = tpu.matmul %81, %66, %cst_52 {dimension_numbers = #tpu.dot_dimension_numbers<[1], [0], [0], [1], [0, 0, 1, 1], [], []>} : vector<8x128xbf16>, vector<128x128xbf16>, vector<8x128xf32> -> vector<8x128xf32>
    %83 = vector.broadcast %68 : vector<1x128xf32> to vector<8x128xf32>
    %84 = arith.addf %82, %83 : vector<8x128xf32>
    %cst_53 = arith.constant 0.000000e+00 : f32
    %85 = vector.broadcast %cst_53 : f32 to vector<8x128xf32>
    %86 = arith.maximumf %84, %85 : vector<8x128xf32>
    %87 = arith.truncf %86 : vector<8x128xf32> to vector<8x128xbf16>
    %cst_54 = arith.constant dense<0.000000e+00> : vector<8x128xf32>
    %88 = tpu.matmul %87, %70, %cst_54 {dimension_numbers = #tpu.dot_dimension_numbers<[1], [0], [0], [1], [0, 0, 1, 1], [], []>} : vector<8x128xbf16>, vector<128x128xbf16>, vector<8x128xf32> -> vector<8x128xf32>
    %89 = vector.broadcast %72 : vector<1x128xf32> to vector<8x128xf32>
    %90 = arith.addf %88, %89 : vector<8x128xf32>
    %cst_55 = arith.constant 0.000000e+00 : f32
    %91 = vector.broadcast %cst_55 : f32 to vector<8x128xf32>
    %92 = arith.maximumf %90, %91 : vector<8x128xf32>
    %c2 = arith.constant 2 : index
    %c0_56 = arith.constant 0 : index
    %c0_57 = arith.constant 0 : index
    %93 = vector.load %arg10[%c2, %c0_56, %c0_57] : memref<4x128x128xbf16, #tpu.memory_space<vmem>>, vector<1x128x128xbf16>
    %94 = vector.shape_cast %93 : vector<1x128x128xbf16> to vector<128x128xbf16>
    %c2_58 = arith.constant 2 : index
    %c0_59 = arith.constant 0 : index
    %c0_60 = arith.constant 0 : index
    %95 = vector.load %arg11[%c2_58, %c0_59, %c0_60] : memref<4x1x128xf32, #tpu.memory_space<vmem>>, vector<1x1x128xf32>
    %96 = vector.shape_cast %95 : vector<1x1x128xf32> to vector<1x128xf32>
    %c2_61 = arith.constant 2 : index
    %c0_62 = arith.constant 0 : index
    %c0_63 = arith.constant 0 : index
    %97 = vector.load %arg12[%c2_61, %c0_62, %c0_63] : memref<4x128x128xbf16, #tpu.memory_space<vmem>>, vector<1x128x128xbf16>
    %98 = vector.shape_cast %97 : vector<1x128x128xbf16> to vector<128x128xbf16>
    %c2_64 = arith.constant 2 : index
    %c0_65 = arith.constant 0 : index
    %c0_66 = arith.constant 0 : index
    %99 = vector.load %arg13[%c2_64, %c0_65, %c0_66] : memref<4x1x128xf32, #tpu.memory_space<vmem>>, vector<1x1x128xf32>
    %100 = vector.shape_cast %99 : vector<1x1x128xf32> to vector<1x128xf32>
    %101 = arith.truncf %92 : vector<8x128xf32> to vector<8x128xbf16>
    %cst_67 = arith.constant dense<0.000000e+00> : vector<16x128xf32>
    %102 = tpu.matmul %20, %101, %cst_67 {dimension_numbers = #tpu.dot_dimension_numbers<[1], [0], [0], [1], [0, 0, 1, 1], [], []>} : vector<16x8xbf16>, vector<8x128xbf16>, vector<16x128xf32> -> vector<16x128xf32>
    %103 = arith.addf %102, %11 : vector<16x128xf32>
    %cst_68 = arith.constant 0.000000e+00 : f32
    %104 = vector.broadcast %cst_68 : f32 to vector<16x128xf32>
    %105 = arith.maximumf %103, %104 : vector<16x128xf32>
    %106 = arith.truncf %105 : vector<16x128xf32> to vector<16x128xbf16>
    %cst_69 = arith.constant dense<0.000000e+00> : vector<8x128xf32>
    %107 = tpu.matmul %26, %106, %cst_69 {dimension_numbers = #tpu.dot_dimension_numbers<[1], [0], [0], [1], [0, 0, 1, 1], [], []>} : vector<8x16xbf16>, vector<16x128xbf16>, vector<8x128xf32> -> vector<8x128xf32>
    %108 = arith.addf %107, %92 : vector<8x128xf32>
    %109 = arith.truncf %108 : vector<8x128xf32> to vector<8x128xbf16>
    %cst_70 = arith.constant dense<0.000000e+00> : vector<8x128xf32>
    %110 = tpu.matmul %109, %94, %cst_70 {dimension_numbers = #tpu.dot_dimension_numbers<[1], [0], [0], [1], [0, 0, 1, 1], [], []>} : vector<8x128xbf16>, vector<128x128xbf16>, vector<8x128xf32> -> vector<8x128xf32>
    %111 = vector.broadcast %96 : vector<1x128xf32> to vector<8x128xf32>
    %112 = arith.addf %110, %111 : vector<8x128xf32>
    %cst_71 = arith.constant 0.000000e+00 : f32
    %113 = vector.broadcast %cst_71 : f32 to vector<8x128xf32>
    %114 = arith.maximumf %112, %113 : vector<8x128xf32>
    %115 = arith.truncf %114 : vector<8x128xf32> to vector<8x128xbf16>
    %cst_72 = arith.constant dense<0.000000e+00> : vector<8x128xf32>
    %116 = tpu.matmul %115, %98, %cst_72 {dimension_numbers = #tpu.dot_dimension_numbers<[1], [0], [0], [1], [0, 0, 1, 1], [], []>} : vector<8x128xbf16>, vector<128x128xbf16>, vector<8x128xf32> -> vector<8x128xf32>
    %117 = vector.broadcast %100 : vector<1x128xf32> to vector<8x128xf32>
    %118 = arith.addf %116, %117 : vector<8x128xf32>
    %cst_73 = arith.constant 0.000000e+00 : f32
    %119 = vector.broadcast %cst_73 : f32 to vector<8x128xf32>
    %120 = arith.maximumf %118, %119 : vector<8x128xf32>
    %c3 = arith.constant 3 : index
    %c0_74 = arith.constant 0 : index
    %c0_75 = arith.constant 0 : index
    %121 = vector.load %arg10[%c3, %c0_74, %c0_75] : memref<4x128x128xbf16, #tpu.memory_space<vmem>>, vector<1x128x128xbf16>
    %122 = vector.shape_cast %121 : vector<1x128x128xbf16> to vector<128x128xbf16>
    %c3_76 = arith.constant 3 : index
    %c0_77 = arith.constant 0 : index
    %c0_78 = arith.constant 0 : index
    %123 = vector.load %arg11[%c3_76, %c0_77, %c0_78] : memref<4x1x128xf32, #tpu.memory_space<vmem>>, vector<1x1x128xf32>
    %124 = vector.shape_cast %123 : vector<1x1x128xf32> to vector<1x128xf32>
    %c3_79 = arith.constant 3 : index
    %c0_80 = arith.constant 0 : index
    %c0_81 = arith.constant 0 : index
    %125 = vector.load %arg12[%c3_79, %c0_80, %c0_81] : memref<4x128x128xbf16, #tpu.memory_space<vmem>>, vector<1x128x128xbf16>
    %126 = vector.shape_cast %125 : vector<1x128x128xbf16> to vector<128x128xbf16>
    %c3_82 = arith.constant 3 : index
    %c0_83 = arith.constant 0 : index
    %c0_84 = arith.constant 0 : index
    %127 = vector.load %arg13[%c3_82, %c0_83, %c0_84] : memref<4x1x128xf32, #tpu.memory_space<vmem>>, vector<1x1x128xf32>
    %128 = vector.shape_cast %127 : vector<1x1x128xf32> to vector<1x128xf32>
    %129 = arith.truncf %120 : vector<8x128xf32> to vector<8x128xbf16>
    %cst_85 = arith.constant dense<0.000000e+00> : vector<16x128xf32>
    %130 = tpu.matmul %20, %129, %cst_85 {dimension_numbers = #tpu.dot_dimension_numbers<[1], [0], [0], [1], [0, 0, 1, 1], [], []>} : vector<16x8xbf16>, vector<8x128xbf16>, vector<16x128xf32> -> vector<16x128xf32>
    %131 = arith.addf %130, %11 : vector<16x128xf32>
    %cst_86 = arith.constant 0.000000e+00 : f32
    %132 = vector.broadcast %cst_86 : f32 to vector<16x128xf32>
    %133 = arith.maximumf %131, %132 : vector<16x128xf32>
    %134 = arith.truncf %133 : vector<16x128xf32> to vector<16x128xbf16>
    %cst_87 = arith.constant dense<0.000000e+00> : vector<8x128xf32>
    %135 = tpu.matmul %26, %134, %cst_87 {dimension_numbers = #tpu.dot_dimension_numbers<[1], [0], [0], [1], [0, 0, 1, 1], [], []>} : vector<8x16xbf16>, vector<16x128xbf16>, vector<8x128xf32> -> vector<8x128xf32>
    %136 = arith.addf %135, %120 : vector<8x128xf32>
    %137 = arith.truncf %136 : vector<8x128xf32> to vector<8x128xbf16>
    %cst_88 = arith.constant dense<0.000000e+00> : vector<8x128xf32>
    %138 = tpu.matmul %137, %122, %cst_88 {dimension_numbers = #tpu.dot_dimension_numbers<[1], [0], [0], [1], [0, 0, 1, 1], [], []>} : vector<8x128xbf16>, vector<128x128xbf16>, vector<8x128xf32> -> vector<8x128xf32>
    %139 = vector.broadcast %124 : vector<1x128xf32> to vector<8x128xf32>
    %140 = arith.addf %138, %139 : vector<8x128xf32>
    %cst_89 = arith.constant 0.000000e+00 : f32
    %141 = vector.broadcast %cst_89 : f32 to vector<8x128xf32>
    %142 = arith.maximumf %140, %141 : vector<8x128xf32>
    %143 = arith.truncf %142 : vector<8x128xf32> to vector<8x128xbf16>
    %cst_90 = arith.constant dense<0.000000e+00> : vector<8x128xf32>
    %144 = tpu.matmul %143, %126, %cst_90 {dimension_numbers = #tpu.dot_dimension_numbers<[1], [0], [0], [1], [0, 0, 1, 1], [], []>} : vector<8x128xbf16>, vector<128x128xbf16>, vector<8x128xf32> -> vector<8x128xf32>
    %145 = vector.broadcast %128 : vector<1x128xf32> to vector<8x128xf32>
    %146 = arith.addf %144, %145 : vector<8x128xf32>
    %147 = arith.truncf %146 : vector<8x128xf32> to vector<8x128xbf16>
    %cst_91 = arith.constant dense<0.000000e+00> : vector<2x128xf32>
    %148 = tpu.matmul %32, %147, %cst_91 {dimension_numbers = #tpu.dot_dimension_numbers<[1], [0], [0], [1], [0, 0, 1, 1], [], []>} : vector<2x8xbf16>, vector<8x128xbf16>, vector<2x128xf32> -> vector<2x128xf32>
    %cst_92 = arith.constant 1.000000e+00 : f32
    %149 = vector.broadcast %cst_92 : f32 to vector<2x1xf32>
    %150 = arith.maximumf %36, %149 : vector<2x1xf32>
    %151 = vector.broadcast %150 : vector<2x1xf32> to vector<2x128xf32>
    %152 = arith.divf %148, %151 : vector<2x128xf32>
    %c0_93 = arith.constant 0 : index
    %c0_94 = arith.constant 0 : index
    %153 = vector.load %arg14[%c0_93, %c0_94] : memref<128x1024xbf16, #tpu.memory_space<vmem>>, vector<128x1024xbf16>
    %154 = arith.truncf %152 : vector<2x128xf32> to vector<2x128xbf16>
    %cst_95 = arith.constant dense<0.000000e+00> : vector<2x1024xf32>
    %155 = tpu.matmul %154, %153, %cst_95 {dimension_numbers = #tpu.dot_dimension_numbers<[1], [0], [0], [1], [0, 0, 1, 1], [], []>} : vector<2x128xbf16>, vector<128x1024xbf16>, vector<2x1024xf32> -> vector<2x1024xf32>
    %c0_96 = arith.constant 0 : index
    %c0_97 = arith.constant 0 : index
    %156 = vector.load %arg15[%c0_96, %c0_97] : memref<1x1024xf32, #tpu.memory_space<vmem>>, vector<1x1024xf32>
    %157 = vector.broadcast %156 : vector<1x1024xf32> to vector<2x1024xf32>
    %158 = arith.addf %155, %157 : vector<2x1024xf32>
    %cst_98 = arith.constant 0.000000e+00 : f32
    %159 = vector.broadcast %cst_98 : f32 to vector<2x1024xf32>
    %160 = arith.maximumf %158, %159 : vector<2x1024xf32>
    %c0_99 = arith.constant 0 : index
    %c0_100 = arith.constant 0 : index
    %161 = vector.load %arg16[%c0_99, %c0_100] : memref<1024x1024xbf16, #tpu.memory_space<vmem>>, vector<1024x1024xbf16>
    %162 = arith.truncf %160 : vector<2x1024xf32> to vector<2x1024xbf16>
    %cst_101 = arith.constant dense<0.000000e+00> : vector<2x1024xf32>
    %163 = tpu.matmul %162, %161, %cst_101 {dimension_numbers = #tpu.dot_dimension_numbers<[1], [0], [0], [1], [0, 0, 1, 1], [], []>} : vector<2x1024xbf16>, vector<1024x1024xbf16>, vector<2x1024xf32> -> vector<2x1024xf32>
    %c0_102 = arith.constant 0 : index
    %c0_103 = arith.constant 0 : index
    %164 = vector.load %arg17[%c0_102, %c0_103] : memref<1x1024xf32, #tpu.memory_space<vmem>>, vector<1x1024xf32>
    %165 = vector.broadcast %164 : vector<1x1024xf32> to vector<2x1024xf32>
    %166 = arith.addf %163, %165 : vector<2x1024xf32>
    %cst_104 = arith.constant 0.000000e+00 : f32
    %167 = vector.broadcast %cst_104 : f32 to vector<2x1024xf32>
    %168 = arith.maximumf %166, %167 : vector<2x1024xf32>
    %c0_105 = arith.constant 0 : index
    %c0_106 = arith.constant 0 : index
    %169 = vector.load %arg18[%c0_105, %c0_106] : memref<1024x512xbf16, #tpu.memory_space<vmem>>, vector<1024x512xbf16>
    %170 = arith.truncf %168 : vector<2x1024xf32> to vector<2x1024xbf16>
    %cst_107 = arith.constant dense<0.000000e+00> : vector<2x512xf32>
    %171 = tpu.matmul %170, %169, %cst_107 {dimension_numbers = #tpu.dot_dimension_numbers<[1], [0], [0], [1], [0, 0, 1, 1], [], []>} : vector<2x1024xbf16>, vector<1024x512xbf16>, vector<2x512xf32> -> vector<2x512xf32>
    %c0_108 = arith.constant 0 : index
    %c0_109 = arith.constant 0 : index
    %172 = vector.load %arg19[%c0_108, %c0_109] : memref<1x512xf32, #tpu.memory_space<vmem>>, vector<1x512xf32>
    %173 = vector.broadcast %172 : vector<1x512xf32> to vector<2x512xf32>
    %174 = arith.addf %171, %173 : vector<2x512xf32>
    %cst_110 = arith.constant 0.000000e+00 : f32
    %175 = vector.broadcast %cst_110 : f32 to vector<2x512xf32>
    %176 = arith.maximumf %174, %175 : vector<2x512xf32>
    %c0_111 = arith.constant 0 : index
    %c0_112 = arith.constant 0 : index
    %177 = vector.load %arg20[%c0_111, %c0_112] : memref<512x128xbf16, #tpu.memory_space<vmem>>, vector<512x128xbf16>
    %178 = arith.truncf %176 : vector<2x512xf32> to vector<2x512xbf16>
    %cst_113 = arith.constant dense<0.000000e+00> : vector<2x128xf32>
    %179 = tpu.matmul %178, %177, %cst_113 {dimension_numbers = #tpu.dot_dimension_numbers<[1], [0], [0], [1], [0, 0, 1, 1], [], []>} : vector<2x512xbf16>, vector<512x128xbf16>, vector<2x128xf32> -> vector<2x128xf32>
    %c0_114 = arith.constant 0 : index
    %c0_115 = arith.constant 0 : index
    %180 = vector.load %arg21[%c0_114, %c0_115] : memref<1x128xf32, #tpu.memory_space<vmem>>, vector<1x128xf32>
    %181 = vector.broadcast %180 : vector<1x128xf32> to vector<2x128xf32>
    %182 = arith.addf %179, %181 : vector<2x128xf32>
    %c0_116 = arith.constant 0 : index
    %c0_117 = arith.constant 0 : index
    %183 = vector.load %arg22[%c0_116, %c0_117] : memref<2x128xf32, #tpu.memory_space<vmem>>, vector<2x128xf32>
    tpu.vector_store %arg22[%c0_116, %c0_117], %182 {strides = array<i32>} : memref<2x128xf32, #tpu.memory_space<vmem>>, vector<2x128xf32>,
    return
  }
  func.func @transform_0(%arg0: i32) -> (i32, i32) {
    %c0_i32 = arith.constant 0 : i32
    %c0_i32_0 = arith.constant 0 : i32
    %c0_i32_1 = arith.constant 0 : i32
    return %c0_i32, %c0_i32_0 : i32, i32
  }
  func.func @transform_1(%arg0: i32) -> (i32, i32) {
    %c0_i32 = arith.constant 0 : i32
    %c0_i32_0 = arith.constant 0 : i32
    %c0_i32_1 = arith.constant 0 : i32
    return %c0_i32, %c0_i32_0 : i32, i32
  }
  func.func @transform_2(%arg0: i32) -> (i32, i32) {
    %c0_i32 = arith.constant 0 : i32
    %c0_i32_0 = arith.constant 0 : i32
    %c0_i32_1 = arith.constant 0 : i32
    return %c0_i32, %c0_i32_0 : i32, i32
  }
  func.func @transform_3(%arg0: i32) -> (i32, i32) {
    %c0_i32 = arith.constant 0 : i32
    %c0_i32_0 = arith.constant 0 : i32
    %c0_i32_1 = arith.constant 0 : i32
    return %c0_i32, %c0_i32_0 : i32, i32
  }
  func.func @transform_4(%arg0: i32) -> (i32, i32) {
    %c0_i32 = arith.constant 0 : i32
    %c0_i32_0 = arith.constant 0 : i32
    %c0_i32_1 = arith.constant 0 : i32
    return %c0_i32, %c0_i32_0 : i32, i32
  }
  func.func @transform_5(%arg0: i32) -> (i32, i32) {
    %c0_i32 = arith.constant 0 : i32
    %c0_i32_0 = arith.constant 0 : i32
    %c0_i32_1 = arith.constant 0 : i32
    return %c0_i32, %c0_i32_0 : i32, i32
  }
  func.func @transform_6(%arg0: i32) -> (i32, i32) {
    %c0_i32 = arith.constant 0 : i32
    %c0_i32_0 = arith.constant 0 : i32
    %c0_i32_1 = arith.constant 0 : i32
    return %c0_i32, %c0_i32_0 : i32, i32
  }
  func.func @transform_7(%arg0: i32) -> (i32, i32) {
    %c0_i32 = arith.constant 0 : i32
    %c0_i32_0 = arith.constant 0 : i32
    %c0_i32_1 = arith.constant 0 : i32
    return %c0_i32, %c0_i32_0 : i32, i32
  }
  func.func @transform_8(%arg0: i32) -> (i32, i32) {
    %c0_i32 = arith.constant 0 : i32
    %c0_i32_0 = arith.constant 0 : i32
    %c0_i32_1 = arith.constant 0 : i32
    return %c0_i32, %c0_i32_0 : i32, i32
  }
  func.func @transform_9(%arg0: i32) -> (i32, i32, i32) {
    %c0_i32 = arith.constant 0 : i32
    %c0_i32_0 = arith.constant 0 : i32
    %c0_i32_1 = arith.constant 0 : i32
    %c0_i32_2 = arith.constant 0 : i32
    return %c0_i32, %c0_i32_0, %c0_i32_1 : i32, i32, i32
  }
  func.func @transform_10(%arg0: i32) -> (i32, i32, i32) {
    %c0_i32 = arith.constant 0 : i32
    %c0_i32_0 = arith.constant 0 : i32
    %c0_i32_1 = arith.constant 0 : i32
    %c0_i32_2 = arith.constant 0 : i32
    return %c0_i32, %c0_i32_0, %c0_i32_1 : i32, i32, i32
  }
  func.func @transform_11(%arg0: i32) -> (i32, i32, i32) {
    %c0_i32 = arith.constant 0 : i32
    %c0_i32_0 = arith.constant 0 : i32
    %c0_i32_1 = arith.constant 0 : i32
    %c0_i32_2 = arith.constant 0 : i32
    return %c0_i32, %c0_i32_0, %c0_i32_1 : i32, i32, i32
  }
  func.func @transform_12(%arg0: i32) -> (i32, i32, i32) {
    %c0_i32 = arith.constant 0 : i32
    %c0_i32_0 = arith.constant 0 : i32
    %c0_i32_1 = arith.constant 0 : i32
    %c0_i32_2 = arith.constant 0 : i32
    return %c0_i32, %c0_i32_0, %c0_i32_1 : i32, i32, i32
  }
  func.func @transform_13(%arg0: i32) -> (i32, i32) {
    %c0_i32 = arith.constant 0 : i32
    %c0_i32_0 = arith.constant 0 : i32
    %c0_i32_1 = arith.constant 0 : i32
    return %c0_i32, %c0_i32_0 : i32, i32
  }
  func.func @transform_14(%arg0: i32) -> (i32, i32) {
    %c0_i32 = arith.constant 0 : i32
    %c0_i32_0 = arith.constant 0 : i32
    %c0_i32_1 = arith.constant 0 : i32
    return %c0_i32, %c0_i32_0 : i32, i32
  }
  func.func @transform_15(%arg0: i32) -> (i32, i32) {
    %c0_i32 = arith.constant 0 : i32
    %c0_i32_0 = arith.constant 0 : i32
    %c0_i32_1 = arith.constant 0 : i32
    return %c0_i32, %c0_i32_0 : i32, i32
  }
  func.func @transform_16(%arg0: i32) -> (i32, i32) {
    %c0_i32 = arith.constant 0 : i32
    %c0_i32_0 = arith.constant 0 : i32
    %c0_i32_1 = arith.constant 0 : i32
    return %c0_i32, %c0_i32_0 : i32, i32
  }
  func.func @transform_17(%arg0: i32) -> (i32, i32) {
    %c0_i32 = arith.constant 0 : i32
    %c0_i32_0 = arith.constant 0 : i32
    %c0_i32_1 = arith.constant 0 : i32
    return %c0_i32, %c0_i32_0 : i32, i32
  }
  func.func @transform_18(%arg0: i32) -> (i32, i32) {
    %c0_i32 = arith.constant 0 : i32
    %c0_i32_0 = arith.constant 0 : i32
    %c0_i32_1 = arith.constant 0 : i32
    return %c0_i32, %c0_i32_0 : i32, i32
  }
  func.func @transform_19(%arg0: i32) -> (i32, i32) {
    %c0_i32 = arith.constant 0 : i32
    %c0_i32_0 = arith.constant 0 : i32
    %c0_i32_1 = arith.constant 0 : i32
    return %c0_i32, %c0_i32_0 : i32, i32
  }
  func.func @transform_20(%arg0: i32) -> (i32, i32) {
    %c0_i32 = arith.constant 0 : i32
    %c0_i32_0 = arith.constant 0 : i32
    %c0_i32_1 = arith.constant 0 : i32
    return %c0_i32, %c0_i32_0 : i32, i32
  }
  func.func @transform_21(%arg0: i32) -> (i32, i32) {
    %c0_i32 = arith.constant 0 : i32
    %c0_i32_0 = arith.constant 0 : i32
    %c0_i32_1 = arith.constant 0 : i32
    return %c0_i32, %c0_i32_0 : i32, i32
  }
}

</mosaic_0001>

<llo_original>
// kernel: gin_forward.1
$region0: #{gin_forward.1}
  #allocation0 [shape = 'u32[]', space=smem, size = 0x4, offset = 0x4, fixed_abs, tag = 'smem constant byte address 0x4 - core index']
  #allocation1 [shape = 'u32[144,128]{1,0:T(1,128)}', space=vmem, size = 0x12000, scoped, tag = 'internal scratch']
  %s0 = inlined_call_operand.vmem [shape: bf16[8,256], index: 0, kind: input, shape index: {}]
  %s1 = inlined_call_operand.hbm [shape: bf16[256,128], index: 1, kind: input, shape index: {}]
  %s2 = inlined_call_operand.hbm [shape: f32[1,128], index: 2, kind: input, shape index: {}]
  %s3 = inlined_call_operand.vmem [shape: bf16[16,128], index: 3, kind: input, shape index: {}]
  %s4 = inlined_call_operand.hbm [shape: bf16[128,128], index: 4, kind: input, shape index: {}]
  %s5 = inlined_call_operand.hbm [shape: f32[1,128], index: 5, kind: input, shape index: {}]
  %s6 = inlined_call_operand.vmem [shape: s32[16,1], index: 6, kind: input, shape index: {}]
  %s7 = inlined_call_operand.vmem [shape: s32[1,16], index: 7, kind: input, shape index: {}]
  %s8 = inlined_call_operand.hbm [shape: s32[1,8], index: 8, kind: input, shape index: {}]
  %s9 = inlined_call_operand.hbm [shape: bf16[4,128,128], index: 9, kind: input, shape index: {}]
  %s10 = inlined_call_operand.hbm [shape: f32[4,1,128], index: 10, kind: input, shape index: {}]
  %s11 = inlined_call_operand.hbm [shape: bf16[4,128,128], index: 11, kind: input, shape index: {}]
  %s12 = inlined_call_operand.hbm [shape: f32[4,1,128], index: 12, kind: input, shape index: {}]
  %s13 = inlined_call_operand.hbm [shape: bf16[128,1024], index: 13, kind: input, shape index: {}]
  %s14 = inlined_call_operand.hbm [shape: f32[1,1024], index: 14, kind: input, shape index: {}]
  %s15 = inlined_call_operand.hbm [shape: bf16[1024,1024], index: 15, kind: input, shape index: {}]
  %s16 = inlined_call_operand.hbm [shape: f32[1,1024], index: 16, kind: input, shape index: {}]
  %s17 = inlined_call_operand.hbm [shape: bf16[1024,512], index: 17, kind: input, shape index: {}]
  %s18 = inlined_call_operand.hbm [shape: f32[1,512], index: 18, kind: input, shape index: {}]
  %s19 = inlined_call_operand.hbm [shape: bf16[512,128], index: 19, kind: input, shape index: {}]
  %s20 = inlined_call_operand.hbm [shape: f32[1,128], index: 20, kind: input, shape index: {}]
  %s21 = inlined_call_operand.hbm [shape: f32[2,128], index: 21, kind: output, shape index: {}]
  %s22 = sld [smem:[#allocation0]]
  $region162: #{gin_forward.1} parent=0
    _
  %s24 = ssub.s32 1, %s22
  %s25 = scalar_select 0, %s24, %s22
  $region1: #{gin_forward.1} parent=0
    #allocation2 [shape = 'u8[65536]{0}', space=vmem, size = 0x10000, scoped, tag = 'input window, operand 1, single buffered']
    #allocation3 [shape = 's32[1]{0}', space=sflag, size = 0x4, scoped, tag = 'scoped memory for gin_forward.1']
    #allocation4 [shape = 's32[1]{0}', space=sflag, size = 0x4, scoped, tag = 'scoped memory for gin_forward.1']
    #allocation5 [shape = 'u8[512]{0}', space=vmem, size = 0x400, scoped, tag = 'input window, operand 2, single buffered']
    #allocation6 [shape = 's32[1]{0}', space=sflag, size = 0x4, scoped, tag = 'scoped memory for gin_forward.1']
    #allocation7 [shape = 'u8[32768]{0}', space=vmem, size = 0x8000, scoped, tag = 'input window, operand 4, single buffered']
    #allocation8 [shape = 'u8[512]{0}', space=vmem, size = 0x400, scoped, tag = 'input window, operand 5, single buffered']
    #allocation9 [shape = 's32[1]{0}', space=sflag, size = 0x4, scoped, tag = 'scoped memory for gin_forward.1']
    #allocation10 [shape = 'u8[512]{0}', space=vmem, size = 0x400, scoped, tag = 'input window, operand 8, single buffered']
    #allocation11 [shape = 'u8[131072]{0}', space=vmem, size = 0x20000, scoped, tag = 'input window, operand 9, single buffered']
    #allocation12 [shape = 's32[1]{0}', space=sflag, size = 0x4, scoped, tag = 'scoped memory for gin_forward.1']
    #allocation13 [shape = 'u8[2048]{0}', space=vmem, size = 0x800, scoped, tag = 'input window, operand 10, single buffered']
    #allocation14 [shape = 'u8[131072]{0}', space=vmem, size = 0x20000, scoped, tag = 'input window, operand 11, single buffered']
    #allocation15 [shape = 's32[1]{0}', space=sflag, size = 0x4, scoped, tag = 'scoped memory for gin_forward.1']
    #allocation16 [shape = 'u8[2048]{0}', space=vmem, size = 0x800, scoped, tag = 'input window, operand 12, single buffered']
    #allocation17 [shape = 'u8[262144]{0}', space=vmem, size = 0x40000, scoped, tag = 'input window, operand 13, single buffered']
    #allocation18 [shape = 's32[1]{0}', space=sflag, size = 0x4, scoped, tag = 'scoped memory for gin_forward.1']
    #allocation19 [shape = 'u8[4096]{0}', space=vmem, size = 0x1000, scoped, tag = 'input window, operand 14, single buffered']
    #allocation20 [shape = 'u8[2097152]{0}', space=vmem, size = 0x200000, scoped, tag = 'input window, operand 15, single buffered']
    #allocation21 [shape = 's32[1]{0}', space=sflag, size = 0x4, scoped, tag = 'scoped memory for gin_forward.1']
    #allocation22 [shape = 'u8[4096]{0}', space=vmem, size = 0x1000, scoped, tag = 'input window, operand 16, single buffered']
    #allocation23 [shape = 'u8[1048576]{0}', space=vmem, size = 0x100000, scoped, tag = 'input window, operand 17, single buffered']
    #allocation24 [shape = 's32[1]{0}', space=sflag, size = 0x4, scoped, tag = 'scoped memory for gin_forward.1']
    #allocation25 [shape = 'u8[2048]{0}', space=vmem, size = 0x800, scoped, tag = 'input window, operand 18, single buffered']
    #allocation26 [shape = 'u8[131072]{0}', space=vmem, size = 0x20000, scoped, tag = 'input window, operand 19, single buffered']
    #allocation27 [shape = 's32[1]{0}', space=sflag, size = 0x4, scoped, tag = 'scoped memory for gin_forward.1']
    #allocation28 [shape = 'u8[512]{0}', space=vmem, size = 0x400, scoped, tag = 'input window, operand 20, single buffered']
    #allocation29 [shape = 'u8[1024]{0}', space=vmem, size = 0x400, scoped, tag = 'output window, operand 0, single buffered']
    %26 = vsyncpa [#allocation3], 0
    %27 = vsyncpa [#allocation6], 0
    %28 = vsyncpa [#allocation9], 0
    %29 = vsyncpa [#allocation12], 0
    %30 = vsyncpa [#allocation15], 0
    %31 = vsyncpa [#allocation18], 0
    %32 = vsyncpa [#allocation21], 0
    %33 = vsyncpa [#allocation24], 0
    %34 = vsyncpa [#allocation27], 0
    %35 = vsyncpa [#allocation4], 0
    // Predicated region
    $region2: #{gin_forward.1} parent=1 // pred_check
      _
    $region3: #{gin_forward.1} parent=1 // pred_check_branch
      %37 = sbr.rel (0) target = $region5
    $region4: #{gin_forward.1} parent=1 // pred_region
      _
    $region5: #{gin_forward.1} parent=1 // pred_fallthru
      _
    // Predicated region
    $region6: #{gin_forward.1} parent=1 // pred_check
      _
    $region7: #{gin_forward.1} parent=1 // pred_check_branch
      %39 = sbr.rel (0) target = $region9
    $region8: #{gin_forward.1} parent=1 // pred_region
      %s41 = ssub.s32 2048, 2048
      %42 = vsyncadd [#allocation3], %s41
      %s43 = sshll.u32 [#allocation2], 4
      %s44 = int_to_ptr.vmem [resolvable:$true] %s43
      %49 = dma.hbm_to_vmem [thread:$0]  %s1, 2048, %s44, [#allocation3], 64, 64, 4
    $region9: #{gin_forward.1} parent=1 // pred_fallthru
      _
    // Predicated region
    $region10: #{gin_forward.1} parent=1 // pred_check
      _
    $region11: #{gin_forward.1} parent=1 // pred_check_branch
      %51 = sbr.rel (0) target = $region13
    $region12: #{gin_forward.1} parent=1 // pred_region
      %s53 = ssub.s32 16, 16
      %54 = vsyncadd [#allocation6], %s53
      %s56 = sshll.u32 [#allocation5], 4
      %s57 = int_to_ptr.vmem [resolvable:$true] %s56
      %59 = dma.hbm_to_vmem [thread:$0]  %s2, 16, %s57, [#allocation6]
    $region13: #{gin_forward.1} parent=1 // pred_fallthru
      _
    // Predicated region
    $region14: #{gin_forward.1} parent=1 // pred_check
      _
    $region15: #{gin_forward.1} parent=1 // pred_check_branch
      %61 = sbr.rel (0) target = $region17
    $region16: #{gin_forward.1} parent=1 // pred_region
      _
    $region17: #{gin_forward.1} parent=1 // pred_fallthru
      _
    // Predicated region
    $region18: #{gin_forward.1} parent=1 // pred_check
      _
    $region19: #{gin_forward.1} parent=1 // pred_check_branch
      %63 = sbr.rel (0) target = $region21
    $region20: #{gin_forward.1} parent=1 // pred_region
      %s65 = ssub.s32 1024, 1024
      %66 = vsyncadd [#allocation6], %s65
      %s67 = sshll.u32 [#allocation7], 4
      %s68 = int_to_ptr.vmem [resolvable:$true] %s67
      %73 = dma.hbm_to_vmem [thread:$0]  %s4, 1024, %s68, [#allocation6], 64, 64, 4
    $region21: #{gin_forward.1} parent=1 // pred_fallthru
      _
    // Predicated region
    $region22: #{gin_forward.1} parent=1 // pred_check
      _
    $region23: #{gin_forward.1} parent=1 // pred_check_branch
      %75 = sbr.rel (0) target = $region25
    $region24: #{gin_forward.1} parent=1 // pred_region
      %s77 = ssub.s32 16, 16
      %78 = vsyncadd [#allocation9], %s77
      %s80 = sshll.u32 [#allocation8], 4
      %s81 = int_to_ptr.vmem [resolvable:$true] %s80
      %83 = dma.hbm_to_vmem [thread:$0]  %s5, 16, %s81, [#allocation9]
    $region25: #{gin_forward.1} parent=1 // pred_fallthru
      _
    // Predicated region
    $region26: #{gin_forward.1} parent=1 // pred_check
      _
    $region27: #{gin_forward.1} parent=1 // pred_check_branch
      %85 = sbr.rel (0) target = $region29
    $region28: #{gin_forward.1} parent=1 // pred_region
      _
    $region29: #{gin_forward.1} parent=1 // pred_fallthru
      _
    // Predicated region
    $region30: #{gin_forward.1} parent=1 // pred_check
      _
    $region31: #{gin_forward.1} parent=1 // pred_check_branch
      %87 = sbr.rel (0) target = $region33
    $region32: #{gin_forward.1} parent=1 // pred_region
      _
    $region33: #{gin_forward.1} parent=1 // pred_fallthru
      _
    // Predicated region
    $region34: #{gin_forward.1} parent=1 // pred_check
      _
    $region35: #{gin_forward.1} parent=1 // pred_check_branch
      %89 = sbr.rel (0) target = $region37
    $region36: #{gin_forward.1} parent=1 // pred_region
      %s91 = ssub.s32 16, 16
      %92 = vsyncadd [#allocation9], %s91
      %s94 = sshll.u32 [#allocation10], 4
      %s95 = int_to_ptr.vmem [resolvable:$true] %s94
      %97 = dma.hbm_to_vmem [thread:$0]  %s8, 16, %s95, [#allocation9]
    $region37: #{gin_forward.1} parent=1 // pred_fallthru
      _
    // Predicated region
    $region38: #{gin_forward.1} parent=1 // pred_check
      _
    $region39: #{gin_forward.1} parent=1 // pred_check_branch
      %99 = sbr.rel (0) target = $region41
    $region40: #{gin_forward.1} parent=1 // pred_region
      %s101 = ssub.s32 4096, 4096
      %102 = vsyncadd [#allocation12], %s101
      %s103 = sshll.u32 [#allocation11], 4
      %s104 = int_to_ptr.vmem [resolvable:$true] %s103
      %109 = dma.hbm_to_vmem [thread:$0]  %s9, 4096, %s104, [#allocation12], 64, 64, 4
    $region41: #{gin_forward.1} parent=1 // pred_fallthru
      _
    // Predicated region
    $region42: #{gin_forward.1} parent=1 // pred_check
      _
    $region43: #{gin_forward.1} parent=1 // pred_check_branch
      %111 = sbr.rel (0) target = $region45
    $region44: #{gin_forward.1} parent=1 // pred_region
      %s113 = ssub.s32 64, 64
      %114 = vsyncadd [#allocation12], %s113
      %s115 = sshll.u32 [#allocation13], 4
      %s116 = int_to_ptr.vmem [resolvable:$true] %s115
      %121 = dma.hbm_to_vmem [thread:$0]  %s10, 64, %s116, [#allocation12], 16, 16, 1
    $region45: #{gin_forward.1} parent=1 // pred_fallthru
      _
    // Predicated region
    $region46: #{gin_forward.1} parent=1 // pred_check
      _
    $region47: #{gin_forward.1} parent=1 // pred_check_branch
      %123 = sbr.rel (0) target = $region49
    $region48: #{gin_forward.1} parent=1 // pred_region
      %s125 = ssub.s32 4096, 4096
      %126 = vsyncadd [#allocation15], %s125
      %s127 = sshll.u32 [#allocation14], 4
      %s128 = int_to_ptr.vmem [resolvable:$true] %s127
      %133 = dma.hbm_to_vmem [thread:$0]  %s11, 4096, %s128, [#allocation15], 64, 64, 4
    $region49: #{gin_forward.1} parent=1 // pred_fallthru
      _
    // Predicated region
    $region50: #{gin_forward.1} parent=1 // pred_check
      _
    $region51: #{gin_forward.1} parent=1 // pred_check_branch
      %135 = sbr.rel (0) target = $region53
    $region52: #{gin_forward.1} parent=1 // pred_region
      %s137 = ssub.s32 64, 64
      %138 = vsyncadd [#allocation15], %s137
      %s139 = sshll.u32 [#allocation16], 4
      %s140 = int_to_ptr.vmem [resolvable:$true] %s139
      %145 = dma.hbm_to_vmem [thread:$0]  %s12, 64, %s140, [#allocation15], 16, 16, 1
    $region53: #{gin_forward.1} parent=1 // pred_fallthru
      _
    // Predicated region
    $region54: #{gin_forward.1} parent=1 // pred_check
      _
    $region55: #{gin_forward.1} parent=1 // pred_check_branch
      %147 = sbr.rel (0) target = $region57
    $region56: #{gin_forward.1} parent=1 // pred_region
      %s149 = ssub.s32 8192, 8192
      %150 = vsyncadd [#allocation18], %s149
      %s151 = sshll.u32 [#allocation17], 4
      %s152 = int_to_ptr.vmem [resolvable:$true] %s151
      %157 = dma.hbm_to_vmem [thread:$0]  %s13, 8192, %s152, [#allocation18], 512, 512, 32
    $region57: #{gin_forward.1} parent=1 // pred_fallthru
      _
    // Predicated region
    $region58: #{gin_forward.1} parent=1 // pred_check
      _
    $region59: #{gin_forward.1} parent=1 // pred_check_branch
      %159 = sbr.rel (0) target = $region61
    $region60: #{gin_forward.1} parent=1 // pred_region
      %s161 = ssub.s32 128, 128
      %162 = vsyncadd [#allocation18], %s161
      %s164 = sshll.u32 [#allocation19], 4
      %s165 = int_to_ptr.vmem [resolvable:$true] %s164
      %167 = dma.hbm_to_vmem [thread:$0]  %s14, 128, %s165, [#allocation18]
    $region61: #{gin_forward.1} parent=1 // pred_fallthru
      _
    // Predicated region
    $region62: #{gin_forward.1} parent=1 // pred_check
      _
    $region63: #{gin_forward.1} parent=1 // pred_check_branch
      %169 = sbr.rel (0) target = $region65
    $region64: #{gin_forward.1} parent=1 // pred_region
      %s171 = ssub.s32 65536, 65536
      %172 = vsyncadd [#allocation21], %s171
      %s173 = sshll.u32 [#allocation20], 4
      %s174 = int_to_ptr.vmem [resolvable:$true] %s173
      %179 = dma.hbm_to_vmem [thread:$0]  %s15, 65536, %s174, [#allocation21], 512, 512, 32
    $region65: #{gin_forward.1} parent=1 // pred_fallthru
      _
    // Predicated region
    $region66: #{gin_forward.1} parent=1 // pred_check
      _
    $region67: #{gin_forward.1} parent=1 // pred_check_branch
      %181 = sbr.rel (0) target = $region69
    $region68: #{gin_forward.1} parent=1 // pred_region
      %s183 = ssub.s32 128, 128
      %184 = vsyncadd [#allocation21], %s183
      %s186 = sshll.u32 [#allocation22], 4
      %s187 = int_to_ptr.vmem [resolvable:$true] %s186
      %189 = dma.hbm_to_vmem [thread:$0]  %s16, 128, %s187, [#allocation21]
    $region69: #{gin_forward.1} parent=1 // pred_fallthru
      _
    // Predicated region
    $region70: #{gin_forward.1} parent=1 // pred_check
      _
    $region71: #{gin_forward.1} parent=1 // pred_check_branch
      %191 = sbr.rel (0) target = $region73
    $region72: #{gin_forward.1} parent=1 // pred_region
      %s193 = ssub.s32 32768, 32768
      %194 = vsyncadd [#allocation24], %s193
      %s195 = sshll.u32 [#allocation23], 4
      %s196 = int_to_ptr.vmem [resolvable:$true] %s195
      %201 = dma.hbm_to_vmem [thread:$0]  %s17, 32768, %s196, [#allocation24], 256, 256, 16
    $region73: #{gin_forward.1} parent=1 // pred_fallthru
      _
    // Predicated region
    $region74: #{gin_forward.1} parent=1 // pred_check
      _
    $region75: #{gin_forward.1} parent=1 // pred_check_branch
      %203 = sbr.rel (0) target = $region77
    $region76: #{gin_forward.1} parent=1 // pred_region
      %s205 = ssub.s32 64, 64
      %206 = vsyncadd [#allocation24], %s205
      %s208 = sshll.u32 [#allocation25], 4
      %s209 = int_to_ptr.vmem [resolvable:$true] %s208
      %211 = dma.hbm_to_vmem [thread:$0]  %s18, 64, %s209, [#allocation24]
    $region77: #{gin_forward.1} parent=1 // pred_fallthru
      _
    // Predicated region
    $region78: #{gin_forward.1} parent=1 // pred_check
      _
    $region79: #{gin_forward.1} parent=1 // pred_check_branch
      %213 = sbr.rel (0) target = $region81
    $region80: #{gin_forward.1} parent=1 // pred_region
      %s215 = ssub.s32 4096, 4096
      %216 = vsyncadd [#allocation27], %s215
      %s217 = sshll.u32 [#allocation26], 4
      %s218 = int_to_ptr.vmem [resolvable:$true] %s217
      %223 = dma.hbm_to_vmem [thread:$0]  %s19, 4096, %s218, [#allocation27], 64, 64, 4
    $region81: #{gin_forward.1} parent=1 // pred_fallthru
      _
    // Predicated region
    $region82: #{gin_forward.1} parent=1 // pred_check
      _
    $region83: #{gin_forward.1} parent=1 // pred_check_branch
      %225 = sbr.rel (0) target = $region85
    $region84: #{gin_forward.1} parent=1 // pred_region
      %s227 = ssub.s32 16, 16
      %228 = vsyncadd [#allocation27], %s227
      %s230 = sshll.u32 [#allocation28], 4
      %s231 = int_to_ptr.vmem [resolvable:$true] %s230
      %233 = dma.hbm_to_vmem [thread:$0]  %s20, 16, %s231, [#allocation27]
    $region85: #{gin_forward.1} parent=1 // pred_fallthru
      _
    // Predicated region
    $region86: #{gin_forward.1} parent=1 // pred_check
      _
    $region87: #{gin_forward.1} parent=1 // pred_check_branch
      %235 = sbr.rel (0) target = $region89
    $region88: #{gin_forward.1} parent=1 // pred_region
      %236 = dma.done [#allocation3], 2048
    $region89: #{gin_forward.1} parent=1 // pred_fallthru
      _
    // Predicated region
    $region90: #{gin_forward.1} parent=1 // pred_check
      _
    $region91: #{gin_forward.1} parent=1 // pred_check_branch
      %238 = sbr.rel (0) target = $region93
    $region92: #{gin_forward.1} parent=1 // pred_region
      %239 = dma.done [#allocation6], 16
    $region93: #{gin_forward.1} parent=1 // pred_fallthru
      _
    // Predicated region
    $region94: #{gin_forward.1} parent=1 // pred_check
      _
    $region95: #{gin_forward.1} parent=1 // pred_check_branch
      %241 = sbr.rel (0) target = $region97
    $region96: #{gin_forward.1} parent=1 // pred_region
      %242 = dma.done [#allocation6], 1024
    $region97: #{gin_forward.1} parent=1 // pred_fallthru
      _
    // Predicated region
    $region98: #{gin_forward.1} parent=1 // pred_check
      _
    $region99: #{gin_forward.1} parent=1 // pred_check_branch
      %244 = sbr.rel (0) target = $region101
    $region100: #{gin_forward.1} parent=1 // pred_region
      %245 = dma.done [#allocation9], 16
    $region101: #{gin_forward.1} parent=1 // pred_fallthru
      _
    // Predicated region
    $region102: #{gin_forward.1} parent=1 // pred_check
      _
    $region103: #{gin_forward.1} parent=1 // pred_check_branch
      %247 = sbr.rel (0) target = $region105
    $region104: #{gin_forward.1} parent=1 // pred_region
      %248 = dma.done [#allocation9], 16
    $region105: #{gin_forward.1} parent=1 // pred_fallthru
      _
    // Predicated region
    $region106: #{gin_forward.1} parent=1 // pred_check
      _
    $region107: #{gin_forward.1} parent=1 // pred_check_branch
      %250 = sbr.rel (0) target = $region109
    $region108: #{gin_forward.1} parent=1 // pred_region
      %251 = dma.done [#allocation12], 4096
    $region109: #{gin_forward.1} parent=1 // pred_fallthru
      _
    // Predicated region
    $region110: #{gin_forward.1} parent=1 // pred_check
      _
    $region111: #{gin_forward.1} parent=1 // pred_check_branch
      %253 = sbr.rel (0) target = $region113
    $region112: #{gin_forward.1} parent=1 // pred_region
      %254 = dma.done [#allocation12], 64
    $region113: #{gin_forward.1} parent=1 // pred_fallthru
      _
    // Predicated region
    $region114: #{gin_forward.1} parent=1 // pred_check
      _
    $region115: #{gin_forward.1} parent=1 // pred_check_branch
      %256 = sbr.rel (0) target = $region117
    $region116: #{gin_forward.1} parent=1 // pred_region
      %257 = dma.done [#allocation15], 4096
    $region117: #{gin_forward.1} parent=1 // pred_fallthru
      _
    // Predicated region
    $region118: #{gin_forward.1} parent=1 // pred_check
      _
    $region119: #{gin_forward.1} parent=1 // pred_check_branch
      %259 = sbr.rel (0) target = $region121
    $region120: #{gin_forward.1} parent=1 // pred_region
      %260 = dma.done [#allocation15], 64
    $region121: #{gin_forward.1} parent=1 // pred_fallthru
      _
    // Predicated region
    $region122: #{gin_forward.1} parent=1 // pred_check
      _
    $region123: #{gin_forward.1} parent=1 // pred_check_branch
      %262 = sbr.rel (0) target = $region125
    $region124: #{gin_forward.1} parent=1 // pred_region
      %263 = dma.done [#allocation18], 8192
    $region125: #{gin_forward.1} parent=1 // pred_fallthru
      _
    // Predicated region
    $region126: #{gin_forward.1} parent=1 // pred_check
      _
    $region127: #{gin_forward.1} parent=1 // pred_check_branch
      %265 = sbr.rel (0) target = $region129
    $region128: #{gin_forward.1} parent=1 // pred_region
      %266 = dma.done [#allocation18], 128
    $region129: #{gin_forward.1} parent=1 // pred_fallthru
      _
    // Predicated region
    $region130: #{gin_forward.1} parent=1 // pred_check
      _
    $region131: #{gin_forward.1} parent=1 // pred_check_branch
      %268 = sbr.rel (0) target = $region133
    $region132: #{gin_forward.1} parent=1 // pred_region
      %269 = dma.done [#allocation21], 65536
    $region133: #{gin_forward.1} parent=1 // pred_fallthru
      _
    // Predicated region
    $region134: #{gin_forward.1} parent=1 // pred_check
      _
    $region135: #{gin_forward.1} parent=1 // pred_check_branch
      %271 = sbr.rel (0) target = $region137
    $region136: #{gin_forward.1} parent=1 // pred_region
      %272 = dma.done [#allocation21], 128
    $region137: #{gin_forward.1} parent=1 // pred_fallthru
      _
    // Predicated region
    $region138: #{gin_forward.1} parent=1 // pred_check
      _
    $region139: #{gin_forward.1} parent=1 // pred_check_branch
      %274 = sbr.rel (0) target = $region141
    $region140: #{gin_forward.1} parent=1 // pred_region
      %275 = dma.done [#allocation24], 32768
    $region141: #{gin_forward.1} parent=1 // pred_fallthru
      _
    // Predicated region
    $region142: #{gin_forward.1} parent=1 // pred_check
      _
    $region143: #{gin_forward.1} parent=1 // pred_check_branch
      %277 = sbr.rel (0) target = $region145
    $region144: #{gin_forward.1} parent=1 // pred_region
      %278 = dma.done [#allocation24], 64
    $region145: #{gin_forward.1} parent=1 // pred_fallthru
      _
    // Predicated region
    $region146: #{gin_forward.1} parent=1 // pred_check
      _
    $region147: #{gin_forward.1} parent=1 // pred_check_branch
      %280 = sbr.rel (0) target = $region149
    $region148: #{gin_forward.1} parent=1 // pred_region
      %281 = dma.done [#allocation27], 4096
    $region149: #{gin_forward.1} parent=1 // pred_fallthru
      _
    // Predicated region
    $region150: #{gin_forward.1} parent=1 // pred_check
      _
    $region151: #{gin_forward.1} parent=1 // pred_check_branch
      %283 = sbr.rel (0) target = $region153
    $region152: #{gin_forward.1} parent=1 // pred_region
      %284 = dma.done [#allocation27], 16
    $region153: #{gin_forward.1} parent=1 // pred_fallthru
      _
    %v286 = vld [vmem:[%s0] sm:$0xff]
    %v287 = vld [vmem:[#allocation2] sm:$0xf]
    %v288 = vld [vmem:[#allocation2 + $0x4] sm:$0xf]
    %v289 = vld [vmem:[#allocation2 + $0x8] sm:$0xf]
    %v290 = vld [vmem:[#allocation2 + $0xc] sm:$0xf]
    %v291 = vld [vmem:[#allocation2 + $0x10] sm:$0xf]
    %v292 = vld [vmem:[#allocation2 + $0x14] sm:$0xf]
    %v293 = vld [vmem:[#allocation2 + $0x18] sm:$0xf]
    %v294 = vld [vmem:[#allocation2 + $0x1c] sm:$0xf]
    %v295 = vld [vmem:[#allocation2 + $0x20] sm:$0xf]
    %v296 = vld [vmem:[#allocation2 + $0x24] sm:$0xf]
    %v297 = vld [vmem:[#allocation2 + $0x28] sm:$0xf]
    %v298 = vld [vmem:[#allocation2 + $0x2c] sm:$0xf]
    %v299 = vld [vmem:[#allocation2 + $0x30] sm:$0xf]
    %v300 = vld [vmem:[#allocation2 + $0x34] sm:$0xf]
    %v301 = vld [vmem:[#allocation2 + $0x38] sm:$0xf]
    %v302 = vld [vmem:[#allocation2 + $0x3c] sm:$0xf]
    %v303 = vld [vmem:[#allocation2 + $0x40] sm:$0xf]
    %v304 = vld [vmem:[#allocation2 + $0x44] sm:$0xf]
    %v305 = vld [vmem:[#allocation2 + $0x48] sm:$0xf]
    %v306 = vld [vmem:[#allocation2 + $0x4c] sm:$0xf]
    %v307 = vld [vmem:[#allocation2 + $0x50] sm:$0xf]
    %v308 = vld [vmem:[#allocation2 + $0x54] sm:$0xf]
    %v309 = vld [vmem:[#allocation2 + $0x58] sm:$0xf]
    %v310 = vld [vmem:[#allocation2 + $0x5c] sm:$0xf]
    %v311 = vld [vmem:[#allocation2 + $0x60] sm:$0xf]
    %v312 = vld [vmem:[#allocation2 + $0x64] sm:$0xf]
    %v313 = vld [vmem:[#allocation2 + $0x68] sm:$0xf]
    %v314 = vld [vmem:[#allocation2 + $0x6c] sm:$0xf]
    %v315 = vld [vmem:[#allocation2 + $0x70] sm:$0xf]
    %v316 = vld [vmem:[#allocation2 + $0x74] sm:$0xf]
    %v317 = vld [vmem:[#allocation2 + $0x78] sm:$0xf]
    %v318 = vld [vmem:[#allocation2 + $0x7c] sm:$0xf]
    %v319 = vld [vmem:[#allocation5] sm:$0x1]
    %v321 = vlaneseq
    %v322 = vshrl.u32 %v321, 7
    %v323 = vsub.s32 0, %v322
    %v324 = vrot.slane %v319, %v323
    %v327 = vunpack.c.l.b16 %v286
    %v328 = vunpack.c.h.b16 %v286
    %v329 = vpack.c.b16 %v327, %v327
    %v330 = vpack.c.b16 %v328, %v328
    %v365 = vunpack.c.l.b16 %v287
    %v366 = vunpack.c.l.b16 %v288
    %v367 = vunpack.c.l.b16 %v289
    %v368 = vunpack.c.l.b16 %v290
    %v369 = vunpack.c.l.b16 %v291
    %v370 = vunpack.c.l.b16 %v292
    %v371 = vunpack.c.l.b16 %v293
    %v372 = vunpack.c.l.b16 %v294
    %v373 = vunpack.c.l.b16 %v295
    %v374 = vunpack.c.l.b16 %v296
    %v375 = vunpack.c.l.b16 %v297
    %v376 = vunpack.c.l.b16 %v298
    %v377 = vunpack.c.l.b16 %v299
    %v378 = vunpack.c.l.b16 %v300
    %v379 = vunpack.c.l.b16 %v301
    %v380 = vunpack.c.l.b16 %v302
    %v381 = vunpack.c.l.b16 %v303
    %v382 = vunpack.c.l.b16 %v304
    %v383 = vunpack.c.l.b16 %v305
    %v384 = vunpack.c.l.b16 %v306
    %v385 = vunpack.c.l.b16 %v307
    %v386 = vunpack.c.l.b16 %v308
    %v387 = vunpack.c.l.b16 %v309
    %v388 = vunpack.c.l.b16 %v310
    %v389 = vunpack.c.l.b16 %v311
    %v390 = vunpack.c.l.b16 %v312
    %v391 = vunpack.c.l.b16 %v313
    %v392 = vunpack.c.l.b16 %v314
    %v393 = vunpack.c.l.b16 %v315
    %v394 = vunpack.c.l.b16 %v316
    %v395 = vunpack.c.l.b16 %v317
    %v396 = vunpack.c.l.b16 %v318
    %v397 = vpack.c.b16 %v366, %v365
    %v398 = vpack.c.b16 %v368, %v367
    %v399 = vpack.c.b16 %v370, %v369
    %v400 = vpack.c.b16 %v372, %v371
    %v401 = vpack.c.b16 %v374, %v373
    %v402 = vpack.c.b16 %v376, %v375
    %v403 = vpack.c.b16 %v378, %v377
    %v404 = vpack.c.b16 %v380, %v379
    %v405 = vpack.c.b16 %v382, %v381
    %v406 = vpack.c.b16 %v384, %v383
    %v407 = vpack.c.b16 %v386, %v385
    %v408 = vpack.c.b16 %v388, %v387
    %v409 = vpack.c.b16 %v390, %v389
    %v410 = vpack.c.b16 %v392, %v391
    %v411 = vpack.c.b16 %v394, %v393
    %v412 = vpack.c.b16 %v396, %v395
    %429 = vmatprep.subr.bf16.mxu0 0
    %430 = vmatpush1.bf16.msra.mxu0 %v397
    %431 = vmatprep.subr.bf16.mxu0 0
    %432 = vmatpush1.bf16.msra.mxu0 %v398
    %433 = vmatprep.subr.bf16.mxu0 0
    %434 = vmatpush1.bf16.msra.mxu0 %v399
    %435 = vmatprep.subr.bf16.mxu0 0
    %436 = vmatpush1.bf16.msra.mxu0 %v400
    %437 = vmatprep.subr.bf16.mxu0 0
    %438 = vmatpush1.bf16.msra.mxu0 %v401
    %439 = vmatprep.subr.bf16.mxu0 0
    %440 = vmatpush1.bf16.msra.mxu0 %v402
    %441 = vmatprep.subr.bf16.mxu0 0
    %442 = vmatpush1.bf16.msra.mxu0 %v403
    %443 = vmatprep.subr.bf16.mxu0 0
    %444 = vmatpush1.bf16.msra.mxu0 %v404
    %445 = vmatprep.subr.bf16.mxu0 0
    %446 = vmatpush1.bf16.msra.mxu0 %v405
    %447 = vmatprep.subr.bf16.mxu0 0
    %448 = vmatpush1.bf16.msra.mxu0 %v406
    %449 = vmatprep.subr.bf16.mxu0 0
    %450 = vmatpush1.bf16.msra.mxu0 %v407
    %451 = vmatprep.subr.bf16.mxu0 0
    %452 = vmatpush1.bf16.msra.mxu0 %v408
    %453 = vmatprep.subr.bf16.mxu0 0
    %454 = vmatpush1.bf16.msra.mxu0 %v409
    %455 = vmatprep.subr.bf16.mxu0 0
    %456 = vmatpush1.bf16.msra.mxu0 %v410
    %457 = vmatprep.subr.bf16.mxu0 0
    %458 = vmatpush1.bf16.msra.mxu0 %v411
    %459 = vmatprep.subr.bf16.mxu0 0
    %460 = vmatpush1.bf16.msra.mxu0 %v412
    %461 = vmatprep.mubr.bf16.mxu0 %v330
    %462 = vmatmul.mubr.bf16.gmra.mrb[0].mxu0 %v329
    %v463 = vpop.f32.mrb[0].mxu0
    %v464 = vadd.f32 %v324, %v463
    %v465 = vpop.f32.mrb[0].mxu0
    %v466 = vpop.f32.mrb[0].mxu0
    %v467 = vpop.f32.mrb[0].mxu0
    %468 = vdwg.mxu0
    %v469 = vld [vmem:[%s3] sm:$0xf]
    %v470 = vld [vmem:[%s3 + $0x4] sm:$0xf]
    %v471 = vld [vmem:[#allocation7] sm:$0xf]
    %v472 = vld [vmem:[#allocation7 + $0x4] sm:$0xf]
    %v473 = vld [vmem:[#allocation7 + $0x8] sm:$0xf]
    %v474 = vld [vmem:[#allocation7 + $0xc] sm:$0xf]
    %v475 = vld [vmem:[#allocation7 + $0x10] sm:$0xf]
    %v476 = vld [vmem:[#allocation7 + $0x14] sm:$0xf]
    %v477 = vld [vmem:[#allocation7 + $0x18] sm:$0xf]
    %v478 = vld [vmem:[#allocation7 + $0x1c] sm:$0xf]
    %v479 = vld [vmem:[#allocation7 + $0x20] sm:$0xf]
    %v480 = vld [vmem:[#allocation7 + $0x24] sm:$0xf]
    %v481 = vld [vmem:[#allocation7 + $0x28] sm:$0xf]
    %v482 = vld [vmem:[#allocation7 + $0x2c] sm:$0xf]
    %v483 = vld [vmem:[#allocation7 + $0x30] sm:$0xf]
    %v484 = vld [vmem:[#allocation7 + $0x34] sm:$0xf]
    %v485 = vld [vmem:[#allocation7 + $0x38] sm:$0xf]
    %v486 = vld [vmem:[#allocation7 + $0x3c] sm:$0xf]
    %v487 = vld [vmem:[#allocation8] sm:$0x1]
    %v489 = vlaneseq
    %v490 = vshrl.u32 %v489, 7
    %v491 = vsub.s32 0, %v490
    %v492 = vrot.slane %v487, %v491
    %v496 = vunpack.c.l.b16 %v469
    %v497 = vunpack.c.l.b16 %v470
    %v498 = vpack.c.b16 %v497, %v496
    %v516 = vunpack.c.l.b16 %v471
    %v517 = vunpack.c.l.b16 %v472
    %v518 = vunpack.c.l.b16 %v473
    %v519 = vunpack.c.l.b16 %v474
    %v520 = vunpack.c.l.b16 %v475
    %v521 = vunpack.c.l.b16 %v476
    %v522 = vunpack.c.l.b16 %v477
    %v523 = vunpack.c.l.b16 %v478
    %v524 = vunpack.c.l.b16 %v479
    %v525 = vunpack.c.l.b16 %v480
    %v526 = vunpack.c.l.b16 %v481
    %v527 = vunpack.c.l.b16 %v482
    %v528 = vunpack.c.l.b16 %v483
    %v529 = vunpack.c.l.b16 %v484
    %v530 = vunpack.c.l.b16 %v485
    %v531 = vunpack.c.l.b16 %v486
    %v532 = vpack.c.b16 %v517, %v516
    %v533 = vpack.c.b16 %v519, %v518
    %v534 = vpack.c.b16 %v521, %v520
    %v535 = vpack.c.b16 %v523, %v522
    %v536 = vpack.c.b16 %v525, %v524
    %v537 = vpack.c.b16 %v527, %v526
    %v538 = vpack.c.b16 %v529, %v528
    %v539 = vpack.c.b16 %v531, %v530
    %548 = vmatprep.subr.bf16.mxu0 0
    %549 = vmatpush1.bf16.msra.mxu0 %v532
    %550 = vmatprep.subr.bf16.mxu0 0
    %551 = vmatpush1.bf16.msra.mxu0 %v533
    %552 = vmatprep.subr.bf16.mxu0 0
    %553 = vmatpush1.bf16.msra.mxu0 %v534
    %554 = vmatprep.subr.bf16.mxu0 0
    %555 = vmatpush1.bf16.msra.mxu0 %v535
    %556 = vmatprep.subr.bf16.mxu0 0
    %557 = vmatpush1.bf16.msra.mxu0 %v536
    %558 = vmatprep.subr.bf16.mxu0 0
    %559 = vmatpush1.bf16.msra.mxu0 %v537
    %560 = vmatprep.subr.bf16.mxu0 0
    %561 = vmatpush1.bf16.msra.mxu0 %v538
    %562 = vmatprep.subr.bf16.mxu0 0
    %563 = vmatpush1.bf16.msra.mxu0 %v539
    %564 = vmatprep.subr.bf16.mxu0 0
    %565 = vmatpush1.bf16.msra.mxu0 0
    %566 = vmatprep.subr.bf16.mxu0 0
    %567 = vmatpush1.bf16.msra.mxu0 0
    %568 = vmatprep.subr.bf16.mxu0 0
    %569 = vmatpush1.bf16.msra.mxu0 0
    %570 = vmatprep.subr.bf16.mxu0 0
    %571 = vmatpush1.bf16.msra.mxu0 0
    %572 = vmatprep.subr.bf16.mxu0 0
    %573 = vmatpush1.bf16.msra.mxu0 0
    %574 = vmatprep.subr.bf16.mxu0 0
    %575 = vmatpush1.bf16.msra.mxu0 0
    %576 = vmatprep.subr.bf16.mxu0 0
    %577 = vmatpush1.bf16.msra.mxu0 0
    %578 = vmatprep.subr.bf16.mxu0 0
    %579 = vmatpush1.bf16.msra.mxu0 0
    %580 = vmatprep.mubr.bf16.mxu0 0
    %581 = vmatmul.mubr.bf16.gmra.mrb[0].mxu0 %v498
    %v582 = vpop.f32.mrb[0].mxu0
    %v583 = vadd.f32 %v492, %v582
    %v584 = vpop.f32.mrb[0].mxu0
    %v585 = vpop.f32.mrb[0].mxu0
    %v586 = vadd.f32 %v492, %v585
    %v587 = vpop.f32.mrb[0].mxu0
    %588 = vdwg.mxu0
    %v589 = vld [vmem:[%s6] sm:$0xff]
    %v590 = vld [vmem:[%s6 + $0x8] sm:$0xff]
    %v591 = vld [vmem:[%s7] sm:$0x1]
    %v592 = vld [vmem:[#allocation10] sm:$0x1]
    %v593 = vlaneseq
    %v594 = vand.u32 %v593, 127
    %595 = vset.pattern.permute.xlu0 0
    %596 = vperm.xlu0 %595, %v589
    %v597 = vpop.permute.xlu0 %596
    %598 = vset.pattern.permute.xlu0 0
    %599 = vperm.xlu0 %598, %v590
    %v600 = vpop.permute.xlu0 %599
    %vm601 = vcmp.eq.s32.totalorder %v594, %v597
    %vm602 = vcmp.eq.s32.totalorder %v594, %v600
    %v603 = vsel %vm601, 1, 0
    %v604 = vsel %vm602, 1, 0
    %v605 = vcvt.s32.f32 %v603
    %v606 = vcvt.s32.f32 %v604
    %v607 = vpack.c.bf16 %v606, %v605
    %v608 = vlaneseq
    %v609 = vshrl.u32 %v608, 7
    %v610 = vlaneseq
    %v611 = vshrl.u32 %v610, 7
    %v612 = vsub.s32 0, %v611
    %v613 = vrot.slane %v591, %v612
    %vm614 = vcmp.eq.s32.totalorder %v609, %v613
    %v615 = vsel %vm614, 1, 0
    %v616 = vcvt.s32.f32 %v615
    %v617 = vpack.c.bf16 %v616, %v616
    %v618 = vlaneseq
    %v619 = vshrl.u32 %v618, 7
    %v620 = vsub.s32 0, %v619
    %v621 = vrot.slane %v592, %v620
    %vm622 = vcmp.eq.s32.totalorder %v609, %v621
    %v623 = vsel %vm622, 1, 0
    %v624 = vcvt.s32.f32 %v623
    %v625 = vpack.c.bf16 %v624, %v624
    %vm626 = vcmask 58368
    %v627 = vsel %vm626, %v624, 0.0
    %628 = vadd.xlane.f32.xlu0 %v627
    %v629 = vpop.xlane.xlu0 %628
    %v630 = vld [vmem:[#allocation11] sm:$0xf]
    %v631 = vld [vmem:[#allocation11 + $0x4] sm:$0xf]
    %v632 = vld [vmem:[#allocation11 + $0x8] sm:$0xf]
    %v633 = vld [vmem:[#allocation11 + $0xc] sm:$0xf]
    %v634 = vld [vmem:[#allocation11 + $0x10] sm:$0xf]
    %v635 = vld [vmem:[#allocation11 + $0x14] sm:$0xf]
    %v636 = vld [vmem:[#allocation11 + $0x18] sm:$0xf]
    %v637 = vld [vmem:[#allocation11 + $0x1c] sm:$0xf]
    %v638 = vld [vmem:[#allocation11 + $0x20] sm:$0xf]
    %v639 = vld [vmem:[#allocation11 + $0x24] sm:$0xf]
    %v640 = vld [vmem:[#allocation11 + $0x28] sm:$0xf]
    %v641 = vld [vmem:[#allocation11 + $0x2c] sm:$0xf]
    %v642 = vld [vmem:[#allocation11 + $0x30] sm:$0xf]
    %v643 = vld [vmem:[#allocation11 + $0x34] sm:$0xf]
    %v644 = vld [vmem:[#allocation11 + $0x38] sm:$0xf]
    %v645 = vld [vmem:[#allocation11 + $0x3c] sm:$0xf]
    %v646 = vld [vmem:[#allocation13] sm:$0x1]
    %v647 = vld [vmem:[#allocation14] sm:$0xf]
    %v648 = vld [vmem:[#allocation14 + $0x4] sm:$0xf]
    %v649 = vld [vmem:[#allocation14 + $0x8] sm:$0xf]
    %v650 = vld [vmem:[#allocation14 + $0xc] sm:$0xf]
    %v651 = vld [vmem:[#allocation14 + $0x10] sm:$0xf]
    %v652 = vld [vmem:[#allocation14 + $0x14] sm:$0xf]
    %v653 = vld [vmem:[#allocation14 + $0x18] sm:$0xf]
    %v654 = vld [vmem:[#allocation14 + $0x1c] sm:$0xf]
    %v655 = vld [vmem:[#allocation14 + $0x20] sm:$0xf]
    %v656 = vld [vmem:[#allocation14 + $0x24] sm:$0xf]
    %v657 = vld [vmem:[#allocation14 + $0x28] sm:$0xf]
    %v658 = vld [vmem:[#allocation14 + $0x2c] sm:$0xf]
    %v659 = vld [vmem:[#allocation14 + $0x30] sm:$0xf]
    %v660 = vld [vmem:[#allocation14 + $0x34] sm:$0xf]
    %v661 = vld [vmem:[#allocation14 + $0x38] sm:$0xf]
    %v662 = vld [vmem:[#allocation14 + $0x3c] sm:$0xf]
    %v663 = vld [vmem:[#allocation16] sm:$0x1]
    %v664 = vpack.c.bf16 %v464, %v464
    %vm665 = vcmask 64512
    %v667 = vsel %vm665, %v607, 0
    %vm669 = vcmask 1043456
    %v671 = vsel %vm669, %v664, 0
    %673 = vmatprep.subr.bf16.mxu0 0
    %674 = vmatpush1.bf16.msra.mxu0 %v671
    %675 = vmatprep.subr.bf16.mxu0 0
    %676 = vmatpush1.bf16.msra.mxu0 0
    %677 = vmatprep.subr.bf16.mxu0 0
    %678 = vmatpush1.bf16.msra.mxu0 0
    %679 = vmatprep.subr.bf16.mxu0 0
    %680 = vmatpush1.bf16.msra.mxu0 0
    %681 = vmatprep.subr.bf16.mxu0 0
    %682 = vmatpush1.bf16.msra.mxu0 0
    %683 = vmatprep.subr.bf16.mxu0 0
    %684 = vmatpush1.bf16.msra.mxu0 0
    %685 = vmatprep.subr.bf16.mxu0 0
    %686 = vmatpush1.bf16.msra.mxu0 0
    %687 = vmatprep.subr.bf16.mxu0 0
    %688 = vmatpush1.bf16.msra.mxu0 0
    %689 = vmatprep.subr.bf16.mxu0 0
    %690 = vmatpush1.bf16.msra.mxu0 0
    %691 = vmatprep.subr.bf16.mxu0 0
    %692 = vmatpush1.bf16.msra.mxu0 0
    %693 = vmatprep.subr.bf16.mxu0 0
    %694 = vmatpush1.bf16.msra.mxu0 0
    %695 = vmatprep.subr.bf16.mxu0 0
    %696 = vmatpush1.bf16.msra.mxu0 0
    %697 = vmatprep.subr.bf16.mxu0 0
    %698 = vmatpush1.bf16.msra.mxu0 0
    %699 = vmatprep.subr.bf16.mxu0 0
    %700 = vmatpush1.bf16.msra.mxu0 0
    %701 = vmatprep.subr.bf16.mxu0 0
    %702 = vmatpush1.bf16.msra.mxu0 0
    %703 = vmatprep.subr.bf16.mxu0 0
    %704 = vmatpush1.bf16.msra.mxu0 0
    %705 = vmatprep.mubr.bf16.mxu0 0
    %706 = vmatmul.mubr.bf16.gmra.mrb[0].mxu0 %v667
    %v707 = vpop.f32.mrb[0].mxu0
    %v708 = vadd.f32 %v583, %v707
    %v709 = vpop.f32.mrb[0].mxu0
    %v710 = vpop.f32.mrb[0].mxu0
    %v711 = vadd.f32 %v586, %v710
    %v712 = vpop.f32.mrb[0].mxu0
    %713 = vdwg.mxu0
    %v714 = vmax.f32 %v708, 0.0
    %v715 = vmax.f32 %v711, 0.0
    %v716 = vpack.c.bf16 %v715, %v714
    %vm717 = vcmask 130048
    %v719 = vsel %vm717, %v617, 0
    %721 = vmatprep.subr.bf16.mxu0 0
    %722 = vmatpush1.bf16.msra.mxu0 %v716
    %723 = vmatprep.subr.bf16.mxu0 0
    %724 = vmatpush1.bf16.msra.mxu0 0
    %725 = vmatprep.subr.bf16.mxu0 0
    %726 = vmatpush1.bf16.msra.mxu0 0
    %727 = vmatprep.subr.bf16.mxu0 0
    %728 = vmatpush1.bf16.msra.mxu0 0
    %729 = vmatprep.subr.bf16.mxu0 0
    %730 = vmatpush1.bf16.msra.mxu0 0
    %731 = vmatprep.subr.bf16.mxu0 0
    %732 = vmatpush1.bf16.msra.mxu0 0
    %733 = vmatprep.subr.bf16.mxu0 0
    %734 = vmatpush1.bf16.msra.mxu0 0
    %735 = vmatprep.subr.bf16.mxu0 0
    %736 = vmatpush1.bf16.msra.mxu0 0
    %737 = vmatprep.subr.bf16.mxu0 0
    %738 = vmatpush1.bf16.msra.mxu0 0
    %739 = vmatprep.subr.bf16.mxu0 0
    %740 = vmatpush1.bf16.msra.mxu0 0
    %741 = vmatprep.subr.bf16.mxu0 0
    %742 = vmatpush1.bf16.msra.mxu0 0
    %743 = vmatprep.subr.bf16.mxu0 0
    %744 = vmatpush1.bf16.msra.mxu0 0
    %745 = vmatprep.subr.bf16.mxu0 0
    %746 = vmatpush1.bf16.msra.mxu0 0
    %747 = vmatprep.subr.bf16.mxu0 0
    %748 = vmatpush1.bf16.msra.mxu0 0
    %749 = vmatprep.subr.bf16.mxu0 0
    %750 = vmatpush1.bf16.msra.mxu0 0
    %751 = vmatprep.subr.bf16.mxu0 0
    %752 = vmatpush1.bf16.msra.mxu0 0
    %753 = vmatprep.mubr.bf16.mxu0 0
    %754 = vmatmul.mubr.bf16.gmra.mrb[0].mxu0 %v719
    %v755 = vpop.f32.mrb[0].mxu0
    %v756 = vadd.f32 %v464, %v755
    %v757 = vpop.f32.mrb[0].mxu0
    %v758 = vpop.f32.mrb[0].mxu0
    %v759 = vpop.f32.mrb[0].mxu0
    %760 = vdwg.mxu0
    %v761 = vpack.c.bf16 %v756, %v756
    %v763 = vlaneseq
    %v764 = vshrl.u32 %v763, 7
    %v765 = vsub.s32 0, %v764
    %v766 = vrot.slane %v646, %v765
    %v784 = vunpack.c.l.b16 %v630
    %v785 = vunpack.c.l.b16 %v631
    %v786 = vunpack.c.l.b16 %v632
    %v787 = vunpack.c.l.b16 %v633
    %v788 = vunpack.c.l.b16 %v634
    %v789 = vunpack.c.l.b16 %v635
    %v790 = vunpack.c.l.b16 %v636
    %v791 = vunpack.c.l.b16 %v637
    %v792 = vunpack.c.l.b16 %v638
    %v793 = vunpack.c.l.b16 %v639
    %v794 = vunpack.c.l.b16 %v640
    %v795 = vunpack.c.l.b16 %v641
    %v796 = vunpack.c.l.b16 %v642
    %v797 = vunpack.c.l.b16 %v643
    %v798 = vunpack.c.l.b16 %v644
    %v799 = vunpack.c.l.b16 %v645
    %v800 = vpack.c.b16 %v785, %v784
    %v801 = vpack.c.b16 %v787, %v786
    %v802 = vpack.c.b16 %v789, %v788
    %v803 = vpack.c.b16 %v791, %v790
    %v804 = vpack.c.b16 %v793, %v792
    %v805 = vpack.c.b16 %v795, %v794
    %v806 = vpack.c.b16 %v797, %v796
    %v807 = vpack.c.b16 %v799, %v798
    %816 = vmatprep.subr.bf16.mxu0 0
    %817 = vmatpush1.bf16.msra.mxu0 %v800
    %818 = vmatprep.subr.bf16.mxu0 0
    %819 = vmatpush1.bf16.msra.mxu0 %v801
    %820 = vmatprep.subr.bf16.mxu0 0
    %821 = vmatpush1.bf16.msra.mxu0 %v802
    %822 = vmatprep.subr.bf16.mxu0 0
    %823 = vmatpush1.bf16.msra.mxu0 %v803
    %824 = vmatprep.subr.bf16.mxu0 0
    %825 = vmatpush1.bf16.msra.mxu0 %v804
    %826 = vmatprep.subr.bf16.mxu0 0
    %827 = vmatpush1.bf16.msra.mxu0 %v805
    %828 = vmatprep.subr.bf16.mxu0 0
    %829 = vmatpush1.bf16.msra.mxu0 %v806
    %830 = vmatprep.subr.bf16.mxu0 0
    %831 = vmatpush1.bf16.msra.mxu0 %v807
    %832 = vmatprep.subr.bf16.mxu0 0
    %833 = vmatpush1.bf16.msra.mxu0 0
    %834 = vmatprep.subr.bf16.mxu0 0
    %835 = vmatpush1.bf16.msra.mxu0 0
    %836 = vmatprep.subr.bf16.mxu0 0
    %837 = vmatpush1.bf16.msra.mxu0 0
    %838 = vmatprep.subr.bf16.mxu0 0
    %839 = vmatpush1.bf16.msra.mxu0 0
    %840 = vmatprep.subr.bf16.mxu0 0
    %841 = vmatpush1.bf16.msra.mxu0 0
    %842 = vmatprep.subr.bf16.mxu0 0
    %843 = vmatpush1.bf16.msra.mxu0 0
    %844 = vmatprep.subr.bf16.mxu0 0
    %845 = vmatpush1.bf16.msra.mxu0 0
    %846 = vmatprep.subr.bf16.mxu0 0
    %847 = vmatpush1.bf16.msra.mxu0 0
    %848 = vmatprep.mubr.bf16.mxu0 0
    %849 = vmatmul.mubr.bf16.gmra.mrb[0].mxu0 %v761
    %v850 = vpop.f32.mrb[0].mxu0
    %v851 = vadd.f32 %v766, %v850
    %v852 = vpop.f32.mrb[0].mxu0
    %v853 = vpop.f32.mrb[0].mxu0
    %v854 = vpop.f32.mrb[0].mxu0
    %855 = vdwg.mxu0
    %v856 = vmax.f32 %v851, 0.0
    %v857 = vpack.c.bf16 %v856, %v856
    %v859 = vlaneseq
    %v860 = vshrl.u32 %v859, 7
    %v861 = vsub.s32 0, %v860
    %v862 = vrot.slane %v663, %v861
    %v880 = vunpack.c.l.b16 %v647
    %v881 = vunpack.c.l.b16 %v648
    %v882 = vunpack.c.l.b16 %v649
    %v883 = vunpack.c.l.b16 %v650
    %v884 = vunpack.c.l.b16 %v651
    %v885 = vunpack.c.l.b16 %v652
    %v886 = vunpack.c.l.b16 %v653
    %v887 = vunpack.c.l.b16 %v654
    %v888 = vunpack.c.l.b16 %v655
    %v889 = vunpack.c.l.b16 %v656
    %v890 = vunpack.c.l.b16 %v657
    %v891 = vunpack.c.l.b16 %v658
    %v892 = vunpack.c.l.b16 %v659
    %v893 = vunpack.c.l.b16 %v660
    %v894 = vunpack.c.l.b16 %v661
    %v895 = vunpack.c.l.b16 %v662
    %v896 = vpack.c.b16 %v881, %v880
    %v897 = vpack.c.b16 %v883, %v882
    %v898 = vpack.c.b16 %v885, %v884
    %v899 = vpack.c.b16 %v887, %v886
    %v900 = vpack.c.b16 %v889, %v888
    %v901 = vpack.c.b16 %v891, %v890
    %v902 = vpack.c.b16 %v893, %v892
    %v903 = vpack.c.b16 %v895, %v894
    %912 = vmatprep.subr.bf16.mxu0 0
    %913 = vmatpush1.bf16.msra.mxu0 %v896
    %914 = vmatprep.subr.bf16.mxu0 0
    %915 = vmatpush1.bf16.msra.mxu0 %v897
    %916 = vmatprep.subr.bf16.mxu0 0
    %917 = vmatpush1.bf16.msra.mxu0 %v898
    %918 = vmatprep.subr.bf16.mxu0 0
    %919 = vmatpush1.bf16.msra.mxu0 %v899
    %920 = vmatprep.subr.bf16.mxu0 0
    %921 = vmatpush1.bf16.msra.mxu0 %v900
    %922 = vmatprep.subr.bf16.mxu0 0
    %923 = vmatpush1.bf16.msra.mxu0 %v901
    %924 = vmatprep.subr.bf16.mxu0 0
    %925 = vmatpush1.bf16.msra.mxu0 %v902
    %926 = vmatprep.subr.bf16.mxu0 0
    %927 = vmatpush1.bf16.msra.mxu0 %v903
    %928 = vmatprep.subr.bf16.mxu0 0
    %929 = vmatpush1.bf16.msra.mxu0 0
    %930 = vmatprep.subr.bf16.mxu0 0
    %931 = vmatpush1.bf16.msra.mxu0 0
    %932 = vmatprep.subr.bf16.mxu0 0
    %933 = vmatpush1.bf16.msra.mxu0 0
    %934 = vmatprep.subr.bf16.mxu0 0
    %935 = vmatpush1.bf16.msra.mxu0 0
    %936 = vmatprep.subr.bf16.mxu0 0
    %937 = vmatpush1.bf16.msra.mxu0 0
    %938 = vmatprep.subr.bf16.mxu0 0
    %939 = vmatpush1.bf16.msra.mxu0 0
    %940 = vmatprep.subr.bf16.mxu0 0
    %941 = vmatpush1.bf16.msra.mxu0 0
    %942 = vmatprep.subr.bf16.mxu0 0
    %943 = vmatpush1.bf16.msra.mxu0 0
    %944 = vmatprep.mubr.bf16.mxu0 0
    %945 = vmatmul.mubr.bf16.gmra.mrb[0].mxu0 %v857
    %v946 = vpop.f32.mrb[0].mxu0
    %v947 = vadd.f32 %v862, %v946
    %v948 = vpop.f32.mrb[0].mxu0
    %v949 = vpop.f32.mrb[0].mxu0
    %v950 = vpop.f32.mrb[0].mxu0
    %951 = vdwg.mxu0
    %v952 = vmax.f32 %v947, 0.0
    %s953 = scalar_lea.vmem [#allocation11], 64
    %v954 = vld [vmem:[%s953] sm:$0xf]
    %v955 = vld [vmem:[%s953 + $0x4] sm:$0xf]
    %v956 = vld [vmem:[%s953 + $0x8] sm:$0xf]
    %v957 = vld [vmem:[%s953 + $0xc] sm:$0xf]
    %v958 = vld [vmem:[%s953 + $0x10] sm:$0xf]
    %v959 = vld [vmem:[%s953 + $0x14] sm:$0xf]
    %v960 = vld [vmem:[%s953 + $0x18] sm:$0xf]
    %v961 = vld [vmem:[%s953 + $0x1c] sm:$0xf]
    %v962 = vld [vmem:[%s953 + $0x20] sm:$0xf]
    %v963 = vld [vmem:[%s953 + $0x24] sm:$0xf]
    %v964 = vld [vmem:[%s953 + $0x28] sm:$0xf]
    %v965 = vld [vmem:[%s953 + $0x2c] sm:$0xf]
    %v966 = vld [vmem:[%s953 + $0x30] sm:$0xf]
    %v967 = vld [vmem:[%s953 + $0x34] sm:$0xf]
    %v968 = vld [vmem:[%s953 + $0x38] sm:$0xf]
    %v969 = vld [vmem:[%s953 + $0x3c] sm:$0xf]
    %s970 = scalar_lea.vmem [#allocation13], 1
    %v971 = vld [vmem:[%s970] sm:$0x1]
    %s972 = scalar_lea.vmem [#allocation14], 64
    %v973 = vld [vmem:[%s972] sm:$0xf]
    %v974 = vld [vmem:[%s972 + $0x4] sm:$0xf]
    %v975 = vld [vmem:[%s972 + $0x8] sm:$0xf]
    %v976 = vld [vmem:[%s972 + $0xc] sm:$0xf]
    %v977 = vld [vmem:[%s972 + $0x10] sm:$0xf]
    %v978 = vld [vmem:[%s972 + $0x14] sm:$0xf]
    %v979 = vld [vmem:[%s972 + $0x18] sm:$0xf]
    %v980 = vld [vmem:[%s972 + $0x1c] sm:$0xf]
    %v981 = vld [vmem:[%s972 + $0x20] sm:$0xf]
    %v982 = vld [vmem:[%s972 + $0x24] sm:$0xf]
    %v983 = vld [vmem:[%s972 + $0x28] sm:$0xf]
    %v984 = vld [vmem:[%s972 + $0x2c] sm:$0xf]
    %v985 = vld [vmem:[%s972 + $0x30] sm:$0xf]
    %v986 = vld [vmem:[%s972 + $0x34] sm:$0xf]
    %v987 = vld [vmem:[%s972 + $0x38] sm:$0xf]
    %v988 = vld [vmem:[%s972 + $0x3c] sm:$0xf]
    %s989 = scalar_lea.vmem [#allocation16], 1
    %v990 = vld [vmem:[%s989] sm:$0x1]
    %v991 = vpack.c.bf16 %v952, %v952
    %v993 = vsel %vm669, %v991, 0
    %995 = vmatprep.subr.bf16.mxu0 0
    %996 = vmatpush1.bf16.msra.mxu0 %v993
    %997 = vmatprep.subr.bf16.mxu0 0
    %998 = vmatpush1.bf16.msra.mxu0 0
    %999 = vmatprep.subr.bf16.mxu0 0
    %1000 = vmatpush1.bf16.msra.mxu0 0
    %1001 = vmatprep.subr.bf16.mxu0 0
    %1002 = vmatpush1.bf16.msra.mxu0 0
    %1003 = vmatprep.subr.bf16.mxu0 0
    %1004 = vmatpush1.bf16.msra.mxu0 0
    %1005 = vmatprep.subr.bf16.mxu0 0
    %1006 = vmatpush1.bf16.msra.mxu0 0
    %1007 = vmatprep.subr.bf16.mxu0 0
    %1008 = vmatpush1.bf16.msra.mxu0 0
    %1009 = vmatprep.subr.bf16.mxu0 0
    %1010 = vmatpush1.bf16.msra.mxu0 0
    %1011 = vmatprep.subr.bf16.mxu0 0
    %1012 = vmatpush1.bf16.msra.mxu0 0
    %1013 = vmatprep.subr.bf16.mxu0 0
    %1014 = vmatpush1.bf16.msra.mxu0 0
    %1015 = vmatprep.subr.bf16.mxu0 0
    %1016 = vmatpush1.bf16.msra.mxu0 0
    %1017 = vmatprep.subr.bf16.mxu0 0
    %1018 = vmatpush1.bf16.msra.mxu0 0
    %1019 = vmatprep.subr.bf16.mxu0 0
    %1020 = vmatpush1.bf16.msra.mxu0 0
    %1021 = vmatprep.subr.bf16.mxu0 0
    %1022 = vmatpush1.bf16.msra.mxu0 0
    %1023 = vmatprep.subr.bf16.mxu0 0
    %1024 = vmatpush1.bf16.msra.mxu0 0
    %1025 = vmatprep.subr.bf16.mxu0 0
    %1026 = vmatpush1.bf16.msra.mxu0 0
    %1027 = vmatprep.mubr.bf16.mxu0 0
    %1028 = vmatmul.mubr.bf16.gmra.mrb[0].mxu0 %v667
    %v1029 = vpop.f32.mrb[0].mxu0
    %v1030 = vadd.f32 %v583, %v1029
    %v1031 = vpop.f32.mrb[0].mxu0
    %v1032 = vpop.f32.mrb[0].mxu0
    %v1033 = vadd.f32 %v586, %v1032
    %v1034 = vpop.f32.mrb[0].mxu0
    %1035 = vdwg.mxu0
    %v1036 = vmax.f32 %v1030, 0.0
    %v1037 = vmax.f32 %v1033, 0.0
    %v1038 = vpack.c.bf16 %v1037, %v1036
    %1039 = vmatprep.subr.bf16.mxu0 0
    %1040 = vmatpush1.bf16.msra.mxu0 %v1038
    %1041 = vmatprep.subr.bf16.mxu0 0
    %1042 = vmatpush1.bf16.msra.mxu0 0
    %1043 = vmatprep.subr.bf16.mxu0 0
    %1044 = vmatpush1.bf16.msra.mxu0 0
    %1045 = vmatprep.subr.bf16.mxu0 0
    %1046 = vmatpush1.bf16.msra.mxu0 0
    %1047 = vmatprep.subr.bf16.mxu0 0
    %1048 = vmatpush1.bf16.msra.mxu0 0
    %1049 = vmatprep.subr.bf16.mxu0 0
    %1050 = vmatpush1.bf16.msra.mxu0 0
    %1051 = vmatprep.subr.bf16.mxu0 0
    %1052 = vmatpush1.bf16.msra.mxu0 0
    %1053 = vmatprep.subr.bf16.mxu0 0
    %1054 = vmatpush1.bf16.msra.mxu0 0
    %1055 = vmatprep.subr.bf16.mxu0 0
    %1056 = vmatpush1.bf16.msra.mxu0 0
    %1057 = vmatprep.subr.bf16.mxu0 0
    %1058 = vmatpush1.bf16.msra.mxu0 0
    %1059 = vmatprep.subr.bf16.mxu0 0
    %1060 = vmatpush1.bf16.msra.mxu0 0
    %1061 = vmatprep.subr.bf16.mxu0 0
    %1062 = vmatpush1.bf16.msra.mxu0 0
    %1063 = vmatprep.subr.bf16.mxu0 0
    %1064 = vmatpush1.bf16.msra.mxu0 0
    %1065 = vmatprep.subr.bf16.mxu0 0
    %1066 = vmatpush1.bf16.msra.mxu0 0
    %1067 = vmatprep.subr.bf16.mxu0 0
    %1068 = vmatpush1.bf16.msra.mxu0 0
    %1069 = vmatprep.subr.bf16.mxu0 0
    %1070 = vmatpush1.bf16.msra.mxu0 0
    %1071 = vmatprep.mubr.bf16.mxu0 0
    %1072 = vmatmul.mubr.bf16.gmra.mrb[0].mxu0 %v719
    %v1073 = vpop.f32.mrb[0].mxu0
    %v1074 = vadd.f32 %v952, %v1073
    %v1075 = vpop.f32.mrb[0].mxu0
    %v1076 = vpop.f32.mrb[0].mxu0
    %v1077 = vpop.f32.mrb[0].mxu0
    %1078 = vdwg.mxu0
    %v1079 = vpack.c.bf16 %v1074, %v1074
    %v1081 = vlaneseq
    %v1082 = vshrl.u32 %v1081, 7
    %v1083 = vsub.s32 0, %v1082
    %v1084 = vrot.slane %v971, %v1083
    %v1102 = vunpack.c.l.b16 %v954
    %v1103 = vunpack.c.l.b16 %v955
    %v1104 = vunpack.c.l.b16 %v956
    %v1105 = vunpack.c.l.b16 %v957
    %v1106 = vunpack.c.l.b16 %v958
    %v1107 = vunpack.c.l.b16 %v959
    %v1108 = vunpack.c.l.b16 %v960
    %v1109 = vunpack.c.l.b16 %v961
    %v1110 = vunpack.c.l.b16 %v962
    %v1111 = vunpack.c.l.b16 %v963
    %v1112 = vunpack.c.l.b16 %v964
    %v1113 = vunpack.c.l.b16 %v965
    %v1114 = vunpack.c.l.b16 %v966
    %v1115 = vunpack.c.l.b16 %v967
    %v1116 = vunpack.c.l.b16 %v968
    %v1117 = vunpack.c.l.b16 %v969
    %v1118 = vpack.c.b16 %v1103, %v1102
    %v1119 = vpack.c.b16 %v1105, %v1104
    %v1120 = vpack.c.b16 %v1107, %v1106
    %v1121 = vpack.c.b16 %v1109, %v1108
    %v1122 = vpack.c.b16 %v1111, %v1110
    %v1123 = vpack.c.b16 %v1113, %v1112
    %v1124 = vpack.c.b16 %v1115, %v1114
    %v1125 = vpack.c.b16 %v1117, %v1116
    %1134 = vmatprep.subr.bf16.mxu0 0
    %1135 = vmatpush1.bf16.msra.mxu0 %v1118
    %1136 = vmatprep.subr.bf16.mxu0 0
    %1137 = vmatpush1.bf16.msra.mxu0 %v1119
    %1138 = vmatprep.subr.bf16.mxu0 0
    %1139 = vmatpush1.bf16.msra.mxu0 %v1120
    %1140 = vmatprep.subr.bf16.mxu0 0
    %1141 = vmatpush1.bf16.msra.mxu0 %v1121
    %1142 = vmatprep.subr.bf16.mxu0 0
    %1143 = vmatpush1.bf16.msra.mxu0 %v1122
    %1144 = vmatprep.subr.bf16.mxu0 0
    %1145 = vmatpush1.bf16.msra.mxu0 %v1123
    %1146 = vmatprep.subr.bf16.mxu0 0
    %1147 = vmatpush1.bf16.msra.mxu0 %v1124
    %1148 = vmatprep.subr.bf16.mxu0 0
    %1149 = vmatpush1.bf16.msra.mxu0 %v1125
    %1150 = vmatprep.subr.bf16.mxu0 0
    %1151 = vmatpush1.bf16.msra.mxu0 0
    %1152 = vmatprep.subr.bf16.mxu0 0
    %1153 = vmatpush1.bf16.msra.mxu0 0
    %1154 = vmatprep.subr.bf16.mxu0 0
    %1155 = vmatpush1.bf16.msra.mxu0 0
    %1156 = vmatprep.subr.bf16.mxu0 0
    %1157 = vmatpush1.bf16.msra.mxu0 0
    %1158 = vmatprep.subr.bf16.mxu0 0
    %1159 = vmatpush1.bf16.msra.mxu0 0
    %1160 = vmatprep.subr.bf16.mxu0 0
    %1161 = vmatpush1.bf16.msra.mxu0 0
    %1162 = vmatprep.subr.bf16.mxu0 0
    %1163 = vmatpush1.bf16.msra.mxu0 0
    %1164 = vmatprep.subr.bf16.mxu0 0
    %1165 = vmatpush1.bf16.msra.mxu0 0
    %1166 = vmatprep.mubr.bf16.mxu0 0
    %1167 = vmatmul.mubr.bf16.gmra.mrb[0].mxu0 %v1079
    %v1168 = vpop.f32.mrb[0].mxu0
    %v1169 = vadd.f32 %v1084, %v1168
    %v1170 = vpop.f32.mrb[0].mxu0
    %v1171 = vpop.f32.mrb[0].mxu0
    %v1172 = vpop.f32.mrb[0].mxu0
    %1173 = vdwg.mxu0
    %v1174 = vmax.f32 %v1169, 0.0
    %v1175 = vpack.c.bf16 %v1174, %v1174
    %v1177 = vlaneseq
    %v1178 = vshrl.u32 %v1177, 7
    %v1179 = vsub.s32 0, %v1178
    %v1180 = vrot.slane %v990, %v1179
    %v1198 = vunpack.c.l.b16 %v973
    %v1199 = vunpack.c.l.b16 %v974
    %v1200 = vunpack.c.l.b16 %v975
    %v1201 = vunpack.c.l.b16 %v976
    %v1202 = vunpack.c.l.b16 %v977
    %v1203 = vunpack.c.l.b16 %v978
    %v1204 = vunpack.c.l.b16 %v979
    %v1205 = vunpack.c.l.b16 %v980
    %v1206 = vunpack.c.l.b16 %v981
    %v1207 = vunpack.c.l.b16 %v982
    %v1208 = vunpack.c.l.b16 %v983
    %v1209 = vunpack.c.l.b16 %v984
    %v1210 = vunpack.c.l.b16 %v985
    %v1211 = vunpack.c.l.b16 %v986
    %v1212 = vunpack.c.l.b16 %v987
    %v1213 = vunpack.c.l.b16 %v988
    %v1214 = vpack.c.b16 %v1199, %v1198
    %v1215 = vpack.c.b16 %v1201, %v1200
    %v1216 = vpack.c.b16 %v1203, %v1202
    %v1217 = vpack.c.b16 %v1205, %v1204
    %v1218 = vpack.c.b16 %v1207, %v1206
    %v1219 = vpack.c.b16 %v1209, %v1208
    %v1220 = vpack.c.b16 %v1211, %v1210
    %v1221 = vpack.c.b16 %v1213, %v1212
    %1230 = vmatprep.subr.bf16.mxu0 0
    %1231 = vmatpush1.bf16.msra.mxu0 %v1214
    %1232 = vmatprep.subr.bf16.mxu0 0
    %1233 = vmatpush1.bf16.msra.mxu0 %v1215
    %1234 = vmatprep.subr.bf16.mxu0 0
    %1235 = vmatpush1.bf16.msra.mxu0 %v1216
    %1236 = vmatprep.subr.bf16.mxu0 0
    %1237 = vmatpush1.bf16.msra.mxu0 %v1217
    %1238 = vmatprep.subr.bf16.mxu0 0
    %1239 = vmatpush1.bf16.msra.mxu0 %v1218
    %1240 = vmatprep.subr.bf16.mxu0 0
    %1241 = vmatpush1.bf16.msra.mxu0 %v1219
    %1242 = vmatprep.subr.bf16.mxu0 0
    %1243 = vmatpush1.bf16.msra.mxu0 %v1220
    %1244 = vmatprep.subr.bf16.mxu0 0
    %1245 = vmatpush1.bf16.msra.mxu0 %v1221
    %1246 = vmatprep.subr.bf16.mxu0 0
    %1247 = vmatpush1.bf16.msra.mxu0 0
    %1248 = vmatprep.subr.bf16.mxu0 0
    %1249 = vmatpush1.bf16.msra.mxu0 0
    %1250 = vmatprep.subr.bf16.mxu0 0
    %1251 = vmatpush1.bf16.msra.mxu0 0
    %1252 = vmatprep.subr.bf16.mxu0 0
    %1253 = vmatpush1.bf16.msra.mxu0 0
    %1254 = vmatprep.subr.bf16.mxu0 0
    %1255 = vmatpush1.bf16.msra.mxu0 0
    %1256 = vmatprep.subr.bf16.mxu0 0
    %1257 = vmatpush1.bf16.msra.mxu0 0
    %1258 = vmatprep.subr.bf16.mxu0 0
    %1259 = vmatpush1.bf16.msra.mxu0 0
    %1260 = vmatprep.subr.bf16.mxu0 0
    %1261 = vmatpush1.bf16.msra.mxu0 0
    %1262 = vmatprep.mubr.bf16.mxu0 0
    %1263 = vmatmul.mubr.bf16.gmra.mrb[0].mxu0 %v1175
    %v1264 = vpop.f32.mrb[0].mxu0
    %v1265 = vadd.f32 %v1180, %v1264
    %v1266 = vpop.f32.mrb[0].mxu0
    %v1267 = vpop.f32.mrb[0].mxu0
    %v1268 = vpop.f32.mrb[0].mxu0
    %1269 = vdwg.mxu0
    %v1270 = vmax.f32 %v1265, 0.0
    %s1271 = scalar_lea.vmem [#allocation11], 128
    %v1272 = vld [vmem:[%s1271] sm:$0xf]
    %v1273 = vld [vmem:[%s1271 + $0x4] sm:$0xf]
    %v1274 = vld [vmem:[%s1271 + $0x8] sm:$0xf]
    %v1275 = vld [vmem:[%s1271 + $0xc] sm:$0xf]
    %v1276 = vld [vmem:[%s1271 + $0x10] sm:$0xf]
    %v1277 = vld [vmem:[%s1271 + $0x14] sm:$0xf]
    %v1278 = vld [vmem:[%s1271 + $0x18] sm:$0xf]
    %v1279 = vld [vmem:[%s1271 + $0x1c] sm:$0xf]
    %v1280 = vld [vmem:[%s1271 + $0x20] sm:$0xf]
    %v1281 = vld [vmem:[%s1271 + $0x24] sm:$0xf]
    %v1282 = vld [vmem:[%s1271 + $0x28] sm:$0xf]
    %v1283 = vld [vmem:[%s1271 + $0x2c] sm:$0xf]
    %v1284 = vld [vmem:[%s1271 + $0x30] sm:$0xf]
    %v1285 = vld [vmem:[%s1271 + $0x34] sm:$0xf]
    %v1286 = vld [vmem:[%s1271 + $0x38] sm:$0xf]
    %v1287 = vld [vmem:[%s1271 + $0x3c] sm:$0xf]
    %s1288 = scalar_lea.vmem [#allocation13], 2
    %v1289 = vld [vmem:[%s1288] sm:$0x1]
    %s1290 = scalar_lea.vmem [#allocation14], 128
    %v1291 = vld [vmem:[%s1290] sm:$0xf]
    %v1292 = vld [vmem:[%s1290 + $0x4] sm:$0xf]
    %v1293 = vld [vmem:[%s1290 + $0x8] sm:$0xf]
    %v1294 = vld [vmem:[%s1290 + $0xc] sm:$0xf]
    %v1295 = vld [vmem:[%s1290 + $0x10] sm:$0xf]
    %v1296 = vld [vmem:[%s1290 + $0x14] sm:$0xf]
    %v1297 = vld [vmem:[%s1290 + $0x18] sm:$0xf]
    %v1298 = vld [vmem:[%s1290 + $0x1c] sm:$0xf]
    %v1299 = vld [vmem:[%s1290 + $0x20] sm:$0xf]
    %v1300 = vld [vmem:[%s1290 + $0x24] sm:$0xf]
    %v1301 = vld [vmem:[%s1290 + $0x28] sm:$0xf]
    %v1302 = vld [vmem:[%s1290 + $0x2c] sm:$0xf]
    %v1303 = vld [vmem:[%s1290 + $0x30] sm:$0xf]
    %v1304 = vld [vmem:[%s1290 + $0x34] sm:$0xf]
    %v1305 = vld [vmem:[%s1290 + $0x38] sm:$0xf]
    %v1306 = vld [vmem:[%s1290 + $0x3c] sm:$0xf]
    %s1307 = scalar_lea.vmem [#allocation16], 2
    %v1308 = vld [vmem:[%s1307] sm:$0x1]
    %v1309 = vpack.c.bf16 %v1270, %v1270
    %v1311 = vsel %vm669, %v1309, 0
    %1313 = vmatprep.subr.bf16.mxu0 0
    %1314 = vmatpush1.bf16.msra.mxu0 %v1311
    %1315 = vmatprep.subr.bf16.mxu0 0
    %1316 = vmatpush1.bf16.msra.mxu0 0
    %1317 = vmatprep.subr.bf16.mxu0 0
    %1318 = vmatpush1.bf16.msra.mxu0 0
    %1319 = vmatprep.subr.bf16.mxu0 0
    %1320 = vmatpush1.bf16.msra.mxu0 0
    %1321 = vmatprep.subr.bf16.mxu0 0
    %1322 = vmatpush1.bf16.msra.mxu0 0
    %1323 = vmatprep.subr.bf16.mxu0 0
    %1324 = vmatpush1.bf16.msra.mxu0 0
    %1325 = vmatprep.subr.bf16.mxu0 0
    %1326 = vmatpush1.bf16.msra.mxu0 0
    %1327 = vmatprep.subr.bf16.mxu0 0
    %1328 = vmatpush1.bf16.msra.mxu0 0
    %1329 = vmatprep.subr.bf16.mxu0 0
    %1330 = vmatpush1.bf16.msra.mxu0 0
    %1331 = vmatprep.subr.bf16.mxu0 0
    %1332 = vmatpush1.bf16.msra.mxu0 0
    %1333 = vmatprep.subr.bf16.mxu0 0
    %1334 = vmatpush1.bf16.msra.mxu0 0
    %1335 = vmatprep.subr.bf16.mxu0 0
    %1336 = vmatpush1.bf16.msra.mxu0 0
    %1337 = vmatprep.subr.bf16.mxu0 0
    %1338 = vmatpush1.bf16.msra.mxu0 0
    %1339 = vmatprep.subr.bf16.mxu0 0
    %1340 = vmatpush1.bf16.msra.mxu0 0
    %1341 = vmatprep.subr.bf16.mxu0 0
    %1342 = vmatpush1.bf16.msra.mxu0 0
    %1343 = vmatprep.subr.bf16.mxu0 0
    %1344 = vmatpush1.bf16.msra.mxu0 0
    %1345 = vmatprep.mubr.bf16.mxu0 0
    %1346 = vmatmul.mubr.bf16.gmra.mrb[0].mxu0 %v667
    %v1347 = vpop.f32.mrb[0].mxu0
    %v1348 = vadd.f32 %v583, %v1347
    %v1349 = vpop.f32.mrb[0].mxu0
    %v1350 = vpop.f32.mrb[0].mxu0
    %v1351 = vadd.f32 %v586, %v1350
    %v1352 = vpop.f32.mrb[0].mxu0
    %1353 = vdwg.mxu0
    %v1354 = vmax.f32 %v1348, 0.0
    %v1355 = vmax.f32 %v1351, 0.0
    %v1356 = vpack.c.bf16 %v1355, %v1354
    %1357 = vmatprep.subr.bf16.mxu0 0
    %1358 = vmatpush1.bf16.msra.mxu0 %v1356
    %1359 = vmatprep.subr.bf16.mxu0 0
    %1360 = vmatpush1.bf16.msra.mxu0 0
    %1361 = vmatprep.subr.bf16.mxu0 0
    %1362 = vmatpush1.bf16.msra.mxu0 0
    %1363 = vmatprep.subr.bf16.mxu0 0
    %1364 = vmatpush1.bf16.msra.mxu0 0
    %1365 = vmatprep.subr.bf16.mxu0 0
    %1366 = vmatpush1.bf16.msra.mxu0 0
    %1367 = vmatprep.subr.bf16.mxu0 0
    %1368 = vmatpush1.bf16.msra.mxu0 0
    %1369 = vmatprep.subr.bf16.mxu0 0
    %1370 = vmatpush1.bf16.msra.mxu0 0
    %1371 = vmatprep.subr.bf16.mxu0 0
    %1372 = vmatpush1.bf16.msra.mxu0 0
    %1373 = vmatprep.subr.bf16.mxu0 0
    %1374 = vmatpush1.bf16.msra.mxu0 0
    %1375 = vmatprep.subr.bf16.mxu0 0
    %1376 = vmatpush1.bf16.msra.mxu0 0
    %1377 = vmatprep.subr.bf16.mxu0 0
    %1378 = vmatpush1.bf16.msra.mxu0 0
    %1379 = vmatprep.subr.bf16.mxu0 0
    %1380 = vmatpush1.bf16.msra.mxu0 0
    %1381 = vmatprep.subr.bf16.mxu0 0
    %1382 = vmatpush1.bf16.msra.mxu0 0
    %1383 = vmatprep.subr.bf16.mxu0 0
    %1384 = vmatpush1.bf16.msra.mxu0 0
    %1385 = vmatprep.subr.bf16.mxu0 0
    %1386 = vmatpush1.bf16.msra.mxu0 0
    %1387 = vmatprep.subr.bf16.mxu0 0
    %1388 = vmatpush1.bf16.msra.mxu0 0
    %1389 = vmatprep.mubr.bf16.mxu0 0
    %1390 = vmatmul.mubr.bf16.gmra.mrb[0].mxu0 %v719
    %v1391 = vpop.f32.mrb[0].mxu0
    %v1392 = vadd.f32 %v1270, %v1391
    %v1393 = vpop.f32.mrb[0].mxu0
    %v1394 = vpop.f32.mrb[0].mxu0
    %v1395 = vpop.f32.mrb[0].mxu0
    %1396 = vdwg.mxu0
    %v1397 = vpack.c.bf16 %v1392, %v1392
    %v1399 = vlaneseq
    %v1400 = vshrl.u32 %v1399, 7
    %v1401 = vsub.s32 0, %v1400
    %v1402 = vrot.slane %v1289, %v1401
    %v1420 = vunpack.c.l.b16 %v1272
    %v1421 = vunpack.c.l.b16 %v1273
    %v1422 = vunpack.c.l.b16 %v1274
    %v1423 = vunpack.c.l.b16 %v1275
    %v1424 = vunpack.c.l.b16 %v1276
    %v1425 = vunpack.c.l.b16 %v1277
    %v1426 = vunpack.c.l.b16 %v1278
    %v1427 = vunpack.c.l.b16 %v1279
    %v1428 = vunpack.c.l.b16 %v1280
    %v1429 = vunpack.c.l.b16 %v1281
    %v1430 = vunpack.c.l.b16 %v1282
    %v1431 = vunpack.c.l.b16 %v1283
    %v1432 = vunpack.c.l.b16 %v1284
    %v1433 = vunpack.c.l.b16 %v1285
    %v1434 = vunpack.c.l.b16 %v1286
    %v1435 = vunpack.c.l.b16 %v1287
    %v1436 = vpack.c.b16 %v1421, %v1420
    %v1437 = vpack.c.b16 %v1423, %v1422
    %v1438 = vpack.c.b16 %v1425, %v1424
    %v1439 = vpack.c.b16 %v1427, %v1426
    %v1440 = vpack.c.b16 %v1429, %v1428
    %v1441 = vpack.c.b16 %v1431, %v1430
    %v1442 = vpack.c.b16 %v1433, %v1432
    %v1443 = vpack.c.b16 %v1435, %v1434
    %1452 = vmatprep.subr.bf16.mxu0 0
    %1453 = vmatpush1.bf16.msra.mxu0 %v1436
    %1454 = vmatprep.subr.bf16.mxu0 0
    %1455 = vmatpush1.bf16.msra.mxu0 %v1437
    %1456 = vmatprep.subr.bf16.mxu0 0
    %1457 = vmatpush1.bf16.msra.mxu0 %v1438
    %1458 = vmatprep.subr.bf16.mxu0 0
    %1459 = vmatpush1.bf16.msra.mxu0 %v1439
    %1460 = vmatprep.subr.bf16.mxu0 0
    %1461 = vmatpush1.bf16.msra.mxu0 %v1440
    %1462 = vmatprep.subr.bf16.mxu0 0
    %1463 = vmatpush1.bf16.msra.mxu0 %v1441
    %1464 = vmatprep.subr.bf16.mxu0 0
    %1465 = vmatpush1.bf16.msra.mxu0 %v1442
    %1466 = vmatprep.subr.bf16.mxu0 0
    %1467 = vmatpush1.bf16.msra.mxu0 %v1443
    %1468 = vmatprep.subr.bf16.mxu0 0
    %1469 = vmatpush1.bf16.msra.mxu0 0
    %1470 = vmatprep.subr.bf16.mxu0 0
    %1471 = vmatpush1.bf16.msra.mxu0 0
    %1472 = vmatprep.subr.bf16.mxu0 0
    %1473 = vmatpush1.bf16.msra.mxu0 0
    %1474 = vmatprep.subr.bf16.mxu0 0
    %1475 = vmatpush1.bf16.msra.mxu0 0
    %1476 = vmatprep.subr.bf16.mxu0 0
    %1477 = vmatpush1.bf16.msra.mxu0 0
    %1478 = vmatprep.subr.bf16.mxu0 0
    %1479 = vmatpush1.bf16.msra.mxu0 0
    %1480 = vmatprep.subr.bf16.mxu0 0
    %1481 = vmatpush1.bf16.msra.mxu0 0
    %1482 = vmatprep.subr.bf16.mxu0 0
    %1483 = vmatpush1.bf16.msra.mxu0 0
    %1484 = vmatprep.mubr.bf16.mxu0 0
    %1485 = vmatmul.mubr.bf16.gmra.mrb[0].mxu0 %v1397
    %v1486 = vpop.f32.mrb[0].mxu0
    %v1487 = vadd.f32 %v1402, %v1486
    %v1488 = vpop.f32.mrb[0].mxu0
    %v1489 = vpop.f32.mrb[0].mxu0
    %v1490 = vpop.f32.mrb[0].mxu0
    %1491 = vdwg.mxu0
    %v1492 = vmax.f32 %v1487, 0.0
    %v1493 = vpack.c.bf16 %v1492, %v1492
    %v1495 = vlaneseq
    %v1496 = vshrl.u32 %v1495, 7
    %v1497 = vsub.s32 0, %v1496
    %v1498 = vrot.slane %v1308, %v1497
    %v1516 = vunpack.c.l.b16 %v1291
    %v1517 = vunpack.c.l.b16 %v1292
    %v1518 = vunpack.c.l.b16 %v1293
    %v1519 = vunpack.c.l.b16 %v1294
    %v1520 = vunpack.c.l.b16 %v1295
    %v1521 = vunpack.c.l.b16 %v1296
    %v1522 = vunpack.c.l.b16 %v1297
    %v1523 = vunpack.c.l.b16 %v1298
    %v1524 = vunpack.c.l.b16 %v1299
    %v1525 = vunpack.c.l.b16 %v1300
    %v1526 = vunpack.c.l.b16 %v1301
    %v1527 = vunpack.c.l.b16 %v1302
    %v1528 = vunpack.c.l.b16 %v1303
    %v1529 = vunpack.c.l.b16 %v1304
    %v1530 = vunpack.c.l.b16 %v1305
    %v1531 = vunpack.c.l.b16 %v1306
    %v1532 = vpack.c.b16 %v1517, %v1516
    %v1533 = vpack.c.b16 %v1519, %v1518
    %v1534 = vpack.c.b16 %v1521, %v1520
    %v1535 = vpack.c.b16 %v1523, %v1522
    %v1536 = vpack.c.b16 %v1525, %v1524
    %v1537 = vpack.c.b16 %v1527, %v1526
    %v1538 = vpack.c.b16 %v1529, %v1528
    %v1539 = vpack.c.b16 %v1531, %v1530
    %1548 = vmatprep.subr.bf16.mxu0 0
    %1549 = vmatpush1.bf16.msra.mxu0 %v1532
    %1550 = vmatprep.subr.bf16.mxu0 0
    %1551 = vmatpush1.bf16.msra.mxu0 %v1533
    %1552 = vmatprep.subr.bf16.mxu0 0
    %1553 = vmatpush1.bf16.msra.mxu0 %v1534
    %1554 = vmatprep.subr.bf16.mxu0 0
    %1555 = vmatpush1.bf16.msra.mxu0 %v1535
    %1556 = vmatprep.subr.bf16.mxu0 0
    %1557 = vmatpush1.bf16.msra.mxu0 %v1536
    %1558 = vmatprep.subr.bf16.mxu0 0
    %1559 = vmatpush1.bf16.msra.mxu0 %v1537
    %1560 = vmatprep.subr.bf16.mxu0 0
    %1561 = vmatpush1.bf16.msra.mxu0 %v1538
    %1562 = vmatprep.subr.bf16.mxu0 0
    %1563 = vmatpush1.bf16.msra.mxu0 %v1539
    %1564 = vmatprep.subr.bf16.mxu0 0
    %1565 = vmatpush1.bf16.msra.mxu0 0
    %1566 = vmatprep.subr.bf16.mxu0 0
    %1567 = vmatpush1.bf16.msra.mxu0 0
    %1568 = vmatprep.subr.bf16.mxu0 0
    %1569 = vmatpush1.bf16.msra.mxu0 0
    %1570 = vmatprep.subr.bf16.mxu0 0
    %1571 = vmatpush1.bf16.msra.mxu0 0
    %1572 = vmatprep.subr.bf16.mxu0 0
    %1573 = vmatpush1.bf16.msra.mxu0 0
    %1574 = vmatprep.subr.bf16.mxu0 0
    %1575 = vmatpush1.bf16.msra.mxu0 0
    %1576 = vmatprep.subr.bf16.mxu0 0
    %1577 = vmatpush1.bf16.msra.mxu0 0
    %1578 = vmatprep.subr.bf16.mxu0 0
    %1579 = vmatpush1.bf16.msra.mxu0 0
    %1580 = vmatprep.mubr.bf16.mxu0 0
    %1581 = vmatmul.mubr.bf16.gmra.mrb[0].mxu0 %v1493
    %v1582 = vpop.f32.mrb[0].mxu0
    %v1583 = vadd.f32 %v1498, %v1582
    %v1584 = vpop.f32.mrb[0].mxu0
    %v1585 = vpop.f32.mrb[0].mxu0
    %v1586 = vpop.f32.mrb[0].mxu0
    %1587 = vdwg.mxu0
    %v1588 = vmax.f32 %v1583, 0.0
    %s1589 = scalar_lea.vmem [#allocation11], 192
    %v1590 = vld [vmem:[%s1589] sm:$0xf]
    %v1591 = vld [vmem:[%s1589 + $0x4] sm:$0xf]
    %v1592 = vld [vmem:[%s1589 + $0x8] sm:$0xf]
    %v1593 = vld [vmem:[%s1589 + $0xc] sm:$0xf]
    %v1594 = vld [vmem:[%s1589 + $0x10] sm:$0xf]
    %v1595 = vld [vmem:[%s1589 + $0x14] sm:$0xf]
    %v1596 = vld [vmem:[%s1589 + $0x18] sm:$0xf]
    %v1597 = vld [vmem:[%s1589 + $0x1c] sm:$0xf]
    %v1598 = vld [vmem:[%s1589 + $0x20] sm:$0xf]
    %v1599 = vld [vmem:[%s1589 + $0x24] sm:$0xf]
    %v1600 = vld [vmem:[%s1589 + $0x28] sm:$0xf]
    %v1601 = vld [vmem:[%s1589 + $0x2c] sm:$0xf]
    %v1602 = vld [vmem:[%s1589 + $0x30] sm:$0xf]
    %v1603 = vld [vmem:[%s1589 + $0x34] sm:$0xf]
    %v1604 = vld [vmem:[%s1589 + $0x38] sm:$0xf]
    %v1605 = vld [vmem:[%s1589 + $0x3c] sm:$0xf]
    %s1606 = scalar_lea.vmem [#allocation13], 3
    %v1607 = vld [vmem:[%s1606] sm:$0x1]
    %s1608 = scalar_lea.vmem [#allocation14], 192
    %v1609 = vld [vmem:[%s1608] sm:$0xf]
    %v1610 = vld [vmem:[%s1608 + $0x4] sm:$0xf]
    %v1611 = vld [vmem:[%s1608 + $0x8] sm:$0xf]
    %v1612 = vld [vmem:[%s1608 + $0xc] sm:$0xf]
    %v1613 = vld [vmem:[%s1608 + $0x10] sm:$0xf]
    %v1614 = vld [vmem:[%s1608 + $0x14] sm:$0xf]
    %v1615 = vld [vmem:[%s1608 + $0x18] sm:$0xf]
    %v1616 = vld [vmem:[%s1608 + $0x1c] sm:$0xf]
    %v1617 = vld [vmem:[%s1608 + $0x20] sm:$0xf]
    %v1618 = vld [vmem:[%s1608 + $0x24] sm:$0xf]
    %v1619 = vld [vmem:[%s1608 + $0x28] sm:$0xf]
    %v1620 = vld [vmem:[%s1608 + $0x2c] sm:$0xf]
    %v1621 = vld [vmem:[%s1608 + $0x30] sm:$0xf]
    %v1622 = vld [vmem:[%s1608 + $0x34] sm:$0xf]
    %v1623 = vld [vmem:[%s1608 + $0x38] sm:$0xf]
    %v1624 = vld [vmem:[%s1608 + $0x3c] sm:$0xf]
    %s1625 = scalar_lea.vmem [#allocation16], 3
    %v1626 = vld [vmem:[%s1625] sm:$0x1]
    %v1627 = vpack.c.bf16 %v1588, %v1588
    %v1629 = vsel %vm669, %v1627, 0
    %1631 = vmatprep.subr.bf16.mxu0 0
    %1632 = vmatpush1.bf16.msra.mxu0 %v1629
    %1633 = vmatprep.subr.bf16.mxu0 0
    %1634 = vmatpush1.bf16.msra.mxu0 0
    %1635 = vmatprep.subr.bf16.mxu0 0
    %1636 = vmatpush1.bf16.msra.mxu0 0
    %1637 = vmatprep.subr.bf16.mxu0 0
    %1638 = vmatpush1.bf16.msra.mxu0 0
    %1639 = vmatprep.subr.bf16.mxu0 0
    %1640 = vmatpush1.bf16.msra.mxu0 0
    %1641 = vmatprep.subr.bf16.mxu0 0
    %1642 = vmatpush1.bf16.msra.mxu0 0
    %1643 = vmatprep.subr.bf16.mxu0 0
    %1644 = vmatpush1.bf16.msra.mxu0 0
    %1645 = vmatprep.subr.bf16.mxu0 0
    %1646 = vmatpush1.bf16.msra.mxu0 0
    %1647 = vmatprep.subr.bf16.mxu0 0
    %1648 = vmatpush1.bf16.msra.mxu0 0
    %1649 = vmatprep.subr.bf16.mxu0 0
    %1650 = vmatpush1.bf16.msra.mxu0 0
    %1651 = vmatprep.subr.bf16.mxu0 0
    %1652 = vmatpush1.bf16.msra.mxu0 0
    %1653 = vmatprep.subr.bf16.mxu0 0
    %1654 = vmatpush1.bf16.msra.mxu0 0
    %1655 = vmatprep.subr.bf16.mxu0 0
    %1656 = vmatpush1.bf16.msra.mxu0 0
    %1657 = vmatprep.subr.bf16.mxu0 0
    %1658 = vmatpush1.bf16.msra.mxu0 0
    %1659 = vmatprep.subr.bf16.mxu0 0
    %1660 = vmatpush1.bf16.msra.mxu0 0
    %1661 = vmatprep.subr.bf16.mxu0 0
    %1662 = vmatpush1.bf16.msra.mxu0 0
    %1663 = vmatprep.mubr.bf16.mxu0 0
    %1664 = vmatmul.mubr.bf16.gmra.mrb[0].mxu0 %v667
    %v1665 = vpop.f32.mrb[0].mxu0
    %v1666 = vadd.f32 %v583, %v1665
    %v1667 = vpop.f32.mrb[0].mxu0
    %v1668 = vpop.f32.mrb[0].mxu0
    %v1669 = vadd.f32 %v586, %v1668
    %v1670 = vpop.f32.mrb[0].mxu0
    %1671 = vdwg.mxu0
    %v1672 = vmax.f32 %v1666, 0.0
    %v1673 = vmax.f32 %v1669, 0.0
    %v1674 = vpack.c.bf16 %v1673, %v1672
    %1675 = vmatprep.subr.bf16.mxu0 0
    %1676 = vmatpush1.bf16.msra.mxu0 %v1674
    %1677 = vmatprep.subr.bf16.mxu0 0
    %1678 = vmatpush1.bf16.msra.mxu0 0
    %1679 = vmatprep.subr.bf16.mxu0 0
    %1680 = vmatpush1.bf16.msra.mxu0 0
    %1681 = vmatprep.subr.bf16.mxu0 0
    %1682 = vmatpush1.bf16.msra.mxu0 0
    %1683 = vmatprep.subr.bf16.mxu0 0
    %1684 = vmatpush1.bf16.msra.mxu0 0
    %1685 = vmatprep.subr.bf16.mxu0 0
    %1686 = vmatpush1.bf16.msra.mxu0 0
    %1687 = vmatprep.subr.bf16.mxu0 0
    %1688 = vmatpush1.bf16.msra.mxu0 0
    %1689 = vmatprep.subr.bf16.mxu0 0
    %1690 = vmatpush1.bf16.msra.mxu0 0
    %1691 = vmatprep.subr.bf16.mxu0 0
    %1692 = vmatpush1.bf16.msra.mxu0 0
    %1693 = vmatprep.subr.bf16.mxu0 0
    %1694 = vmatpush1.bf16.msra.mxu0 0
    %1695 = vmatprep.subr.bf16.mxu0 0
    %1696 = vmatpush1.bf16.msra.mxu0 0
    %1697 = vmatprep.subr.bf16.mxu0 0
    %1698 = vmatpush1.bf16.msra.mxu0 0
    %1699 = vmatprep.subr.bf16.mxu0 0
    %1700 = vmatpush1.bf16.msra.mxu0 0
    %1701 = vmatprep.subr.bf16.mxu0 0
    %1702 = vmatpush1.bf16.msra.mxu0 0
    %1703 = vmatprep.subr.bf16.mxu0 0
    %1704 = vmatpush1.bf16.msra.mxu0 0
    %1705 = vmatprep.subr.bf16.mxu0 0
    %1706 = vmatpush1.bf16.msra.mxu0 0
    %1707 = vmatprep.mubr.bf16.mxu0 0
    %1708 = vmatmul.mubr.bf16.gmra.mrb[0].mxu0 %v719
    %v1709 = vpop.f32.mrb[0].mxu0
    %v1710 = vadd.f32 %v1588, %v1709
    %v1711 = vpop.f32.mrb[0].mxu0
    %v1712 = vpop.f32.mrb[0].mxu0
    %v1713 = vpop.f32.mrb[0].mxu0
    %1714 = vdwg.mxu0
    %v1715 = vpack.c.bf16 %v1710, %v1710
    %v1717 = vlaneseq
    %v1718 = vshrl.u32 %v1717, 7
    %v1719 = vsub.s32 0, %v1718
    %v1720 = vrot.slane %v1607, %v1719
    %v1738 = vunpack.c.l.b16 %v1590
    %v1739 = vunpack.c.l.b16 %v1591
    %v1740 = vunpack.c.l.b16 %v1592
    %v1741 = vunpack.c.l.b16 %v1593
    %v1742 = vunpack.c.l.b16 %v1594
    %v1743 = vunpack.c.l.b16 %v1595
    %v1744 = vunpack.c.l.b16 %v1596
    %v1745 = vunpack.c.l.b16 %v1597
    %v1746 = vunpack.c.l.b16 %v1598
    %v1747 = vunpack.c.l.b16 %v1599
    %v1748 = vunpack.c.l.b16 %v1600
    %v1749 = vunpack.c.l.b16 %v1601
    %v1750 = vunpack.c.l.b16 %v1602
    %v1751 = vunpack.c.l.b16 %v1603
    %v1752 = vunpack.c.l.b16 %v1604
    %v1753 = vunpack.c.l.b16 %v1605
    %v1754 = vpack.c.b16 %v1739, %v1738
    %v1755 = vpack.c.b16 %v1741, %v1740
    %v1756 = vpack.c.b16 %v1743, %v1742
    %v1757 = vpack.c.b16 %v1745, %v1744
    %v1758 = vpack.c.b16 %v1747, %v1746
    %v1759 = vpack.c.b16 %v1749, %v1748
    %v1760 = vpack.c.b16 %v1751, %v1750
    %v1761 = vpack.c.b16 %v1753, %v1752
    %1770 = vmatprep.subr.bf16.mxu0 0
    %1771 = vmatpush1.bf16.msra.mxu0 %v1754
    %1772 = vmatprep.subr.bf16.mxu0 0
    %1773 = vmatpush1.bf16.msra.mxu0 %v1755
    %1774 = vmatprep.subr.bf16.mxu0 0
    %1775 = vmatpush1.bf16.msra.mxu0 %v1756
    %1776 = vmatprep.subr.bf16.mxu0 0
    %1777 = vmatpush1.bf16.msra.mxu0 %v1757
    %1778 = vmatprep.subr.bf16.mxu0 0
    %1779 = vmatpush1.bf16.msra.mxu0 %v1758
    %1780 = vmatprep.subr.bf16.mxu0 0
    %1781 = vmatpush1.bf16.msra.mxu0 %v1759
    %1782 = vmatprep.subr.bf16.mxu0 0
    %1783 = vmatpush1.bf16.msra.mxu0 %v1760
    %1784 = vmatprep.subr.bf16.mxu0 0
    %1785 = vmatpush1.bf16.msra.mxu0 %v1761
    %1786 = vmatprep.subr.bf16.mxu0 0
    %1787 = vmatpush1.bf16.msra.mxu0 0
    %1788 = vmatprep.subr.bf16.mxu0 0
    %1789 = vmatpush1.bf16.msra.mxu0 0
    %1790 = vmatprep.subr.bf16.mxu0 0
    %1791 = vmatpush1.bf16.msra.mxu0 0
    %1792 = vmatprep.subr.bf16.mxu0 0
    %1793 = vmatpush1.bf16.msra.mxu0 0
    %1794 = vmatprep.subr.bf16.mxu0 0
    %1795 = vmatpush1.bf16.msra.mxu0 0
    %1796 = vmatprep.subr.bf16.mxu0 0
    %1797 = vmatpush1.bf16.msra.mxu0 0
    %1798 = vmatprep.subr.bf16.mxu0 0
    %1799 = vmatpush1.bf16.msra.mxu0 0
    %1800 = vmatprep.subr.bf16.mxu0 0
    %1801 = vmatpush1.bf16.msra.mxu0 0
    %1802 = vmatprep.mubr.bf16.mxu0 0
    %1803 = vmatmul.mubr.bf16.gmra.mrb[0].mxu0 %v1715
    %v1804 = vpop.f32.mrb[0].mxu0
    %v1805 = vadd.f32 %v1720, %v1804
    %v1806 = vpop.f32.mrb[0].mxu0
    %v1807 = vpop.f32.mrb[0].mxu0
    %v1808 = vpop.f32.mrb[0].mxu0
    %1809 = vdwg.mxu0
    %v1810 = vmax.f32 %v1805, 0.0
    %v1811 = vpack.c.bf16 %v1810, %v1810
    %v1813 = vlaneseq
    %v1814 = vshrl.u32 %v1813, 7
    %v1815 = vsub.s32 0, %v1814
    %v1816 = vrot.slane %v1626, %v1815
    %v1834 = vunpack.c.l.b16 %v1609
    %v1835 = vunpack.c.l.b16 %v1610
    %v1836 = vunpack.c.l.b16 %v1611
    %v1837 = vunpack.c.l.b16 %v1612
    %v1838 = vunpack.c.l.b16 %v1613
    %v1839 = vunpack.c.l.b16 %v1614
    %v1840 = vunpack.c.l.b16 %v1615
    %v1841 = vunpack.c.l.b16 %v1616
    %v1842 = vunpack.c.l.b16 %v1617
    %v1843 = vunpack.c.l.b16 %v1618
    %v1844 = vunpack.c.l.b16 %v1619
    %v1845 = vunpack.c.l.b16 %v1620
    %v1846 = vunpack.c.l.b16 %v1621
    %v1847 = vunpack.c.l.b16 %v1622
    %v1848 = vunpack.c.l.b16 %v1623
    %v1849 = vunpack.c.l.b16 %v1624
    %v1850 = vpack.c.b16 %v1835, %v1834
    %v1851 = vpack.c.b16 %v1837, %v1836
    %v1852 = vpack.c.b16 %v1839, %v1838
    %v1853 = vpack.c.b16 %v1841, %v1840
    %v1854 = vpack.c.b16 %v1843, %v1842
    %v1855 = vpack.c.b16 %v1845, %v1844
    %v1856 = vpack.c.b16 %v1847, %v1846
    %v1857 = vpack.c.b16 %v1849, %v1848
    %1866 = vmatprep.subr.bf16.mxu0 0
    %1867 = vmatpush1.bf16.msra.mxu0 %v1850
    %1868 = vmatprep.subr.bf16.mxu0 0
    %1869 = vmatpush1.bf16.msra.mxu0 %v1851
    %1870 = vmatprep.subr.bf16.mxu0 0
    %1871 = vmatpush1.bf16.msra.mxu0 %v1852
    %1872 = vmatprep.subr.bf16.mxu0 0
    %1873 = vmatpush1.bf16.msra.mxu0 %v1853
    %1874 = vmatprep.subr.bf16.mxu0 0
    %1875 = vmatpush1.bf16.msra.mxu0 %v1854
    %1876 = vmatprep.subr.bf16.mxu0 0
    %1877 = vmatpush1.bf16.msra.mxu0 %v1855
    %1878 = vmatprep.subr.bf16.mxu0 0
    %1879 = vmatpush1.bf16.msra.mxu0 %v1856
    %1880 = vmatprep.subr.bf16.mxu0 0
    %1881 = vmatpush1.bf16.msra.mxu0 %v1857
    %1882 = vmatprep.subr.bf16.mxu0 0
    %1883 = vmatpush1.bf16.msra.mxu0 0
    %1884 = vmatprep.subr.bf16.mxu0 0
    %1885 = vmatpush1.bf16.msra.mxu0 0
    %1886 = vmatprep.subr.bf16.mxu0 0
    %1887 = vmatpush1.bf16.msra.mxu0 0
    %1888 = vmatprep.subr.bf16.mxu0 0
    %1889 = vmatpush1.bf16.msra.mxu0 0
    %1890 = vmatprep.subr.bf16.mxu0 0
    %1891 = vmatpush1.bf16.msra.mxu0 0
    %1892 = vmatprep.subr.bf16.mxu0 0
    %1893 = vmatpush1.bf16.msra.mxu0 0
    %1894 = vmatprep.subr.bf16.mxu0 0
    %1895 = vmatpush1.bf16.msra.mxu0 0
    %1896 = vmatprep.subr.bf16.mxu0 0
    %1897 = vmatpush1.bf16.msra.mxu0 0
    %1898 = vmatprep.mubr.bf16.mxu0 0
    %1899 = vmatmul.mubr.bf16.gmra.mrb[0].mxu0 %v1811
    %v1900 = vpop.f32.mrb[0].mxu0
    %v1901 = vadd.f32 %v1816, %v1900
    %v1902 = vpop.f32.mrb[0].mxu0
    %v1903 = vpop.f32.mrb[0].mxu0
    %v1904 = vpop.f32.mrb[0].mxu0
    %1905 = vdwg.mxu0
    %v1906 = vpack.c.bf16 %v1901, %v1901
    %v1908 = vsel %vm665, %v625, 0
    %v1911 = vsel %vm669, %v1906, 0
    %1913 = vmatprep.subr.bf16.mxu0 0
    %1914 = vmatpush1.bf16.msra.mxu0 %v1911
    %1915 = vmatprep.subr.bf16.mxu0 0
    %1916 = vmatpush1.bf16.msra.mxu0 0
    %1917 = vmatprep.subr.bf16.mxu0 0
    %1918 = vmatpush1.bf16.msra.mxu0 0
    %1919 = vmatprep.subr.bf16.mxu0 0
    %1920 = vmatpush1.bf16.msra.mxu0 0
    %1921 = vmatprep.subr.bf16.mxu0 0
    %1922 = vmatpush1.bf16.msra.mxu0 0
    %1923 = vmatprep.subr.bf16.mxu0 0
    %1924 = vmatpush1.bf16.msra.mxu0 0
    %1925 = vmatprep.subr.bf16.mxu0 0
    %1926 = vmatpush1.bf16.msra.mxu0 0
    %1927 = vmatprep.subr.bf16.mxu0 0
    %1928 = vmatpush1.bf16.msra.mxu0 0
    %1929 = vmatprep.subr.bf16.mxu0 0
    %1930 = vmatpush1.bf16.msra.mxu0 0
    %1931 = vmatprep.subr.bf16.mxu0 0
    %1932 = vmatpush1.bf16.msra.mxu0 0
    %1933 = vmatprep.subr.bf16.mxu0 0
    %1934 = vmatpush1.bf16.msra.mxu0 0
    %1935 = vmatprep.subr.bf16.mxu0 0
    %1936 = vmatpush1.bf16.msra.mxu0 0
    %1937 = vmatprep.subr.bf16.mxu0 0
    %1938 = vmatpush1.bf16.msra.mxu0 0
    %1939 = vmatprep.subr.bf16.mxu0 0
    %1940 = vmatpush1.bf16.msra.mxu0 0
    %1941 = vmatprep.subr.bf16.mxu0 0
    %1942 = vmatpush1.bf16.msra.mxu0 0
    %1943 = vmatprep.subr.bf16.mxu0 0
    %1944 = vmatpush1.bf16.msra.mxu0 0
    %1945 = vmatprep.mubr.bf16.mxu0 0
    %1946 = vmatmul.mubr.bf16.gmra.mrb[0].mxu0 %v1908
    %v1947 = vpop.f32.mrb[0].mxu0
    %v1948 = vadd.f32 0.0, %v1947
    %v1949 = vpop.f32.mrb[0].mxu0
    %v1950 = vpop.f32.mrb[0].mxu0
    %v1951 = vpop.f32.mrb[0].mxu0
    %1952 = vdwg.mxu0
    %v1953 = vmax.f32 %v629, 1.0
    %v1954 = vrcp.pop %v1953
    %v1955 = vmul.f32 %v1948, %v1954
    %v1956 = vld [vmem:[#allocation17] sm:$0xff]
    %v1957 = vld [vmem:[#allocation17 + $0x8] sm:$0xff]
    %v1958 = vld [vmem:[#allocation17 + $0x10] sm:$0xff]
    %v1959 = vld [vmem:[#allocation17 + $0x18] sm:$0xff]
    %v1960 = vld [vmem:[#allocation17 + $0x20] sm:$0xff]
    %v1961 = vld [vmem:[#allocation17 + $0x28] sm:$0xff]
    %v1962 = vld [vmem:[#allocation17 + $0x30] sm:$0xff]
    %v1963 = vld [vmem:[#allocation17 + $0x38] sm:$0xff]
    %v1964 = vld [vmem:[#allocation17 + $0x40] sm:$0xff]
    %v1965 = vld [vmem:[#allocation17 + $0x48] sm:$0xff]
    %v1966 = vld [vmem:[#allocation17 + $0x50] sm:$0xff]
    %v1967 = vld [vmem:[#allocation17 + $0x58] sm:$0xff]
    %v1968 = vld [vmem:[#allocation17 + $0x60] sm:$0xff]
    %v1969 = vld [vmem:[#allocation17 + $0x68] sm:$0xff]
    %v1970 = vld [vmem:[#allocation17 + $0x70] sm:$0xff]
    %v1971 = vld [vmem:[#allocation17 + $0x78] sm:$0xff]
    %v1972 = vld [vmem:[#allocation17 + $0x80] sm:$0xff]
    %v1973 = vld [vmem:[#allocation17 + $0x88] sm:$0xff]
    %v1974 = vld [vmem:[#allocation17 + $0x90] sm:$0xff]
    %v1975 = vld [vmem:[#allocation17 + $0x98] sm:$0xff]
    %v1976 = vld [vmem:[#allocation17 + $0xa0] sm:$0xff]
    %v1977 = vld [vmem:[#allocation17 + $0xa8] sm:$0xff]
    %v1978 = vld [vmem:[#allocation17 + $0xb0] sm:$0xff]
    %v1979 = vld [vmem:[#allocation17 + $0xb8] sm:$0xff]
    %v1980 = vld [vmem:[#allocation17 + $0xc0] sm:$0xff]
    %v1981 = vld [vmem:[#allocation17 + $0xc8] sm:$0xff]
    %v1982 = vld [vmem:[#allocation17 + $0xd0] sm:$0xff]
    %v1983 = vld [vmem:[#allocation17 + $0xd8] sm:$0xff]
    %v1984 = vld [vmem:[#allocation17 + $0xe0] sm:$0xff]
    %v1985 = vld [vmem:[#allocation17 + $0xe8] sm:$0xff]
    %v1986 = vld [vmem:[#allocation17 + $0xf0] sm:$0xff]
    %v1987 = vld [vmem:[#allocation17 + $0xf8] sm:$0xff]
    %v1988 = vld [vmem:[#allocation17 + $0x100] sm:$0xff]
    %v1989 = vld [vmem:[#allocation17 + $0x108] sm:$0xff]
    %v1990 = vld [vmem:[#allocation17 + $0x110] sm:$0xff]
    %v1991 = vld [vmem:[#allocation17 + $0x118] sm:$0xff]
    %v1992 = vld [vmem:[#allocation17 + $0x120] sm:$0xff]
    %v1993 = vld [vmem:[#allocation17 + $0x128] sm:$0xff]
    %v1994 = vld [vmem:[#allocation17 + $0x130] sm:$0xff]
    %v1995 = vld [vmem:[#allocation17 + $0x138] sm:$0xff]
    %v1996 = vld [vmem:[#allocation17 + $0x140] sm:$0xff]
    %v1997 = vld [vmem:[#allocation17 + $0x148] sm:$0xff]
    %v1998 = vld [vmem:[#allocation17 + $0x150] sm:$0xff]
    %v1999 = vld [vmem:[#allocation17 + $0x158] sm:$0xff]
    %v2000 = vld [vmem:[#allocation17 + $0x160] sm:$0xff]
    %v2001 = vld [vmem:[#allocation17 + $0x168] sm:$0xff]
    %v2002 = vld [vmem:[#allocation17 + $0x170] sm:$0xff]
    %v2003 = vld [vmem:[#allocation17 + $0x178] sm:$0xff]
    %v2004 = vld [vmem:[#allocation17 + $0x180] sm:$0xff]
    %v2005 = vld [vmem:[#allocation17 + $0x188] sm:$0xff]
    %v2006 = vld [vmem:[#allocation17 + $0x190] sm:$0xff]
    %v2007 = vld [vmem:[#allocation17 + $0x198] sm:$0xff]
    %v2008 = vld [vmem:[#allocation17 + $0x1a0] sm:$0xff]
    %v2009 = vld [vmem:[#allocation17 + $0x1a8] sm:$0xff]
    %v2010 = vld [vmem:[#allocation17 + $0x1b0] sm:$0xff]
    %v2011 = vld [vmem:[#allocation17 + $0x1b8] sm:$0xff]
    %v2012 = vld [vmem:[#allocation17 + $0x1c0] sm:$0xff]
    %v2013 = vld [vmem:[#allocation17 + $0x1c8] sm:$0xff]
    %v2014 = vld [vmem:[#allocation17 + $0x1d0] sm:$0xff]
    %v2015 = vld [vmem:[#allocation17 + $0x1d8] sm:$0xff]
    %v2016 = vld [vmem:[#allocation17 + $0x1e0] sm:$0xff]
    %v2017 = vld [vmem:[#allocation17 + $0x1e8] sm:$0xff]
    %v2018 = vld [vmem:[#allocation17 + $0x1f0] sm:$0xff]
    %v2019 = vld [vmem:[#allocation17 + $0x1f8] sm:$0xff]
    %v2020 = vpack.c.bf16 %v1955, %v1955
    %v2021 = vld [vmem:[#allocation19] sm:$0xff]
    %v2023 = vlaneseq
    %v2024 = vshrl.u32 %v2023, 7
    %v2025 = vsub.s32 0, %v2024
    %v2026 = vrot.slane %v2021, %v2025
    %v2027 = vlaneseq
    %v2028 = vshrl.u32 %v2027, 7
    %v2029 = vsub.s32 1, %v2028
    %v2030 = vrot.slane %v2021, %v2029
    %v2031 = vlaneseq
    %v2032 = vshrl.u32 %v2031, 7
    %v2033 = vsub.s32 2, %v2032
    %v2034 = vrot.slane %v2021, %v2033
    %v2035 = vlaneseq
    %v2036 = vshrl.u32 %v2035, 7
    %v2037 = vsub.s32 3, %v2036
    %v2038 = vrot.slane %v2021, %v2037
    %v2039 = vlaneseq
    %v2040 = vshrl.u32 %v2039, 7
    %v2041 = vsub.s32 4, %v2040
    %v2042 = vrot.slane %v2021, %v2041
    %v2043 = vlaneseq
    %v2044 = vshrl.u32 %v2043, 7
    %v2045 = vsub.s32 5, %v2044
    %v2046 = vrot.slane %v2021, %v2045
    %v2047 = vlaneseq
    %v2048 = vshrl.u32 %v2047, 7
    %v2049 = vsub.s32 6, %v2048
    %v2050 = vrot.slane %v2021, %v2049
    %v2051 = vlaneseq
    %v2052 = vshrl.u32 %v2051, 7
    %v2053 = vsub.s32 7, %v2052
    %v2054 = vrot.slane %v2021, %v2053
    %v2127 = vunpack.c.l.b16 %v1956
    %v2128 = vunpack.c.h.b16 %v1956
    %v2129 = vunpack.c.l.b16 %v1957
    %v2130 = vunpack.c.h.b16 %v1957
    %v2131 = vunpack.c.l.b16 %v1958
    %v2132 = vunpack.c.h.b16 %v1958
    %v2133 = vunpack.c.l.b16 %v1959
    %v2134 = vunpack.c.h.b16 %v1959
    %v2135 = vunpack.c.l.b16 %v1960
    %v2136 = vunpack.c.h.b16 %v1960
    %v2137 = vunpack.c.l.b16 %v1961
    %v2138 = vunpack.c.h.b16 %v1961
    %v2139 = vunpack.c.l.b16 %v1962
    %v2140 = vunpack.c.h.b16 %v1962
    %v2141 = vunpack.c.l.b16 %v1963
    %v2142 = vunpack.c.h.b16 %v1963
    %v2143 = vunpack.c.l.b16 %v1964
    %v2144 = vunpack.c.h.b16 %v1964
    %v2145 = vunpack.c.l.b16 %v1965
    %v2146 = vunpack.c.h.b16 %v1965
    %v2147 = vunpack.c.l.b16 %v1966
    %v2148 = vunpack.c.h.b16 %v1966
    %v2149 = vunpack.c.l.b16 %v1967
    %v2150 = vunpack.c.h.b16 %v1967
    %v2151 = vunpack.c.l.b16 %v1968
    %v2152 = vunpack.c.h.b16 %v1968
    %v2153 = vunpack.c.l.b16 %v1969
    %v2154 = vunpack.c.h.b16 %v1969
    %v2155 = vunpack.c.l.b16 %v1970
    %v2156 = vunpack.c.h.b16 %v1970
    %v2157 = vunpack.c.l.b16 %v1971
    %v2158 = vunpack.c.h.b16 %v1971
    %v2159 = vunpack.c.l.b16 %v1972
    %v2160 = vunpack.c.h.b16 %v1972
    %v2161 = vunpack.c.l.b16 %v1973
    %v2162 = vunpack.c.h.b16 %v1973
    %v2163 = vunpack.c.l.b16 %v1974
    %v2164 = vunpack.c.h.b16 %v1974
    %v2165 = vunpack.c.l.b16 %v1975
    %v2166 = vunpack.c.h.b16 %v1975
    %v2167 = vunpack.c.l.b16 %v1976
    %v2168 = vunpack.c.h.b16 %v1976
    %v2169 = vunpack.c.l.b16 %v1977
    %v2170 = vunpack.c.h.b16 %v1977
    %v2171 = vunpack.c.l.b16 %v1978
    %v2172 = vunpack.c.h.b16 %v1978
    %v2173 = vunpack.c.l.b16 %v1979
    %v2174 = vunpack.c.h.b16 %v1979
    %v2175 = vunpack.c.l.b16 %v1980
    %v2176 = vunpack.c.h.b16 %v1980
    %v2177 = vunpack.c.l.b16 %v1981
    %v2178 = vunpack.c.h.b16 %v1981
    %v2179 = vunpack.c.l.b16 %v1982
    %v2180 = vunpack.c.h.b16 %v1982
    %v2181 = vunpack.c.l.b16 %v1983
    %v2182 = vunpack.c.h.b16 %v1983
    %v2183 = vunpack.c.l.b16 %v1984
    %v2184 = vunpack.c.h.b16 %v1984
    %v2185 = vunpack.c.l.b16 %v1985
    %v2186 = vunpack.c.h.b16 %v1985
    %v2187 = vunpack.c.l.b16 %v1986
    %v2188 = vunpack.c.h.b16 %v1986
    %v2189 = vunpack.c.l.b16 %v1987
    %v2190 = vunpack.c.h.b16 %v1987
    %v2191 = vunpack.c.l.b16 %v1988
    %v2192 = vunpack.c.h.b16 %v1988
    %v2193 = vunpack.c.l.b16 %v1989
    %v2194 = vunpack.c.h.b16 %v1989
    %v2195 = vunpack.c.l.b16 %v1990
    %v2196 = vunpack.c.h.b16 %v1990
    %v2197 = vunpack.c.l.b16 %v1991
    %v2198 = vunpack.c.h.b16 %v1991
    %v2199 = vunpack.c.l.b16 %v1992
    %v2200 = vunpack.c.h.b16 %v1992
    %v2201 = vunpack.c.l.b16 %v1993
    %v2202 = vunpack.c.h.b16 %v1993
    %v2203 = vunpack.c.l.b16 %v1994
    %v2204 = vunpack.c.h.b16 %v1994
    %v2205 = vunpack.c.l.b16 %v1995
    %v2206 = vunpack.c.h.b16 %v1995
    %v2207 = vunpack.c.l.b16 %v1996
    %v2208 = vunpack.c.h.b16 %v1996
    %v2209 = vunpack.c.l.b16 %v1997
    %v2210 = vunpack.c.h.b16 %v1997
    %v2211 = vunpack.c.l.b16 %v1998
    %v2212 = vunpack.c.h.b16 %v1998
    %v2213 = vunpack.c.l.b16 %v1999
    %v2214 = vunpack.c.h.b16 %v1999
    %v2215 = vunpack.c.l.b16 %v2000
    %v2216 = vunpack.c.h.b16 %v2000
    %v2217 = vunpack.c.l.b16 %v2001
    %v2218 = vunpack.c.h.b16 %v2001
    %v2219 = vunpack.c.l.b16 %v2002
    %v2220 = vunpack.c.h.b16 %v2002
    %v2221 = vunpack.c.l.b16 %v2003
    %v2222 = vunpack.c.h.b16 %v2003
    %v2223 = vunpack.c.l.b16 %v2004
    %v2224 = vunpack.c.h.b16 %v2004
    %v2225 = vunpack.c.l.b16 %v2005
    %v2226 = vunpack.c.h.b16 %v2005
    %v2227 = vunpack.c.l.b16 %v2006
    %v2228 = vunpack.c.h.b16 %v2006
    %v2229 = vunpack.c.l.b16 %v2007
    %v2230 = vunpack.c.h.b16 %v2007
    %v2231 = vunpack.c.l.b16 %v2008
    %v2232 = vunpack.c.h.b16 %v2008
    %v2233 = vunpack.c.l.b16 %v2009
    %v2234 = vunpack.c.h.b16 %v2009
    %v2235 = vunpack.c.l.b16 %v2010
    %v2236 = vunpack.c.h.b16 %v2010
    %v2237 = vunpack.c.l.b16 %v2011
    %v2238 = vunpack.c.h.b16 %v2011
    %v2239 = vunpack.c.l.b16 %v2012
    %v2240 = vunpack.c.h.b16 %v2012
    %v2241 = vunpack.c.l.b16 %v2013
    %v2242 = vunpack.c.h.b16 %v2013
    %v2243 = vunpack.c.l.b16 %v2014
    %v2244 = vunpack.c.h.b16 %v2014
    %v2245 = vunpack.c.l.b16 %v2015
    %v2246 = vunpack.c.h.b16 %v2015
    %v2247 = vunpack.c.l.b16 %v2016
    %v2248 = vunpack.c.h.b16 %v2016
    %v2249 = vunpack.c.l.b16 %v2017
    %v2250 = vunpack.c.h.b16 %v2017
    %v2251 = vunpack.c.l.b16 %v2018
    %v2252 = vunpack.c.h.b16 %v2018
    %v2253 = vunpack.c.l.b16 %v2019
    %v2254 = vunpack.c.h.b16 %v2019
    %v2255 = vpack.c.b16 %v2135, %v2127
    %v2256 = vpack.c.b16 %v2136, %v2128
    %v2257 = vpack.c.b16 %v2137, %v2129
    %v2258 = vpack.c.b16 %v2138, %v2130
    %v2259 = vpack.c.b16 %v2139, %v2131
    %v2260 = vpack.c.b16 %v2140, %v2132
    %v2261 = vpack.c.b16 %v2141, %v2133
    %v2262 = vpack.c.b16 %v2142, %v2134
    %v2263 = vpack.c.b16 %v2151, %v2143
    %v2264 = vpack.c.b16 %v2152, %v2144
    %v2265 = vpack.c.b16 %v2153, %v2145
    %v2266 = vpack.c.b16 %v2154, %v2146
    %v2267 = vpack.c.b16 %v2155, %v2147
    %v2268 = vpack.c.b16 %v2156, %v2148
    %v2269 = vpack.c.b16 %v2157, %v2149
    %v2270 = vpack.c.b16 %v2158, %v2150
    %v2271 = vpack.c.b16 %v2167, %v2159
    %v2272 = vpack.c.b16 %v2168, %v2160
    %v2273 = vpack.c.b16 %v2169, %v2161
    %v2274 = vpack.c.b16 %v2170, %v2162
    %v2275 = vpack.c.b16 %v2171, %v2163
    %v2276 = vpack.c.b16 %v2172, %v2164
    %v2277 = vpack.c.b16 %v2173, %v2165
    %v2278 = vpack.c.b16 %v2174, %v2166
    %v2279 = vpack.c.b16 %v2183, %v2175
    %v2280 = vpack.c.b16 %v2184, %v2176
    %v2281 = vpack.c.b16 %v2185, %v2177
    %v2282 = vpack.c.b16 %v2186, %v2178
    %v2283 = vpack.c.b16 %v2187, %v2179
    %v2284 = vpack.c.b16 %v2188, %v2180
    %v2285 = vpack.c.b16 %v2189, %v2181
    %v2286 = vpack.c.b16 %v2190, %v2182
    %v2287 = vpack.c.b16 %v2199, %v2191
    %v2288 = vpack.c.b16 %v2200, %v2192
    %v2289 = vpack.c.b16 %v2201, %v2193
    %v2290 = vpack.c.b16 %v2202, %v2194
    %v2291 = vpack.c.b16 %v2203, %v2195
    %v2292 = vpack.c.b16 %v2204, %v2196
    %v2293 = vpack.c.b16 %v2205, %v2197
    %v2294 = vpack.c.b16 %v2206, %v2198
    %v2295 = vpack.c.b16 %v2215, %v2207
    %v2296 = vpack.c.b16 %v2216, %v2208
    %v2297 = vpack.c.b16 %v2217, %v2209
    %v2298 = vpack.c.b16 %v2218, %v2210
    %v2299 = vpack.c.b16 %v2219, %v2211
    %v2300 = vpack.c.b16 %v2220, %v2212
    %v2301 = vpack.c.b16 %v2221, %v2213
    %v2302 = vpack.c.b16 %v2222, %v2214
    %v2303 = vpack.c.b16 %v2231, %v2223
    %v2304 = vpack.c.b16 %v2232, %v2224
    %v2305 = vpack.c.b16 %v2233, %v2225
    %v2306 = vpack.c.b16 %v2234, %v2226
    %v2307 = vpack.c.b16 %v2235, %v2227
    %v2308 = vpack.c.b16 %v2236, %v2228
    %v2309 = vpack.c.b16 %v2237, %v2229
    %v2310 = vpack.c.b16 %v2238, %v2230
    %v2311 = vpack.c.b16 %v2247, %v2239
    %v2312 = vpack.c.b16 %v2248, %v2240
    %v2313 = vpack.c.b16 %v2249, %v2241
    %v2314 = vpack.c.b16 %v2250, %v2242
    %v2315 = vpack.c.b16 %v2251, %v2243
    %v2316 = vpack.c.b16 %v2252, %v2244
    %v2317 = vpack.c.b16 %v2253, %v2245
    %v2318 = vpack.c.b16 %v2254, %v2246
    %2383 = vmatprep.subr.bf16.mxu0 %v2256
    %2384 = vmatpush1.bf16.msra.mxu0 %v2255
    %2385 = vmatprep.subr.bf16.mxu0 %v2264
    %2386 = vmatpush1.bf16.msra.mxu0 %v2263
    %2387 = vmatprep.subr.bf16.mxu0 %v2272
    %2388 = vmatpush1.bf16.msra.mxu0 %v2271
    %2389 = vmatprep.subr.bf16.mxu0 %v2280
    %2390 = vmatpush1.bf16.msra.mxu0 %v2279
    %2391 = vmatprep.subr.bf16.mxu0 %v2288
    %2392 = vmatpush1.bf16.msra.mxu0 %v2287
    %2393 = vmatprep.subr.bf16.mxu0 %v2296
    %2394 = vmatpush1.bf16.msra.mxu0 %v2295
    %2395 = vmatprep.subr.bf16.mxu0 %v2304
    %2396 = vmatpush1.bf16.msra.mxu0 %v2303
    %2397 = vmatprep.subr.bf16.mxu0 %v2312
    %2398 = vmatpush1.bf16.msra.mxu0 %v2311
    %2399 = vmatprep.subr.bf16.mxu0 0
    %2400 = vmatpush1.bf16.msra.mxu0 0
    %2401 = vmatprep.subr.bf16.mxu0 0
    %2402 = vmatpush1.bf16.msra.mxu0 0
    %2403 = vmatprep.subr.bf16.mxu0 0
    %2404 = vmatpush1.bf16.msra.mxu0 0
    %2405 = vmatprep.subr.bf16.mxu0 0
    %2406 = vmatpush1.bf16.msra.mxu0 0
    %2407 = vmatprep.subr.bf16.mxu0 0
    %2408 = vmatpush1.bf16.msra.mxu0 0
    %2409 = vmatprep.subr.bf16.mxu0 0
    %2410 = vmatpush1.bf16.msra.mxu0 0
    %2411 = vmatprep.subr.bf16.mxu0 0
    %2412 = vmatpush1.bf16.msra.mxu0 0
    %2413 = vmatprep.subr.bf16.mxu0 0
    %2414 = vmatpush1.bf16.msra.mxu0 0
    %2415 = vmatprep.mubr.bf16.mxu0 0
    %2416 = vmatmul.mubr.bf16.gmra.mrb[0].mxu0 %v2020
    %v2417 = vpop.f32.mrb[0].mxu0
    %v2418 = vadd.f32 %v2026, %v2417
    %v2419 = vpop.f32.mrb[0].mxu0
    %v2420 = vadd.f32 %v2030, %v2419
    %v2421 = vpop.f32.mrb[0].mxu0
    %v2422 = vpop.f32.mrb[0].mxu0
    %2423 = vdwg.mxu0
    %2424 = vmatprep.subr.bf16.mxu0 %v2258
    %2425 = vmatpush1.bf16.msra.mxu0 %v2257
    %2426 = vmatprep.subr.bf16.mxu0 %v2266
    %2427 = vmatpush1.bf16.msra.mxu0 %v2265
    %2428 = vmatprep.subr.bf16.mxu0 %v2274
    %2429 = vmatpush1.bf16.msra.mxu0 %v2273
    %2430 = vmatprep.subr.bf16.mxu0 %v2282
    %2431 = vmatpush1.bf16.msra.mxu0 %v2281
    %2432 = vmatprep.subr.bf16.mxu0 %v2290
    %2433 = vmatpush1.bf16.msra.mxu0 %v2289
    %2434 = vmatprep.subr.bf16.mxu0 %v2298
    %2435 = vmatpush1.bf16.msra.mxu0 %v2297
    %2436 = vmatprep.subr.bf16.mxu0 %v2306
    %2437 = vmatpush1.bf16.msra.mxu0 %v2305
    %2438 = vmatprep.subr.bf16.mxu0 %v2314
    %2439 = vmatpush1.bf16.msra.mxu0 %v2313
    %2440 = vmatprep.subr.bf16.mxu0 0
    %2441 = vmatpush1.bf16.msra.mxu0 0
    %2442 = vmatprep.subr.bf16.mxu0 0
    %2443 = vmatpush1.bf16.msra.mxu0 0
    %2444 = vmatprep.subr.bf16.mxu0 0
    %2445 = vmatpush1.bf16.msra.mxu0 0
    %2446 = vmatprep.subr.bf16.mxu0 0
    %2447 = vmatpush1.bf16.msra.mxu0 0
    %2448 = vmatprep.subr.bf16.mxu0 0
    %2449 = vmatpush1.bf16.msra.mxu0 0
    %2450 = vmatprep.subr.bf16.mxu0 0
    %2451 = vmatpush1.bf16.msra.mxu0 0
    %2452 = vmatprep.subr.bf16.mxu0 0
    %2453 = vmatpush1.bf16.msra.mxu0 0
    %2454 = vmatprep.subr.bf16.mxu0 0
    %2455 = vmatpush1.bf16.msra.mxu0 0
    %2456 = vmatprep.mubr.bf16.mxu0 0
    %2457 = vmatmul.mubr.bf16.gmra.mrb[0].mxu0 %v2020
    %v2458 = vpop.f32.mrb[0].mxu0
    %v2459 = vadd.f32 %v2034, %v2458
    %v2460 = vpop.f32.mrb[0].mxu0
    %v2461 = vadd.f32 %v2038, %v2460
    %v2462 = vpop.f32.mrb[0].mxu0
    %v2463 = vpop.f32.mrb[0].mxu0
    %2464 = vdwg.mxu0
    %2465 = vmatprep.subr.bf16.mxu0 %v2260
    %2466 = vmatpush1.bf16.msra.mxu0 %v2259
    %2467 = vmatprep.subr.bf16.mxu0 %v2268
    %2468 = vmatpush1.bf16.msra.mxu0 %v2267
    %2469 = vmatprep.subr.bf16.mxu0 %v2276
    %2470 = vmatpush1.bf16.msra.mxu0 %v2275
    %2471 = vmatprep.subr.bf16.mxu0 %v2284
    %2472 = vmatpush1.bf16.msra.mxu0 %v2283
    %2473 = vmatprep.subr.bf16.mxu0 %v2292
    %2474 = vmatpush1.bf16.msra.mxu0 %v2291
    %2475 = vmatprep.subr.bf16.mxu0 %v2300
    %2476 = vmatpush1.bf16.msra.mxu0 %v2299
    %2477 = vmatprep.subr.bf16.mxu0 %v2308
    %2478 = vmatpush1.bf16.msra.mxu0 %v2307
    %2479 = vmatprep.subr.bf16.mxu0 %v2316
    %2480 = vmatpush1.bf16.msra.mxu0 %v2315
    %2481 = vmatprep.subr.bf16.mxu0 0
    %2482 = vmatpush1.bf16.msra.mxu0 0
    %2483 = vmatprep.subr.bf16.mxu0 0
    %2484 = vmatpush1.bf16.msra.mxu0 0
    %2485 = vmatprep.subr.bf16.mxu0 0
    %2486 = vmatpush1.bf16.msra.mxu0 0
    %2487 = vmatprep.subr.bf16.mxu0 0
    %2488 = vmatpush1.bf16.msra.mxu0 0
    %2489 = vmatprep.subr.bf16.mxu0 0
    %2490 = vmatpush1.bf16.msra.mxu0 0
    %2491 = vmatprep.subr.bf16.mxu0 0
    %2492 = vmatpush1.bf16.msra.mxu0 0
    %2493 = vmatprep.subr.bf16.mxu0 0
    %2494 = vmatpush1.bf16.msra.mxu0 0
    %2495 = vmatprep.subr.bf16.mxu0 0
    %2496 = vmatpush1.bf16.msra.mxu0 0
    %2497 = vmatprep.mubr.bf16.mxu0 0
    %2498 = vmatmul.mubr.bf16.gmra.mrb[0].mxu0 %v2020
    %v2499 = vpop.f32.mrb[0].mxu0
    %v2500 = vadd.f32 %v2042, %v2499
    %v2501 = vpop.f32.mrb[0].mxu0
    %v2502 = vadd.f32 %v2046, %v2501
    %v2503 = vpop.f32.mrb[0].mxu0
    %v2504 = vpop.f32.mrb[0].mxu0
    %2505 = vdwg.mxu0
    %2506 = vmatprep.subr.bf16.mxu0 %v2262
    %2507 = vmatpush1.bf16.msra.mxu0 %v2261
    %2508 = vmatprep.subr.bf16.mxu0 %v2270
    %2509 = vmatpush1.bf16.msra.mxu0 %v2269
    %2510 = vmatprep.subr.bf16.mxu0 %v2278
    %2511 = vmatpush1.bf16.msra.mxu0 %v2277
    %2512 = vmatprep.subr.bf16.mxu0 %v2286
    %2513 = vmatpush1.bf16.msra.mxu0 %v2285
    %2514 = vmatprep.subr.bf16.mxu0 %v2294
    %2515 = vmatpush1.bf16.msra.mxu0 %v2293
    %2516 = vmatprep.subr.bf16.mxu0 %v2302
    %2517 = vmatpush1.bf16.msra.mxu0 %v2301
    %2518 = vmatprep.subr.bf16.mxu0 %v2310
    %2519 = vmatpush1.bf16.msra.mxu0 %v2309
    %2520 = vmatprep.subr.bf16.mxu0 %v2318
    %2521 = vmatpush1.bf16.msra.mxu0 %v2317
    %2522 = vmatprep.subr.bf16.mxu0 0
    %2523 = vmatpush1.bf16.msra.mxu0 0
    %2524 = vmatprep.subr.bf16.mxu0 0
    %2525 = vmatpush1.bf16.msra.mxu0 0
    %2526 = vmatprep.subr.bf16.mxu0 0
    %2527 = vmatpush1.bf16.msra.mxu0 0
    %2528 = vmatprep.subr.bf16.mxu0 0
    %2529 = vmatpush1.bf16.msra.mxu0 0
    %2530 = vmatprep.subr.bf16.mxu0 0
    %2531 = vmatpush1.bf16.msra.mxu0 0
    %2532 = vmatprep.subr.bf16.mxu0 0
    %2533 = vmatpush1.bf16.msra.mxu0 0
    %2534 = vmatprep.subr.bf16.mxu0 0
    %2535 = vmatpush1.bf16.msra.mxu0 0
    %2536 = vmatprep.subr.bf16.mxu0 0
    %2537 = vmatpush1.bf16.msra.mxu0 0
    %2538 = vmatprep.mubr.bf16.mxu0 0
    %2539 = vmatmul.mubr.bf16.gmra.mrb[0].mxu0 %v2020
    %v2540 = vpop.f32.mrb[0].mxu0
    %v2541 = vadd.f32 %v2050, %v2540
    %v2542 = vpop.f32.mrb[0].mxu0
    %v2543 = vadd.f32 %v2054, %v2542
    %v2544 = vpop.f32.mrb[0].mxu0
    %v2545 = vpop.f32.mrb[0].mxu0
    %2546 = vdwg.mxu0
    %v2547 = vmax.f32 %v2418, 0.0
    %v2548 = vmax.f32 %v2420, 0.0
    %v2549 = vmax.f32 %v2459, 0.0
    %v2550 = vmax.f32 %v2461, 0.0
    %v2551 = vmax.f32 %v2500, 0.0
    %v2552 = vmax.f32 %v2502, 0.0
    %v2553 = vmax.f32 %v2541, 0.0
    %v2554 = vmax.f32 %v2543, 0.0
    %v2555 = vld [vmem:[#allocation20] sm:$0xff]
    %v2556 = vld [vmem:[#allocation20 + $0x8] sm:$0xff]
    %v2557 = vld [vmem:[#allocation20 + $0x10] sm:$0xff]
    %v2558 = vld [vmem:[#allocation20 + $0x18] sm:$0xff]
    %v2559 = vld [vmem:[#allocation20 + $0x20] sm:$0xff]
    %v2560 = vld [vmem:[#allocation20 + $0x28] sm:$0xff]
    %v2561 = vld [vmem:[#allocation20 + $0x30] sm:$0xff]
    %v2562 = vld [vmem:[#allocation20 + $0x38] sm:$0xff]
    %v2563 = vld [vmem:[#allocation20 + $0x40] sm:$0xff]
    %v2564 = vld [vmem:[#allocation20 + $0x48] sm:$0xff]
    %v2565 = vld [vmem:[#allocation20 + $0x50] sm:$0xff]
    %v2566 = vld [vmem:[#allocation20 + $0x58] sm:$0xff]
    %v2567 = vld [vmem:[#allocation20 + $0x60] sm:$0xff]
    %v2568 = vld [vmem:[#allocation20 + $0x68] sm:$0xff]
    %v2569 = vld [vmem:[#allocation20 + $0x70] sm:$0xff]
    %v2570 = vld [vmem:[#allocation20 + $0x78] sm:$0xff]
    %v2571 = vld [vmem:[#allocation20 + $0x80] sm:$0xff]
    %v2572 = vld [vmem:[#allocation20 + $0x88] sm:$0xff]
    %v2573 = vld [vmem:[#allocation20 + $0x90] sm:$0xff]
    %v2574 = vld [vmem:[#allocation20 + $0x98] sm:$0xff]
    %v2575 = vld [vmem:[#allocation20 + $0xa0] sm:$0xff]
    %v2576 = vld [vmem:[#allocation20 + $0xa8] sm:$0xff]
    %v2577 = vld [vmem:[#allocation20 + $0xb0] sm:$0xff]
    %v2578 = vld [vmem:[#allocation20 + $0xb8] sm:$0xff]
    %v2579 = vld [vmem:[#allocation20 + $0xc0] sm:$0xff]
    %v2580 = vld [vmem:[#allocation20 + $0xc8] sm:$0xff]
    %v2581 = vld [vmem:[#allocation20 + $0xd0] sm:$0xff]
    %v2582 = vld [vmem:[#allocation20 + $0xd8] sm:$0xff]
    %v2583 = vld [vmem:[#allocation20 + $0xe0] sm:$0xff]
    %v2584 = vld [vmem:[#allocation20 + $0xe8] sm:$0xff]
    %v2585 = vld [vmem:[#allocation20 + $0xf0] sm:$0xff]
    %v2586 = vld [vmem:[#allocation20 + $0xf8] sm:$0xff]
    %v2587 = vld [vmem:[#allocation20 + $0x100] sm:$0xff]
    %v2588 = vld [vmem:[#allocation20 + $0x108] sm:$0xff]
    %v2589 = vld [vmem:[#allocation20 + $0x110] sm:$0xff]
    %v2590 = vld [vmem:[#allocation20 + $0x118] sm:$0xff]
    %v2591 = vld [vmem:[#allocation20 + $0x120] sm:$0xff]
    %v2592 = vld [vmem:[#allocation20 + $0x128] sm:$0xff]
    %v2593 = vld [vmem:[#allocation20 + $0x130] sm:$0xff]
    %v2594 = vld [vmem:[#allocation20 + $0x138] sm:$0xff]
    %v2595 = vld [vmem:[#allocation20 + $0x140] sm:$0xff]
    %v2596 = vld [vmem:[#allocation20 + $0x148] sm:$0xff]
    %v2597 = vld [vmem:[#allocation20 + $0x150] sm:$0xff]
    %v2598 = vld [vmem:[#allocation20 + $0x158] sm:$0xff]
    %v2599 = vld [vmem:[#allocation20 + $0x160] sm:$0xff]
    %v2600 = vld [vmem:[#allocation20 + $0x168] sm:$0xff]
    %v2601 = vld [vmem:[#allocation20 + $0x170] sm:$0xff]
    %v2602 = vld [vmem:[#allocation20 + $0x178] sm:$0xff]
    %v2603 = vld [vmem:[#allocation20 + $0x180] sm:$0xff]
    %v2604 = vld [vmem:[#allocation20 + $0x188] sm:$0xff]
    %v2605 = vld [vmem:[#allocation20 + $0x190] sm:$0xff]
    %v2606 = vld [vmem:[#allocation20 + $0x198] sm:$0xff]
    %v2607 = vld [vmem:[#allocation20 + $0x1a0] sm:$0xff]
    %v2608 = vld [vmem:[#allocation20 + $0x1a8] sm:$0xff]
    %v2609 = vld [vmem:[#allocation20 + $0x1b0] sm:$0xff]
    %v2610 = vld [vmem:[#allocation20 + $0x1b8] sm:$0xff]
    %v2611 = vld [vmem:[#allocation20 + $0x1c0] sm:$0xff]
    %v2612 = vld [vmem:[#allocation20 + $0x1c8] sm:$0xff]
    %v2613 = vld [vmem:[#allocation20 + $0x1d0] sm:$0xff]
    %v2614 = vld [vmem:[#allocation20 + $0x1d8] sm:$0xff]
    %v2615 = vld [vmem:[#allocation20 + $0x1e0] sm:$0xff]
    %v2616 = vld [vmem:[#allocation20 + $0x1e8] sm:$0xff]
    %v2617 = vld [vmem:[#allocation20 + $0x1f0] sm:$0xff]
    %v2618 = vld [vmem:[#allocation20 + $0x1f8] sm:$0xff]
    %v2619 = vld [vmem:[#allocation20 + $0x200] sm:$0xff]
    %v2620 = vld [vmem:[#allocation20 + $0x208] sm:$0xff]
    %v2621 = vld [vmem:[#allocation20 + $0x210] sm:$0xff]
    %v2622 = vld [vmem:[#allocation20 + $0x218] sm:$0xff]
    %v2623 = vld [vmem:[#allocation20 + $0x220] sm:$0xff]
    %v2624 = vld [vmem:[#allocation20 + $0x228] sm:$0xff]
    %v2625 = vld [vmem:[#allocation20 + $0x230] sm:$0xff]
    %v2626 = vld [vmem:[#allocation20 + $0x238] sm:$0xff]
    %v2627 = vld [vmem:[#allocation20 + $0x240] sm:$0xff]
    %v2628 = vld [vmem:[#allocation20 + $0x248] sm:$0xff]
    %v2629 = vld [vmem:[#allocation20 + $0x250] sm:$0xff]
    %v2630 = vld [vmem:[#allocation20 + $0x258] sm:$0xff]
    %v2631 = vld [vmem:[#allocation20 + $0x260] sm:$0xff]
    %v2632 = vld [vmem:[#allocation20 + $0x268] sm:$0xff]
    %v2633 = vld [vmem:[#allocation20 + $0x270] sm:$0xff]
    %v2634 = vld [vmem:[#allocation20 + $0x278] sm:$0xff]
    %v2635 = vld [vmem:[#allocation20 + $0x280] sm:$0xff]
    %v2636 = vld [vmem:[#allocation20 + $0x288] sm:$0xff]
    %v2637 = vld [vmem:[#allocation20 + $0x290] sm:$0xff]
    %v2638 = vld [vmem:[#allocation20 + $0x298] sm:$0xff]
    %v2639 = vld [vmem:[#allocation20 + $0x2a0] sm:$0xff]
    %v2640 = vld [vmem:[#allocation20 + $0x2a8] sm:$0xff]
    %v2641 = vld [vmem:[#allocation20 + $0x2b0] sm:$0xff]
    %v2642 = vld [vmem:[#allocation20 + $0x2b8] sm:$0xff]
    %v2643 = vld [vmem:[#allocation20 + $0x2c0] sm:$0xff]
    %v2644 = vld [vmem:[#allocation20 + $0x2c8] sm:$0xff]
    %v2645 = vld [vmem:[#allocation20 + $0x2d0] sm:$0xff]
    %v2646 = vld [vmem:[#allocation20 + $0x2d8] sm:$0xff]
    %v2647 = vld [vmem:[#allocation20 + $0x2e0] sm:$0xff]
    %v2648 = vld [vmem:[#allocation20 + $0x2e8] sm:$0xff]
    %v2649 = vld [vmem:[#allocation20 + $0x2f0] sm:$0xff]
    %v2650 = vld [vmem:[#allocation20 + $0x2f8] sm:$0xff]
    %v2651 = vld [vmem:[#allocation20 + $0x300] sm:$0xff]
    %v2652 = vld [vmem:[#allocation20 + $0x308] sm:$0xff]
    %v2653 = vld [vmem:[#allocation20 + $0x310] sm:$0xff]
    %v2654 = vld [vmem:[#allocation20 + $0x318] sm:$0xff]
    %v2655 = vld [vmem:[#allocation20 + $0x320] sm:$0xff]
    %v2656 = vld [vmem:[#allocation20 + $0x328] sm:$0xff]
    %v2657 = vld [vmem:[#allocation20 + $0x330] sm:$0xff]
    %v2658 = vld [vmem:[#allocation20 + $0x338] sm:$0xff]
    %v2659 = vld [vmem:[#allocation20 + $0x340] sm:$0xff]
    %v2660 = vld [vmem:[#allocation20 + $0x348] sm:$0xff]
    %v2661 = vld [vmem:[#allocation20 + $0x350] sm:$0xff]
    %v2662 = vld [vmem:[#allocation20 + $0x358] sm:$0xff]
    %v2663 = vld [vmem:[#allocation20 + $0x360] sm:$0xff]
    %v2664 = vld [vmem:[#allocation20 + $0x368] sm:$0xff]
    %v2665 = vld [vmem:[#allocation20 + $0x370] sm:$0xff]
    %v2666 = vld [vmem:[#allocation20 + $0x378] sm:$0xff]
    %v2667 = vld [vmem:[#allocation20 + $0x380] sm:$0xff]
    %v2668 = vld [vmem:[#allocation20 + $0x388] sm:$0xff]
    %v2669 = vld [vmem:[#allocation20 + $0x390] sm:$0xff]
    %v2670 = vld [vmem:[#allocation20 + $0x398] sm:$0xff]
    %v2671 = vld [vmem:[#allocation20 + $0x3a0] sm:$0xff]
    %v2672 = vld [vmem:[#allocation20 + $0x3a8] sm:$0xff]
    %v2673 = vld [vmem:[#allocation20 + $0x3b0] sm:$0xff]
    %v2674 = vld [vmem:[#allocation20 + $0x3b8] sm:$0xff]
    %v2675 = vld [vmem:[#allocation20 + $0x3c0] sm:$0xff]
    %v2676 = vld [vmem:[#allocation20 + $0x3c8] sm:$0xff]
    %v2677 = vld [vmem:[#allocation20 + $0x3d0] sm:$0xff]
    %v2678 = vld [vmem:[#allocation20 + $0x3d8] sm:$0xff]
    %v2679 = vld [vmem:[#allocation20 + $0x3e0] sm:$0xff]
    %v2680 = vld [vmem:[#allocation20 + $0x3e8] sm:$0xff]
    %v2681 = vld [vmem:[#allocation20 + $0x3f0] sm:$0xff]
    %v2682 = vld [vmem:[#allocation20 + $0x3f8] sm:$0xff]
    %v2683 = vld [vmem:[#allocation20 + $0x400] sm:$0xff]
    %v2684 = vld [vmem:[#allocation20 + $0x408] sm:$0xff]
    %v2685 = vld [vmem:[#allocation20 + $0x410] sm:$0xff]
    %v2686 = vld [vmem:[#allocation20 + $0x418] sm:$0xff]
    %v2687 = vld [vmem:[#allocation20 + $0x420] sm:$0xff]
    %v2688 = vld [vmem:[#allocation20 + $0x428] sm:$0xff]
    %v2689 = vld [vmem:[#allocation20 + $0x430] sm:$0xff]
    %v2690 = vld [vmem:[#allocation20 + $0x438] sm:$0xff]
    %v2691 = vld [vmem:[#allocation20 + $0x440] sm:$0xff]
    %v2692 = vld [vmem:[#allocation20 + $0x448] sm:$0xff]
    %v2693 = vld [vmem:[#allocation20 + $0x450] sm:$0xff]
    %v2694 = vld [vmem:[#allocation20 + $0x458] sm:$0xff]
    %v2695 = vld [vmem:[#allocation20 + $0x460] sm:$0xff]
    %v2696 = vld [vmem:[#allocation20 + $0x468] sm:$0xff]
    %v2697 = vld [vmem:[#allocation20 + $0x470] sm:$0xff]
    %v2698 = vld [vmem:[#allocation20 + $0x478] sm:$0xff]
    %v2699 = vld [vmem:[#allocation20 + $0x480] sm:$0xff]
    %v2700 = vld [vmem:[#allocation20 + $0x488] sm:$0xff]
    %v2701 = vld [vmem:[#allocation20 + $0x490] sm:$0xff]
    %v2702 = vld [vmem:[#allocation20 + $0x498] sm:$0xff]
    %v2703 = vld [vmem:[#allocation20 + $0x4a0] sm:$0xff]
    %v2704 = vld [vmem:[#allocation20 + $0x4a8] sm:$0xff]
    %v2705 = vld [vmem:[#allocation20 + $0x4b0] sm:$0xff]
    %v2706 = vld [vmem:[#allocation20 + $0x4b8] sm:$0xff]
    %v2707 = vld [vmem:[#allocation20 + $0x4c0] sm:$0xff]
    %v2708 = vld [vmem:[#allocation20 + $0x4c8] sm:$0xff]
    %v2709 = vld [vmem:[#allocation20 + $0x4d0] sm:$0xff]
    %v2710 = vld [vmem:[#allocation20 + $0x4d8] sm:$0xff]
    %v2711 = vld [vmem:[#allocation20 + $0x4e0] sm:$0xff]
    %v2712 = vld [vmem:[#allocation20 + $0x4e8] sm:$0xff]
    %v2713 = vld [vmem:[#allocation20 + $0x4f0] sm:$0xff]
    %v2714 = vld [vmem:[#allocation20 + $0x4f8] sm:$0xff]
    %v2715 = vld [vmem:[#allocation20 + $0x500] sm:$0xff]
    %v2716 = vld [vmem:[#allocation20 + $0x508] sm:$0xff]
    %v2717 = vld [vmem:[#allocation20 + $0x510] sm:$0xff]
    %v2718 = vld [vmem:[#allocation20 + $0x518] sm:$0xff]
    %v2719 = vld [vmem:[#allocation20 + $0x520] sm:$0xff]
    %v2720 = vld [vmem:[#allocation20 + $0x528] sm:$0xff]
    %v2721 = vld [vmem:[#allocation20 + $0x530] sm:$0xff]
    %v2722 = vld [vmem:[#allocation20 + $0x538] sm:$0xff]
    %v2723 = vld [vmem:[#allocation20 + $0x540] sm:$0xff]
    %v2724 = vld [vmem:[#allocation20 + $0x548] sm:$0xff]
    %v2725 = vld [vmem:[#allocation20 + $0x550] sm:$0xff]
    %v2726 = vld [vmem:[#allocation20 + $0x558] sm:$0xff]
    %v2727 = vld [vmem:[#allocation20 + $0x560] sm:$0xff]
    %v2728 = vld [vmem:[#allocation20 + $0x568] sm:$0xff]
    %v2729 = vld [vmem:[#allocation20 + $0x570] sm:$0xff]
    %v2730 = vld [vmem:[#allocation20 + $0x578] sm:$0xff]
    %v2731 = vld [vmem:[#allocation20 + $0x580] sm:$0xff]
    %v2732 = vld [vmem:[#allocation20 + $0x588] sm:$0xff]
    %v2733 = vld [vmem:[#allocation20 + $0x590] sm:$0xff]
    %v2734 = vld [vmem:[#allocation20 + $0x598] sm:$0xff]
    %v2735 = vld [vmem:[#allocation20 + $0x5a0] sm:$0xff]
    %v2736 = vld [vmem:[#allocation20 + $0x5a8] sm:$0xff]
    %v2737 = vld [vmem:[#allocation20 + $0x5b0] sm:$0xff]
    %v2738 = vld [vmem:[#allocation20 + $0x5b8] sm:$0xff]
    %v2739 = vld [vmem:[#allocation20 + $0x5c0] sm:$0xff]
    %v2740 = vld [vmem:[#allocation20 + $0x5c8] sm:$0xff]
    %v2741 = vld [vmem:[#allocation20 + $0x5d0] sm:$0xff]
    %v2742 = vld [vmem:[#allocation20 + $0x5d8] sm:$0xff]
    %v2743 = vld [vmem:[#allocation20 + $0x5e0] sm:$0xff]
    %v2744 = vld [vmem:[#allocation20 + $0x5e8] sm:$0xff]
    %v2745 = vld [vmem:[#allocation20 + $0x5f0] sm:$0xff]
    %v2746 = vld [vmem:[#allocation20 + $0x5f8] sm:$0xff]
    %v2747 = vld [vmem:[#allocation20 + $0x600] sm:$0xff]
    %v2748 = vld [vmem:[#allocation20 + $0x608] sm:$0xff]
    %v2749 = vld [vmem:[#allocation20 + $0x610] sm:$0xff]
    %v2750 = vld [vmem:[#allocation20 + $0x618] sm:$0xff]
    %v2751 = vld [vmem:[#allocation20 + $0x620] sm:$0xff]
    %v2752 = vld [vmem:[#allocation20 + $0x628] sm:$0xff]
    %v2753 = vld [vmem:[#allocation20 + $0x630] sm:$0xff]
    %v2754 = vld [vmem:[#allocation20 + $0x638] sm:$0xff]
    %v2755 = vld [vmem:[#allocation20 + $0x640] sm:$0xff]
    %v2756 = vld [vmem:[#allocation20 + $0x648] sm:$0xff]
    %v2757 = vld [vmem:[#allocation20 + $0x650] sm:$0xff]
    %v2758 = vld [vmem:[#allocation20 + $0x658] sm:$0xff]
    %v2759 = vld [vmem:[#allocation20 + $0x660] sm:$0xff]
    %v2760 = vld [vmem:[#allocation20 + $0x668] sm:$0xff]
    %v2761 = vld [vmem:[#allocation20 + $0x670] sm:$0xff]
    %v2762 = vld [vmem:[#allocation20 + $0x678] sm:$0xff]
    %v2763 = vld [vmem:[#allocation20 + $0x680] sm:$0xff]
    %v2764 = vld [vmem:[#allocation20 + $0x688] sm:$0xff]
    %v2765 = vld [vmem:[#allocation20 + $0x690] sm:$0xff]
    %v2766 = vld [vmem:[#allocation20 + $0x698] sm:$0xff]
    %v2767 = vld [vmem:[#allocation20 + $0x6a0] sm:$0xff]
    %v2768 = vld [vmem:[#allocation20 + $0x6a8] sm:$0xff]
    %v2769 = vld [vmem:[#allocation20 + $0x6b0] sm:$0xff]
    %v2770 = vld [vmem:[#allocation20 + $0x6b8] sm:$0xff]
    %v2771 = vld [vmem:[#allocation20 + $0x6c0] sm:$0xff]
    %v2772 = vld [vmem:[#allocation20 + $0x6c8] sm:$0xff]
    %v2773 = vld [vmem:[#allocation20 + $0x6d0] sm:$0xff]
    %v2774 = vld [vmem:[#allocation20 + $0x6d8] sm:$0xff]
    %v2775 = vld [vmem:[#allocation20 + $0x6e0] sm:$0xff]
    %v2776 = vld [vmem:[#allocation20 + $0x6e8] sm:$0xff]
    %v2777 = vld [vmem:[#allocation20 + $0x6f0] sm:$0xff]
    %v2778 = vld [vmem:[#allocation20 + $0x6f8] sm:$0xff]
    %v2779 = vld [vmem:[#allocation20 + $0x700] sm:$0xff]
    %v2780 = vld [vmem:[#allocation20 + $0x708] sm:$0xff]
    %v2781 = vld [vmem:[#allocation20 + $0x710] sm:$0xff]
    %v2782 = vld [vmem:[#allocation20 + $0x718] sm:$0xff]
    %v2783 = vld [vmem:[#allocation20 + $0x720] sm:$0xff]
    %v2784 = vld [vmem:[#allocation20 + $0x728] sm:$0xff]
    %v2785 = vld [vmem:[#allocation20 + $0x730] sm:$0xff]
    %v2786 = vld [vmem:[#allocation20 + $0x738] sm:$0xff]
    %v2787 = vld [vmem:[#allocation20 + $0x740] sm:$0xff]
    %v2788 = vld [vmem:[#allocation20 + $0x748] sm:$0xff]
    %v2789 = vld [vmem:[#allocation20 + $0x750] sm:$0xff]
    %v2790 = vld [vmem:[#allocation20 + $0x758] sm:$0xff]
    %v2791 = vld [vmem:[#allocation20 + $0x760] sm:$0xff]
    %v2792 = vld [vmem:[#allocation20 + $0x768] sm:$0xff]
    %v2793 = vld [vmem:[#allocation20 + $0x770] sm:$0xff]
    %v2794 = vld [vmem:[#allocation20 + $0x778] sm:$0xff]
    %v2795 = vld [vmem:[#allocation20 + $0x780] sm:$0xff]
    %v2796 = vld [vmem:[#allocation20 + $0x788] sm:$0xff]
    %v2797 = vld [vmem:[#allocation20 + $0x790] sm:$0xff]
    %v2798 = vld [vmem:[#allocation20 + $0x798] sm:$0xff]
    %v2799 = vld [vmem:[#allocation20 + $0x7a0] sm:$0xff]
    %v2800 = vld [vmem:[#allocation20 + $0x7a8] sm:$0xff]
    %v2801 = vld [vmem:[#allocation20 + $0x7b0] sm:$0xff]
    %v2802 = vld [vmem:[#allocation20 + $0x7b8] sm:$0xff]
    %v2803 = vld [vmem:[#allocation20 + $0x7c0] sm:$0xff]
    %v2804 = vld [vmem:[#allocation20 + $0x7c8] sm:$0xff]
    %v2805 = vld [vmem:[#allocation20 + $0x7d0] sm:$0xff]
    %v2806 = vld [vmem:[#allocation20 + $0x7d8] sm:$0xff]
    %v2807 = vld [vmem:[#allocation20 + $0x7e0] sm:$0xff]
    %v2808 = vld [vmem:[#allocation20 + $0x7e8] sm:$0xff]
    %v2809 = vld [vmem:[#allocation20 + $0x7f0] sm:$0xff]
    %v2810 = vld [vmem:[#allocation20 + $0x7f8] sm:$0xff]
    %v2811 = vld [vmem:[#allocation20 + $0x800] sm:$0xff]
    %v2812 = vld [vmem:[#allocation20 + $0x808] sm:$0xff]
    %v2813 = vld [vmem:[#allocation20 + $0x810] sm:$0xff]
    %v2814 = vld [vmem:[#allocation20 + $0x818] sm:$0xff]
    %v2815 = vld [vmem:[#allocation20 + $0x820] sm:$0xff]
    %v2816 = vld [vmem:[#allocation20 + $0x828] sm:$0xff]
    %v2817 = vld [vmem:[#allocation20 + $0x830] sm:$0xff]
    %v2818 = vld [vmem:[#allocation20 + $0x838] sm:$0xff]
    %v2819 = vld [vmem:[#allocation20 + $0x840] sm:$0xff]
    %v2820 = vld [vmem:[#allocation20 + $0x848] sm:$0xff]
    %v2821 = vld [vmem:[#allocation20 + $0x850] sm:$0xff]
    %v2822 = vld [vmem:[#allocation20 + $0x858] sm:$0xff]
    %v2823 = vld [vmem:[#allocation20 + $0x860] sm:$0xff]
    %v2824 = vld [vmem:[#allocation20 + $0x868] sm:$0xff]
    %v2825 = vld [vmem:[#allocation20 + $0x870] sm:$0xff]
    %v2826 = vld [vmem:[#allocation20 + $0x878] sm:$0xff]
    %v2827 = vld [vmem:[#allocation20 + $0x880] sm:$0xff]
    %v2828 = vld [vmem:[#allocation20 + $0x888] sm:$0xff]
    %v2829 = vld [vmem:[#allocation20 + $0x890] sm:$0xff]
    %v2830 = vld [vmem:[#allocation20 + $0x898] sm:$0xff]
    %v2831 = vld [vmem:[#allocation20 + $0x8a0] sm:$0xff]
    %v2832 = vld [vmem:[#allocation20 + $0x8a8] sm:$0xff]
    %v2833 = vld [vmem:[#allocation20 + $0x8b0] sm:$0xff]
    %v2834 = vld [vmem:[#allocation20 + $0x8b8] sm:$0xff]
    %v2835 = vld [vmem:[#allocation20 + $0x8c0] sm:$0xff]
    %v2836 = vld [vmem:[#allocation20 + $0x8c8] sm:$0xff]
    %v2837 = vld [vmem:[#allocation20 + $0x8d0] sm:$0xff]
    %v2838 = vld [vmem:[#allocation20 + $0x8d8] sm:$0xff]
    %v2839 = vld [vmem:[#allocation20 + $0x8e0] sm:$0xff]
    %v2840 = vld [vmem:[#allocation20 + $0x8e8] sm:$0xff]
    %v2841 = vld [vmem:[#allocation20 + $0x8f0] sm:$0xff]
    %v2842 = vld [vmem:[#allocation20 + $0x8f8] sm:$0xff]
    %v2843 = vld [vmem:[#allocation20 + $0x900] sm:$0xff]
    %v2844 = vld [vmem:[#allocation20 + $0x908] sm:$0xff]
    %v2845 = vld [vmem:[#allocation20 + $0x910] sm:$0xff]
    %v2846 = vld [vmem:[#allocation20 + $0x918] sm:$0xff]
    %v2847 = vld [vmem:[#allocation20 + $0x920] sm:$0xff]
    %v2848 = vld [vmem:[#allocation20 + $0x928] sm:$0xff]
    %v2849 = vld [vmem:[#allocation20 + $0x930] sm:$0xff]
    %v2850 = vld [vmem:[#allocation20 + $0x938] sm:$0xff]
    %v2851 = vld [vmem:[#allocation20 + $0x940] sm:$0xff]
    %v2852 = vld [vmem:[#allocation20 + $0x948] sm:$0xff]
    %v2853 = vld [vmem:[#allocation20 + $0x950] sm:$0xff]
    %v2854 = vld [vmem:[#allocation20 + $0x958] sm:$0xff]
    %v2855 = vld [vmem:[#allocation20 + $0x960] sm:$0xff]
    %v2856 = vld [vmem:[#allocation20 + $0x968] sm:$0xff]
    %v2857 = vld [vmem:[#allocation20 + $0x970] sm:$0xff]
    %v2858 = vld [vmem:[#allocation20 + $0x978] sm:$0xff]
    %v2859 = vld [vmem:[#allocation20 + $0x980] sm:$0xff]
    %v2860 = vld [vmem:[#allocation20 + $0x988] sm:$0xff]
    %v2861 = vld [vmem:[#allocation20 + $0x990] sm:$0xff]
    %v2862 = vld [vmem:[#allocation20 + $0x998] sm:$0xff]
    %v2863 = vld [vmem:[#allocation20 + $0x9a0] sm:$0xff]
    %v2864 = vld [vmem:[#allocation20 + $0x9a8] sm:$0xff]
    %v2865 = vld [vmem:[#allocation20 + $0x9b0] sm:$0xff]
    %v2866 = vld [vmem:[#allocation20 + $0x9b8] sm:$0xff]
    %v2867 = vld [vmem:[#allocation20 + $0x9c0] sm:$0xff]
    %v2868 = vld [vmem:[#allocation20 + $0x9c8] sm:$0xff]
    %v2869 = vld [vmem:[#allocation20 + $0x9d0] sm:$0xff]
    %v2870 = vld [vmem:[#allocation20 + $0x9d8] sm:$0xff]
    %v2871 = vld [vmem:[#allocation20 + $0x9e0] sm:$0xff]
    %v2872 = vld [vmem:[#allocation20 + $0x9e8] sm:$0xff]
    %v2873 = vld [vmem:[#allocation20 + $0x9f0] sm:$0xff]
    %v2874 = vld [vmem:[#allocation20 + $0x9f8] sm:$0xff]
    %v2875 = vld [vmem:[#allocation20 + $0xa00] sm:$0xff]
    %v2876 = vld [vmem:[#allocation20 + $0xa08] sm:$0xff]
    %v2877 = vld [vmem:[#allocation20 + $0xa10] sm:$0xff]
    %v2878 = vld [vmem:[#allocation20 + $0xa18] sm:$0xff]
    %v2879 = vld [vmem:[#allocation20 + $0xa20] sm:$0xff]
    %v2880 = vld [vmem:[#allocation20 + $0xa28] sm:$0xff]
    %v2881 = vld [vmem:[#allocation20 + $0xa30] sm:$0xff]
    %v2882 = vld [vmem:[#allocation20 + $0xa38] sm:$0xff]
    %v2883 = vld [vmem:[#allocation20 + $0xa40] sm:$0xff]
    %v2884 = vld [vmem:[#allocation20 + $0xa48] sm:$0xff]
    %v2885 = vld [vmem:[#allocation20 + $0xa50] sm:$0xff]
    %v2886 = vld [vmem:[#allocation20 + $0xa58] sm:$0xff]
    %v2887 = vld [vmem:[#allocation20 + $0xa60] sm:$0xff]
    %v2888 = vld [vmem:[#allocation20 + $0xa68] sm:$0xff]
    %v2889 = vld [vmem:[#allocation20 + $0xa70] sm:$0xff]
    %v2890 = vld [vmem:[#allocation20 + $0xa78] sm:$0xff]
    %v2891 = vld [vmem:[#allocation20 + $0xa80] sm:$0xff]
    %v2892 = vld [vmem:[#allocation20 + $0xa88] sm:$0xff]
    %v2893 = vld [vmem:[#allocation20 + $0xa90] sm:$0xff]
    %v2894 = vld [vmem:[#allocation20 + $0xa98] sm:$0xff]
    %v2895 = vld [vmem:[#allocation20 + $0xaa0] sm:$0xff]
    %v2896 = vld [vmem:[#allocation20 + $0xaa8] sm:$0xff]
    %v2897 = vld [vmem:[#allocation20 + $0xab0] sm:$0xff]
    %v2898 = vld [vmem:[#allocation20 + $0xab8] sm:$0xff]
    %v2899 = vld [vmem:[#allocation20 + $0xac0] sm:$0xff]
    %v2900 = vld [vmem:[#allocation20 + $0xac8] sm:$0xff]
    %v2901 = vld [vmem:[#allocation20 + $0xad0] sm:$0xff]
    %v2902 = vld [vmem:[#allocation20 + $0xad8] sm:$0xff]
    %v2903 = vld [vmem:[#allocation20 + $0xae0] sm:$0xff]
    %v2904 = vld [vmem:[#allocation20 + $0xae8] sm:$0xff]
    %v2905 = vld [vmem:[#allocation20 + $0xaf0] sm:$0xff]
    %v2906 = vld [vmem:[#allocation20 + $0xaf8] sm:$0xff]
    %v2907 = vld [vmem:[#allocation20 + $0xb00] sm:$0xff]
    %v2908 = vld [vmem:[#allocation20 + $0xb08] sm:$0xff]
    %v2909 = vld [vmem:[#allocation20 + $0xb10] sm:$0xff]
    %v2910 = vld [vmem:[#allocation20 + $0xb18] sm:$0xff]
    %v2911 = vld [vmem:[#allocation20 + $0xb20] sm:$0xff]
    %v2912 = vld [vmem:[#allocation20 + $0xb28] sm:$0xff]
    %v2913 = vld [vmem:[#allocation20 + $0xb30] sm:$0xff]
    %v2914 = vld [vmem:[#allocation20 + $0xb38] sm:$0xff]
    %v2915 = vld [vmem:[#allocation20 + $0xb40] sm:$0xff]
    %v2916 = vld [vmem:[#allocation20 + $0xb48] sm:$0xff]
    %v2917 = vld [vmem:[#allocation20 + $0xb50] sm:$0xff]
    %v2918 = vld [vmem:[#allocation20 + $0xb58] sm:$0xff]
    %v2919 = vld [vmem:[#allocation20 + $0xb60] sm:$0xff]
    %v2920 = vld [vmem:[#allocation20 + $0xb68] sm:$0xff]
    %v2921 = vld [vmem:[#allocation20 + $0xb70] sm:$0xff]
    %v2922 = vld [vmem:[#allocation20 + $0xb78] sm:$0xff]
    %v2923 = vld [vmem:[#allocation20 + $0xb80] sm:$0xff]
    %v2924 = vld [vmem:[#allocation20 + $0xb88] sm:$0xff]
    %v2925 = vld [vmem:[#allocation20 + $0xb90] sm:$0xff]
    %v2926 = vld [vmem:[#allocation20 + $0xb98] sm:$0xff]
    %v2927 = vld [vmem:[#allocation20 + $0xba0] sm:$0xff]
    %v2928 = vld [vmem:[#allocation20 + $0xba8] sm:$0xff]
    %v2929 = vld [vmem:[#allocation20 + $0xbb0] sm:$0xff]
    %v2930 = vld [vmem:[#allocation20 + $0xbb8] sm:$0xff]
    %v2931 = vld [vmem:[#allocation20 + $0xbc0] sm:$0xff]
    %v2932 = vld [vmem:[#allocation20 + $0xbc8] sm:$0xff]
    %v2933 = vld [vmem:[#allocation20 + $0xbd0] sm:$0xff]
    %v2934 = vld [vmem:[#allocation20 + $0xbd8] sm:$0xff]
    %v2935 = vld [vmem:[#allocation20 + $0xbe0] sm:$0xff]
    %v2936 = vld [vmem:[#allocation20 + $0xbe8] sm:$0xff]
    %v2937 = vld [vmem:[#allocation20 + $0xbf0] sm:$0xff]
    %v2938 = vld [vmem:[#allocation20 + $0xbf8] sm:$0xff]
    %v2939 = vld [vmem:[#allocation20 + $0xc00] sm:$0xff]
    %v2940 = vld [vmem:[#allocation20 + $0xc08] sm:$0xff]
    %v2941 = vld [vmem:[#allocation20 + $0xc10] sm:$0xff]
    %v2942 = vld [vmem:[#allocation20 + $0xc18] sm:$0xff]
    %v2943 = vld [vmem:[#allocation20 + $0xc20] sm:$0xff]
    %v2944 = vld [vmem:[#allocation20 + $0xc28] sm:$0xff]
    %v2945 = vld [vmem:[#allocation20 + $0xc30] sm:$0xff]
    %v2946 = vld [vmem:[#allocation20 + $0xc38] sm:$0xff]
    %v2947 = vld [vmem:[#allocation20 + $0xc40] sm:$0xff]
    %v2948 = vld [vmem:[#allocation20 + $0xc48] sm:$0xff]
    %v2949 = vld [vmem:[#allocation20 + $0xc50] sm:$0xff]
    %v2950 = vld [vmem:[#allocation20 + $0xc58] sm:$0xff]
    %v2951 = vld [vmem:[#allocation20 + $0xc60] sm:$0xff]
    %v2952 = vld [vmem:[#allocation20 + $0xc68] sm:$0xff]
    %v2953 = vld [vmem:[#allocation20 + $0xc70] sm:$0xff]
    %v2954 = vld [vmem:[#allocation20 + $0xc78] sm:$0xff]
    %v2955 = vld [vmem:[#allocation20 + $0xc80] sm:$0xff]
    %v2956 = vld [vmem:[#allocation20 + $0xc88] sm:$0xff]
    %v2957 = vld [vmem:[#allocation20 + $0xc90] sm:$0xff]
    %v2958 = vld [vmem:[#allocation20 + $0xc98] sm:$0xff]
    %v2959 = vld [vmem:[#allocation20 + $0xca0] sm:$0xff]
    %v2960 = vld [vmem:[#allocation20 + $0xca8] sm:$0xff]
    %v2961 = vld [vmem:[#allocation20 + $0xcb0] sm:$0xff]
    %v2962 = vld [vmem:[#allocation20 + $0xcb8] sm:$0xff]
    %v2963 = vld [vmem:[#allocation20 + $0xcc0] sm:$0xff]
    %v2964 = vld [vmem:[#allocation20 + $0xcc8] sm:$0xff]
    %v2965 = vld [vmem:[#allocation20 + $0xcd0] sm:$0xff]
    %v2966 = vld [vmem:[#allocation20 + $0xcd8] sm:$0xff]
    %v2967 = vld [vmem:[#allocation20 + $0xce0] sm:$0xff]
    %v2968 = vld [vmem:[#allocation20 + $0xce8] sm:$0xff]
    %v2969 = vld [vmem:[#allocation20 + $0xcf0] sm:$0xff]
    %v2970 = vld [vmem:[#allocation20 + $0xcf8] sm:$0xff]
    %v2971 = vld [vmem:[#allocation20 + $0xd00] sm:$0xff]
    %v2972 = vld [vmem:[#allocation20 + $0xd08] sm:$0xff]
    %v2973 = vld [vmem:[#allocation20 + $0xd10] sm:$0xff]
    %v2974 = vld [vmem:[#allocation20 + $0xd18] sm:$0xff]
    %v2975 = vld [vmem:[#allocation20 + $0xd20] sm:$0xff]
    %v2976 = vld [vmem:[#allocation20 + $0xd28] sm:$0xff]
    %v2977 = vld [vmem:[#allocation20 + $0xd30] sm:$0xff]
    %v2978 = vld [vmem:[#allocation20 + $0xd38] sm:$0xff]
    %v2979 = vld [vmem:[#allocation20 + $0xd40] sm:$0xff]
    %v2980 = vld [vmem:[#allocation20 + $0xd48] sm:$0xff]
    %v2981 = vld [vmem:[#allocation20 + $0xd50] sm:$0xff]
    %v2982 = vld [vmem:[#allocation20 + $0xd58] sm:$0xff]
    %v2983 = vld [vmem:[#allocation20 + $0xd60] sm:$0xff]
    %v2984 = vld [vmem:[#allocation20 + $0xd68] sm:$0xff]
    %v2985 = vld [vmem:[#allocation20 + $0xd70] sm:$0xff]
    %v2986 = vld [vmem:[#allocation20 + $0xd78] sm:$0xff]
    %v2987 = vld [vmem:[#allocation20 + $0xd80] sm:$0xff]
    %v2988 = vld [vmem:[#allocation20 + $0xd88] sm:$0xff]
    %v2989 = vld [vmem:[#allocation20 + $0xd90] sm:$0xff]
    %v2990 = vld [vmem:[#allocation20 + $0xd98] sm:$0xff]
    %v2991 = vld [vmem:[#allocation20 + $0xda0] sm:$0xff]
    %v2992 = vld [vmem:[#allocation20 + $0xda8] sm:$0xff]
    %v2993 = vld [vmem:[#allocation20 + $0xdb0] sm:$0xff]
    %v2994 = vld [vmem:[#allocation20 + $0xdb8] sm:$0xff]
    %v2995 = vld [vmem:[#allocation20 + $0xdc0] sm:$0xff]
    %v2996 = vld [vmem:[#allocation20 + $0xdc8] sm:$0xff]
    %v2997 = vld [vmem:[#allocation20 + $0xdd0] sm:$0xff]
    %v2998 = vld [vmem:[#allocation20 + $0xdd8] sm:$0xff]
    %v2999 = vld [vmem:[#allocation20 + $0xde0] sm:$0xff]
    %v3000 = vld [vmem:[#allocation20 + $0xde8] sm:$0xff]
    %v3001 = vld [vmem:[#allocation20 + $0xdf0] sm:$0xff]
    %v3002 = vld [vmem:[#allocation20 + $0xdf8] sm:$0xff]
    %v3003 = vld [vmem:[#allocation20 + $0xe00] sm:$0xff]
    %v3004 = vld [vmem:[#allocation20 + $0xe08] sm:$0xff]
    %v3005 = vld [vmem:[#allocation20 + $0xe10] sm:$0xff]
    %v3006 = vld [vmem:[#allocation20 + $0xe18] sm:$0xff]
    %v3007 = vld [vmem:[#allocation20 + $0xe20] sm:$0xff]
    %v3008 = vld [vmem:[#allocation20 + $0xe28] sm:$0xff]
    %v3009 = vld [vmem:[#allocation20 + $0xe30] sm:$0xff]
    %v3010 = vld [vmem:[#allocation20 + $0xe38] sm:$0xff]
    %v3011 = vld [vmem:[#allocation20 + $0xe40] sm:$0xff]
    %v3012 = vld [vmem:[#allocation20 + $0xe48] sm:$0xff]
    %v3013 = vld [vmem:[#allocation20 + $0xe50] sm:$0xff]
    %v3014 = vld [vmem:[#allocation20 + $0xe58] sm:$0xff]
    %v3015 = vld [vmem:[#allocation20 + $0xe60] sm:$0xff]
    %v3016 = vld [vmem:[#allocation20 + $0xe68] sm:$0xff]
    %v3017 = vld [vmem:[#allocation20 + $0xe70] sm:$0xff]
    %v3018 = vld [vmem:[#allocation20 + $0xe78] sm:$0xff]
    %v3019 = vld [vmem:[#allocation20 + $0xe80] sm:$0xff]
    %v3020 = vld [vmem:[#allocation20 + $0xe88] sm:$0xff]
    %v3021 = vld [vmem:[#allocation20 + $0xe90] sm:$0xff]
    %v3022 = vld [vmem:[#allocation20 + $0xe98] sm:$0xff]
    %v3023 = vld [vmem:[#allocation20 + $0xea0] sm:$0xff]
    %v3024 = vld [vmem:[#allocation20 + $0xea8] sm:$0xff]
    %v3025 = vld [vmem:[#allocation20 + $0xeb0] sm:$0xff]
    %v3026 = vld [vmem:[#allocation20 + $0xeb8] sm:$0xff]
    %v3027 = vld [vmem:[#allocation20 + $0xec0] sm:$0xff]
    %v3028 = vld [vmem:[#allocation20 + $0xec8] sm:$0xff]
    %v3029 = vld [vmem:[#allocation20 + $0xed0] sm:$0xff]
    %v3030 = vld [vmem:[#allocation20 + $0xed8] sm:$0xff]
    %v3031 = vld [vmem:[#allocation20 + $0xee0] sm:$0xff]
    %v3032 = vld [vmem:[#allocation20 + $0xee8] sm:$0xff]
    %v3033 = vld [vmem:[#allocation20 + $0xef0] sm:$0xff]
    %v3034 = vld [vmem:[#allocation20 + $0xef8] sm:$0xff]
    %v3035 = vld [vmem:[#allocation20 + $0xf00] sm:$0xff]
    %v3036 = vld [vmem:[#allocation20 + $0xf08] sm:$0xff]
    %v3037 = vld [vmem:[#allocation20 + $0xf10] sm:$0xff]
    %v3038 = vld [vmem:[#allocation20 + $0xf18] sm:$0xff]
    %v3039 = vld [vmem:[#allocation20 + $0xf20] sm:$0xff]
    %v3040 = vld [vmem:[#allocation20 + $0xf28] sm:$0xff]
    %v3041 = vld [vmem:[#allocation20 + $0xf30] sm:$0xff]
    %v3042 = vld [vmem:[#allocation20 + $0xf38] sm:$0xff]
    %v3043 = vld [vmem:[#allocation20 + $0xf40] sm:$0xff]
    %v3044 = vld [vmem:[#allocation20 + $0xf48] sm:$0xff]
    %v3045 = vld [vmem:[#allocation20 + $0xf50] sm:$0xff]
    %v3046 = vld [vmem:[#allocation20 + $0xf58] sm:$0xff]
    %v3047 = vld [vmem:[#allocation20 + $0xf60] sm:$0xff]
    %v3048 = vld [vmem:[#allocation20 + $0xf68] sm:$0xff]
    %v3049 = vld [vmem:[#allocation20 + $0xf70] sm:$0xff]
    %v3050 = vld [vmem:[#allocation20 + $0xf78] sm:$0xff]
    %v3051 = vld [vmem:[#allocation20 + $0xf80] sm:$0xff]
    %v3052 = vld [vmem:[#allocation20 + $0xf88] sm:$0xff]
    %v3053 = vld [vmem:[#allocation20 + $0xf90] sm:$0xff]
    %v3054 = vld [vmem:[#allocation20 + $0xf98] sm:$0xff]
    %v3055 = vld [vmem:[#allocation20 + $0xfa0] sm:$0xff]
    %v3056 = vld [vmem:[#allocation20 + $0xfa8] sm:$0xff]
    %v3057 = vld [vmem:[#allocation20 + $0xfb0] sm:$0xff]
    %v3058 = vld [vmem:[#allocation20 + $0xfb8] sm:$0xff]
    %v3059 = vld [vmem:[#allocation20 + $0xfc0] sm:$0xff]
    %v3060 = vld [vmem:[#allocation20 + $0xfc8] sm:$0xff]
    %v3061 = vld [vmem:[#allocation20 + $0xfd0] sm:$0xff]
    %v3062 = vld [vmem:[#allocation20 + $0xfd8] sm:$0xff]
    %v3063 = vld [vmem:[#allocation20 + $0xfe0] sm:$0xff]
    %v3064 = vld [vmem:[#allocation20 + $0xfe8] sm:$0xff]
    %v3065 = vld [vmem:[#allocation20 + $0xff0] sm:$0xff]
    %v3066 = vld [vmem:[#allocation20 + $0xff8] sm:$0xff]
    %v3067 = vpack.c.bf16 %v2547, %v2547
    %v3068 = vpack.c.bf16 %v2548, %v2548
    %v3069 = vpack.c.bf16 %v2549, %v2549
    %v3070 = vpack.c.bf16 %v2550, %v2550
    %v3071 = vpack.c.bf16 %v2551, %v2551
    %v3072 = vpack.c.bf16 %v2552, %v2552
    %v3073 = vpack.c.bf16 %v2553, %v2553
    %v3074 = vpack.c.bf16 %v2554, %v2554
    %v3075 = vld [vmem:[#allocation22] sm:$0xff]
    %v3077 = vlaneseq
    %v3078 = vshrl.u32 %v3077, 7
    %v3079 = vsub.s32 0, %v3078
    %v3080 = vrot.slane %v3075, %v3079
    %v3081 = vlaneseq
    %v3082 = vshrl.u32 %v3081, 7
    %v3083 = vsub.s32 1, %v3082
    %v3084 = vrot.slane %v3075, %v3083
    %v3085 = vlaneseq
    %v3086 = vshrl.u32 %v3085, 7
    %v3087 = vsub.s32 2, %v3086
    %v3088 = vrot.slane %v3075, %v3087
    %v3089 = vlaneseq
    %v3090 = vshrl.u32 %v3089, 7
    %v3091 = vsub.s32 3, %v3090
    %v3092 = vrot.slane %v3075, %v3091
    %v3093 = vlaneseq
    %v3094 = vshrl.u32 %v3093, 7
    %v3095 = vsub.s32 4, %v3094
    %v3096 = vrot.slane %v3075, %v3095
    %v3097 = vlaneseq
    %v3098 = vshrl.u32 %v3097, 7
    %v3099 = vsub.s32 5, %v3098
    %v3100 = vrot.slane %v3075, %v3099
    %v3101 = vlaneseq
    %v3102 = vshrl.u32 %v3101, 7
    %v3103 = vsub.s32 6, %v3102
    %v3104 = vrot.slane %v3075, %v3103
    %v3105 = vlaneseq
    %v3106 = vshrl.u32 %v3105, 7
    %v3107 = vsub.s32 7, %v3106
    %v3108 = vrot.slane %v3075, %v3107
    %v3629 = vunpack.c.l.b16 %v2555
    %v3630 = vunpack.c.h.b16 %v2555
    %v3631 = vunpack.c.l.b16 %v2556
    %v3632 = vunpack.c.h.b16 %v2556
    %v3633 = vunpack.c.l.b16 %v2557
    %v3634 = vunpack.c.h.b16 %v2557
    %v3635 = vunpack.c.l.b16 %v2558
    %v3636 = vunpack.c.h.b16 %v2558
    %v3637 = vunpack.c.l.b16 %v2559
    %v3638 = vunpack.c.h.b16 %v2559
    %v3639 = vunpack.c.l.b16 %v2560
    %v3640 = vunpack.c.h.b16 %v2560
    %v3641 = vunpack.c.l.b16 %v2561
    %v3642 = vunpack.c.h.b16 %v2561
    %v3643 = vunpack.c.l.b16 %v2562
    %v3644 = vunpack.c.h.b16 %v2562
    %v3645 = vunpack.c.l.b16 %v2563
    %v3646 = vunpack.c.h.b16 %v2563
    %v3647 = vunpack.c.l.b16 %v2564
    %v3648 = vunpack.c.h.b16 %v2564
    %v3649 = vunpack.c.l.b16 %v2565
    %v3650 = vunpack.c.h.b16 %v2565
    %v3651 = vunpack.c.l.b16 %v2566
    %v3652 = vunpack.c.h.b16 %v2566
    %v3653 = vunpack.c.l.b16 %v2567
    %v3654 = vunpack.c.h.b16 %v2567
    %v3655 = vunpack.c.l.b16 %v2568
    %v3656 = vunpack.c.h.b16 %v2568
    %v3657 = vunpack.c.l.b16 %v2569
    %v3658 = vunpack.c.h.b16 %v2569
    %v3659 = vunpack.c.l.b16 %v2570
    %v3660 = vunpack.c.h.b16 %v2570
    %v3661 = vunpack.c.l.b16 %v2571
    %v3662 = vunpack.c.h.b16 %v2571
    %v3663 = vunpack.c.l.b16 %v2572
    %v3664 = vunpack.c.h.b16 %v2572
    %v3665 = vunpack.c.l.b16 %v2573
    %v3666 = vunpack.c.h.b16 %v2573
    %v3667 = vunpack.c.l.b16 %v2574
    %v3668 = vunpack.c.h.b16 %v2574
    %v3669 = vunpack.c.l.b16 %v2575
    %v3670 = vunpack.c.h.b16 %v2575
    %v3671 = vunpack.c.l.b16 %v2576
    %v3672 = vunpack.c.h.b16 %v2576
    %v3673 = vunpack.c.l.b16 %v2577
    %v3674 = vunpack.c.h.b16 %v2577
    %v3675 = vunpack.c.l.b16 %v2578
    %v3676 = vunpack.c.h.b16 %v2578
    %v3677 = vunpack.c.l.b16 %v2579
    %v3678 = vunpack.c.h.b16 %v2579
    %v3679 = vunpack.c.l.b16 %v2580
    %v3680 = vunpack.c.h.b16 %v2580
    %v3681 = vunpack.c.l.b16 %v2581
    %v3682 = vunpack.c.h.b16 %v2581
    %v3683 = vunpack.c.l.b16 %v2582
    %v3684 = vunpack.c.h.b16 %v2582
    %v3685 = vunpack.c.l.b16 %v2583
    %v3686 = vunpack.c.h.b16 %v2583
    %v3687 = vunpack.c.l.b16 %v2584
    %v3688 = vunpack.c.h.b16 %v2584
    %v3689 = vunpack.c.l.b16 %v2585
    %v3690 = vunpack.c.h.b16 %v2585
    %v3691 = vunpack.c.l.b16 %v2586
    %v3692 = vunpack.c.h.b16 %v2586
    %v3693 = vunpack.c.l.b16 %v2587
    %v3694 = vunpack.c.h.b16 %v2587
    %v3695 = vunpack.c.l.b16 %v2588
    %v3696 = vunpack.c.h.b16 %v2588
    %v3697 = vunpack.c.l.b16 %v2589
    %v3698 = vunpack.c.h.b16 %v2589
    %v3699 = vunpack.c.l.b16 %v2590
    %v3700 = vunpack.c.h.b16 %v2590
    %v3701 = vunpack.c.l.b16 %v2591
    %v3702 = vunpack.c.h.b16 %v2591
    %v3703 = vunpack.c.l.b16 %v2592
    %v3704 = vunpack.c.h.b16 %v2592
    %v3705 = vunpack.c.l.b16 %v2593
    %v3706 = vunpack.c.h.b16 %v2593
    %v3707 = vunpack.c.l.b16 %v2594
    %v3708 = vunpack.c.h.b16 %v2594
    %v3709 = vunpack.c.l.b16 %v2595
    %v3710 = vunpack.c.h.b16 %v2595
    %v3711 = vunpack.c.l.b16 %v2596
    %v3712 = vunpack.c.h.b16 %v2596
    %v3713 = vunpack.c.l.b16 %v2597
    %v3714 = vunpack.c.h.b16 %v2597
    %v3715 = vunpack.c.l.b16 %v2598
    %v3716 = vunpack.c.h.b16 %v2598
    %v3717 = vunpack.c.l.b16 %v2599
    %v3718 = vunpack.c.h.b16 %v2599
    %v3719 = vunpack.c.l.b16 %v2600
    %v3720 = vunpack.c.h.b16 %v2600
    %v3721 = vunpack.c.l.b16 %v2601
    %v3722 = vunpack.c.h.b16 %v2601
    %v3723 = vunpack.c.l.b16 %v2602
    %v3724 = vunpack.c.h.b16 %v2602
    %v3725 = vunpack.c.l.b16 %v2603
    %v3726 = vunpack.c.h.b16 %v2603
    %v3727 = vunpack.c.l.b16 %v2604
    %v3728 = vunpack.c.h.b16 %v2604
    %v3729 = vunpack.c.l.b16 %v2605
    %v3730 = vunpack.c.h.b16 %v2605
    %v3731 = vunpack.c.l.b16 %v2606
    %v3732 = vunpack.c.h.b16 %v2606
    %v3733 = vunpack.c.l.b16 %v2607
    %v3734 = vunpack.c.h.b16 %v2607
    %v3735 = vunpack.c.l.b16 %v2608
    %v3736 = vunpack.c.h.b16 %v2608
    %v3737 = vunpack.c.l.b16 %v2609
    %v3738 = vunpack.c.h.b16 %v2609
    %v3739 = vunpack.c.l.b16 %v2610
    %v3740 = vunpack.c.h.b16 %v2610
    %v3741 = vunpack.c.l.b16 %v2611
    %v3742 = vunpack.c.h.b16 %v2611
    %v3743 = vunpack.c.l.b16 %v2612
    %v3744 = vunpack.c.h.b16 %v2612
    %v3745 = vunpack.c.l.b16 %v2613
    %v3746 = vunpack.c.h.b16 %v2613
    %v3747 = vunpack.c.l.b16 %v2614
    %v3748 = vunpack.c.h.b16 %v2614
    %v3749 = vunpack.c.l.b16 %v2615
    %v3750 = vunpack.c.h.b16 %v2615
    %v3751 = vunpack.c.l.b16 %v2616
    %v3752 = vunpack.c.h.b16 %v2616
    %v3753 = vunpack.c.l.b16 %v2617
    %v3754 = vunpack.c.h.b16 %v2617
    %v3755 = vunpack.c.l.b16 %v2618
    %v3756 = vunpack.c.h.b16 %v2618
    %v3757 = vunpack.c.l.b16 %v2619
    %v3758 = vunpack.c.h.b16 %v2619
    %v3759 = vunpack.c.l.b16 %v2620
    %v3760 = vunpack.c.h.b16 %v2620
    %v3761 = vunpack.c.l.b16 %v2621
    %v3762 = vunpack.c.h.b16 %v2621
    %v3763 = vunpack.c.l.b16 %v2622
    %v3764 = vunpack.c.h.b16 %v2622
    %v3765 = vunpack.c.l.b16 %v2623
    %v3766 = vunpack.c.h.b16 %v2623
    %v3767 = vunpack.c.l.b16 %v2624
    %v3768 = vunpack.c.h.b16 %v2624
    %v3769 = vunpack.c.l.b16 %v2625
    %v3770 = vunpack.c.h.b16 %v2625
    %v3771 = vunpack.c.l.b16 %v2626
    %v3772 = vunpack.c.h.b16 %v2626
    %v3773 = vunpack.c.l.b16 %v2627
    %v3774 = vunpack.c.h.b16 %v2627
    %v3775 = vunpack.c.l.b16 %v2628
    %v3776 = vunpack.c.h.b16 %v2628
    %v3777 = vunpack.c.l.b16 %v2629
    %v3778 = vunpack.c.h.b16 %v2629
    %v3779 = vunpack.c.l.b16 %v2630
    %v3780 = vunpack.c.h.b16 %v2630
    %v3781 = vunpack.c.l.b16 %v2631
    %v3782 = vunpack.c.h.b16 %v2631
    %v3783 = vunpack.c.l.b16 %v2632
    %v3784 = vunpack.c.h.b16 %v2632
    %v3785 = vunpack.c.l.b16 %v2633
    %v3786 = vunpack.c.h.b16 %v2633
    %v3787 = vunpack.c.l.b16 %v2634
    %v3788 = vunpack.c.h.b16 %v2634
    %v3789 = vunpack.c.l.b16 %v2635
    %v3790 = vunpack.c.h.b16 %v2635
    %v3791 = vunpack.c.l.b16 %v2636
    %v3792 = vunpack.c.h.b16 %v2636
    %v3793 = vunpack.c.l.b16 %v2637
    %v3794 = vunpack.c.h.b16 %v2637
    %v3795 = vunpack.c.l.b16 %v2638
    %v3796 = vunpack.c.h.b16 %v2638
    %v3797 = vunpack.c.l.b16 %v2639
    %v3798 = vunpack.c.h.b16 %v2639
    %v3799 = vunpack.c.l.b16 %v2640
    %v3800 = vunpack.c.h.b16 %v2640
    %v3801 = vunpack.c.l.b16 %v2641
    %v3802 = vunpack.c.h.b16 %v2641
    %v3803 = vunpack.c.l.b16 %v2642
    %v3804 = vunpack.c.h.b16 %v2642
    %v3805 = vunpack.c.l.b16 %v2643
    %v3806 = vunpack.c.h.b16 %v2643
    %v3807 = vunpack.c.l.b16 %v2644
    %v3808 = vunpack.c.h.b16 %v2644
    %v3809 = vunpack.c.l.b16 %v2645
    %v3810 = vunpack.c.h.b16 %v2645
    %v3811 = vunpack.c.l.b16 %v2646
    %v3812 = vunpack.c.h.b16 %v2646
    %v3813 = vunpack.c.l.b16 %v2647
    %v3814 = vunpack.c.h.b16 %v2647
    %v3815 = vunpack.c.l.b16 %v2648
    %v3816 = vunpack.c.h.b16 %v2648
    %v3817 = vunpack.c.l.b16 %v2649
    %v3818 = vunpack.c.h.b16 %v2649
    %v3819 = vunpack.c.l.b16 %v2650
    %v3820 = vunpack.c.h.b16 %v2650
    %v3821 = vunpack.c.l.b16 %v2651
    %v3822 = vunpack.c.h.b16 %v2651
    %v3823 = vunpack.c.l.b16 %v2652
    %v3824 = vunpack.c.h.b16 %v2652
    %v3825 = vunpack.c.l.b16 %v2653
    %v3826 = vunpack.c.h.b16 %v2653
    %v3827 = vunpack.c.l.b16 %v2654
    %v3828 = vunpack.c.h.b16 %v2654
    %v3829 = vunpack.c.l.b16 %v2655
    %v3830 = vunpack.c.h.b16 %v2655
    %v3831 = vunpack.c.l.b16 %v2656
    %v3832 = vunpack.c.h.b16 %v2656
    %v3833 = vunpack.c.l.b16 %v2657
    %v3834 = vunpack.c.h.b16 %v2657
    %v3835 = vunpack.c.l.b16 %v2658
    %v3836 = vunpack.c.h.b16 %v2658
    %v3837 = vunpack.c.l.b16 %v2659
    %v3838 = vunpack.c.h.b16 %v2659
    %v3839 = vunpack.c.l.b16 %v2660
    %v3840 = vunpack.c.h.b16 %v2660
    %v3841 = vunpack.c.l.b16 %v2661
    %v3842 = vunpack.c.h.b16 %v2661
    %v3843 = vunpack.c.l.b16 %v2662
    %v3844 = vunpack.c.h.b16 %v2662
    %v3845 = vunpack.c.l.b16 %v2663
    %v3846 = vunpack.c.h.b16 %v2663
    %v3847 = vunpack.c.l.b16 %v2664
    %v3848 = vunpack.c.h.b16 %v2664
    %v3849 = vunpack.c.l.b16 %v2665
    %v3850 = vunpack.c.h.b16 %v2665
    %v3851 = vunpack.c.l.b16 %v2666
    %v3852 = vunpack.c.h.b16 %v2666
    %v3853 = vunpack.c.l.b16 %v2667
    %v3854 = vunpack.c.h.b16 %v2667
    %v3855 = vunpack.c.l.b16 %v2668
    %v3856 = vunpack.c.h.b16 %v2668
    %v3857 = vunpack.c.l.b16 %v2669
    %v3858 = vunpack.c.h.b16 %v2669
    %v3859 = vunpack.c.l.b16 %v2670
    %v3860 = vunpack.c.h.b16 %v2670
    %v3861 = vunpack.c.l.b16 %v2671
    %v3862 = vunpack.c.h.b16 %v2671
    %v3863 = vunpack.c.l.b16 %v2672
    %v3864 = vunpack.c.h.b16 %v2672
    %v3865 = vunpack.c.l.b16 %v2673
    %v3866 = vunpack.c.h.b16 %v2673
    %v3867 = vunpack.c.l.b16 %v2674
    %v3868 = vunpack.c.h.b16 %v2674
    %v3869 = vunpack.c.l.b16 %v2675
    %v3870 = vunpack.c.h.b16 %v2675
    %v3871 = vunpack.c.l.b16 %v2676
    %v3872 = vunpack.c.h.b16 %v2676
    %v3873 = vunpack.c.l.b16 %v2677
    %v3874 = vunpack.c.h.b16 %v2677
    %v3875 = vunpack.c.l.b16 %v2678
    %v3876 = vunpack.c.h.b16 %v2678
    %v3877 = vunpack.c.l.b16 %v2679
    %v3878 = vunpack.c.h.b16 %v2679
    %v3879 = vunpack.c.l.b16 %v2680
    %v3880 = vunpack.c.h.b16 %v2680
    %v3881 = vunpack.c.l.b16 %v2681
    %v3882 = vunpack.c.h.b16 %v2681
    %v3883 = vunpack.c.l.b16 %v2682
    %v3884 = vunpack.c.h.b16 %v2682
    %v3885 = vunpack.c.l.b16 %v2683
    %v3886 = vunpack.c.h.b16 %v2683
    %v3887 = vunpack.c.l.b16 %v2684
    %v3888 = vunpack.c.h.b16 %v2684
    %v3889 = vunpack.c.l.b16 %v2685
    %v3890 = vunpack.c.h.b16 %v2685
    %v3891 = vunpack.c.l.b16 %v2686
    %v3892 = vunpack.c.h.b16 %v2686
    %v3893 = vunpack.c.l.b16 %v2687
    %v3894 = vunpack.c.h.b16 %v2687
    %v3895 = vunpack.c.l.b16 %v2688
    %v3896 = vunpack.c.h.b16 %v2688
    %v3897 = vunpack.c.l.b16 %v2689
    %v3898 = vunpack.c.h.b16 %v2689
    %v3899 = vunpack.c.l.b16 %v2690
    %v3900 = vunpack.c.h.b16 %v2690
    %v3901 = vunpack.c.l.b16 %v2691
    %v3902 = vunpack.c.h.b16 %v2691
    %v3903 = vunpack.c.l.b16 %v2692
    %v3904 = vunpack.c.h.b16 %v2692
    %v3905 = vunpack.c.l.b16 %v2693
    %v3906 = vunpack.c.h.b16 %v2693
    %v3907 = vunpack.c.l.b16 %v2694
    %v3908 = vunpack.c.h.b16 %v2694
    %v3909 = vunpack.c.l.b16 %v2695
    %v3910 = vunpack.c.h.b16 %v2695
    %v3911 = vunpack.c.l.b16 %v2696
    %v3912 = vunpack.c.h.b16 %v2696
    %v3913 = vunpack.c.l.b16 %v2697
    %v3914 = vunpack.c.h.b16 %v2697
    %v3915 = vunpack.c.l.b16 %v2698
    %v3916 = vunpack.c.h.b16 %v2698
    %v3917 = vunpack.c.l.b16 %v2699
    %v3918 = vunpack.c.h.b16 %v2699
    %v3919 = vunpack.c.l.b16 %v2700
    %v3920 = vunpack.c.h.b16 %v2700
    %v3921 = vunpack.c.l.b16 %v2701
    %v3922 = vunpack.c.h.b16 %v2701
    %v3923 = vunpack.c.l.b16 %v2702
    %v3924 = vunpack.c.h.b16 %v2702
    %v3925 = vunpack.c.l.b16 %v2703
    %v3926 = vunpack.c.h.b16 %v2703
    %v3927 = vunpack.c.l.b16 %v2704
    %v3928 = vunpack.c.h.b16 %v2704
    %v3929 = vunpack.c.l.b16 %v2705
    %v3930 = vunpack.c.h.b16 %v2705
    %v3931 = vunpack.c.l.b16 %v2706
    %v3932 = vunpack.c.h.b16 %v2706
    %v3933 = vunpack.c.l.b16 %v2707
    %v3934 = vunpack.c.h.b16 %v2707
    %v3935 = vunpack.c.l.b16 %v2708
    %v3936 = vunpack.c.h.b16 %v2708
    %v3937 = vunpack.c.l.b16 %v2709
    %v3938 = vunpack.c.h.b16 %v2709
    %v3939 = vunpack.c.l.b16 %v2710
    %v3940 = vunpack.c.h.b16 %v2710
    %v3941 = vunpack.c.l.b16 %v2711
    %v3942 = vunpack.c.h.b16 %v2711
    %v3943 = vunpack.c.l.b16 %v2712
    %v3944 = vunpack.c.h.b16 %v2712
    %v3945 = vunpack.c.l.b16 %v2713
    %v3946 = vunpack.c.h.b16 %v2713
    %v3947 = vunpack.c.l.b16 %v2714
    %v3948 = vunpack.c.h.b16 %v2714
    %v3949 = vunpack.c.l.b16 %v2715
    %v3950 = vunpack.c.h.b16 %v2715
    %v3951 = vunpack.c.l.b16 %v2716
    %v3952 = vunpack.c.h.b16 %v2716
    %v3953 = vunpack.c.l.b16 %v2717
    %v3954 = vunpack.c.h.b16 %v2717
    %v3955 = vunpack.c.l.b16 %v2718
    %v3956 = vunpack.c.h.b16 %v2718
    %v3957 = vunpack.c.l.b16 %v2719
    %v3958 = vunpack.c.h.b16 %v2719
    %v3959 = vunpack.c.l.b16 %v2720
    %v3960 = vunpack.c.h.b16 %v2720
    %v3961 = vunpack.c.l.b16 %v2721
    %v3962 = vunpack.c.h.b16 %v2721
    %v3963 = vunpack.c.l.b16 %v2722
    %v3964 = vunpack.c.h.b16 %v2722
    %v3965 = vunpack.c.l.b16 %v2723
    %v3966 = vunpack.c.h.b16 %v2723
    %v3967 = vunpack.c.l.b16 %v2724
    %v3968 = vunpack.c.h.b16 %v2724
    %v3969 = vunpack.c.l.b16 %v2725
    %v3970 = vunpack.c.h.b16 %v2725
    %v3971 = vunpack.c.l.b16 %v2726
    %v3972 = vunpack.c.h.b16 %v2726
    %v3973 = vunpack.c.l.b16 %v2727
    %v3974 = vunpack.c.h.b16 %v2727
    %v3975 = vunpack.c.l.b16 %v2728
    %v3976 = vunpack.c.h.b16 %v2728
    %v3977 = vunpack.c.l.b16 %v2729
    %v3978 = vunpack.c.h.b16 %v2729
    %v3979 = vunpack.c.l.b16 %v2730
    %v3980 = vunpack.c.h.b16 %v2730
    %v3981 = vunpack.c.l.b16 %v2731
    %v3982 = vunpack.c.h.b16 %v2731
    %v3983 = vunpack.c.l.b16 %v2732
    %v3984 = vunpack.c.h.b16 %v2732
    %v3985 = vunpack.c.l.b16 %v2733
    %v3986 = vunpack.c.h.b16 %v2733
    %v3987 = vunpack.c.l.b16 %v2734
    %v3988 = vunpack.c.h.b16 %v2734
    %v3989 = vunpack.c.l.b16 %v2735
    %v3990 = vunpack.c.h.b16 %v2735
    %v3991 = vunpack.c.l.b16 %v2736
    %v3992 = vunpack.c.h.b16 %v2736
    %v3993 = vunpack.c.l.b16 %v2737
    %v3994 = vunpack.c.h.b16 %v2737
    %v3995 = vunpack.c.l.b16 %v2738
    %v3996 = vunpack.c.h.b16 %v2738
    %v3997 = vunpack.c.l.b16 %v2739
    %v3998 = vunpack.c.h.b16 %v2739
    %v3999 = vunpack.c.l.b16 %v2740
    %v4000 = vunpack.c.h.b16 %v2740
    %v4001 = vunpack.c.l.b16 %v2741
    %v4002 = vunpack.c.h.b16 %v2741
    %v4003 = vunpack.c.l.b16 %v2742
    %v4004 = vunpack.c.h.b16 %v2742
    %v4005 = vunpack.c.l.b16 %v2743
    %v4006 = vunpack.c.h.b16 %v2743
    %v4007 = vunpack.c.l.b16 %v2744
    %v4008 = vunpack.c.h.b16 %v2744
    %v4009 = vunpack.c.l.b16 %v2745
    %v4010 = vunpack.c.h.b16 %v2745
    %v4011 = vunpack.c.l.b16 %v2746
    %v4012 = vunpack.c.h.b16 %v2746
    %v4013 = vunpack.c.l.b16 %v2747
    %v4014 = vunpack.c.h.b16 %v2747
    %v4015 = vunpack.c.l.b16 %v2748
    %v4016 = vunpack.c.h.b16 %v2748
    %v4017 = vunpack.c.l.b16 %v2749
    %v4018 = vunpack.c.h.b16 %v2749
    %v4019 = vunpack.c.l.b16 %v2750
    %v4020 = vunpack.c.h.b16 %v2750
    %v4021 = vunpack.c.l.b16 %v2751
    %v4022 = vunpack.c.h.b16 %v2751
    %v4023 = vunpack.c.l.b16 %v2752
    %v4024 = vunpack.c.h.b16 %v2752
    %v4025 = vunpack.c.l.b16 %v2753
    %v4026 = vunpack.c.h.b16 %v2753
    %v4027 = vunpack.c.l.b16 %v2754
    %v4028 = vunpack.c.h.b16 %v2754
    %v4029 = vunpack.c.l.b16 %v2755
    %v4030 = vunpack.c.h.b16 %v2755
    %v4031 = vunpack.c.l.b16 %v2756
    %v4032 = vunpack.c.h.b16 %v2756
    %v4033 = vunpack.c.l.b16 %v2757
    %v4034 = vunpack.c.h.b16 %v2757
    %v4035 = vunpack.c.l.b16 %v2758
    %v4036 = vunpack.c.h.b16 %v2758
    %v4037 = vunpack.c.l.b16 %v2759
    %v4038 = vunpack.c.h.b16 %v2759
    %v4039 = vunpack.c.l.b16 %v2760
    %v4040 = vunpack.c.h.b16 %v2760
    %v4041 = vunpack.c.l.b16 %v2761
    %v4042 = vunpack.c.h.b16 %v2761
    %v4043 = vunpack.c.l.b16 %v2762
    %v4044 = vunpack.c.h.b16 %v2762
    %v4045 = vunpack.c.l.b16 %v2763
    %v4046 = vunpack.c.h.b16 %v2763
    %v4047 = vunpack.c.l.b16 %v2764
    %v4048 = vunpack.c.h.b16 %v2764
    %v4049 = vunpack.c.l.b16 %v2765
    %v4050 = vunpack.c.h.b16 %v2765
    %v4051 = vunpack.c.l.b16 %v2766
    %v4052 = vunpack.c.h.b16 %v2766
    %v4053 = vunpack.c.l.b16 %v2767
    %v4054 = vunpack.c.h.b16 %v2767
    %v4055 = vunpack.c.l.b16 %v2768
    %v4056 = vunpack.c.h.b16 %v2768
    %v4057 = vunpack.c.l.b16 %v2769
    %v4058 = vunpack.c.h.b16 %v2769
    %v4059 = vunpack.c.l.b16 %v2770
    %v4060 = vunpack.c.h.b16 %v2770
    %v4061 = vunpack.c.l.b16 %v2771
    %v4062 = vunpack.c.h.b16 %v2771
    %v4063 = vunpack.c.l.b16 %v2772
    %v4064 = vunpack.c.h.b16 %v2772
    %v4065 = vunpack.c.l.b16 %v2773
    %v4066 = vunpack.c.h.b16 %v2773
    %v4067 = vunpack.c.l.b16 %v2774
    %v4068 = vunpack.c.h.b16 %v2774
    %v4069 = vunpack.c.l.b16 %v2775
    %v4070 = vunpack.c.h.b16 %v2775
    %v4071 = vunpack.c.l.b16 %v2776
    %v4072 = vunpack.c.h.b16 %v2776
    %v4073 = vunpack.c.l.b16 %v2777
    %v4074 = vunpack.c.h.b16 %v2777
    %v4075 = vunpack.c.l.b16 %v2778
    %v4076 = vunpack.c.h.b16 %v2778
    %v4077 = vunpack.c.l.b16 %v2779
    %v4078 = vunpack.c.h.b16 %v2779
    %v4079 = vunpack.c.l.b16 %v2780
    %v4080 = vunpack.c.h.b16 %v2780
    %v4081 = vunpack.c.l.b16 %v2781
    %v4082 = vunpack.c.h.b16 %v2781
    %v4083 = vunpack.c.l.b16 %v2782
    %v4084 = vunpack.c.h.b16 %v2782
    %v4085 = vunpack.c.l.b16 %v2783
    %v4086 = vunpack.c.h.b16 %v2783
    %v4087 = vunpack.c.l.b16 %v2784
    %v4088 = vunpack.c.h.b16 %v2784
    %v4089 = vunpack.c.l.b16 %v2785
    %v4090 = vunpack.c.h.b16 %v2785
    %v4091 = vunpack.c.l.b16 %v2786
    %v4092 = vunpack.c.h.b16 %v2786
    %v4093 = vunpack.c.l.b16 %v2787
    %v4094 = vunpack.c.h.b16 %v2787
    %v4095 = vunpack.c.l.b16 %v2788
    %v4096 = vunpack.c.h.b16 %v2788
    %v4097 = vunpack.c.l.b16 %v2789
    %v4098 = vunpack.c.h.b16 %v2789
    %v4099 = vunpack.c.l.b16 %v2790
    %v4100 = vunpack.c.h.b16 %v2790
    %v4101 = vunpack.c.l.b16 %v2791
    %v4102 = vunpack.c.h.b16 %v2791
    %v4103 = vunpack.c.l.b16 %v2792
    %v4104 = vunpack.c.h.b16 %v2792
    %v4105 = vunpack.c.l.b16 %v2793
    %v4106 = vunpack.c.h.b16 %v2793
    %v4107 = vunpack.c.l.b16 %v2794
    %v4108 = vunpack.c.h.b16 %v2794
    %v4109 = vunpack.c.l.b16 %v2795
    %v4110 = vunpack.c.h.b16 %v2795
    %v4111 = vunpack.c.l.b16 %v2796
    %v4112 = vunpack.c.h.b16 %v2796
    %v4113 = vunpack.c.l.b16 %v2797
    %v4114 = vunpack.c.h.b16 %v2797
    %v4115 = vunpack.c.l.b16 %v2798
    %v4116 = vunpack.c.h.b16 %v2798
    %v4117 = vunpack.c.l.b16 %v2799
    %v4118 = vunpack.c.h.b16 %v2799
    %v4119 = vunpack.c.l.b16 %v2800
    %v4120 = vunpack.c.h.b16 %v2800
    %v4121 = vunpack.c.l.b16 %v2801
    %v4122 = vunpack.c.h.b16 %v2801
    %v4123 = vunpack.c.l.b16 %v2802
    %v4124 = vunpack.c.h.b16 %v2802
    %v4125 = vunpack.c.l.b16 %v2803
    %v4126 = vunpack.c.h.b16 %v2803
    %v4127 = vunpack.c.l.b16 %v2804
    %v4128 = vunpack.c.h.b16 %v2804
    %v4129 = vunpack.c.l.b16 %v2805
    %v4130 = vunpack.c.h.b16 %v2805
    %v4131 = vunpack.c.l.b16 %v2806
    %v4132 = vunpack.c.h.b16 %v2806
    %v4133 = vunpack.c.l.b16 %v2807
    %v4134 = vunpack.c.h.b16 %v2807
    %v4135 = vunpack.c.l.b16 %v2808
    %v4136 = vunpack.c.h.b16 %v2808
    %v4137 = vunpack.c.l.b16 %v2809
    %v4138 = vunpack.c.h.b16 %v2809
    %v4139 = vunpack.c.l.b16 %v2810
    %v4140 = vunpack.c.h.b16 %v2810
    %v4141 = vunpack.c.l.b16 %v2811
    %v4142 = vunpack.c.h.b16 %v2811
    %v4143 = vunpack.c.l.b16 %v2812
    %v4144 = vunpack.c.h.b16 %v2812
    %v4145 = vunpack.c.l.b16 %v2813
    %v4146 = vunpack.c.h.b16 %v2813
    %v4147 = vunpack.c.l.b16 %v2814
    %v4148 = vunpack.c.h.b16 %v2814
    %v4149 = vunpack.c.l.b16 %v2815
    %v4150 = vunpack.c.h.b16 %v2815
    %v4151 = vunpack.c.l.b16 %v2816
    %v4152 = vunpack.c.h.b16 %v2816
    %v4153 = vunpack.c.l.b16 %v2817
    %v4154 = vunpack.c.h.b16 %v2817
    %v4155 = vunpack.c.l.b16 %v2818
    %v4156 = vunpack.c.h.b16 %v2818
    %v4157 = vunpack.c.l.b16 %v2819
    %v4158 = vunpack.c.h.b16 %v2819
    %v4159 = vunpack.c.l.b16 %v2820
    %v4160 = vunpack.c.h.b16 %v2820
    %v4161 = vunpack.c.l.b16 %v2821
    %v4162 = vunpack.c.h.b16 %v2821
    %v4163 = vunpack.c.l.b16 %v2822
    %v4164 = vunpack.c.h.b16 %v2822
    %v4165 = vunpack.c.l.b16 %v2823
    %v4166 = vunpack.c.h.b16 %v2823
    %v4167 = vunpack.c.l.b16 %v2824
    %v4168 = vunpack.c.h.b16 %v2824
    %v4169 = vunpack.c.l.b16 %v2825
    %v4170 = vunpack.c.h.b16 %v2825
    %v4171 = vunpack.c.l.b16 %v2826
    %v4172 = vunpack.c.h.b16 %v2826
    %v4173 = vunpack.c.l.b16 %v2827
    %v4174 = vunpack.c.h.b16 %v2827
    %v4175 = vunpack.c.l.b16 %v2828
    %v4176 = vunpack.c.h.b16 %v2828
    %v4177 = vunpack.c.l.b16 %v2829
    %v4178 = vunpack.c.h.b16 %v2829
    %v4179 = vunpack.c.l.b16 %v2830
    %v4180 = vunpack.c.h.b16 %v2830
    %v4181 = vunpack.c.l.b16 %v2831
    %v4182 = vunpack.c.h.b16 %v2831
    %v4183 = vunpack.c.l.b16 %v2832
    %v4184 = vunpack.c.h.b16 %v2832
    %v4185 = vunpack.c.l.b16 %v2833
    %v4186 = vunpack.c.h.b16 %v2833
    %v4187 = vunpack.c.l.b16 %v2834
    %v4188 = vunpack.c.h.b16 %v2834
    %v4189 = vunpack.c.l.b16 %v2835
    %v4190 = vunpack.c.h.b16 %v2835
    %v4191 = vunpack.c.l.b16 %v2836
    %v4192 = vunpack.c.h.b16 %v2836
    %v4193 = vunpack.c.l.b16 %v2837
    %v4194 = vunpack.c.h.b16 %v2837
    %v4195 = vunpack.c.l.b16 %v2838
    %v4196 = vunpack.c.h.b16 %v2838
    %v4197 = vunpack.c.l.b16 %v2839
    %v4198 = vunpack.c.h.b16 %v2839
    %v4199 = vunpack.c.l.b16 %v2840
    %v4200 = vunpack.c.h.b16 %v2840
    %v4201 = vunpack.c.l.b16 %v2841
    %v4202 = vunpack.c.h.b16 %v2841
    %v4203 = vunpack.c.l.b16 %v2842
    %v4204 = vunpack.c.h.b16 %v2842
    %v4205 = vunpack.c.l.b16 %v2843
    %v4206 = vunpack.c.h.b16 %v2843
    %v4207 = vunpack.c.l.b16 %v2844
    %v4208 = vunpack.c.h.b16 %v2844
    %v4209 = vunpack.c.l.b16 %v2845
    %v4210 = vunpack.c.h.b16 %v2845
    %v4211 = vunpack.c.l.b16 %v2846
    %v4212 = vunpack.c.h.b16 %v2846
    %v4213 = vunpack.c.l.b16 %v2847
    %v4214 = vunpack.c.h.b16 %v2847
    %v4215 = vunpack.c.l.b16 %v2848
    %v4216 = vunpack.c.h.b16 %v2848
    %v4217 = vunpack.c.l.b16 %v2849
    %v4218 = vunpack.c.h.b16 %v2849
    %v4219 = vunpack.c.l.b16 %v2850
    %v4220 = vunpack.c.h.b16 %v2850
    %v4221 = vunpack.c.l.b16 %v2851
    %v4222 = vunpack.c.h.b16 %v2851
    %v4223 = vunpack.c.l.b16 %v2852
    %v4224 = vunpack.c.h.b16 %v2852
    %v4225 = vunpack.c.l.b16 %v2853
    %v4226 = vunpack.c.h.b16 %v2853
    %v4227 = vunpack.c.l.b16 %v2854
    %v4228 = vunpack.c.h.b16 %v2854
    %v4229 = vunpack.c.l.b16 %v2855
    %v4230 = vunpack.c.h.b16 %v2855
    %v4231 = vunpack.c.l.b16 %v2856
    %v4232 = vunpack.c.h.b16 %v2856
    %v4233 = vunpack.c.l.b16 %v2857
    %v4234 = vunpack.c.h.b16 %v2857
    %v4235 = vunpack.c.l.b16 %v2858
    %v4236 = vunpack.c.h.b16 %v2858
    %v4237 = vunpack.c.l.b16 %v2859
    %v4238 = vunpack.c.h.b16 %v2859
    %v4239 = vunpack.c.l.b16 %v2860
    %v4240 = vunpack.c.h.b16 %v2860
    %v4241 = vunpack.c.l.b16 %v2861
    %v4242 = vunpack.c.h.b16 %v2861
    %v4243 = vunpack.c.l.b16 %v2862
    %v4244 = vunpack.c.h.b16 %v2862
    %v4245 = vunpack.c.l.b16 %v2863
    %v4246 = vunpack.c.h.b16 %v2863
    %v4247 = vunpack.c.l.b16 %v2864
    %v4248 = vunpack.c.h.b16 %v2864
    %v4249 = vunpack.c.l.b16 %v2865
    %v4250 = vunpack.c.h.b16 %v2865
    %v4251 = vunpack.c.l.b16 %v2866
    %v4252 = vunpack.c.h.b16 %v2866
    %v4253 = vunpack.c.l.b16 %v2867
    %v4254 = vunpack.c.h.b16 %v2867
    %v4255 = vunpack.c.l.b16 %v2868
    %v4256 = vunpack.c.h.b16 %v2868
    %v4257 = vunpack.c.l.b16 %v2869
    %v4258 = vunpack.c.h.b16 %v2869
    %v4259 = vunpack.c.l.b16 %v2870
    %v4260 = vunpack.c.h.b16 %v2870
    %v4261 = vunpack.c.l.b16 %v2871
    %v4262 = vunpack.c.h.b16 %v2871
    %v4263 = vunpack.c.l.b16 %v2872
    %v4264 = vunpack.c.h.b16 %v2872
    %v4265 = vunpack.c.l.b16 %v2873
    %v4266 = vunpack.c.h.b16 %v2873
    %v4267 = vunpack.c.l.b16 %v2874
    %v4268 = vunpack.c.h.b16 %v2874
    %v4269 = vunpack.c.l.b16 %v2875
    %v4270 = vunpack.c.h.b16 %v2875
    %v4271 = vunpack.c.l.b16 %v2876
    %v4272 = vunpack.c.h.b16 %v2876
    %v4273 = vunpack.c.l.b16 %v2877
    %v4274 = vunpack.c.h.b16 %v2877
    %v4275 = vunpack.c.l.b16 %v2878
    %v4276 = vunpack.c.h.b16 %v2878
    %v4277 = vunpack.c.l.b16 %v2879
    %v4278 = vunpack.c.h.b16 %v2879
    %v4279 = vunpack.c.l.b16 %v2880
    %v4280 = vunpack.c.h.b16 %v2880
    %v4281 = vunpack.c.l.b16 %v2881
    %v4282 = vunpack.c.h.b16 %v2881
    %v4283 = vunpack.c.l.b16 %v2882
    %v4284 = vunpack.c.h.b16 %v2882
    %v4285 = vunpack.c.l.b16 %v2883
    %v4286 = vunpack.c.h.b16 %v2883
    %v4287 = vunpack.c.l.b16 %v2884
    %v4288 = vunpack.c.h.b16 %v2884
    %v4289 = vunpack.c.l.b16 %v2885
    %v4290 = vunpack.c.h.b16 %v2885
    %v4291 = vunpack.c.l.b16 %v2886
    %v4292 = vunpack.c.h.b16 %v2886
    %v4293 = vunpack.c.l.b16 %v2887
    %v4294 = vunpack.c.h.b16 %v2887
    %v4295 = vunpack.c.l.b16 %v2888
    %v4296 = vunpack.c.h.b16 %v2888
    %v4297 = vunpack.c.l.b16 %v2889
    %v4298 = vunpack.c.h.b16 %v2889
    %v4299 = vunpack.c.l.b16 %v2890
    %v4300 = vunpack.c.h.b16 %v2890
    %v4301 = vunpack.c.l.b16 %v2891
    %v4302 = vunpack.c.h.b16 %v2891
    %v4303 = vunpack.c.l.b16 %v2892
    %v4304 = vunpack.c.h.b16 %v2892
    %v4305 = vunpack.c.l.b16 %v2893
    %v4306 = vunpack.c.h.b16 %v2893
    %v4307 = vunpack.c.l.b16 %v2894
    %v4308 = vunpack.c.h.b16 %v2894
    %v4309 = vunpack.c.l.b16 %v2895
    %v4310 = vunpack.c.h.b16 %v2895
    %v4311 = vunpack.c.l.b16 %v2896
    %v4312 = vunpack.c.h.b16 %v2896
    %v4313 = vunpack.c.l.b16 %v2897
    %v4314 = vunpack.c.h.b16 %v2897
    %v4315 = vunpack.c.l.b16 %v2898
    %v4316 = vunpack.c.h.b16 %v2898
    %v4317 = vunpack.c.l.b16 %v2899
    %v4318 = vunpack.c.h.b16 %v2899
    %v4319 = vunpack.c.l.b16 %v2900
    %v4320 = vunpack.c.h.b16 %v2900
    %v4321 = vunpack.c.l.b16 %v2901
    %v4322 = vunpack.c.h.b16 %v2901
    %v4323 = vunpack.c.l.b16 %v2902
    %v4324 = vunpack.c.h.b16 %v2902
    %v4325 = vunpack.c.l.b16 %v2903
    %v4326 = vunpack.c.h.b16 %v2903
    %v4327 = vunpack.c.l.b16 %v2904
    %v4328 = vunpack.c.h.b16 %v2904
    %v4329 = vunpack.c.l.b16 %v2905
    %v4330 = vunpack.c.h.b16 %v2905
    %v4331 = vunpack.c.l.b16 %v2906
    %v4332 = vunpack.c.h.b16 %v2906
    %v4333 = vunpack.c.l.b16 %v2907
    %v4334 = vunpack.c.h.b16 %v2907
    %v4335 = vunpack.c.l.b16 %v2908
    %v4336 = vunpack.c.h.b16 %v2908
    %v4337 = vunpack.c.l.b16 %v2909
    %v4338 = vunpack.c.h.b16 %v2909
    %v4339 = vunpack.c.l.b16 %v2910
    %v4340 = vunpack.c.h.b16 %v2910
    %v4341 = vunpack.c.l.b16 %v2911
    %v4342 = vunpack.c.h.b16 %v2911
    %v4343 = vunpack.c.l.b16 %v2912
    %v4344 = vunpack.c.h.b16 %v2912
    %v4345 = vunpack.c.l.b16 %v2913
    %v4346 = vunpack.c.h.b16 %v2913
    %v4347 = vunpack.c.l.b16 %v2914
    %v4348 = vunpack.c.h.b16 %v2914
    %v4349 = vunpack.c.l.b16 %v2915
    %v4350 = vunpack.c.h.b16 %v2915
    %v4351 = vunpack.c.l.b16 %v2916
    %v4352 = vunpack.c.h.b16 %v2916
    %v4353 = vunpack.c.l.b16 %v2917
    %v4354 = vunpack.c.h.b16 %v2917
    %v4355 = vunpack.c.l.b16 %v2918
    %v4356 = vunpack.c.h.b16 %v2918
    %v4357 = vunpack.c.l.b16 %v2919
    %v4358 = vunpack.c.h.b16 %v2919
    %v4359 = vunpack.c.l.b16 %v2920
    %v4360 = vunpack.c.h.b16 %v2920
    %v4361 = vunpack.c.l.b16 %v2921
    %v4362 = vunpack.c.h.b16 %v2921
    %v4363 = vunpack.c.l.b16 %v2922
    %v4364 = vunpack.c.h.b16 %v2922
    %v4365 = vunpack.c.l.b16 %v2923
    %v4366 = vunpack.c.h.b16 %v2923
    %v4367 = vunpack.c.l.b16 %v2924
    %v4368 = vunpack.c.h.b16 %v2924
    %v4369 = vunpack.c.l.b16 %v2925
    %v4370 = vunpack.c.h.b16 %v2925
    %v4371 = vunpack.c.l.b16 %v2926
    %v4372 = vunpack.c.h.b16 %v2926
    %v4373 = vunpack.c.l.b16 %v2927
    %v4374 = vunpack.c.h.b16 %v2927
    %v4375 = vunpack.c.l.b16 %v2928
    %v4376 = vunpack.c.h.b16 %v2928
    %v4377 = vunpack.c.l.b16 %v2929
    %v4378 = vunpack.c.h.b16 %v2929
    %v4379 = vunpack.c.l.b16 %v2930
    %v4380 = vunpack.c.h.b16 %v2930
    %v4381 = vunpack.c.l.b16 %v2931
    %v4382 = vunpack.c.h.b16 %v2931
    %v4383 = vunpack.c.l.b16 %v2932
    %v4384 = vunpack.c.h.b16 %v2932
    %v4385 = vunpack.c.l.b16 %v2933
    %v4386 = vunpack.c.h.b16 %v2933
    %v4387 = vunpack.c.l.b16 %v2934
    %v4388 = vunpack.c.h.b16 %v2934
    %v4389 = vunpack.c.l.b16 %v2935
    %v4390 = vunpack.c.h.b16 %v2935
    %v4391 = vunpack.c.l.b16 %v2936
    %v4392 = vunpack.c.h.b16 %v2936
    %v4393 = vunpack.c.l.b16 %v2937
    %v4394 = vunpack.c.h.b16 %v2937
    %v4395 = vunpack.c.l.b16 %v2938
    %v4396 = vunpack.c.h.b16 %v2938
    %v4397 = vunpack.c.l.b16 %v2939
    %v4398 = vunpack.c.h.b16 %v2939
    %v4399 = vunpack.c.l.b16 %v2940
    %v4400 = vunpack.c.h.b16 %v2940
    %v4401 = vunpack.c.l.b16 %v2941
    %v4402 = vunpack.c.h.b16 %v2941
    %v4403 = vunpack.c.l.b16 %v2942
    %v4404 = vunpack.c.h.b16 %v2942
    %v4405 = vunpack.c.l.b16 %v2943
    %v4406 = vunpack.c.h.b16 %v2943
    %v4407 = vunpack.c.l.b16 %v2944
    %v4408 = vunpack.c.h.b16 %v2944
    %v4409 = vunpack.c.l.b16 %v2945
    %v4410 = vunpack.c.h.b16 %v2945
    %v4411 = vunpack.c.l.b16 %v2946
    %v4412 = vunpack.c.h.b16 %v2946
    %v4413 = vunpack.c.l.b16 %v2947
    %v4414 = vunpack.c.h.b16 %v2947
    %v4415 = vunpack.c.l.b16 %v2948
    %v4416 = vunpack.c.h.b16 %v2948
    %v4417 = vunpack.c.l.b16 %v2949
    %v4418 = vunpack.c.h.b16 %v2949
    %v4419 = vunpack.c.l.b16 %v2950
    %v4420 = vunpack.c.h.b16 %v2950
    %v4421 = vunpack.c.l.b16 %v2951
    %v4422 = vunpack.c.h.b16 %v2951
    %v4423 = vunpack.c.l.b16 %v2952
    %v4424 = vunpack.c.h.b16 %v2952
    %v4425 = vunpack.c.l.b16 %v2953
    %v4426 = vunpack.c.h.b16 %v2953
    %v4427 = vunpack.c.l.b16 %v2954
    %v4428 = vunpack.c.h.b16 %v2954
    %v4429 = vunpack.c.l.b16 %v2955
    %v4430 = vunpack.c.h.b16 %v2955
    %v4431 = vunpack.c.l.b16 %v2956
    %v4432 = vunpack.c.h.b16 %v2956
    %v4433 = vunpack.c.l.b16 %v2957
    %v4434 = vunpack.c.h.b16 %v2957
    %v4435 = vunpack.c.l.b16 %v2958
    %v4436 = vunpack.c.h.b16 %v2958
    %v4437 = vunpack.c.l.b16 %v2959
    %v4438 = vunpack.c.h.b16 %v2959
    %v4439 = vunpack.c.l.b16 %v2960
    %v4440 = vunpack.c.h.b16 %v2960
    %v4441 = vunpack.c.l.b16 %v2961
    %v4442 = vunpack.c.h.b16 %v2961
    %v4443 = vunpack.c.l.b16 %v2962
    %v4444 = vunpack.c.h.b16 %v2962
    %v4445 = vunpack.c.l.b16 %v2963
    %v4446 = vunpack.c.h.b16 %v2963
    %v4447 = vunpack.c.l.b16 %v2964
    %v4448 = vunpack.c.h.b16 %v2964
    %v4449 = vunpack.c.l.b16 %v2965
    %v4450 = vunpack.c.h.b16 %v2965
    %v4451 = vunpack.c.l.b16 %v2966
    %v4452 = vunpack.c.h.b16 %v2966
    %v4453 = vunpack.c.l.b16 %v2967
    %v4454 = vunpack.c.h.b16 %v2967
    %v4455 = vunpack.c.l.b16 %v2968
    %v4456 = vunpack.c.h.b16 %v2968
    %v4457 = vunpack.c.l.b16 %v2969
    %v4458 = vunpack.c.h.b16 %v2969
    %v4459 = vunpack.c.l.b16 %v2970
    %v4460 = vunpack.c.h.b16 %v2970
    %v4461 = vunpack.c.l.b16 %v2971
    %v4462 = vunpack.c.h.b16 %v2971
    %v4463 = vunpack.c.l.b16 %v2972
    %v4464 = vunpack.c.h.b16 %v2972
    %v4465 = vunpack.c.l.b16 %v2973
    %v4466 = vunpack.c.h.b16 %v2973
    %v4467 = vunpack.c.l.b16 %v2974
    %v4468 = vunpack.c.h.b16 %v2974
    %v4469 = vunpack.c.l.b16 %v2975
    %v4470 = vunpack.c.h.b16 %v2975
    %v4471 = vunpack.c.l.b16 %v2976
    %v4472 = vunpack.c.h.b16 %v2976
    %v4473 = vunpack.c.l.b16 %v2977
    %v4474 = vunpack.c.h.b16 %v2977
    %v4475 = vunpack.c.l.b16 %v2978
    %v4476 = vunpack.c.h.b16 %v2978
    %v4477 = vunpack.c.l.b16 %v2979
    %v4478 = vunpack.c.h.b16 %v2979
    %v4479 = vunpack.c.l.b16 %v2980
    %v4480 = vunpack.c.h.b16 %v2980
    %v4481 = vunpack.c.l.b16 %v2981
    %v4482 = vunpack.c.h.b16 %v2981
    %v4483 = vunpack.c.l.b16 %v2982
    %v4484 = vunpack.c.h.b16 %v2982
    %v4485 = vunpack.c.l.b16 %v2983
    %v4486 = vunpack.c.h.b16 %v2983
    %v4487 = vunpack.c.l.b16 %v2984
    %v4488 = vunpack.c.h.b16 %v2984
    %v4489 = vunpack.c.l.b16 %v2985
    %v4490 = vunpack.c.h.b16 %v2985
    %v4491 = vunpack.c.l.b16 %v2986
    %v4492 = vunpack.c.h.b16 %v2986
    %v4493 = vunpack.c.l.b16 %v2987
    %v4494 = vunpack.c.h.b16 %v2987
    %v4495 = vunpack.c.l.b16 %v2988
    %v4496 = vunpack.c.h.b16 %v2988
    %v4497 = vunpack.c.l.b16 %v2989
    %v4498 = vunpack.c.h.b16 %v2989
    %v4499 = vunpack.c.l.b16 %v2990
    %v4500 = vunpack.c.h.b16 %v2990
    %v4501 = vunpack.c.l.b16 %v2991
    %v4502 = vunpack.c.h.b16 %v2991
    %v4503 = vunpack.c.l.b16 %v2992
    %v4504 = vunpack.c.h.b16 %v2992
    %v4505 = vunpack.c.l.b16 %v2993
    %v4506 = vunpack.c.h.b16 %v2993
    %v4507 = vunpack.c.l.b16 %v2994
    %v4508 = vunpack.c.h.b16 %v2994
    %v4509 = vunpack.c.l.b16 %v2995
    %v4510 = vunpack.c.h.b16 %v2995
    %v4511 = vunpack.c.l.b16 %v2996
    %v4512 = vunpack.c.h.b16 %v2996
    %v4513 = vunpack.c.l.b16 %v2997
    %v4514 = vunpack.c.h.b16 %v2997
    %v4515 = vunpack.c.l.b16 %v2998
    %v4516 = vunpack.c.h.b16 %v2998
    %v4517 = vunpack.c.l.b16 %v2999
    %v4518 = vunpack.c.h.b16 %v2999
    %v4519 = vunpack.c.l.b16 %v3000
    %v4520 = vunpack.c.h.b16 %v3000
    %v4521 = vunpack.c.l.b16 %v3001
    %v4522 = vunpack.c.h.b16 %v3001
    %v4523 = vunpack.c.l.b16 %v3002
    %v4524 = vunpack.c.h.b16 %v3002
    %v4525 = vunpack.c.l.b16 %v3003
    %v4526 = vunpack.c.h.b16 %v3003
    %v4527 = vunpack.c.l.b16 %v3004
    %v4528 = vunpack.c.h.b16 %v3004
    %v4529 = vunpack.c.l.b16 %v3005
    %v4530 = vunpack.c.h.b16 %v3005
    %v4531 = vunpack.c.l.b16 %v3006
    %v4532 = vunpack.c.h.b16 %v3006
    %v4533 = vunpack.c.l.b16 %v3007
    %v4534 = vunpack.c.h.b16 %v3007
    %v4535 = vunpack.c.l.b16 %v3008
    %v4536 = vunpack.c.h.b16 %v3008
    %v4537 = vunpack.c.l.b16 %v3009
    %v4538 = vunpack.c.h.b16 %v3009
    %v4539 = vunpack.c.l.b16 %v3010
    %v4540 = vunpack.c.h.b16 %v3010
    %v4541 = vunpack.c.l.b16 %v3011
    %v4542 = vunpack.c.h.b16 %v3011
    %v4543 = vunpack.c.l.b16 %v3012
    %v4544 = vunpack.c.h.b16 %v3012
    %v4545 = vunpack.c.l.b16 %v3013
    %v4546 = vunpack.c.h.b16 %v3013
    %v4547 = vunpack.c.l.b16 %v3014
    %v4548 = vunpack.c.h.b16 %v3014
    %v4549 = vunpack.c.l.b16 %v3015
    %v4550 = vunpack.c.h.b16 %v3015
    %v4551 = vunpack.c.l.b16 %v3016
    %v4552 = vunpack.c.h.b16 %v3016
    %v4553 = vunpack.c.l.b16 %v3017
    %v4554 = vunpack.c.h.b16 %v3017
    %v4555 = vunpack.c.l.b16 %v3018
    %v4556 = vunpack.c.h.b16 %v3018
    %v4557 = vunpack.c.l.b16 %v3019
    %v4558 = vunpack.c.h.b16 %v3019
    %v4559 = vunpack.c.l.b16 %v3020
    %v4560 = vunpack.c.h.b16 %v3020
    %v4561 = vunpack.c.l.b16 %v3021
    %v4562 = vunpack.c.h.b16 %v3021
    %v4563 = vunpack.c.l.b16 %v3022
    %v4564 = vunpack.c.h.b16 %v3022
    %v4565 = vunpack.c.l.b16 %v3023
    %v4566 = vunpack.c.h.b16 %v3023
    %v4567 = vunpack.c.l.b16 %v3024
    %v4568 = vunpack.c.h.b16 %v3024
    %v4569 = vunpack.c.l.b16 %v3025
    %v4570 = vunpack.c.h.b16 %v3025
    %v4571 = vunpack.c.l.b16 %v3026
    %v4572 = vunpack.c.h.b16 %v3026
    %v4573 = vunpack.c.l.b16 %v3027
    %v4574 = vunpack.c.h.b16 %v3027
    %v4575 = vunpack.c.l.b16 %v3028
    %v4576 = vunpack.c.h.b16 %v3028
    %v4577 = vunpack.c.l.b16 %v3029
    %v4578 = vunpack.c.h.b16 %v3029
    %v4579 = vunpack.c.l.b16 %v3030
    %v4580 = vunpack.c.h.b16 %v3030
    %v4581 = vunpack.c.l.b16 %v3031
    %v4582 = vunpack.c.h.b16 %v3031
    %v4583 = vunpack.c.l.b16 %v3032
    %v4584 = vunpack.c.h.b16 %v3032
    %v4585 = vunpack.c.l.b16 %v3033
    %v4586 = vunpack.c.h.b16 %v3033
    %v4587 = vunpack.c.l.b16 %v3034
    %v4588 = vunpack.c.h.b16 %v3034
    %v4589 = vunpack.c.l.b16 %v3035
    %v4590 = vunpack.c.h.b16 %v3035
    %v4591 = vunpack.c.l.b16 %v3036
    %v4592 = vunpack.c.h.b16 %v3036
    %v4593 = vunpack.c.l.b16 %v3037
    %v4594 = vunpack.c.h.b16 %v3037
    %v4595 = vunpack.c.l.b16 %v3038
    %v4596 = vunpack.c.h.b16 %v3038
    %v4597 = vunpack.c.l.b16 %v3039
    %v4598 = vunpack.c.h.b16 %v3039
    %v4599 = vunpack.c.l.b16 %v3040
    %v4600 = vunpack.c.h.b16 %v3040
    %v4601 = vunpack.c.l.b16 %v3041
    %v4602 = vunpack.c.h.b16 %v3041
    %v4603 = vunpack.c.l.b16 %v3042
    %v4604 = vunpack.c.h.b16 %v3042
    %v4605 = vunpack.c.l.b16 %v3043
    %v4606 = vunpack.c.h.b16 %v3043
    %v4607 = vunpack.c.l.b16 %v3044
    %v4608 = vunpack.c.h.b16 %v3044
    %v4609 = vunpack.c.l.b16 %v3045
    %v4610 = vunpack.c.h.b16 %v3045
    %v4611 = vunpack.c.l.b16 %v3046
    %v4612 = vunpack.c.h.b16 %v3046
    %v4613 = vunpack.c.l.b16 %v3047
    %v4614 = vunpack.c.h.b16 %v3047
    %v4615 = vunpack.c.l.b16 %v3048
    %v4616 = vunpack.c.h.b16 %v3048
    %v4617 = vunpack.c.l.b16 %v3049
    %v4618 = vunpack.c.h.b16 %v3049
    %v4619 = vunpack.c.l.b16 %v3050
    %v4620 = vunpack.c.h.b16 %v3050
    %v4621 = vunpack.c.l.b16 %v3051
    %v4622 = vunpack.c.h.b16 %v3051
    %v4623 = vunpack.c.l.b16 %v3052
    %v4624 = vunpack.c.h.b16 %v3052
    %v4625 = vunpack.c.l.b16 %v3053
    %v4626 = vunpack.c.h.b16 %v3053
    %v4627 = vunpack.c.l.b16 %v3054
    %v4628 = vunpack.c.h.b16 %v3054
    %v4629 = vunpack.c.l.b16 %v3055
    %v4630 = vunpack.c.h.b16 %v3055
    %v4631 = vunpack.c.l.b16 %v3056
    %v4632 = vunpack.c.h.b16 %v3056
    %v4633 = vunpack.c.l.b16 %v3057
    %v4634 = vunpack.c.h.b16 %v3057
    %v4635 = vunpack.c.l.b16 %v3058
    %v4636 = vunpack.c.h.b16 %v3058
    %v4637 = vunpack.c.l.b16 %v3059
    %v4638 = vunpack.c.h.b16 %v3059
    %v4639 = vunpack.c.l.b16 %v3060
    %v4640 = vunpack.c.h.b16 %v3060
    %v4641 = vunpack.c.l.b16 %v3061
    %v4642 = vunpack.c.h.b16 %v3061
    %v4643 = vunpack.c.l.b16 %v3062
    %v4644 = vunpack.c.h.b16 %v3062
    %v4645 = vunpack.c.l.b16 %v3063
    %v4646 = vunpack.c.h.b16 %v3063
    %v4647 = vunpack.c.l.b16 %v3064
    %v4648 = vunpack.c.h.b16 %v3064
    %v4649 = vunpack.c.l.b16 %v3065
    %v4650 = vunpack.c.h.b16 %v3065
    %v4651 = vunpack.c.l.b16 %v3066
    %v4652 = vunpack.c.h.b16 %v3066
    %v4653 = vpack.c.b16 %v3637, %v3629
    %v4654 = vpack.c.b16 %v3638, %v3630
    %v4655 = vpack.c.b16 %v3639, %v3631
    %v4656 = vpack.c.b16 %v3640, %v3632
    %v4657 = vpack.c.b16 %v3641, %v3633
    %v4658 = vpack.c.b16 %v3642, %v3634
    %v4659 = vpack.c.b16 %v3643, %v3635
    %v4660 = vpack.c.b16 %v3644, %v3636
    %v4661 = vpack.c.b16 %v3653, %v3645
    %v4662 = vpack.c.b16 %v3654, %v3646
    %v4663 = vpack.c.b16 %v3655, %v3647
    %v4664 = vpack.c.b16 %v3656, %v3648
    %v4665 = vpack.c.b16 %v3657, %v3649
    %v4666 = vpack.c.b16 %v3658, %v3650
    %v4667 = vpack.c.b16 %v3659, %v3651
    %v4668 = vpack.c.b16 %v3660, %v3652
    %v4669 = vpack.c.b16 %v3669, %v3661
    %v4670 = vpack.c.b16 %v3670, %v3662
    %v4671 = vpack.c.b16 %v3671, %v3663
    %v4672 = vpack.c.b16 %v3672, %v3664
    %v4673 = vpack.c.b16 %v3673, %v3665
    %v4674 = vpack.c.b16 %v3674, %v3666
    %v4675 = vpack.c.b16 %v3675, %v3667
    %v4676 = vpack.c.b16 %v3676, %v3668
    %v4677 = vpack.c.b16 %v3685, %v3677
    %v4678 = vpack.c.b16 %v3686, %v3678
    %v4679 = vpack.c.b16 %v3687, %v3679
    %v4680 = vpack.c.b16 %v3688, %v3680
    %v4681 = vpack.c.b16 %v3689, %v3681
    %v4682 = vpack.c.b16 %v3690, %v3682
    %v4683 = vpack.c.b16 %v3691, %v3683
    %v4684 = vpack.c.b16 %v3692, %v3684
    %v4685 = vpack.c.b16 %v3701, %v3693
    %v4686 = vpack.c.b16 %v3702, %v3694
    %v4687 = vpack.c.b16 %v3703, %v3695
    %v4688 = vpack.c.b16 %v3704, %v3696
    %v4689 = vpack.c.b16 %v3705, %v3697
    %v4690 = vpack.c.b16 %v3706, %v3698
    %v4691 = vpack.c.b16 %v3707, %v3699
    %v4692 = vpack.c.b16 %v3708, %v3700
    %v4693 = vpack.c.b16 %v3717, %v3709
    %v4694 = vpack.c.b16 %v3718, %v3710
    %v4695 = vpack.c.b16 %v3719, %v3711
    %v4696 = vpack.c.b16 %v3720, %v3712
    %v4697 = vpack.c.b16 %v3721, %v3713
    %v4698 = vpack.c.b16 %v3722, %v3714
    %v4699 = vpack.c.b16 %v3723, %v3715
    %v4700 = vpack.c.b16 %v3724, %v3716
    %v4701 = vpack.c.b16 %v3733, %v3725
    %v4702 = vpack.c.b16 %v3734, %v3726
    %v4703 = vpack.c.b16 %v3735, %v3727
    %v4704 = vpack.c.b16 %v3736, %v3728
    %v4705 = vpack.c.b16 %v3737, %v3729
    %v4706 = vpack.c.b16 %v3738, %v3730
    %v4707 = vpack.c.b16 %v3739, %v3731
    %v4708 = vpack.c.b16 %v3740, %v3732
    %v4709 = vpack.c.b16 %v3749, %v3741
    %v4710 = vpack.c.b16 %v3750, %v3742
    %v4711 = vpack.c.b16 %v3751, %v3743
    %v4712 = vpack.c.b16 %v3752, %v3744
    %v4713 = vpack.c.b16 %v3753, %v3745
    %v4714 = vpack.c.b16 %v3754, %v3746
    %v4715 = vpack.c.b16 %v3755, %v3747
    %v4716 = vpack.c.b16 %v3756, %v3748
    %v4717 = vpack.c.b16 %v3765, %v3757
    %v4718 = vpack.c.b16 %v3766, %v3758
    %v4719 = vpack.c.b16 %v3767, %v3759
    %v4720 = vpack.c.b16 %v3768, %v3760
    %v4721 = vpack.c.b16 %v3769, %v3761
    %v4722 = vpack.c.b16 %v3770, %v3762
    %v4723 = vpack.c.b16 %v3771, %v3763
    %v4724 = vpack.c.b16 %v3772, %v3764
    %v4725 = vpack.c.b16 %v3781, %v3773
    %v4726 = vpack.c.b16 %v3782, %v3774
    %v4727 = vpack.c.b16 %v3783, %v3775
    %v4728 = vpack.c.b16 %v3784, %v3776
    %v4729 = vpack.c.b16 %v3785, %v3777
    %v4730 = vpack.c.b16 %v3786, %v3778
    %v4731 = vpack.c.b16 %v3787, %v3779
    %v4732 = vpack.c.b16 %v3788, %v3780
    %v4733 = vpack.c.b16 %v3797, %v3789
    %v4734 = vpack.c.b16 %v3798, %v3790
    %v4735 = vpack.c.b16 %v3799, %v3791
    %v4736 = vpack.c.b16 %v3800, %v3792
    %v4737 = vpack.c.b16 %v3801, %v3793
    %v4738 = vpack.c.b16 %v3802, %v3794
    %v4739 = vpack.c.b16 %v3803, %v3795
    %v4740 = vpack.c.b16 %v3804, %v3796
    %v4741 = vpack.c.b16 %v3813, %v3805
    %v4742 = vpack.c.b16 %v3814, %v3806
    %v4743 = vpack.c.b16 %v3815, %v3807
    %v4744 = vpack.c.b16 %v3816, %v3808
    %v4745 = vpack.c.b16 %v3817, %v3809
    %v4746 = vpack.c.b16 %v3818, %v3810
    %v4747 = vpack.c.b16 %v3819, %v3811
    %v4748 = vpack.c.b16 %v3820, %v3812
    %v4749 = vpack.c.b16 %v3829, %v3821
    %v4750 = vpack.c.b16 %v3830, %v3822
    %v4751 = vpack.c.b16 %v3831, %v3823
    %v4752 = vpack.c.b16 %v3832, %v3824
    %v4753 = vpack.c.b16 %v3833, %v3825
    %v4754 = vpack.c.b16 %v3834, %v3826
    %v4755 = vpack.c.b16 %v3835, %v3827
    %v4756 = vpack.c.b16 %v3836, %v3828
    %v4757 = vpack.c.b16 %v3845, %v3837
    %v4758 = vpack.c.b16 %v3846, %v3838
    %v4759 = vpack.c.b16 %v3847, %v3839
    %v4760 = vpack.c.b16 %v3848, %v3840
    %v4761 = vpack.c.b16 %v3849, %v3841
    %v4762 = vpack.c.b16 %v3850, %v3842
    %v4763 = vpack.c.b16 %v3851, %v3843
    %v4764 = vpack.c.b16 %v3852, %v3844
    %v4765 = vpack.c.b16 %v3861, %v3853
    %v4766 = vpack.c.b16 %v3862, %v3854
    %v4767 = vpack.c.b16 %v3863, %v3855
    %v4768 = vpack.c.b16 %v3864, %v3856
    %v4769 = vpack.c.b16 %v3865, %v3857
    %v4770 = vpack.c.b16 %v3866, %v3858
    %v4771 = vpack.c.b16 %v3867, %v3859
    %v4772 = vpack.c.b16 %v3868, %v3860
    %v4773 = vpack.c.b16 %v3877, %v3869
    %v4774 = vpack.c.b16 %v3878, %v3870
    %v4775 = vpack.c.b16 %v3879, %v3871
    %v4776 = vpack.c.b16 %v3880, %v3872
    %v4777 = vpack.c.b16 %v3881, %v3873
    %v4778 = vpack.c.b16 %v3882, %v3874
    %v4779 = vpack.c.b16 %v3883, %v3875
    %v4780 = vpack.c.b16 %v3884, %v3876
    %v4781 = vpack.c.b16 %v3893, %v3885
    %v4782 = vpack.c.b16 %v3894, %v3886
    %v4783 = vpack.c.b16 %v3895, %v3887
    %v4784 = vpack.c.b16 %v3896, %v3888
    %v4785 = vpack.c.b16 %v3897, %v3889
    %v4786 = vpack.c.b16 %v3898, %v3890
    %v4787 = vpack.c.b16 %v3899, %v3891
    %v4788 = vpack.c.b16 %v3900, %v3892
    %v4789 = vpack.c.b16 %v3909, %v3901
    %v4790 = vpack.c.b16 %v3910, %v3902
    %v4791 = vpack.c.b16 %v3911, %v3903
    %v4792 = vpack.c.b16 %v3912, %v3904
    %v4793 = vpack.c.b16 %v3913, %v3905
    %v4794 = vpack.c.b16 %v3914, %v3906
    %v4795 = vpack.c.b16 %v3915, %v3907
    %v4796 = vpack.c.b16 %v3916, %v3908
    %v4797 = vpack.c.b16 %v3925, %v3917
    %v4798 = vpack.c.b16 %v3926, %v3918
    %v4799 = vpack.c.b16 %v3927, %v3919
    %v4800 = vpack.c.b16 %v3928, %v3920
    %v4801 = vpack.c.b16 %v3929, %v3921
    %v4802 = vpack.c.b16 %v3930, %v3922
    %v4803 = vpack.c.b16 %v3931, %v3923
    %v4804 = vpack.c.b16 %v3932, %v3924
    %v4805 = vpack.c.b16 %v3941, %v3933
    %v4806 = vpack.c.b16 %v3942, %v3934
    %v4807 = vpack.c.b16 %v3943, %v3935
    %v4808 = vpack.c.b16 %v3944, %v3936
    %v4809 = vpack.c.b16 %v3945, %v3937
    %v4810 = vpack.c.b16 %v3946, %v3938
    %v4811 = vpack.c.b16 %v3947, %v3939
    %v4812 = vpack.c.b16 %v3948, %v3940
    %v4813 = vpack.c.b16 %v3957, %v3949
    %v4814 = vpack.c.b16 %v3958, %v3950
    %v4815 = vpack.c.b16 %v3959, %v3951
    %v4816 = vpack.c.b16 %v3960, %v3952
    %v4817 = vpack.c.b16 %v3961, %v3953
    %v4818 = vpack.c.b16 %v3962, %v3954
    %v4819 = vpack.c.b16 %v3963, %v3955
    %v4820 = vpack.c.b16 %v3964, %v3956
    %v4821 = vpack.c.b16 %v3973, %v3965
    %v4822 = vpack.c.b16 %v3974, %v3966
    %v4823 = vpack.c.b16 %v3975, %v3967
    %v4824 = vpack.c.b16 %v3976, %v3968
    %v4825 = vpack.c.b16 %v3977, %v3969
    %v4826 = vpack.c.b16 %v3978, %v3970
    %v4827 = vpack.c.b16 %v3979, %v3971
    %v4828 = vpack.c.b16 %v3980, %v3972
    %v4829 = vpack.c.b16 %v3989, %v3981
    %v4830 = vpack.c.b16 %v3990, %v3982
    %v4831 = vpack.c.b16 %v3991, %v3983
    %v4832 = vpack.c.b16 %v3992, %v3984
    %v4833 = vpack.c.b16 %v3993, %v3985
    %v4834 = vpack.c.b16 %v3994, %v3986
    %v4835 = vpack.c.b16 %v3995, %v3987
    %v4836 = vpack.c.b16 %v3996, %v3988
    %v4837 = vpack.c.b16 %v4005, %v3997
    %v4838 = vpack.c.b16 %v4006, %v3998
    %v4839 = vpack.c.b16 %v4007, %v3999
    %v4840 = vpack.c.b16 %v4008, %v4000
    %v4841 = vpack.c.b16 %v4009, %v4001
    %v4842 = vpack.c.b16 %v4010, %v4002
    %v4843 = vpack.c.b16 %v4011, %v4003
    %v4844 = vpack.c.b16 %v4012, %v4004
    %v4845 = vpack.c.b16 %v4021, %v4013
    %v4846 = vpack.c.b16 %v4022, %v4014
    %v4847 = vpack.c.b16 %v4023, %v4015
    %v4848 = vpack.c.b16 %v4024, %v4016
    %v4849 = vpack.c.b16 %v4025, %v4017
    %v4850 = vpack.c.b16 %v4026, %v4018
    %v4851 = vpack.c.b16 %v4027, %v4019
    %v4852 = vpack.c.b16 %v4028, %v4020
    %v4853 = vpack.c.b16 %v4037, %v4029
    %v4854 = vpack.c.b16 %v4038, %v4030
    %v4855 = vpack.c.b16 %v4039, %v4031
    %v4856 = vpack.c.b16 %v4040, %v4032
    %v4857 = vpack.c.b16 %v4041, %v4033
    %v4858 = vpack.c.b16 %v4042, %v4034
    %v4859 = vpack.c.b16 %v4043, %v4035
    %v4860 = vpack.c.b16 %v4044, %v4036
    %v4861 = vpack.c.b16 %v4053, %v4045
    %v4862 = vpack.c.b16 %v4054, %v4046
    %v4863 = vpack.c.b16 %v4055, %v4047
    %v4864 = vpack.c.b16 %v4056, %v4048
    %v4865 = vpack.c.b16 %v4057, %v4049
    %v4866 = vpack.c.b16 %v4058, %v4050
    %v4867 = vpack.c.b16 %v4059, %v4051
    %v4868 = vpack.c.b16 %v4060, %v4052
    %v4869 = vpack.c.b16 %v4069, %v4061
    %v4870 = vpack.c.b16 %v4070, %v4062
    %v4871 = vpack.c.b16 %v4071, %v4063
    %v4872 = vpack.c.b16 %v4072, %v4064
    %v4873 = vpack.c.b16 %v4073, %v4065
    %v4874 = vpack.c.b16 %v4074, %v4066
    %v4875 = vpack.c.b16 %v4075, %v4067
    %v4876 = vpack.c.b16 %v4076, %v4068
    %v4877 = vpack.c.b16 %v4085, %v4077
    %v4878 = vpack.c.b16 %v4086, %v4078
    %v4879 = vpack.c.b16 %v4087, %v4079
    %v4880 = vpack.c.b16 %v4088, %v4080
    %v4881 = vpack.c.b16 %v4089, %v4081
    %v4882 = vpack.c.b16 %v4090, %v4082
    %v4883 = vpack.c.b16 %v4091, %v4083
    %v4884 = vpack.c.b16 %v4092, %v4084
    %v4885 = vpack.c.b16 %v4101, %v4093
    %v4886 = vpack.c.b16 %v4102, %v4094
    %v4887 = vpack.c.b16 %v4103, %v4095
    %v4888 = vpack.c.b16 %v4104, %v4096
    %v4889 = vpack.c.b16 %v4105, %v4097
    %v4890 = vpack.c.b16 %v4106, %v4098
    %v4891 = vpack.c.b16 %v4107, %v4099
    %v4892 = vpack.c.b16 %v4108, %v4100
    %v4893 = vpack.c.b16 %v4117, %v4109
    %v4894 = vpack.c.b16 %v4118, %v4110
    %v4895 = vpack.c.b16 %v4119, %v4111
    %v4896 = vpack.c.b16 %v4120, %v4112
    %v4897 = vpack.c.b16 %v4121, %v4113
    %v4898 = vpack.c.b16 %v4122, %v4114
    %v4899 = vpack.c.b16 %v4123, %v4115
    %v4900 = vpack.c.b16 %v4124, %v4116
    %v4901 = vpack.c.b16 %v4133, %v4125
    %v4902 = vpack.c.b16 %v4134, %v4126
    %v4903 = vpack.c.b16 %v4135, %v4127
    %v4904 = vpack.c.b16 %v4136, %v4128
    %v4905 = vpack.c.b16 %v4137, %v4129
    %v4906 = vpack.c.b16 %v4138, %v4130
    %v4907 = vpack.c.b16 %v4139, %v4131
    %v4908 = vpack.c.b16 %v4140, %v4132
    %v4909 = vpack.c.b16 %v4149, %v4141
    %v4910 = vpack.c.b16 %v4150, %v4142
    %v4911 = vpack.c.b16 %v4151, %v4143
    %v4912 = vpack.c.b16 %v4152, %v4144
    %v4913 = vpack.c.b16 %v4153, %v4145
    %v4914 = vpack.c.b16 %v4154, %v4146
    %v4915 = vpack.c.b16 %v4155, %v4147
    %v4916 = vpack.c.b16 %v4156, %v4148
    %v4917 = vpack.c.b16 %v4165, %v4157
    %v4918 = vpack.c.b16 %v4166, %v4158
    %v4919 = vpack.c.b16 %v4167, %v4159
    %v4920 = vpack.c.b16 %v4168, %v4160
    %v4921 = vpack.c.b16 %v4169, %v4161
    %v4922 = vpack.c.b16 %v4170, %v4162
    %v4923 = vpack.c.b16 %v4171, %v4163
    %v4924 = vpack.c.b16 %v4172, %v4164
    %v4925 = vpack.c.b16 %v4181, %v4173
    %v4926 = vpack.c.b16 %v4182, %v4174
    %v4927 = vpack.c.b16 %v4183, %v4175
    %v4928 = vpack.c.b16 %v4184, %v4176
    %v4929 = vpack.c.b16 %v4185, %v4177
    %v4930 = vpack.c.b16 %v4186, %v4178
    %v4931 = vpack.c.b16 %v4187, %v4179
    %v4932 = vpack.c.b16 %v4188, %v4180
    %v4933 = vpack.c.b16 %v4197, %v4189
    %v4934 = vpack.c.b16 %v4198, %v4190
    %v4935 = vpack.c.b16 %v4199, %v4191
    %v4936 = vpack.c.b16 %v4200, %v4192
    %v4937 = vpack.c.b16 %v4201, %v4193
    %v4938 = vpack.c.b16 %v4202, %v4194
    %v4939 = vpack.c.b16 %v4203, %v4195
    %v4940 = vpack.c.b16 %v4204, %v4196
    %v4941 = vpack.c.b16 %v4213, %v4205
    %v4942 = vpack.c.b16 %v4214, %v4206
    %v4943 = vpack.c.b16 %v4215, %v4207
    %v4944 = vpack.c.b16 %v4216, %v4208
    %v4945 = vpack.c.b16 %v4217, %v4209
    %v4946 = vpack.c.b16 %v4218, %v4210
    %v4947 = vpack.c.b16 %v4219, %v4211
    %v4948 = vpack.c.b16 %v4220, %v4212
    %v4949 = vpack.c.b16 %v4229, %v4221
    %v4950 = vpack.c.b16 %v4230, %v4222
    %v4951 = vpack.c.b16 %v4231, %v4223
    %v4952 = vpack.c.b16 %v4232, %v4224
    %v4953 = vpack.c.b16 %v4233, %v4225
    %v4954 = vpack.c.b16 %v4234, %v4226
    %v4955 = vpack.c.b16 %v4235, %v4227
    %v4956 = vpack.c.b16 %v4236, %v4228
    %v4957 = vpack.c.b16 %v4245, %v4237
    %v4958 = vpack.c.b16 %v4246, %v4238
    %v4959 = vpack.c.b16 %v4247, %v4239
    %v4960 = vpack.c.b16 %v4248, %v4240
    %v4961 = vpack.c.b16 %v4249, %v4241
    %v4962 = vpack.c.b16 %v4250, %v4242
    %v4963 = vpack.c.b16 %v4251, %v4243
    %v4964 = vpack.c.b16 %v4252, %v4244
    %v4965 = vpack.c.b16 %v4261, %v4253
    %v4966 = vpack.c.b16 %v4262, %v4254
    %v4967 = vpack.c.b16 %v4263, %v4255
    %v4968 = vpack.c.b16 %v4264, %v4256
    %v4969 = vpack.c.b16 %v4265, %v4257
    %v4970 = vpack.c.b16 %v4266, %v4258
    %v4971 = vpack.c.b16 %v4267, %v4259
    %v4972 = vpack.c.b16 %v4268, %v4260
    %v4973 = vpack.c.b16 %v4277, %v4269
    %v4974 = vpack.c.b16 %v4278, %v4270
    %v4975 = vpack.c.b16 %v4279, %v4271
    %v4976 = vpack.c.b16 %v4280, %v4272
    %v4977 = vpack.c.b16 %v4281, %v4273
    %v4978 = vpack.c.b16 %v4282, %v4274
    %v4979 = vpack.c.b16 %v4283, %v4275
    %v4980 = vpack.c.b16 %v4284, %v4276
    %v4981 = vpack.c.b16 %v4293, %v4285
    %v4982 = vpack.c.b16 %v4294, %v4286
    %v4983 = vpack.c.b16 %v4295, %v4287
    %v4984 = vpack.c.b16 %v4296, %v4288
    %v4985 = vpack.c.b16 %v4297, %v4289
    %v4986 = vpack.c.b16 %v4298, %v4290
    %v4987 = vpack.c.b16 %v4299, %v4291
    %v4988 = vpack.c.b16 %v4300, %v4292
    %v4989 = vpack.c.b16 %v4309, %v4301
    %v4990 = vpack.c.b16 %v4310, %v4302
    %v4991 = vpack.c.b16 %v4311, %v4303
    %v4992 = vpack.c.b16 %v4312, %v4304
    %v4993 = vpack.c.b16 %v4313, %v4305
    %v4994 = vpack.c.b16 %v4314, %v4306
    %v4995 = vpack.c.b16 %v4315, %v4307
    %v4996 = vpack.c.b16 %v4316, %v4308
    %v4997 = vpack.c.b16 %v4325, %v4317
    %v4998 = vpack.c.b16 %v4326, %v4318
    %v4999 = vpack.c.b16 %v4327, %v4319
    %v5000 = vpack.c.b16 %v4328, %v4320
    %v5001 = vpack.c.b16 %v4329, %v4321
    %v5002 = vpack.c.b16 %v4330, %v4322
    %v5003 = vpack.c.b16 %v4331, %v4323
    %v5004 = vpack.c.b16 %v4332, %v4324
    %v5005 = vpack.c.b16 %v4341, %v4333
    %v5006 = vpack.c.b16 %v4342, %v4334
    %v5007 = vpack.c.b16 %v4343, %v4335
    %v5008 = vpack.c.b16 %v4344, %v4336
    %v5009 = vpack.c.b16 %v4345, %v4337
    %v5010 = vpack.c.b16 %v4346, %v4338
    %v5011 = vpack.c.b16 %v4347, %v4339
    %v5012 = vpack.c.b16 %v4348, %v4340
    %v5013 = vpack.c.b16 %v4357, %v4349
    %v5014 = vpack.c.b16 %v4358, %v4350
    %v5015 = vpack.c.b16 %v4359, %v4351
    %v5016 = vpack.c.b16 %v4360, %v4352
    %v5017 = vpack.c.b16 %v4361, %v4353
    %v5018 = vpack.c.b16 %v4362, %v4354
    %v5019 = vpack.c.b16 %v4363, %v4355
    %v5020 = vpack.c.b16 %v4364, %v4356
    %v5021 = vpack.c.b16 %v4373, %v4365
    %v5022 = vpack.c.b16 %v4374, %v4366
    %v5023 = vpack.c.b16 %v4375, %v4367
    %v5024 = vpack.c.b16 %v4376, %v4368
    %v5025 = vpack.c.b16 %v4377, %v4369
    %v5026 = vpack.c.b16 %v4378, %v4370
    %v5027 = vpack.c.b16 %v4379, %v4371
    %v5028 = vpack.c.b16 %v4380, %v4372
    %v5029 = vpack.c.b16 %v4389, %v4381
    %v5030 = vpack.c.b16 %v4390, %v4382
    %v5031 = vpack.c.b16 %v4391, %v4383
    %v5032 = vpack.c.b16 %v4392, %v4384
    %v5033 = vpack.c.b16 %v4393, %v4385
    %v5034 = vpack.c.b16 %v4394, %v4386
    %v5035 = vpack.c.b16 %v4395, %v4387
    %v5036 = vpack.c.b16 %v4396, %v4388
    %v5037 = vpack.c.b16 %v4405, %v4397
    %v5038 = vpack.c.b16 %v4406, %v4398
    %v5039 = vpack.c.b16 %v4407, %v4399
    %v5040 = vpack.c.b16 %v4408, %v4400
    %v5041 = vpack.c.b16 %v4409, %v4401
    %v5042 = vpack.c.b16 %v4410, %v4402
    %v5043 = vpack.c.b16 %v4411, %v4403
    %v5044 = vpack.c.b16 %v4412, %v4404
    %v5045 = vpack.c.b16 %v4421, %v4413
    %v5046 = vpack.c.b16 %v4422, %v4414
    %v5047 = vpack.c.b16 %v4423, %v4415
    %v5048 = vpack.c.b16 %v4424, %v4416
    %v5049 = vpack.c.b16 %v4425, %v4417
    %v5050 = vpack.c.b16 %v4426, %v4418
    %v5051 = vpack.c.b16 %v4427, %v4419
    %v5052 = vpack.c.b16 %v4428, %v4420
    %v5053 = vpack.c.b16 %v4437, %v4429
    %v5054 = vpack.c.b16 %v4438, %v4430
    %v5055 = vpack.c.b16 %v4439, %v4431
    %v5056 = vpack.c.b16 %v4440, %v4432
    %v5057 = vpack.c.b16 %v4441, %v4433
    %v5058 = vpack.c.b16 %v4442, %v4434
    %v5059 = vpack.c.b16 %v4443, %v4435
    %v5060 = vpack.c.b16 %v4444, %v4436
    %v5061 = vpack.c.b16 %v4453, %v4445
    %v5062 = vpack.c.b16 %v4454, %v4446
    %v5063 = vpack.c.b16 %v4455, %v4447
    %v5064 = vpack.c.b16 %v4456, %v4448
    %v5065 = vpack.c.b16 %v4457, %v4449
    %v5066 = vpack.c.b16 %v4458, %v4450
    %v5067 = vpack.c.b16 %v4459, %v4451
    %v5068 = vpack.c.b16 %v4460, %v4452
    %v5069 = vpack.c.b16 %v4469, %v4461
    %v5070 = vpack.c.b16 %v4470, %v4462
    %v5071 = vpack.c.b16 %v4471, %v4463
    %v5072 = vpack.c.b16 %v4472, %v4464
    %v5073 = vpack.c.b16 %v4473, %v4465
    %v5074 = vpack.c.b16 %v4474, %v4466
    %v5075 = vpack.c.b16 %v4475, %v4467
    %v5076 = vpack.c.b16 %v4476, %v4468
    %v5077 = vpack.c.b16 %v4485, %v4477
    %v5078 = vpack.c.b16 %v4486, %v4478
    %v5079 = vpack.c.b16 %v4487, %v4479
    %v5080 = vpack.c.b16 %v4488, %v4480
    %v5081 = vpack.c.b16 %v4489, %v4481
    %v5082 = vpack.c.b16 %v4490, %v4482
    %v5083 = vpack.c.b16 %v4491, %v4483
    %v5084 = vpack.c.b16 %v4492, %v4484
    %v5085 = vpack.c.b16 %v4501, %v4493
    %v5086 = vpack.c.b16 %v4502, %v4494
    %v5087 = vpack.c.b16 %v4503, %v4495
    %v5088 = vpack.c.b16 %v4504, %v4496
    %v5089 = vpack.c.b16 %v4505, %v4497
    %v5090 = vpack.c.b16 %v4506, %v4498
    %v5091 = vpack.c.b16 %v4507, %v4499
    %v5092 = vpack.c.b16 %v4508, %v4500
    %v5093 = vpack.c.b16 %v4517, %v4509
    %v5094 = vpack.c.b16 %v4518, %v4510
    %v5095 = vpack.c.b16 %v4519, %v4511
    %v5096 = vpack.c.b16 %v4520, %v4512
    %v5097 = vpack.c.b16 %v4521, %v4513
    %v5098 = vpack.c.b16 %v4522, %v4514
    %v5099 = vpack.c.b16 %v4523, %v4515
    %v5100 = vpack.c.b16 %v4524, %v4516
    %v5101 = vpack.c.b16 %v4533, %v4525
    %v5102 = vpack.c.b16 %v4534, %v4526
    %v5103 = vpack.c.b16 %v4535, %v4527
    %v5104 = vpack.c.b16 %v4536, %v4528
    %v5105 = vpack.c.b16 %v4537, %v4529
    %v5106 = vpack.c.b16 %v4538, %v4530
    %v5107 = vpack.c.b16 %v4539, %v4531
    %v5108 = vpack.c.b16 %v4540, %v4532
    %v5109 = vpack.c.b16 %v4549, %v4541
    %v5110 = vpack.c.b16 %v4550, %v4542
    %v5111 = vpack.c.b16 %v4551, %v4543
    %v5112 = vpack.c.b16 %v4552, %v4544
    %v5113 = vpack.c.b16 %v4553, %v4545
    %v5114 = vpack.c.b16 %v4554, %v4546
    %v5115 = vpack.c.b16 %v4555, %v4547
    %v5116 = vpack.c.b16 %v4556, %v4548
    %v5117 = vpack.c.b16 %v4565, %v4557
    %v5118 = vpack.c.b16 %v4566, %v4558
    %v5119 = vpack.c.b16 %v4567, %v4559
    %v5120 = vpack.c.b16 %v4568, %v4560
    %v5121 = vpack.c.b16 %v4569, %v4561
    %v5122 = vpack.c.b16 %v4570, %v4562
    %v5123 = vpack.c.b16 %v4571, %v4563
    %v5124 = vpack.c.b16 %v4572, %v4564
    %v5125 = vpack.c.b16 %v4581, %v4573
    %v5126 = vpack.c.b16 %v4582, %v4574
    %v5127 = vpack.c.b16 %v4583, %v4575
    %v5128 = vpack.c.b16 %v4584, %v4576
    %v5129 = vpack.c.b16 %v4585, %v4577
    %v5130 = vpack.c.b16 %v4586, %v4578
    %v5131 = vpack.c.b16 %v4587, %v4579
    %v5132 = vpack.c.b16 %v4588, %v4580
    %v5133 = vpack.c.b16 %v4597, %v4589
    %v5134 = vpack.c.b16 %v4598, %v4590
    %v5135 = vpack.c.b16 %v4599, %v4591
    %v5136 = vpack.c.b16 %v4600, %v4592
    %v5137 = vpack.c.b16 %v4601, %v4593
    %v5138 = vpack.c.b16 %v4602, %v4594
    %v5139 = vpack.c.b16 %v4603, %v4595
    %v5140 = vpack.c.b16 %v4604, %v4596
    %v5141 = vpack.c.b16 %v4613, %v4605
    %v5142 = vpack.c.b16 %v4614, %v4606
    %v5143 = vpack.c.b16 %v4615, %v4607
    %v5144 = vpack.c.b16 %v4616, %v4608
    %v5145 = vpack.c.b16 %v4617, %v4609
    %v5146 = vpack.c.b16 %v4618, %v4610
    %v5147 = vpack.c.b16 %v4619, %v4611
    %v5148 = vpack.c.b16 %v4620, %v4612
    %v5149 = vpack.c.b16 %v4629, %v4621
    %v5150 = vpack.c.b16 %v4630, %v4622
    %v5151 = vpack.c.b16 %v4631, %v4623
    %v5152 = vpack.c.b16 %v4632, %v4624
    %v5153 = vpack.c.b16 %v4633, %v4625
    %v5154 = vpack.c.b16 %v4634, %v4626
    %v5155 = vpack.c.b16 %v4635, %v4627
    %v5156 = vpack.c.b16 %v4636, %v4628
    %v5157 = vpack.c.b16 %v4645, %v4637
    %v5158 = vpack.c.b16 %v4646, %v4638
    %v5159 = vpack.c.b16 %v4647, %v4639
    %v5160 = vpack.c.b16 %v4648, %v4640
    %v5161 = vpack.c.b16 %v4649, %v4641
    %v5162 = vpack.c.b16 %v4650, %v4642
    %v5163 = vpack.c.b16 %v4651, %v4643
    %v5164 = vpack.c.b16 %v4652, %v4644
    %5677 = vmatprep.subr.bf16.mxu0 %v4654
    %5678 = vmatpush1.bf16.msra.mxu0 %v4653
    %5679 = vmatprep.subr.bf16.mxu0 %v4662
    %5680 = vmatpush1.bf16.msra.mxu0 %v4661
    %5681 = vmatprep.subr.bf16.mxu0 %v4670
    %5682 = vmatpush1.bf16.msra.mxu0 %v4669
    %5683 = vmatprep.subr.bf16.mxu0 %v4678
    %5684 = vmatpush1.bf16.msra.mxu0 %v4677
    %5685 = vmatprep.subr.bf16.mxu0 %v4686
    %5686 = vmatpush1.bf16.msra.mxu0 %v4685
    %5687 = vmatprep.subr.bf16.mxu0 %v4694
    %5688 = vmatpush1.bf16.msra.mxu0 %v4693
    %5689 = vmatprep.subr.bf16.mxu0 %v4702
    %5690 = vmatpush1.bf16.msra.mxu0 %v4701
    %5691 = vmatprep.subr.bf16.mxu0 %v4710
    %5692 = vmatpush1.bf16.msra.mxu0 %v4709
    %5693 = vmatprep.subr.bf16.mxu0 %v4718
    %5694 = vmatpush1.bf16.msra.mxu0 %v4717
    %5695 = vmatprep.subr.bf16.mxu0 %v4726
    %5696 = vmatpush1.bf16.msra.mxu0 %v4725
    %5697 = vmatprep.subr.bf16.mxu0 %v4734
    %5698 = vmatpush1.bf16.msra.mxu0 %v4733
    %5699 = vmatprep.subr.bf16.mxu0 %v4742
    %5700 = vmatpush1.bf16.msra.mxu0 %v4741
    %5701 = vmatprep.subr.bf16.mxu0 %v4750
    %5702 = vmatpush1.bf16.msra.mxu0 %v4749
    %5703 = vmatprep.subr.bf16.mxu0 %v4758
    %5704 = vmatpush1.bf16.msra.mxu0 %v4757
    %5705 = vmatprep.subr.bf16.mxu0 %v4766
    %5706 = vmatpush1.bf16.msra.mxu0 %v4765
    %5707 = vmatprep.subr.bf16.mxu0 %v4774
    %5708 = vmatpush1.bf16.msra.mxu0 %v4773
    %5709 = vmatprep.mubr.bf16.mxu0 %v3068
    %5710 = vmatmul.mubr.bf16.gmra.mrb[0].mxu0 %v3067
    %v5711 = vpop.f32.mrb[0].mxu0
    %v5712 = vadd.f32 %v3080, %v5711
    %v5713 = vpop.f32.mrb[0].mxu0
    %v5714 = vadd.f32 %v3084, %v5713
    %v5715 = vpop.f32.mrb[0].mxu0
    %v5716 = vpop.f32.mrb[0].mxu0
    %5717 = vdwg.mxu0
    %5718 = vmatprep.subr.bf16.mxu0 %v4782
    %5719 = vmatpush1.bf16.msra.mxu0 %v4781
    %5720 = vmatprep.subr.bf16.mxu0 %v4790
    %5721 = vmatpush1.bf16.msra.mxu0 %v4789
    %5722 = vmatprep.subr.bf16.mxu0 %v4798
    %5723 = vmatpush1.bf16.msra.mxu0 %v4797
    %5724 = vmatprep.subr.bf16.mxu0 %v4806
    %5725 = vmatpush1.bf16.msra.mxu0 %v4805
    %5726 = vmatprep.subr.bf16.mxu0 %v4814
    %5727 = vmatpush1.bf16.msra.mxu0 %v4813
    %5728 = vmatprep.subr.bf16.mxu0 %v4822
    %5729 = vmatpush1.bf16.msra.mxu0 %v4821
    %5730 = vmatprep.subr.bf16.mxu0 %v4830
    %5731 = vmatpush1.bf16.msra.mxu0 %v4829
    %5732 = vmatprep.subr.bf16.mxu0 %v4838
    %5733 = vmatpush1.bf16.msra.mxu0 %v4837
    %5734 = vmatprep.subr.bf16.mxu0 %v4846
    %5735 = vmatpush1.bf16.msra.mxu0 %v4845
    %5736 = vmatprep.subr.bf16.mxu0 %v4854
    %5737 = vmatpush1.bf16.msra.mxu0 %v4853
    %5738 = vmatprep.subr.bf16.mxu0 %v4862
    %5739 = vmatpush1.bf16.msra.mxu0 %v4861
    %5740 = vmatprep.subr.bf16.mxu0 %v4870
    %5741 = vmatpush1.bf16.msra.mxu0 %v4869
    %5742 = vmatprep.subr.bf16.mxu0 %v4878
    %5743 = vmatpush1.bf16.msra.mxu0 %v4877
    %5744 = vmatprep.subr.bf16.mxu0 %v4886
    %5745 = vmatpush1.bf16.msra.mxu0 %v4885
    %5746 = vmatprep.subr.bf16.mxu0 %v4894
    %5747 = vmatpush1.bf16.msra.mxu0 %v4893
    %5748 = vmatprep.subr.bf16.mxu0 %v4902
    %5749 = vmatpush1.bf16.msra.mxu0 %v4901
    %5750 = vmatprep.mubr.bf16.mxu0 %v3070
    %5751 = vmatmul.mubr.bf16.gmra.mrb[0].mxu0 %v3069
    %v5752 = vpop.f32.mrb[0].mxu0
    %v5753 = vadd.f32 %v5712, %v5752
    %v5754 = vpop.f32.mrb[0].mxu0
    %v5755 = vadd.f32 %v5714, %v5754
    %v5756 = vpop.f32.mrb[0].mxu0
    %v5757 = vpop.f32.mrb[0].mxu0
    %5758 = vdwg.mxu0
    %5759 = vmatprep.subr.bf16.mxu0 %v4910
    %5760 = vmatpush1.bf16.msra.mxu0 %v4909
    %5761 = vmatprep.subr.bf16.mxu0 %v4918
    %5762 = vmatpush1.bf16.msra.mxu0 %v4917
    %5763 = vmatprep.subr.bf16.mxu0 %v4926
    %5764 = vmatpush1.bf16.msra.mxu0 %v4925
    %5765 = vmatprep.subr.bf16.mxu0 %v4934
    %5766 = vmatpush1.bf16.msra.mxu0 %v4933
    %5767 = vmatprep.subr.bf16.mxu0 %v4942
    %5768 = vmatpush1.bf16.msra.mxu0 %v4941
    %5769 = vmatprep.subr.bf16.mxu0 %v4950
    %5770 = vmatpush1.bf16.msra.mxu0 %v4949
    %5771 = vmatprep.subr.bf16.mxu0 %v4958
    %5772 = vmatpush1.bf16.msra.mxu0 %v4957
    %5773 = vmatprep.subr.bf16.mxu0 %v4966
    %5774 = vmatpush1.bf16.msra.mxu0 %v4965
    %5775 = vmatprep.subr.bf16.mxu0 %v4974
    %5776 = vmatpush1.bf16.msra.mxu0 %v4973
    %5777 = vmatprep.subr.bf16.mxu0 %v4982
    %5778 = vmatpush1.bf16.msra.mxu0 %v4981
    %5779 = vmatprep.subr.bf16.mxu0 %v4990
    %5780 = vmatpush1.bf16.msra.mxu0 %v4989
    %5781 = vmatprep.subr.bf16.mxu0 %v4998
    %5782 = vmatpush1.bf16.msra.mxu0 %v4997
    %5783 = vmatprep.subr.bf16.mxu0 %v5006
    %5784 = vmatpush1.bf16.msra.mxu0 %v5005
    %5785 = vmatprep.subr.bf16.mxu0 %v5014
    %5786 = vmatpush1.bf16.msra.mxu0 %v5013
    %5787 = vmatprep.subr.bf16.mxu0 %v5022
    %5788 = vmatpush1.bf16.msra.mxu0 %v5021
    %5789 = vmatprep.subr.bf16.mxu0 %v5030
    %5790 = vmatpush1.bf16.msra.mxu0 %v5029
    %5791 = vmatprep.mubr.bf16.mxu0 %v3072
    %5792 = vmatmul.mubr.bf16.gmra.mrb[0].mxu0 %v3071
    %v5793 = vpop.f32.mrb[0].mxu0
    %v5794 = vadd.f32 %v5753, %v5793
    %v5795 = vpop.f32.mrb[0].mxu0
    %v5796 = vadd.f32 %v5755, %v5795
    %v5797 = vpop.f32.mrb[0].mxu0
    %v5798 = vpop.f32.mrb[0].mxu0
    %5799 = vdwg.mxu0
    %5800 = vmatprep.subr.bf16.mxu0 %v5038
    %5801 = vmatpush1.bf16.msra.mxu0 %v5037
    %5802 = vmatprep.subr.bf16.mxu0 %v5046
    %5803 = vmatpush1.bf16.msra.mxu0 %v5045
    %5804 = vmatprep.subr.bf16.mxu0 %v5054
    %5805 = vmatpush1.bf16.msra.mxu0 %v5053
    %5806 = vmatprep.subr.bf16.mxu0 %v5062
    %5807 = vmatpush1.bf16.msra.mxu0 %v5061
    %5808 = vmatprep.subr.bf16.mxu0 %v5070
    %5809 = vmatpush1.bf16.msra.mxu0 %v5069
    %5810 = vmatprep.subr.bf16.mxu0 %v5078
    %5811 = vmatpush1.bf16.msra.mxu0 %v5077
    %5812 = vmatprep.subr.bf16.mxu0 %v5086
    %5813 = vmatpush1.bf16.msra.mxu0 %v5085
    %5814 = vmatprep.subr.bf16.mxu0 %v5094
    %5815 = vmatpush1.bf16.msra.mxu0 %v5093
    %5816 = vmatprep.subr.bf16.mxu0 %v5102
    %5817 = vmatpush1.bf16.msra.mxu0 %v5101
    %5818 = vmatprep.subr.bf16.mxu0 %v5110
    %5819 = vmatpush1.bf16.msra.mxu0 %v5109
    %5820 = vmatprep.subr.bf16.mxu0 %v5118
    %5821 = vmatpush1.bf16.msra.mxu0 %v5117
    %5822 = vmatprep.subr.bf16.mxu0 %v5126
    %5823 = vmatpush1.bf16.msra.mxu0 %v5125
    %5824 = vmatprep.subr.bf16.mxu0 %v5134
    %5825 = vmatpush1.bf16.msra.mxu0 %v5133
    %5826 = vmatprep.subr.bf16.mxu0 %v5142
    %5827 = vmatpush1.bf16.msra.mxu0 %v5141
    %5828 = vmatprep.subr.bf16.mxu0 %v5150
    %5829 = vmatpush1.bf16.msra.mxu0 %v5149
    %5830 = vmatprep.subr.bf16.mxu0 %v5158
    %5831 = vmatpush1.bf16.msra.mxu0 %v5157
    %5832 = vmatprep.mubr.bf16.mxu0 %v3074
    %5833 = vmatmul.mubr.bf16.gmra.mrb[0].mxu0 %v3073
    %v5834 = vpop.f32.mrb[0].mxu0
    %v5835 = vadd.f32 %v5794, %v5834
    %v5836 = vpop.f32.mrb[0].mxu0
    %v5837 = vadd.f32 %v5796, %v5836
    %v5838 = vpop.f32.mrb[0].mxu0
    %v5839 = vpop.f32.mrb[0].mxu0
    %5840 = vdwg.mxu0
    %5841 = vmatprep.subr.bf16.mxu0 %v4656
    %5842 = vmatpush1.bf16.msra.mxu0 %v4655
    %5843 = vmatprep.subr.bf16.mxu0 %v4664
    %5844 = vmatpush1.bf16.msra.mxu0 %v4663
    %5845 = vmatprep.subr.bf16.mxu0 %v4672
    %5846 = vmatpush1.bf16.msra.mxu0 %v4671
    %5847 = vmatprep.subr.bf16.mxu0 %v4680
    %5848 = vmatpush1.bf16.msra.mxu0 %v4679
    %5849 = vmatprep.subr.bf16.mxu0 %v4688
    %5850 = vmatpush1.bf16.msra.mxu0 %v4687
    %5851 = vmatprep.subr.bf16.mxu0 %v4696
    %5852 = vmatpush1.bf16.msra.mxu0 %v4695
    %5853 = vmatprep.subr.bf16.mxu0 %v4704
    %5854 = vmatpush1.bf16.msra.mxu0 %v4703
    %5855 = vmatprep.subr.bf16.mxu0 %v4712
    %5856 = vmatpush1.bf16.msra.mxu0 %v4711
    %5857 = vmatprep.subr.bf16.mxu0 %v4720
    %5858 = vmatpush1.bf16.msra.mxu0 %v4719
    %5859 = vmatprep.subr.bf16.mxu0 %v4728
    %5860 = vmatpush1.bf16.msra.mxu0 %v4727
    %5861 = vmatprep.subr.bf16.mxu0 %v4736
    %5862 = vmatpush1.bf16.msra.mxu0 %v4735
    %5863 = vmatprep.subr.bf16.mxu0 %v4744
    %5864 = vmatpush1.bf16.msra.mxu0 %v4743
    %5865 = vmatprep.subr.bf16.mxu0 %v4752
    %5866 = vmatpush1.bf16.msra.mxu0 %v4751
    %5867 = vmatprep.subr.bf16.mxu0 %v4760
    %5868 = vmatpush1.bf16.msra.mxu0 %v4759
    %5869 = vmatprep.subr.bf16.mxu0 %v4768
    %5870 = vmatpush1.bf16.msra.mxu0 %v4767
    %5871 = vmatprep.subr.bf16.mxu0 %v4776
    %5872 = vmatpush1.bf16.msra.mxu0 %v4775
    %5873 = vmatprep.mubr.bf16.mxu0 %v3068
    %5874 = vmatmul.mubr.bf16.gmra.mrb[0].mxu0 %v3067
    %v5875 = vpop.f32.mrb[0].mxu0
    %v5876 = vadd.f32 %v3088, %v5875
    %v5877 = vpop.f32.mrb[0].mxu0
    %v5878 = vadd.f32 %v3092, %v5877
    %v5879 = vpop.f32.mrb[0].mxu0
    %v5880 = vpop.f32.mrb[0].mxu0
    %5881 = vdwg.mxu0
    %5882 = vmatprep.subr.bf16.mxu0 %v4784
    %5883 = vmatpush1.bf16.msra.mxu0 %v4783
    %5884 = vmatprep.subr.bf16.mxu0 %v4792
    %5885 = vmatpush1.bf16.msra.mxu0 %v4791
    %5886 = vmatprep.subr.bf16.mxu0 %v4800
    %5887 = vmatpush1.bf16.msra.mxu0 %v4799
    %5888 = vmatprep.subr.bf16.mxu0 %v4808
    %5889 = vmatpush1.bf16.msra.mxu0 %v4807
    %5890 = vmatprep.subr.bf16.mxu0 %v4816
    %5891 = vmatpush1.bf16.msra.mxu0 %v4815
    %5892 = vmatprep.subr.bf16.mxu0 %v4824
    %5893 = vmatpush1.bf16.msra.mxu0 %v4823
    %5894 = vmatprep.subr.bf16.mxu0 %v4832
    %5895 = vmatpush1.bf16.msra.mxu0 %v4831
    %5896 = vmatprep.subr.bf16.mxu0 %v4840
    %5897 = vmatpush1.bf16.msra.mxu0 %v4839
    %5898 = vmatprep.subr.bf16.mxu0 %v4848
    %5899 = vmatpush1.bf16.msra.mxu0 %v4847
    %5900 = vmatprep.subr.bf16.mxu0 %v4856
    %5901 = vmatpush1.bf16.msra.mxu0 %v4855
    %5902 = vmatprep.subr.bf16.mxu0 %v4864
    %5903 = vmatpush1.bf16.msra.mxu0 %v4863
    %5904 = vmatprep.subr.bf16.mxu0 %v4872
    %5905 = vmatpush1.bf16.msra.mxu0 %v4871
    %5906 = vmatprep.subr.bf16.mxu0 %v4880
    %5907 = vmatpush1.bf16.msra.mxu0 %v4879
    %5908 = vmatprep.subr.bf16.mxu0 %v4888
    %5909 = vmatpush1.bf16.msra.mxu0 %v4887
    %5910 = vmatprep.subr.bf16.mxu0 %v4896
    %5911 = vmatpush1.bf16.msra.mxu0 %v4895
    %5912 = vmatprep.subr.bf16.mxu0 %v4904
    %5913 = vmatpush1.bf16.msra.mxu0 %v4903
    %5914 = vmatprep.mubr.bf16.mxu0 %v3070
    %5915 = vmatmul.mubr.bf16.gmra.mrb[0].mxu0 %v3069
    %v5916 = vpop.f32.mrb[0].mxu0
    %v5917 = vadd.f32 %v5876, %v5916
    %v5918 = vpop.f32.mrb[0].mxu0
    %v5919 = vadd.f32 %v5878, %v5918
    %v5920 = vpop.f32.mrb[0].mxu0
    %v5921 = vpop.f32.mrb[0].mxu0
    %5922 = vdwg.mxu0
    %5923 = vmatprep.subr.bf16.mxu0 %v4912
    %5924 = vmatpush1.bf16.msra.mxu0 %v4911
    %5925 = vmatprep.subr.bf16.mxu0 %v4920
    %5926 = vmatpush1.bf16.msra.mxu0 %v4919
    %5927 = vmatprep.subr.bf16.mxu0 %v4928
    %5928 = vmatpush1.bf16.msra.mxu0 %v4927
    %5929 = vmatprep.subr.bf16.mxu0 %v4936
    %5930 = vmatpush1.bf16.msra.mxu0 %v4935
    %5931 = vmatprep.subr.bf16.mxu0 %v4944
    %5932 = vmatpush1.bf16.msra.mxu0 %v4943
    %5933 = vmatprep.subr.bf16.mxu0 %v4952
    %5934 = vmatpush1.bf16.msra.mxu0 %v4951
    %5935 = vmatprep.subr.bf16.mxu0 %v4960
    %5936 = vmatpush1.bf16.msra.mxu0 %v4959
    %5937 = vmatprep.subr.bf16.mxu0 %v4968
    %5938 = vmatpush1.bf16.msra.mxu0 %v4967
    %5939 = vmatprep.subr.bf16.mxu0 %v4976
    %5940 = vmatpush1.bf16.msra.mxu0 %v4975
    %5941 = vmatprep.subr.bf16.mxu0 %v4984
    %5942 = vmatpush1.bf16.msra.mxu0 %v4983
    %5943 = vmatprep.subr.bf16.mxu0 %v4992
    %5944 = vmatpush1.bf16.msra.mxu0 %v4991
    %5945 = vmatprep.subr.bf16.mxu0 %v5000
    %5946 = vmatpush1.bf16.msra.mxu0 %v4999
    %5947 = vmatprep.subr.bf16.mxu0 %v5008
    %5948 = vmatpush1.bf16.msra.mxu0 %v5007
    %5949 = vmatprep.subr.bf16.mxu0 %v5016
    %5950 = vmatpush1.bf16.msra.mxu0 %v5015
    %5951 = vmatprep.subr.bf16.mxu0 %v5024
    %5952 = vmatpush1.bf16.msra.mxu0 %v5023
    %5953 = vmatprep.subr.bf16.mxu0 %v5032
    %5954 = vmatpush1.bf16.msra.mxu0 %v5031
    %5955 = vmatprep.mubr.bf16.mxu0 %v3072
    %5956 = vmatmul.mubr.bf16.gmra.mrb[0].mxu0 %v3071
    %v5957 = vpop.f32.mrb[0].mxu0
    %v5958 = vadd.f32 %v5917, %v5957
    %v5959 = vpop.f32.mrb[0].mxu0
    %v5960 = vadd.f32 %v5919, %v5959
    %v5961 = vpop.f32.mrb[0].mxu0
    %v5962 = vpop.f32.mrb[0].mxu0
    %5963 = vdwg.mxu0
    %5964 = vmatprep.subr.bf16.mxu0 %v5040
    %5965 = vmatpush1.bf16.msra.mxu0 %v5039
    %5966 = vmatprep.subr.bf16.mxu0 %v5048
    %5967 = vmatpush1.bf16.msra.mxu0 %v5047
    %5968 = vmatprep.subr.bf16.mxu0 %v5056
    %5969 = vmatpush1.bf16.msra.mxu0 %v5055
    %5970 = vmatprep.subr.bf16.mxu0 %v5064
    %5971 = vmatpush1.bf16.msra.mxu0 %v5063
    %5972 = vmatprep.subr.bf16.mxu0 %v5072
    %5973 = vmatpush1.bf16.msra.mxu0 %v5071
    %5974 = vmatprep.subr.bf16.mxu0 %v5080
    %5975 = vmatpush1.bf16.msra.mxu0 %v5079
    %5976 = vmatprep.subr.bf16.mxu0 %v5088
    %5977 = vmatpush1.bf16.msra.mxu0 %v5087
    %5978 = vmatprep.subr.bf16.mxu0 %v5096
    %5979 = vmatpush1.bf16.msra.mxu0 %v5095
    %5980 = vmatprep.subr.bf16.mxu0 %v5104
    %5981 = vmatpush1.bf16.msra.mxu0 %v5103
    %5982 = vmatprep.subr.bf16.mxu0 %v5112
    %5983 = vmatpush1.bf16.msra.mxu0 %v5111
    %5984 = vmatprep.subr.bf16.mxu0 %v5120
    %5985 = vmatpush1.bf16.msra.mxu0 %v5119
    %5986 = vmatprep.subr.bf16.mxu0 %v5128
    %5987 = vmatpush1.bf16.msra.mxu0 %v5127
    %5988 = vmatprep.subr.bf16.mxu0 %v5136
    %5989 = vmatpush1.bf16.msra.mxu0 %v5135
    %5990 = vmatprep.subr.bf16.mxu0 %v5144
    %5991 = vmatpush1.bf16.msra.mxu0 %v5143
    %5992 = vmatprep.subr.bf16.mxu0 %v5152
    %5993 = vmatpush1.bf16.msra.mxu0 %v5151
    %5994 = vmatprep.subr.bf16.mxu0 %v5160
    %5995 = vmatpush1.bf16.msra.mxu0 %v5159
    %5996 = vmatprep.mubr.bf16.mxu0 %v3074
    %5997 = vmatmul.mubr.bf16.gmra.mrb[0].mxu0 %v3073
    %v5998 = vpop.f32.mrb[0].mxu0
    %v5999 = vadd.f32 %v5958, %v5998
    %v6000 = vpop.f32.mrb[0].mxu0
    %v6001 = vadd.f32 %v5960, %v6000
    %v6002 = vpop.f32.mrb[0].mxu0
    %v6003 = vpop.f32.mrb[0].mxu0
    %6004 = vdwg.mxu0
    %6005 = vmatprep.subr.bf16.mxu0 %v4658
    %6006 = vmatpush1.bf16.msra.mxu0 %v4657
    %6007 = vmatprep.subr.bf16.mxu0 %v4666
    %6008 = vmatpush1.bf16.msra.mxu0 %v4665
    %6009 = vmatprep.subr.bf16.mxu0 %v4674
    %6010 = vmatpush1.bf16.msra.mxu0 %v4673
    %6011 = vmatprep.subr.bf16.mxu0 %v4682
    %6012 = vmatpush1.bf16.msra.mxu0 %v4681
    %6013 = vmatprep.subr.bf16.mxu0 %v4690
    %6014 = vmatpush1.bf16.msra.mxu0 %v4689
    %6015 = vmatprep.subr.bf16.mxu0 %v4698
    %6016 = vmatpush1.bf16.msra.mxu0 %v4697
    %6017 = vmatprep.subr.bf16.mxu0 %v4706
    %6018 = vmatpush1.bf16.msra.mxu0 %v4705
    %6019 = vmatprep.subr.bf16.mxu0 %v4714
    %6020 = vmatpush1.bf16.msra.mxu0 %v4713
    %6021 = vmatprep.subr.bf16.mxu0 %v4722
    %6022 = vmatpush1.bf16.msra.mxu0 %v4721
    %6023 = vmatprep.subr.bf16.mxu0 %v4730
    %6024 = vmatpush1.bf16.msra.mxu0 %v4729
    %6025 = vmatprep.subr.bf16.mxu0 %v4738
    %6026 = vmatpush1.bf16.msra.mxu0 %v4737
    %6027 = vmatprep.subr.bf16.mxu0 %v4746
    %6028 = vmatpush1.bf16.msra.mxu0 %v4745
    %6029 = vmatprep.subr.bf16.mxu0 %v4754
    %6030 = vmatpush1.bf16.msra.mxu0 %v4753
    %6031 = vmatprep.subr.bf16.mxu0 %v4762
    %6032 = vmatpush1.bf16.msra.mxu0 %v4761
    %6033 = vmatprep.subr.bf16.mxu0 %v4770
    %6034 = vmatpush1.bf16.msra.mxu0 %v4769
    %6035 = vmatprep.subr.bf16.mxu0 %v4778
    %6036 = vmatpush1.bf16.msra.mxu0 %v4777
    %6037 = vmatprep.mubr.bf16.mxu0 %v3068
    %6038 = vmatmul.mubr.bf16.gmra.mrb[0].mxu0 %v3067
    %v6039 = vpop.f32.mrb[0].mxu0
    %v6040 = vadd.f32 %v3096, %v6039
    %v6041 = vpop.f32.mrb[0].mxu0
    %v6042 = vadd.f32 %v3100, %v6041
    %v6043 = vpop.f32.mrb[0].mxu0
    %v6044 = vpop.f32.mrb[0].mxu0
    %6045 = vdwg.mxu0
    %6046 = vmatprep.subr.bf16.mxu0 %v4786
    %6047 = vmatpush1.bf16.msra.mxu0 %v4785
    %6048 = vmatprep.subr.bf16.mxu0 %v4794
    %6049 = vmatpush1.bf16.msra.mxu0 %v4793
    %6050 = vmatprep.subr.bf16.mxu0 %v4802
    %6051 = vmatpush1.bf16.msra.mxu0 %v4801
    %6052 = vmatprep.subr.bf16.mxu0 %v4810
    %6053 = vmatpush1.bf16.msra.mxu0 %v4809
    %6054 = vmatprep.subr.bf16.mxu0 %v4818
    %6055 = vmatpush1.bf16.msra.mxu0 %v4817
    %6056 = vmatprep.subr.bf16.mxu0 %v4826
    %6057 = vmatpush1.bf16.msra.mxu0 %v4825
    %6058 = vmatprep.subr.bf16.mxu0 %v4834
    %6059 = vmatpush1.bf16.msra.mxu0 %v4833
    %6060 = vmatprep.subr.bf16.mxu0 %v4842
    %6061 = vmatpush1.bf16.msra.mxu0 %v4841
    %6062 = vmatprep.subr.bf16.mxu0 %v4850
    %6063 = vmatpush1.bf16.msra.mxu0 %v4849
    %6064 = vmatprep.subr.bf16.mxu0 %v4858
    %6065 = vmatpush1.bf16.msra.mxu0 %v4857
    %6066 = vmatprep.subr.bf16.mxu0 %v4866
    %6067 = vmatpush1.bf16.msra.mxu0 %v4865
    %6068 = vmatprep.subr.bf16.mxu0 %v4874
    %6069 = vmatpush1.bf16.msra.mxu0 %v4873
    %6070 = vmatprep.subr.bf16.mxu0 %v4882
    %6071 = vmatpush1.bf16.msra.mxu0 %v4881
    %6072 = vmatprep.subr.bf16.mxu0 %v4890
    %6073 = vmatpush1.bf16.msra.mxu0 %v4889
    %6074 = vmatprep.subr.bf16.mxu0 %v4898
    %6075 = vmatpush1.bf16.msra.mxu0 %v4897
    %6076 = vmatprep.subr.bf16.mxu0 %v4906
    %6077 = vmatpush1.bf16.msra.mxu0 %v4905
    %6078 = vmatprep.mubr.bf16.mxu0 %v3070
    %6079 = vmatmul.mubr.bf16.gmra.mrb[0].mxu0 %v3069
    %v6080 = vpop.f32.mrb[0].mxu0
    %v6081 = vadd.f32 %v6040, %v6080
    %v6082 = vpop.f32.mrb[0].mxu0
    %v6083 = vadd.f32 %v6042, %v6082
    %v6084 = vpop.f32.mrb[0].mxu0
    %v6085 = vpop.f32.mrb[0].mxu0
    %6086 = vdwg.mxu0
    %6087 = vmatprep.subr.bf16.mxu0 %v4914
    %6088 = vmatpush1.bf16.msra.mxu0 %v4913
    %6089 = vmatprep.subr.bf16.mxu0 %v4922
    %6090 = vmatpush1.bf16.msra.mxu0 %v4921
    %6091 = vmatprep.subr.bf16.mxu0 %v4930
    %6092 = vmatpush1.bf16.msra.mxu0 %v4929
    %6093 = vmatprep.subr.bf16.mxu0 %v4938
    %6094 = vmatpush1.bf16.msra.mxu0 %v4937
    %6095 = vmatprep.subr.bf16.mxu0 %v4946
    %6096 = vmatpush1.bf16.msra.mxu0 %v4945
    %6097 = vmatprep.subr.bf16.mxu0 %v4954
    %6098 = vmatpush1.bf16.msra.mxu0 %v4953
    %6099 = vmatprep.subr.bf16.mxu0 %v4962
    %6100 = vmatpush1.bf16.msra.mxu0 %v4961
    %6101 = vmatprep.subr.bf16.mxu0 %v4970
    %6102 = vmatpush1.bf16.msra.mxu0 %v4969
    %6103 = vmatprep.subr.bf16.mxu0 %v4978
    %6104 = vmatpush1.bf16.msra.mxu0 %v4977
    %6105 = vmatprep.subr.bf16.mxu0 %v4986
    %6106 = vmatpush1.bf16.msra.mxu0 %v4985
    %6107 = vmatprep.subr.bf16.mxu0 %v4994
    %6108 = vmatpush1.bf16.msra.mxu0 %v4993
    %6109 = vmatprep.subr.bf16.mxu0 %v5002
    %6110 = vmatpush1.bf16.msra.mxu0 %v5001
    %6111 = vmatprep.subr.bf16.mxu0 %v5010
    %6112 = vmatpush1.bf16.msra.mxu0 %v5009
    %6113 = vmatprep.subr.bf16.mxu0 %v5018
    %6114 = vmatpush1.bf16.msra.mxu0 %v5017
    %6115 = vmatprep.subr.bf16.mxu0 %v5026
    %6116 = vmatpush1.bf16.msra.mxu0 %v5025
    %6117 = vmatprep.subr.bf16.mxu0 %v5034
    %6118 = vmatpush1.bf16.msra.mxu0 %v5033
    %6119 = vmatprep.mubr.bf16.mxu0 %v3072
    %6120 = vmatmul.mubr.bf16.gmra.mrb[0].mxu0 %v3071
    %v6121 = vpop.f32.mrb[0].mxu0
    %v6122 = vadd.f32 %v6081, %v6121
    %v6123 = vpop.f32.mrb[0].mxu0
    %v6124 = vadd.f32 %v6083, %v6123
    %v6125 = vpop.f32.mrb[0].mxu0
    %v6126 = vpop.f32.mrb[0].mxu0
    %6127 = vdwg.mxu0
    %6128 = vmatprep.subr.bf16.mxu0 %v5042
    %6129 = vmatpush1.bf16.msra.mxu0 %v5041
    %6130 = vmatprep.subr.bf16.mxu0 %v5050
    %6131 = vmatpush1.bf16.msra.mxu0 %v5049
    %6132 = vmatprep.subr.bf16.mxu0 %v5058
    %6133 = vmatpush1.bf16.msra.mxu0 %v5057
    %6134 = vmatprep.subr.bf16.mxu0 %v5066
    %6135 = vmatpush1.bf16.msra.mxu0 %v5065
    %6136 = vmatprep.subr.bf16.mxu0 %v5074
    %6137 = vmatpush1.bf16.msra.mxu0 %v5073
    %6138 = vmatprep.subr.bf16.mxu0 %v5082
    %6139 = vmatpush1.bf16.msra.mxu0 %v5081
    %6140 = vmatprep.subr.bf16.mxu0 %v5090
    %6141 = vmatpush1.bf16.msra.mxu0 %v5089
    %6142 = vmatprep.subr.bf16.mxu0 %v5098
    %6143 = vmatpush1.bf16.msra.mxu0 %v5097
    %6144 = vmatprep.subr.bf16.mxu0 %v5106
    %6145 = vmatpush1.bf16.msra.mxu0 %v5105
    %6146 = vmatprep.subr.bf16.mxu0 %v5114
    %6147 = vmatpush1.bf16.msra.mxu0 %v5113
    %6148 = vmatprep.subr.bf16.mxu0 %v5122
    %6149 = vmatpush1.bf16.msra.mxu0 %v5121
    %6150 = vmatprep.subr.bf16.mxu0 %v5130
    %6151 = vmatpush1.bf16.msra.mxu0 %v5129
    %6152 = vmatprep.subr.bf16.mxu0 %v5138
    %6153 = vmatpush1.bf16.msra.mxu0 %v5137
    %6154 = vmatprep.subr.bf16.mxu0 %v5146
    %6155 = vmatpush1.bf16.msra.mxu0 %v5145
    %6156 = vmatprep.subr.bf16.mxu0 %v5154
    %6157 = vmatpush1.bf16.msra.mxu0 %v5153
    %6158 = vmatprep.subr.bf16.mxu0 %v5162
    %6159 = vmatpush1.bf16.msra.mxu0 %v5161
    %6160 = vmatprep.mubr.bf16.mxu0 %v3074
    %6161 = vmatmul.mubr.bf16.gmra.mrb[0].mxu0 %v3073
    %v6162 = vpop.f32.mrb[0].mxu0
    %v6163 = vadd.f32 %v6122, %v6162
    %v6164 = vpop.f32.mrb[0].mxu0
    %v6165 = vadd.f32 %v6124, %v6164
    %v6166 = vpop.f32.mrb[0].mxu0
    %v6167 = vpop.f32.mrb[0].mxu0
    %6168 = vdwg.mxu0
    %6169 = vmatprep.subr.bf16.mxu0 %v4660
    %6170 = vmatpush1.bf16.msra.mxu0 %v4659
    %6171 = vmatprep.subr.bf16.mxu0 %v4668
    %6172 = vmatpush1.bf16.msra.mxu0 %v4667
    %6173 = vmatprep.subr.bf16.mxu0 %v4676
    %6174 = vmatpush1.bf16.msra.mxu0 %v4675
    %6175 = vmatprep.subr.bf16.mxu0 %v4684
    %6176 = vmatpush1.bf16.msra.mxu0 %v4683
    %6177 = vmatprep.subr.bf16.mxu0 %v4692
    %6178 = vmatpush1.bf16.msra.mxu0 %v4691
    %6179 = vmatprep.subr.bf16.mxu0 %v4700
    %6180 = vmatpush1.bf16.msra.mxu0 %v4699
    %6181 = vmatprep.subr.bf16.mxu0 %v4708
    %6182 = vmatpush1.bf16.msra.mxu0 %v4707
    %6183 = vmatprep.subr.bf16.mxu0 %v4716
    %6184 = vmatpush1.bf16.msra.mxu0 %v4715
    %6185 = vmatprep.subr.bf16.mxu0 %v4724
    %6186 = vmatpush1.bf16.msra.mxu0 %v4723
    %6187 = vmatprep.subr.bf16.mxu0 %v4732
    %6188 = vmatpush1.bf16.msra.mxu0 %v4731
    %6189 = vmatprep.subr.bf16.mxu0 %v4740
    %6190 = vmatpush1.bf16.msra.mxu0 %v4739
    %6191 = vmatprep.subr.bf16.mxu0 %v4748
    %6192 = vmatpush1.bf16.msra.mxu0 %v4747
    %6193 = vmatprep.subr.bf16.mxu0 %v4756
    %6194 = vmatpush1.bf16.msra.mxu0 %v4755
    %6195 = vmatprep.subr.bf16.mxu0 %v4764
    %6196 = vmatpush1.bf16.msra.mxu0 %v4763
    %6197 = vmatprep.subr.bf16.mxu0 %v4772
    %6198 = vmatpush1.bf16.msra.mxu0 %v4771
    %6199 = vmatprep.subr.bf16.mxu0 %v4780
    %6200 = vmatpush1.bf16.msra.mxu0 %v4779
    %6201 = vmatprep.mubr.bf16.mxu0 %v3068
    %6202 = vmatmul.mubr.bf16.gmra.mrb[0].mxu0 %v3067
    %v6203 = vpop.f32.mrb[0].mxu0
    %v6204 = vadd.f32 %v3104, %v6203
    %v6205 = vpop.f32.mrb[0].mxu0
    %v6206 = vadd.f32 %v3108, %v6205
    %v6207 = vpop.f32.mrb[0].mxu0
    %v6208 = vpop.f32.mrb[0].mxu0
    %6209 = vdwg.mxu0
    %6210 = vmatprep.subr.bf16.mxu0 %v4788
    %6211 = vmatpush1.bf16.msra.mxu0 %v4787
    %6212 = vmatprep.subr.bf16.mxu0 %v4796
    %6213 = vmatpush1.bf16.msra.mxu0 %v4795
    %6214 = vmatprep.subr.bf16.mxu0 %v4804
    %6215 = vmatpush1.bf16.msra.mxu0 %v4803
    %6216 = vmatprep.subr.bf16.mxu0 %v4812
    %6217 = vmatpush1.bf16.msra.mxu0 %v4811
    %6218 = vmatprep.subr.bf16.mxu0 %v4820
    %6219 = vmatpush1.bf16.msra.mxu0 %v4819
    %6220 = vmatprep.subr.bf16.mxu0 %v4828
    %6221 = vmatpush1.bf16.msra.mxu0 %v4827
    %6222 = vmatprep.subr.bf16.mxu0 %v4836
    %6223 = vmatpush1.bf16.msra.mxu0 %v4835
    %6224 = vmatprep.subr.bf16.mxu0 %v4844
    %6225 = vmatpush1.bf16.msra.mxu0 %v4843
    %6226 = vmatprep.subr.bf16.mxu0 %v4852
    %6227 = vmatpush1.bf16.msra.mxu0 %v4851
    %6228 = vmatprep.subr.bf16.mxu0 %v4860
    %6229 = vmatpush1.bf16.msra.mxu0 %v4859
    %6230 = vmatprep.subr.bf16.mxu0 %v4868
    %6231 = vmatpush1.bf16.msra.mxu0 %v4867
    %6232 = vmatprep.subr.bf16.mxu0 %v4876
    %6233 = vmatpush1.bf16.msra.mxu0 %v4875
    %6234 = vmatprep.subr.bf16.mxu0 %v4884
    %6235 = vmatpush1.bf16.msra.mxu0 %v4883
    %6236 = vmatprep.subr.bf16.mxu0 %v4892
    %6237 = vmatpush1.bf16.msra.mxu0 %v4891
    %6238 = vmatprep.subr.bf16.mxu0 %v4900
    %6239 = vmatpush1.bf16.msra.mxu0 %v4899
    %6240 = vmatprep.subr.bf16.mxu0 %v4908
    %6241 = vmatpush1.bf16.msra.mxu0 %v4907
    %6242 = vmatprep.mubr.bf16.mxu0 %v3070
    %6243 = vmatmul.mubr.bf16.gmra.mrb[0].mxu0 %v3069
    %v6244 = vpop.f32.mrb[0].mxu0
    %v6245 = vadd.f32 %v6204, %v6244
    %v6246 = vpop.f32.mrb[0].mxu0
    %v6247 = vadd.f32 %v6206, %v6246
    %v6248 = vpop.f32.mrb[0].mxu0
    %v6249 = vpop.f32.mrb[0].mxu0
    %6250 = vdwg.mxu0
    %6251 = vmatprep.subr.bf16.mxu0 %v4916
    %6252 = vmatpush1.bf16.msra.mxu0 %v4915
    %6253 = vmatprep.subr.bf16.mxu0 %v4924
    %6254 = vmatpush1.bf16.msra.mxu0 %v4923
    %6255 = vmatprep.subr.bf16.mxu0 %v4932
    %6256 = vmatpush1.bf16.msra.mxu0 %v4931
    %6257 = vmatprep.subr.bf16.mxu0 %v4940
    %6258 = vmatpush1.bf16.msra.mxu0 %v4939
    %6259 = vmatprep.subr.bf16.mxu0 %v4948
    %6260 = vmatpush1.bf16.msra.mxu0 %v4947
    %6261 = vmatprep.subr.bf16.mxu0 %v4956
    %6262 = vmatpush1.bf16.msra.mxu0 %v4955
    %6263 = vmatprep.subr.bf16.mxu0 %v4964
    %6264 = vmatpush1.bf16.msra.mxu0 %v4963
    %6265 = vmatprep.subr.bf16.mxu0 %v4972
    %6266 = vmatpush1.bf16.msra.mxu0 %v4971
    %6267 = vmatprep.subr.bf16.mxu0 %v4980
    %6268 = vmatpush1.bf16.msra.mxu0 %v4979
    %6269 = vmatprep.subr.bf16.mxu0 %v4988
    %6270 = vmatpush1.bf16.msra.mxu0 %v4987
    %6271 = vmatprep.subr.bf16.mxu0 %v4996
    %6272 = vmatpush1.bf16.msra.mxu0 %v4995
    %6273 = vmatprep.subr.bf16.mxu0 %v5004
    %6274 = vmatpush1.bf16.msra.mxu0 %v5003
    %6275 = vmatprep.subr.bf16.mxu0 %v5012
    %6276 = vmatpush1.bf16.msra.mxu0 %v5011
    %6277 = vmatprep.subr.bf16.mxu0 %v5020
    %6278 = vmatpush1.bf16.msra.mxu0 %v5019
    %6279 = vmatprep.subr.bf16.mxu0 %v5028
    %6280 = vmatpush1.bf16.msra.mxu0 %v5027
    %6281 = vmatprep.subr.bf16.mxu0 %v5036
    %6282 = vmatpush1.bf16.msra.mxu0 %v5035
    %6283 = vmatprep.mubr.bf16.mxu0 %v3072
    %6284 = vmatmul.mubr.bf16.gmra.mrb[0].mxu0 %v3071
    %v6285 = vpop.f32.mrb[0].mxu0
    %v6286 = vadd.f32 %v6245, %v6285
    %v6287 = vpop.f32.mrb[0].mxu0
    %v6288 = vadd.f32 %v6247, %v6287
    %v6289 = vpop.f32.mrb[0].mxu0
    %v6290 = vpop.f32.mrb[0].mxu0
    %6291 = vdwg.mxu0
    %6292 = vmatprep.subr.bf16.mxu0 %v5044
    %6293 = vmatpush1.bf16.msra.mxu0 %v5043
    %6294 = vmatprep.subr.bf16.mxu0 %v5052
    %6295 = vmatpush1.bf16.msra.mxu0 %v5051
    %6296 = vmatprep.subr.bf16.mxu0 %v5060
    %6297 = vmatpush1.bf16.msra.mxu0 %v5059
    %6298 = vmatprep.subr.bf16.mxu0 %v5068
    %6299 = vmatpush1.bf16.msra.mxu0 %v5067
    %6300 = vmatprep.subr.bf16.mxu0 %v5076
    %6301 = vmatpush1.bf16.msra.mxu0 %v5075
    %6302 = vmatprep.subr.bf16.mxu0 %v5084
    %6303 = vmatpush1.bf16.msra.mxu0 %v5083
    %6304 = vmatprep.subr.bf16.mxu0 %v5092
    %6305 = vmatpush1.bf16.msra.mxu0 %v5091
    %6306 = vmatprep.subr.bf16.mxu0 %v5100
    %6307 = vmatpush1.bf16.msra.mxu0 %v5099
    %6308 = vmatprep.subr.bf16.mxu0 %v5108
    %6309 = vmatpush1.bf16.msra.mxu0 %v5107
    %6310 = vmatprep.subr.bf16.mxu0 %v5116
    %6311 = vmatpush1.bf16.msra.mxu0 %v5115
    %6312 = vmatprep.subr.bf16.mxu0 %v5124
    %6313 = vmatpush1.bf16.msra.mxu0 %v5123
    %6314 = vmatprep.subr.bf16.mxu0 %v5132
    %6315 = vmatpush1.bf16.msra.mxu0 %v5131
    %6316 = vmatprep.subr.bf16.mxu0 %v5140
    %6317 = vmatpush1.bf16.msra.mxu0 %v5139
    %6318 = vmatprep.subr.bf16.mxu0 %v5148
    %6319 = vmatpush1.bf16.msra.mxu0 %v5147
    %6320 = vmatprep.subr.bf16.mxu0 %v5156
    %6321 = vmatpush1.bf16.msra.mxu0 %v5155
    %6322 = vmatprep.subr.bf16.mxu0 %v5164
    %6323 = vmatpush1.bf16.msra.mxu0 %v5163
    %6324 = vmatprep.mubr.bf16.mxu0 %v3074
    %6325 = vmatmul.mubr.bf16.gmra.mrb[0].mxu0 %v3073
    %v6326 = vpop.f32.mrb[0].mxu0
    %v6327 = vadd.f32 %v6286, %v6326
    %v6328 = vpop.f32.mrb[0].mxu0
    %v6329 = vadd.f32 %v6288, %v6328
    %v6330 = vpop.f32.mrb[0].mxu0
    %v6331 = vpop.f32.mrb[0].mxu0
    %6332 = vdwg.mxu0
    %v6333 = vmax.f32 %v5835, 0.0
    %v6334 = vmax.f32 %v5837, 0.0
    %v6335 = vmax.f32 %v5999, 0.0
    %v6336 = vmax.f32 %v6001, 0.0
    %v6337 = vmax.f32 %v6163, 0.0
    %v6338 = vmax.f32 %v6165, 0.0
    %v6339 = vmax.f32 %v6327, 0.0
    %v6340 = vmax.f32 %v6329, 0.0
    %v6341 = vld [vmem:[#allocation23] sm:$0xff]
    %v6342 = vld [vmem:[#allocation23 + $0x8] sm:$0xff]
    %v6343 = vld [vmem:[#allocation23 + $0x10] sm:$0xff]
    %v6344 = vld [vmem:[#allocation23 + $0x18] sm:$0xff]
    %v6345 = vld [vmem:[#allocation23 + $0x20] sm:$0xff]
    %v6346 = vld [vmem:[#allocation23 + $0x28] sm:$0xff]
    %v6347 = vld [vmem:[#allocation23 + $0x30] sm:$0xff]
    %v6348 = vld [vmem:[#allocation23 + $0x38] sm:$0xff]
    %v6349 = vld [vmem:[#allocation23 + $0x40] sm:$0xff]
    %v6350 = vld [vmem:[#allocation23 + $0x48] sm:$0xff]
    %v6351 = vld [vmem:[#allocation23 + $0x50] sm:$0xff]
    %v6352 = vld [vmem:[#allocation23 + $0x58] sm:$0xff]
    %v6353 = vld [vmem:[#allocation23 + $0x60] sm:$0xff]
    %v6354 = vld [vmem:[#allocation23 + $0x68] sm:$0xff]
    %v6355 = vld [vmem:[#allocation23 + $0x70] sm:$0xff]
    %v6356 = vld [vmem:[#allocation23 + $0x78] sm:$0xff]
    %v6357 = vld [vmem:[#allocation23 + $0x80] sm:$0xff]
    %v6358 = vld [vmem:[#allocation23 + $0x88] sm:$0xff]
    %v6359 = vld [vmem:[#allocation23 + $0x90] sm:$0xff]
    %v6360 = vld [vmem:[#allocation23 + $0x98] sm:$0xff]
    %v6361 = vld [vmem:[#allocation23 + $0xa0] sm:$0xff]
    %v6362 = vld [vmem:[#allocation23 + $0xa8] sm:$0xff]
    %v6363 = vld [vmem:[#allocation23 + $0xb0] sm:$0xff]
    %v6364 = vld [vmem:[#allocation23 + $0xb8] sm:$0xff]
    %v6365 = vld [vmem:[#allocation23 + $0xc0] sm:$0xff]
    %v6366 = vld [vmem:[#allocation23 + $0xc8] sm:$0xff]
    %v6367 = vld [vmem:[#allocation23 + $0xd0] sm:$0xff]
    %v6368 = vld [vmem:[#allocation23 + $0xd8] sm:$0xff]
    %v6369 = vld [vmem:[#allocation23 + $0xe0] sm:$0xff]
    %v6370 = vld [vmem:[#allocation23 + $0xe8] sm:$0xff]
    %v6371 = vld [vmem:[#allocation23 + $0xf0] sm:$0xff]
    %v6372 = vld [vmem:[#allocation23 + $0xf8] sm:$0xff]
    %v6373 = vld [vmem:[#allocation23 + $0x100] sm:$0xff]
    %v6374 = vld [vmem:[#allocation23 + $0x108] sm:$0xff]
    %v6375 = vld [vmem:[#allocation23 + $0x110] sm:$0xff]
    %v6376 = vld [vmem:[#allocation23 + $0x118] sm:$0xff]
    %v6377 = vld [vmem:[#allocation23 + $0x120] sm:$0xff]
    %v6378 = vld [vmem:[#allocation23 + $0x128] sm:$0xff]
    %v6379 = vld [vmem:[#allocation23 + $0x130] sm:$0xff]
    %v6380 = vld [vmem:[#allocation23 + $0x138] sm:$0xff]
    %v6381 = vld [vmem:[#allocation23 + $0x140] sm:$0xff]
    %v6382 = vld [vmem:[#allocation23 + $0x148] sm:$0xff]
    %v6383 = vld [vmem:[#allocation23 + $0x150] sm:$0xff]
    %v6384 = vld [vmem:[#allocation23 + $0x158] sm:$0xff]
    %v6385 = vld [vmem:[#allocation23 + $0x160] sm:$0xff]
    %v6386 = vld [vmem:[#allocation23 + $0x168] sm:$0xff]
    %v6387 = vld [vmem:[#allocation23 + $0x170] sm:$0xff]
    %v6388 = vld [vmem:[#allocation23 + $0x178] sm:$0xff]
    %v6389 = vld [vmem:[#allocation23 + $0x180] sm:$0xff]
    %v6390 = vld [vmem:[#allocation23 + $0x188] sm:$0xff]
    %v6391 = vld [vmem:[#allocation23 + $0x190] sm:$0xff]
    %v6392 = vld [vmem:[#allocation23 + $0x198] sm:$0xff]
    %v6393 = vld [vmem:[#allocation23 + $0x1a0] sm:$0xff]
    %v6394 = vld [vmem:[#allocation23 + $0x1a8] sm:$0xff]
    %v6395 = vld [vmem:[#allocation23 + $0x1b0] sm:$0xff]
    %v6396 = vld [vmem:[#allocation23 + $0x1b8] sm:$0xff]
    %v6397 = vld [vmem:[#allocation23 + $0x1c0] sm:$0xff]
    %v6398 = vld [vmem:[#allocation23 + $0x1c8] sm:$0xff]
    %v6399 = vld [vmem:[#allocation23 + $0x1d0] sm:$0xff]
    %v6400 = vld [vmem:[#allocation23 + $0x1d8] sm:$0xff]
    %v6401 = vld [vmem:[#allocation23 + $0x1e0] sm:$0xff]
    %v6402 = vld [vmem:[#allocation23 + $0x1e8] sm:$0xff]
    %v6403 = vld [vmem:[#allocation23 + $0x1f0] sm:$0xff]
    %v6404 = vld [vmem:[#allocation23 + $0x1f8] sm:$0xff]
    %v6405 = vld [vmem:[#allocation23 + $0x200] sm:$0xff]
    %v6406 = vld [vmem:[#allocation23 + $0x208] sm:$0xff]
    %v6407 = vld [vmem:[#allocation23 + $0x210] sm:$0xff]
    %v6408 = vld [vmem:[#allocation23 + $0x218] sm:$0xff]
    %v6409 = vld [vmem:[#allocation23 + $0x220] sm:$0xff]
    %v6410 = vld [vmem:[#allocation23 + $0x228] sm:$0xff]
    %v6411 = vld [vmem:[#allocation23 + $0x230] sm:$0xff]
    %v6412 = vld [vmem:[#allocation23 + $0x238] sm:$0xff]
    %v6413 = vld [vmem:[#allocation23 + $0x240] sm:$0xff]
    %v6414 = vld [vmem:[#allocation23 + $0x248] sm:$0xff]
    %v6415 = vld [vmem:[#allocation23 + $0x250] sm:$0xff]
    %v6416 = vld [vmem:[#allocation23 + $0x258] sm:$0xff]
    %v6417 = vld [vmem:[#allocation23 + $0x260] sm:$0xff]
    %v6418 = vld [vmem:[#allocation23 + $0x268] sm:$0xff]
    %v6419 = vld [vmem:[#allocation23 + $0x270] sm:$0xff]
    %v6420 = vld [vmem:[#allocation23 + $0x278] sm:$0xff]
    %v6421 = vld [vmem:[#allocation23 + $0x280] sm:$0xff]
    %v6422 = vld [vmem:[#allocation23 + $0x288] sm:$0xff]
    %v6423 = vld [vmem:[#allocation23 + $0x290] sm:$0xff]
    %v6424 = vld [vmem:[#allocation23 + $0x298] sm:$0xff]
    %v6425 = vld [vmem:[#allocation23 + $0x2a0] sm:$0xff]
    %v6426 = vld [vmem:[#allocation23 + $0x2a8] sm:$0xff]
    %v6427 = vld [vmem:[#allocation23 + $0x2b0] sm:$0xff]
    %v6428 = vld [vmem:[#allocation23 + $0x2b8] sm:$0xff]
    %v6429 = vld [vmem:[#allocation23 + $0x2c0] sm:$0xff]
    %v6430 = vld [vmem:[#allocation23 + $0x2c8] sm:$0xff]
    %v6431 = vld [vmem:[#allocation23 + $0x2d0] sm:$0xff]
    %v6432 = vld [vmem:[#allocation23 + $0x2d8] sm:$0xff]
    %v6433 = vld [vmem:[#allocation23 + $0x2e0] sm:$0xff]
    %v6434 = vld [vmem:[#allocation23 + $0x2e8] sm:$0xff]
    %v6435 = vld [vmem:[#allocation23 + $0x2f0] sm:$0xff]
    %v6436 = vld [vmem:[#allocation23 + $0x2f8] sm:$0xff]
    %v6437 = vld [vmem:[#allocation23 + $0x300] sm:$0xff]
    %v6438 = vld [vmem:[#allocation23 + $0x308] sm:$0xff]
    %v6439 = vld [vmem:[#allocation23 + $0x310] sm:$0xff]
    %v6440 = vld [vmem:[#allocation23 + $0x318] sm:$0xff]
    %v6441 = vld [vmem:[#allocation23 + $0x320] sm:$0xff]
    %v6442 = vld [vmem:[#allocation23 + $0x328] sm:$0xff]
    %v6443 = vld [vmem:[#allocation23 + $0x330] sm:$0xff]
    %v6444 = vld [vmem:[#allocation23 + $0x338] sm:$0xff]
    %v6445 = vld [vmem:[#allocation23 + $0x340] sm:$0xff]
    %v6446 = vld [vmem:[#allocation23 + $0x348] sm:$0xff]
    %v6447 = vld [vmem:[#allocation23 + $0x350] sm:$0xff]
    %v6448 = vld [vmem:[#allocation23 + $0x358] sm:$0xff]
    %v6449 = vld [vmem:[#allocation23 + $0x360] sm:$0xff]
    %v6450 = vld [vmem:[#allocation23 + $0x368] sm:$0xff]
    %v6451 = vld [vmem:[#allocation23 + $0x370] sm:$0xff]
    %v6452 = vld [vmem:[#allocation23 + $0x378] sm:$0xff]
    %v6453 = vld [vmem:[#allocation23 + $0x380] sm:$0xff]
    %v6454 = vld [vmem:[#allocation23 + $0x388] sm:$0xff]
    %v6455 = vld [vmem:[#allocation23 + $0x390] sm:$0xff]
    %v6456 = vld [vmem:[#allocation23 + $0x398] sm:$0xff]
    %v6457 = vld [vmem:[#allocation23 + $0x3a0] sm:$0xff]
    %v6458 = vld [vmem:[#allocation23 + $0x3a8] sm:$0xff]
    %v6459 = vld [vmem:[#allocation23 + $0x3b0] sm:$0xff]
    %v6460 = vld [vmem:[#allocation23 + $0x3b8] sm:$0xff]
    %v6461 = vld [vmem:[#allocation23 + $0x3c0] sm:$0xff]
    %v6462 = vld [vmem:[#allocation23 + $0x3c8] sm:$0xff]
    %v6463 = vld [vmem:[#allocation23 + $0x3d0] sm:$0xff]
    %v6464 = vld [vmem:[#allocation23 + $0x3d8] sm:$0xff]
    %v6465 = vld [vmem:[#allocation23 + $0x3e0] sm:$0xff]
    %v6466 = vld [vmem:[#allocation23 + $0x3e8] sm:$0xff]
    %v6467 = vld [vmem:[#allocation23 + $0x3f0] sm:$0xff]
    %v6468 = vld [vmem:[#allocation23 + $0x3f8] sm:$0xff]
    %v6469 = vld [vmem:[#allocation23 + $0x400] sm:$0xff]
    %v6470 = vld [vmem:[#allocation23 + $0x408] sm:$0xff]
    %v6471 = vld [vmem:[#allocation23 + $0x410] sm:$0xff]
    %v6472 = vld [vmem:[#allocation23 + $0x418] sm:$0xff]
    %v6473 = vld [vmem:[#allocation23 + $0x420] sm:$0xff]
    %v6474 = vld [vmem:[#allocation23 + $0x428] sm:$0xff]
    %v6475 = vld [vmem:[#allocation23 + $0x430] sm:$0xff]
    %v6476 = vld [vmem:[#allocation23 + $0x438] sm:$0xff]
    %v6477 = vld [vmem:[#allocation23 + $0x440] sm:$0xff]
    %v6478 = vld [vmem:[#allocation23 + $0x448] sm:$0xff]
    %v6479 = vld [vmem:[#allocation23 + $0x450] sm:$0xff]
    %v6480 = vld [vmem:[#allocation23 + $0x458] sm:$0xff]
    %v6481 = vld [vmem:[#allocation23 + $0x460] sm:$0xff]
    %v6482 = vld [vmem:[#allocation23 + $0x468] sm:$0xff]
    %v6483 = vld [vmem:[#allocation23 + $0x470] sm:$0xff]
    %v6484 = vld [vmem:[#allocation23 + $0x478] sm:$0xff]
    %v6485 = vld [vmem:[#allocation23 + $0x480] sm:$0xff]
    %v6486 = vld [vmem:[#allocation23 + $0x488] sm:$0xff]
    %v6487 = vld [vmem:[#allocation23 + $0x490] sm:$0xff]
    %v6488 = vld [vmem:[#allocation23 + $0x498] sm:$0xff]
    %v6489 = vld [vmem:[#allocation23 + $0x4a0] sm:$0xff]
    %v6490 = vld [vmem:[#allocation23 + $0x4a8] sm:$0xff]
    %v6491 = vld [vmem:[#allocation23 + $0x4b0] sm:$0xff]
    %v6492 = vld [vmem:[#allocation23 + $0x4b8] sm:$0xff]
    %v6493 = vld [vmem:[#allocation23 + $0x4c0] sm:$0xff]
    %v6494 = vld [vmem:[#allocation23 + $0x4c8] sm:$0xff]
    %v6495 = vld [vmem:[#allocation23 + $0x4d0] sm:$0xff]
    %v6496 = vld [vmem:[#allocation23 + $0x4d8] sm:$0xff]
    %v6497 = vld [vmem:[#allocation23 + $0x4e0] sm:$0xff]
    %v6498 = vld [vmem:[#allocation23 + $0x4e8] sm:$0xff]
    %v6499 = vld [vmem:[#allocation23 + $0x4f0] sm:$0xff]
    %v6500 = vld [vmem:[#allocation23 + $0x4f8] sm:$0xff]
    %v6501 = vld [vmem:[#allocation23 + $0x500] sm:$0xff]
    %v6502 = vld [vmem:[#allocation23 + $0x508] sm:$0xff]
    %v6503 = vld [vmem:[#allocation23 + $0x510] sm:$0xff]
    %v6504 = vld [vmem:[#allocation23 + $0x518] sm:$0xff]
    %v6505 = vld [vmem:[#allocation23 + $0x520] sm:$0xff]
    %v6506 = vld [vmem:[#allocation23 + $0x528] sm:$0xff]
    %v6507 = vld [vmem:[#allocation23 + $0x530] sm:$0xff]
    %v6508 = vld [vmem:[#allocation23 + $0x538] sm:$0xff]
    %v6509 = vld [vmem:[#allocation23 + $0x540] sm:$0xff]
    %v6510 = vld [vmem:[#allocation23 + $0x548] sm:$0xff]
    %v6511 = vld [vmem:[#allocation23 + $0x550] sm:$0xff]
    %v6512 = vld [vmem:[#allocation23 + $0x558] sm:$0xff]
    %v6513 = vld [vmem:[#allocation23 + $0x560] sm:$0xff]
    %v6514 = vld [vmem:[#allocation23 + $0x568] sm:$0xff]
    %v6515 = vld [vmem:[#allocation23 + $0x570] sm:$0xff]
    %v6516 = vld [vmem:[#allocation23 + $0x578] sm:$0xff]
    %v6517 = vld [vmem:[#allocation23 + $0x580] sm:$0xff]
    %v6518 = vld [vmem:[#allocation23 + $0x588] sm:$0xff]
    %v6519 = vld [vmem:[#allocation23 + $0x590] sm:$0xff]
    %v6520 = vld [vmem:[#allocation23 + $0x598] sm:$0xff]
    %v6521 = vld [vmem:[#allocation23 + $0x5a0] sm:$0xff]
    %v6522 = vld [vmem:[#allocation23 + $0x5a8] sm:$0xff]
    %v6523 = vld [vmem:[#allocation23 + $0x5b0] sm:$0xff]
    %v6524 = vld [vmem:[#allocation23 + $0x5b8] sm:$0xff]
    %v6525 = vld [vmem:[#allocation23 + $0x5c0] sm:$0xff]
    %v6526 = vld [vmem:[#allocation23 + $0x5c8] sm:$0xff]
    %v6527 = vld [vmem:[#allocation23 + $0x5d0] sm:$0xff]
    %v6528 = vld [vmem:[#allocation23 + $0x5d8] sm:$0xff]
    %v6529 = vld [vmem:[#allocation23 + $0x5e0] sm:$0xff]
    %v6530 = vld [vmem:[#allocation23 + $0x5e8] sm:$0xff]
    %v6531 = vld [vmem:[#allocation23 + $0x5f0] sm:$0xff]
    %v6532 = vld [vmem:[#allocation23 + $0x5f8] sm:$0xff]
    %v6533 = vld [vmem:[#allocation23 + $0x600] sm:$0xff]
    %v6534 = vld [vmem:[#allocation23 + $0x608] sm:$0xff]
    %v6535 = vld [vmem:[#allocation23 + $0x610] sm:$0xff]
    %v6536 = vld [vmem:[#allocation23 + $0x618] sm:$0xff]
    %v6537 = vld [vmem:[#allocation23 + $0x620] sm:$0xff]
    %v6538 = vld [vmem:[#allocation23 + $0x628] sm:$0xff]
    %v6539 = vld [vmem:[#allocation23 + $0x630] sm:$0xff]
    %v6540 = vld [vmem:[#allocation23 + $0x638] sm:$0xff]
    %v6541 = vld [vmem:[#allocation23 + $0x640] sm:$0xff]
    %v6542 = vld [vmem:[#allocation23 + $0x648] sm:$0xff]
    %v6543 = vld [vmem:[#allocation23 + $0x650] sm:$0xff]
    %v6544 = vld [vmem:[#allocation23 + $0x658] sm:$0xff]
    %v6545 = vld [vmem:[#allocation23 + $0x660] sm:$0xff]
    %v6546 = vld [vmem:[#allocation23 + $0x668] sm:$0xff]
    %v6547 = vld [vmem:[#allocation23 + $0x670] sm:$0xff]
    %v6548 = vld [vmem:[#allocation23 + $0x678] sm:$0xff]
    %v6549 = vld [vmem:[#allocation23 + $0x680] sm:$0xff]
    %v6550 = vld [vmem:[#allocation23 + $0x688] sm:$0xff]
    %v6551 = vld [vmem:[#allocation23 + $0x690] sm:$0xff]
    %v6552 = vld [vmem:[#allocation23 + $0x698] sm:$0xff]
    %v6553 = vld [vmem:[#allocation23 + $0x6a0] sm:$0xff]
    %v6554 = vld [vmem:[#allocation23 + $0x6a8] sm:$0xff]
    %v6555 = vld [vmem:[#allocation23 + $0x6b0] sm:$0xff]
    %v6556 = vld [vmem:[#allocation23 + $0x6b8] sm:$0xff]
    %v6557 = vld [vmem:[#allocation23 + $0x6c0] sm:$0xff]
    %v6558 = vld [vmem:[#allocation23 + $0x6c8] sm:$0xff]
    %v6559 = vld [vmem:[#allocation23 + $0x6d0] sm:$0xff]
    %v6560 = vld [vmem:[#allocation23 + $0x6d8] sm:$0xff]
    %v6561 = vld [vmem:[#allocation23 + $0x6e0] sm:$0xff]
    %v6562 = vld [vmem:[#allocation23 + $0x6e8] sm:$0xff]
    %v6563 = vld [vmem:[#allocation23 + $0x6f0] sm:$0xff]
    %v6564 = vld [vmem:[#allocation23 + $0x6f8] sm:$0xff]
    %v6565 = vld [vmem:[#allocation23 + $0x700] sm:$0xff]
    %v6566 = vld [vmem:[#allocation23 + $0x708] sm:$0xff]
    %v6567 = vld [vmem:[#allocation23 + $0x710] sm:$0xff]
    %v6568 = vld [vmem:[#allocation23 + $0x718] sm:$0xff]
    %v6569 = vld [vmem:[#allocation23 + $0x720] sm:$0xff]
    %v6570 = vld [vmem:[#allocation23 + $0x728] sm:$0xff]
    %v6571 = vld [vmem:[#allocation23 + $0x730] sm:$0xff]
    %v6572 = vld [vmem:[#allocation23 + $0x738] sm:$0xff]
    %v6573 = vld [vmem:[#allocation23 + $0x740] sm:$0xff]
    %v6574 = vld [vmem:[#allocation23 + $0x748] sm:$0xff]
    %v6575 = vld [vmem:[#allocation23 + $0x750] sm:$0xff]
    %v6576 = vld [vmem:[#allocation23 + $0x758] sm:$0xff]
    %v6577 = vld [vmem:[#allocation23 + $0x760] sm:$0xff]
    %v6578 = vld [vmem:[#allocation23 + $0x768] sm:$0xff]
    %v6579 = vld [vmem:[#allocation23 + $0x770] sm:$0xff]
    %v6580 = vld [vmem:[#allocation23 + $0x778] sm:$0xff]
    %v6581 = vld [vmem:[#allocation23 + $0x780] sm:$0xff]
    %v6582 = vld [vmem:[#allocation23 + $0x788] sm:$0xff]
    %v6583 = vld [vmem:[#allocation23 + $0x790] sm:$0xff]
    %v6584 = vld [vmem:[#allocation23 + $0x798] sm:$0xff]
    %v6585 = vld [vmem:[#allocation23 + $0x7a0] sm:$0xff]
    %v6586 = vld [vmem:[#allocation23 + $0x7a8] sm:$0xff]
    %v6587 = vld [vmem:[#allocation23 + $0x7b0] sm:$0xff]
    %v6588 = vld [vmem:[#allocation23 + $0x7b8] sm:$0xff]
    %v6589 = vld [vmem:[#allocation23 + $0x7c0] sm:$0xff]
    %v6590 = vld [vmem:[#allocation23 + $0x7c8] sm:$0xff]
    %v6591 = vld [vmem:[#allocation23 + $0x7d0] sm:$0xff]
    %v6592 = vld [vmem:[#allocation23 + $0x7d8] sm:$0xff]
    %v6593 = vld [vmem:[#allocation23 + $0x7e0] sm:$0xff]
    %v6594 = vld [vmem:[#allocation23 + $0x7e8] sm:$0xff]
    %v6595 = vld [vmem:[#allocation23 + $0x7f0] sm:$0xff]
    %v6596 = vld [vmem:[#allocation23 + $0x7f8] sm:$0xff]
    %v6597 = vpack.c.bf16 %v6333, %v6333
    %v6598 = vpack.c.bf16 %v6334, %v6334
    %v6599 = vpack.c.bf16 %v6335, %v6335
    %v6600 = vpack.c.bf16 %v6336, %v6336
    %v6601 = vpack.c.bf16 %v6337, %v6337
    %v6602 = vpack.c.bf16 %v6338, %v6338
    %v6603 = vpack.c.bf16 %v6339, %v6339
    %v6604 = vpack.c.bf16 %v6340, %v6340
    %v6605 = vld [vmem:[#allocation25] sm:$0xf]
    %v6607 = vlaneseq
    %v6608 = vshrl.u32 %v6607, 7
    %v6609 = vsub.s32 0, %v6608
    %v6610 = vrot.slane %v6605, %v6609
    %v6611 = vlaneseq
    %v6612 = vshrl.u32 %v6611, 7
    %v6613 = vsub.s32 1, %v6612
    %v6614 = vrot.slane %v6605, %v6613
    %v6615 = vlaneseq
    %v6616 = vshrl.u32 %v6615, 7
    %v6617 = vsub.s32 2, %v6616
    %v6618 = vrot.slane %v6605, %v6617
    %v6619 = vlaneseq
    %v6620 = vshrl.u32 %v6619, 7
    %v6621 = vsub.s32 3, %v6620
    %v6622 = vrot.slane %v6605, %v6621
    %v6883 = vunpack.c.l.b16 %v6341
    %v6884 = vunpack.c.h.b16 %v6341
    %v6885 = vunpack.c.l.b16 %v6342
    %v6886 = vunpack.c.h.b16 %v6342
    %v6887 = vunpack.c.l.b16 %v6343
    %v6888 = vunpack.c.h.b16 %v6343
    %v6889 = vunpack.c.l.b16 %v6344
    %v6890 = vunpack.c.h.b16 %v6344
    %v6891 = vunpack.c.l.b16 %v6345
    %v6892 = vunpack.c.h.b16 %v6345
    %v6893 = vunpack.c.l.b16 %v6346
    %v6894 = vunpack.c.h.b16 %v6346
    %v6895 = vunpack.c.l.b16 %v6347
    %v6896 = vunpack.c.h.b16 %v6347
    %v6897 = vunpack.c.l.b16 %v6348
    %v6898 = vunpack.c.h.b16 %v6348
    %v6899 = vunpack.c.l.b16 %v6349
    %v6900 = vunpack.c.h.b16 %v6349
    %v6901 = vunpack.c.l.b16 %v6350
    %v6902 = vunpack.c.h.b16 %v6350
    %v6903 = vunpack.c.l.b16 %v6351
    %v6904 = vunpack.c.h.b16 %v6351
    %v6905 = vunpack.c.l.b16 %v6352
    %v6906 = vunpack.c.h.b16 %v6352
    %v6907 = vunpack.c.l.b16 %v6353
    %v6908 = vunpack.c.h.b16 %v6353
    %v6909 = vunpack.c.l.b16 %v6354
    %v6910 = vunpack.c.h.b16 %v6354
    %v6911 = vunpack.c.l.b16 %v6355
    %v6912 = vunpack.c.h.b16 %v6355
    %v6913 = vunpack.c.l.b16 %v6356
    %v6914 = vunpack.c.h.b16 %v6356
    %v6915 = vunpack.c.l.b16 %v6357
    %v6916 = vunpack.c.h.b16 %v6357
    %v6917 = vunpack.c.l.b16 %v6358
    %v6918 = vunpack.c.h.b16 %v6358
    %v6919 = vunpack.c.l.b16 %v6359
    %v6920 = vunpack.c.h.b16 %v6359
    %v6921 = vunpack.c.l.b16 %v6360
    %v6922 = vunpack.c.h.b16 %v6360
    %v6923 = vunpack.c.l.b16 %v6361
    %v6924 = vunpack.c.h.b16 %v6361
    %v6925 = vunpack.c.l.b16 %v6362
    %v6926 = vunpack.c.h.b16 %v6362
    %v6927 = vunpack.c.l.b16 %v6363
    %v6928 = vunpack.c.h.b16 %v6363
    %v6929 = vunpack.c.l.b16 %v6364
    %v6930 = vunpack.c.h.b16 %v6364
    %v6931 = vunpack.c.l.b16 %v6365
    %v6932 = vunpack.c.h.b16 %v6365
    %v6933 = vunpack.c.l.b16 %v6366
    %v6934 = vunpack.c.h.b16 %v6366
    %v6935 = vunpack.c.l.b16 %v6367
    %v6936 = vunpack.c.h.b16 %v6367
    %v6937 = vunpack.c.l.b16 %v6368
    %v6938 = vunpack.c.h.b16 %v6368
    %v6939 = vunpack.c.l.b16 %v6369
    %v6940 = vunpack.c.h.b16 %v6369
    %v6941 = vunpack.c.l.b16 %v6370
    %v6942 = vunpack.c.h.b16 %v6370
    %v6943 = vunpack.c.l.b16 %v6371
    %v6944 = vunpack.c.h.b16 %v6371
    %v6945 = vunpack.c.l.b16 %v6372
    %v6946 = vunpack.c.h.b16 %v6372
    %v6947 = vunpack.c.l.b16 %v6373
    %v6948 = vunpack.c.h.b16 %v6373
    %v6949 = vunpack.c.l.b16 %v6374
    %v6950 = vunpack.c.h.b16 %v6374
    %v6951 = vunpack.c.l.b16 %v6375
    %v6952 = vunpack.c.h.b16 %v6375
    %v6953 = vunpack.c.l.b16 %v6376
    %v6954 = vunpack.c.h.b16 %v6376
    %v6955 = vunpack.c.l.b16 %v6377
    %v6956 = vunpack.c.h.b16 %v6377
    %v6957 = vunpack.c.l.b16 %v6378
    %v6958 = vunpack.c.h.b16 %v6378
    %v6959 = vunpack.c.l.b16 %v6379
    %v6960 = vunpack.c.h.b16 %v6379
    %v6961 = vunpack.c.l.b16 %v6380
    %v6962 = vunpack.c.h.b16 %v6380
    %v6963 = vunpack.c.l.b16 %v6381
    %v6964 = vunpack.c.h.b16 %v6381
    %v6965 = vunpack.c.l.b16 %v6382
    %v6966 = vunpack.c.h.b16 %v6382
    %v6967 = vunpack.c.l.b16 %v6383
    %v6968 = vunpack.c.h.b16 %v6383
    %v6969 = vunpack.c.l.b16 %v6384
    %v6970 = vunpack.c.h.b16 %v6384
    %v6971 = vunpack.c.l.b16 %v6385
    %v6972 = vunpack.c.h.b16 %v6385
    %v6973 = vunpack.c.l.b16 %v6386
    %v6974 = vunpack.c.h.b16 %v6386
    %v6975 = vunpack.c.l.b16 %v6387
    %v6976 = vunpack.c.h.b16 %v6387
    %v6977 = vunpack.c.l.b16 %v6388
    %v6978 = vunpack.c.h.b16 %v6388
    %v6979 = vunpack.c.l.b16 %v6389
    %v6980 = vunpack.c.h.b16 %v6389
    %v6981 = vunpack.c.l.b16 %v6390
    %v6982 = vunpack.c.h.b16 %v6390
    %v6983 = vunpack.c.l.b16 %v6391
    %v6984 = vunpack.c.h.b16 %v6391
    %v6985 = vunpack.c.l.b16 %v6392
    %v6986 = vunpack.c.h.b16 %v6392
    %v6987 = vunpack.c.l.b16 %v6393
    %v6988 = vunpack.c.h.b16 %v6393
    %v6989 = vunpack.c.l.b16 %v6394
    %v6990 = vunpack.c.h.b16 %v6394
    %v6991 = vunpack.c.l.b16 %v6395
    %v6992 = vunpack.c.h.b16 %v6395
    %v6993 = vunpack.c.l.b16 %v6396
    %v6994 = vunpack.c.h.b16 %v6396
    %v6995 = vunpack.c.l.b16 %v6397
    %v6996 = vunpack.c.h.b16 %v6397
    %v6997 = vunpack.c.l.b16 %v6398
    %v6998 = vunpack.c.h.b16 %v6398
    %v6999 = vunpack.c.l.b16 %v6399
    %v7000 = vunpack.c.h.b16 %v6399
    %v7001 = vunpack.c.l.b16 %v6400
    %v7002 = vunpack.c.h.b16 %v6400
    %v7003 = vunpack.c.l.b16 %v6401
    %v7004 = vunpack.c.h.b16 %v6401
    %v7005 = vunpack.c.l.b16 %v6402
    %v7006 = vunpack.c.h.b16 %v6402
    %v7007 = vunpack.c.l.b16 %v6403
    %v7008 = vunpack.c.h.b16 %v6403
    %v7009 = vunpack.c.l.b16 %v6404
    %v7010 = vunpack.c.h.b16 %v6404
    %v7011 = vunpack.c.l.b16 %v6405
    %v7012 = vunpack.c.h.b16 %v6405
    %v7013 = vunpack.c.l.b16 %v6406
    %v7014 = vunpack.c.h.b16 %v6406
    %v7015 = vunpack.c.l.b16 %v6407
    %v7016 = vunpack.c.h.b16 %v6407
    %v7017 = vunpack.c.l.b16 %v6408
    %v7018 = vunpack.c.h.b16 %v6408
    %v7019 = vunpack.c.l.b16 %v6409
    %v7020 = vunpack.c.h.b16 %v6409
    %v7021 = vunpack.c.l.b16 %v6410
    %v7022 = vunpack.c.h.b16 %v6410
    %v7023 = vunpack.c.l.b16 %v6411
    %v7024 = vunpack.c.h.b16 %v6411
    %v7025 = vunpack.c.l.b16 %v6412
    %v7026 = vunpack.c.h.b16 %v6412
    %v7027 = vunpack.c.l.b16 %v6413
    %v7028 = vunpack.c.h.b16 %v6413
    %v7029 = vunpack.c.l.b16 %v6414
    %v7030 = vunpack.c.h.b16 %v6414
    %v7031 = vunpack.c.l.b16 %v6415
    %v7032 = vunpack.c.h.b16 %v6415
    %v7033 = vunpack.c.l.b16 %v6416
    %v7034 = vunpack.c.h.b16 %v6416
    %v7035 = vunpack.c.l.b16 %v6417
    %v7036 = vunpack.c.h.b16 %v6417
    %v7037 = vunpack.c.l.b16 %v6418
    %v7038 = vunpack.c.h.b16 %v6418
    %v7039 = vunpack.c.l.b16 %v6419
    %v7040 = vunpack.c.h.b16 %v6419
    %v7041 = vunpack.c.l.b16 %v6420
    %v7042 = vunpack.c.h.b16 %v6420
    %v7043 = vunpack.c.l.b16 %v6421
    %v7044 = vunpack.c.h.b16 %v6421
    %v7045 = vunpack.c.l.b16 %v6422
    %v7046 = vunpack.c.h.b16 %v6422
    %v7047 = vunpack.c.l.b16 %v6423
    %v7048 = vunpack.c.h.b16 %v6423
    %v7049 = vunpack.c.l.b16 %v6424
    %v7050 = vunpack.c.h.b16 %v6424
    %v7051 = vunpack.c.l.b16 %v6425
    %v7052 = vunpack.c.h.b16 %v6425
    %v7053 = vunpack.c.l.b16 %v6426
    %v7054 = vunpack.c.h.b16 %v6426
    %v7055 = vunpack.c.l.b16 %v6427
    %v7056 = vunpack.c.h.b16 %v6427
    %v7057 = vunpack.c.l.b16 %v6428
    %v7058 = vunpack.c.h.b16 %v6428
    %v7059 = vunpack.c.l.b16 %v6429
    %v7060 = vunpack.c.h.b16 %v6429
    %v7061 = vunpack.c.l.b16 %v6430
    %v7062 = vunpack.c.h.b16 %v6430
    %v7063 = vunpack.c.l.b16 %v6431
    %v7064 = vunpack.c.h.b16 %v6431
    %v7065 = vunpack.c.l.b16 %v6432
    %v7066 = vunpack.c.h.b16 %v6432
    %v7067 = vunpack.c.l.b16 %v6433
    %v7068 = vunpack.c.h.b16 %v6433
    %v7069 = vunpack.c.l.b16 %v6434
    %v7070 = vunpack.c.h.b16 %v6434
    %v7071 = vunpack.c.l.b16 %v6435
    %v7072 = vunpack.c.h.b16 %v6435
    %v7073 = vunpack.c.l.b16 %v6436
    %v7074 = vunpack.c.h.b16 %v6436
    %v7075 = vunpack.c.l.b16 %v6437
    %v7076 = vunpack.c.h.b16 %v6437
    %v7077 = vunpack.c.l.b16 %v6438
    %v7078 = vunpack.c.h.b16 %v6438
    %v7079 = vunpack.c.l.b16 %v6439
    %v7080 = vunpack.c.h.b16 %v6439
    %v7081 = vunpack.c.l.b16 %v6440
    %v7082 = vunpack.c.h.b16 %v6440
    %v7083 = vunpack.c.l.b16 %v6441
    %v7084 = vunpack.c.h.b16 %v6441
    %v7085 = vunpack.c.l.b16 %v6442
    %v7086 = vunpack.c.h.b16 %v6442
    %v7087 = vunpack.c.l.b16 %v6443
    %v7088 = vunpack.c.h.b16 %v6443
    %v7089 = vunpack.c.l.b16 %v6444
    %v7090 = vunpack.c.h.b16 %v6444
    %v7091 = vunpack.c.l.b16 %v6445
    %v7092 = vunpack.c.h.b16 %v6445
    %v7093 = vunpack.c.l.b16 %v6446
    %v7094 = vunpack.c.h.b16 %v6446
    %v7095 = vunpack.c.l.b16 %v6447
    %v7096 = vunpack.c.h.b16 %v6447
    %v7097 = vunpack.c.l.b16 %v6448
    %v7098 = vunpack.c.h.b16 %v6448
    %v7099 = vunpack.c.l.b16 %v6449
    %v7100 = vunpack.c.h.b16 %v6449
    %v7101 = vunpack.c.l.b16 %v6450
    %v7102 = vunpack.c.h.b16 %v6450
    %v7103 = vunpack.c.l.b16 %v6451
    %v7104 = vunpack.c.h.b16 %v6451
    %v7105 = vunpack.c.l.b16 %v6452
    %v7106 = vunpack.c.h.b16 %v6452
    %v7107 = vunpack.c.l.b16 %v6453
    %v7108 = vunpack.c.h.b16 %v6453
    %v7109 = vunpack.c.l.b16 %v6454
    %v7110 = vunpack.c.h.b16 %v6454
    %v7111 = vunpack.c.l.b16 %v6455
    %v7112 = vunpack.c.h.b16 %v6455
    %v7113 = vunpack.c.l.b16 %v6456
    %v7114 = vunpack.c.h.b16 %v6456
    %v7115 = vunpack.c.l.b16 %v6457
    %v7116 = vunpack.c.h.b16 %v6457
    %v7117 = vunpack.c.l.b16 %v6458
    %v7118 = vunpack.c.h.b16 %v6458
    %v7119 = vunpack.c.l.b16 %v6459
    %v7120 = vunpack.c.h.b16 %v6459
    %v7121 = vunpack.c.l.b16 %v6460
    %v7122 = vunpack.c.h.b16 %v6460
    %v7123 = vunpack.c.l.b16 %v6461
    %v7124 = vunpack.c.h.b16 %v6461
    %v7125 = vunpack.c.l.b16 %v6462
    %v7126 = vunpack.c.h.b16 %v6462
    %v7127 = vunpack.c.l.b16 %v6463
    %v7128 = vunpack.c.h.b16 %v6463
    %v7129 = vunpack.c.l.b16 %v6464
    %v7130 = vunpack.c.h.b16 %v6464
    %v7131 = vunpack.c.l.b16 %v6465
    %v7132 = vunpack.c.h.b16 %v6465
    %v7133 = vunpack.c.l.b16 %v6466
    %v7134 = vunpack.c.h.b16 %v6466
    %v7135 = vunpack.c.l.b16 %v6467
    %v7136 = vunpack.c.h.b16 %v6467
    %v7137 = vunpack.c.l.b16 %v6468
    %v7138 = vunpack.c.h.b16 %v6468
    %v7139 = vunpack.c.l.b16 %v6469
    %v7140 = vunpack.c.h.b16 %v6469
    %v7141 = vunpack.c.l.b16 %v6470
    %v7142 = vunpack.c.h.b16 %v6470
    %v7143 = vunpack.c.l.b16 %v6471
    %v7144 = vunpack.c.h.b16 %v6471
    %v7145 = vunpack.c.l.b16 %v6472
    %v7146 = vunpack.c.h.b16 %v6472
    %v7147 = vunpack.c.l.b16 %v6473
    %v7148 = vunpack.c.h.b16 %v6473
    %v7149 = vunpack.c.l.b16 %v6474
    %v7150 = vunpack.c.h.b16 %v6474
    %v7151 = vunpack.c.l.b16 %v6475
    %v7152 = vunpack.c.h.b16 %v6475
    %v7153 = vunpack.c.l.b16 %v6476
    %v7154 = vunpack.c.h.b16 %v6476
    %v7155 = vunpack.c.l.b16 %v6477
    %v7156 = vunpack.c.h.b16 %v6477
    %v7157 = vunpack.c.l.b16 %v6478
    %v7158 = vunpack.c.h.b16 %v6478
    %v7159 = vunpack.c.l.b16 %v6479
    %v7160 = vunpack.c.h.b16 %v6479
    %v7161 = vunpack.c.l.b16 %v6480
    %v7162 = vunpack.c.h.b16 %v6480
    %v7163 = vunpack.c.l.b16 %v6481
    %v7164 = vunpack.c.h.b16 %v6481
    %v7165 = vunpack.c.l.b16 %v6482
    %v7166 = vunpack.c.h.b16 %v6482
    %v7167 = vunpack.c.l.b16 %v6483
    %v7168 = vunpack.c.h.b16 %v6483
    %v7169 = vunpack.c.l.b16 %v6484
    %v7170 = vunpack.c.h.b16 %v6484
    %v7171 = vunpack.c.l.b16 %v6485
    %v7172 = vunpack.c.h.b16 %v6485
    %v7173 = vunpack.c.l.b16 %v6486
    %v7174 = vunpack.c.h.b16 %v6486
    %v7175 = vunpack.c.l.b16 %v6487
    %v7176 = vunpack.c.h.b16 %v6487
    %v7177 = vunpack.c.l.b16 %v6488
    %v7178 = vunpack.c.h.b16 %v6488
    %v7179 = vunpack.c.l.b16 %v6489
    %v7180 = vunpack.c.h.b16 %v6489
    %v7181 = vunpack.c.l.b16 %v6490
    %v7182 = vunpack.c.h.b16 %v6490
    %v7183 = vunpack.c.l.b16 %v6491
    %v7184 = vunpack.c.h.b16 %v6491
    %v7185 = vunpack.c.l.b16 %v6492
    %v7186 = vunpack.c.h.b16 %v6492
    %v7187 = vunpack.c.l.b16 %v6493
    %v7188 = vunpack.c.h.b16 %v6493
    %v7189 = vunpack.c.l.b16 %v6494
    %v7190 = vunpack.c.h.b16 %v6494
    %v7191 = vunpack.c.l.b16 %v6495
    %v7192 = vunpack.c.h.b16 %v6495
    %v7193 = vunpack.c.l.b16 %v6496
    %v7194 = vunpack.c.h.b16 %v6496
    %v7195 = vunpack.c.l.b16 %v6497
    %v7196 = vunpack.c.h.b16 %v6497
    %v7197 = vunpack.c.l.b16 %v6498
    %v7198 = vunpack.c.h.b16 %v6498
    %v7199 = vunpack.c.l.b16 %v6499
    %v7200 = vunpack.c.h.b16 %v6499
    %v7201 = vunpack.c.l.b16 %v6500
    %v7202 = vunpack.c.h.b16 %v6500
    %v7203 = vunpack.c.l.b16 %v6501
    %v7204 = vunpack.c.h.b16 %v6501
    %v7205 = vunpack.c.l.b16 %v6502
    %v7206 = vunpack.c.h.b16 %v6502
    %v7207 = vunpack.c.l.b16 %v6503
    %v7208 = vunpack.c.h.b16 %v6503
    %v7209 = vunpack.c.l.b16 %v6504
    %v7210 = vunpack.c.h.b16 %v6504
    %v7211 = vunpack.c.l.b16 %v6505
    %v7212 = vunpack.c.h.b16 %v6505
    %v7213 = vunpack.c.l.b16 %v6506
    %v7214 = vunpack.c.h.b16 %v6506
    %v7215 = vunpack.c.l.b16 %v6507
    %v7216 = vunpack.c.h.b16 %v6507
    %v7217 = vunpack.c.l.b16 %v6508
    %v7218 = vunpack.c.h.b16 %v6508
    %v7219 = vunpack.c.l.b16 %v6509
    %v7220 = vunpack.c.h.b16 %v6509
    %v7221 = vunpack.c.l.b16 %v6510
    %v7222 = vunpack.c.h.b16 %v6510
    %v7223 = vunpack.c.l.b16 %v6511
    %v7224 = vunpack.c.h.b16 %v6511
    %v7225 = vunpack.c.l.b16 %v6512
    %v7226 = vunpack.c.h.b16 %v6512
    %v7227 = vunpack.c.l.b16 %v6513
    %v7228 = vunpack.c.h.b16 %v6513
    %v7229 = vunpack.c.l.b16 %v6514
    %v7230 = vunpack.c.h.b16 %v6514
    %v7231 = vunpack.c.l.b16 %v6515
    %v7232 = vunpack.c.h.b16 %v6515
    %v7233 = vunpack.c.l.b16 %v6516
    %v7234 = vunpack.c.h.b16 %v6516
    %v7235 = vunpack.c.l.b16 %v6517
    %v7236 = vunpack.c.h.b16 %v6517
    %v7237 = vunpack.c.l.b16 %v6518
    %v7238 = vunpack.c.h.b16 %v6518
    %v7239 = vunpack.c.l.b16 %v6519
    %v7240 = vunpack.c.h.b16 %v6519
    %v7241 = vunpack.c.l.b16 %v6520
    %v7242 = vunpack.c.h.b16 %v6520
    %v7243 = vunpack.c.l.b16 %v6521
    %v7244 = vunpack.c.h.b16 %v6521
    %v7245 = vunpack.c.l.b16 %v6522
    %v7246 = vunpack.c.h.b16 %v6522
    %v7247 = vunpack.c.l.b16 %v6523
    %v7248 = vunpack.c.h.b16 %v6523
    %v7249 = vunpack.c.l.b16 %v6524
    %v7250 = vunpack.c.h.b16 %v6524
    %v7251 = vunpack.c.l.b16 %v6525
    %v7252 = vunpack.c.h.b16 %v6525
    %v7253 = vunpack.c.l.b16 %v6526
    %v7254 = vunpack.c.h.b16 %v6526
    %v7255 = vunpack.c.l.b16 %v6527
    %v7256 = vunpack.c.h.b16 %v6527
    %v7257 = vunpack.c.l.b16 %v6528
    %v7258 = vunpack.c.h.b16 %v6528
    %v7259 = vunpack.c.l.b16 %v6529
    %v7260 = vunpack.c.h.b16 %v6529
    %v7261 = vunpack.c.l.b16 %v6530
    %v7262 = vunpack.c.h.b16 %v6530
    %v7263 = vunpack.c.l.b16 %v6531
    %v7264 = vunpack.c.h.b16 %v6531
    %v7265 = vunpack.c.l.b16 %v6532
    %v7266 = vunpack.c.h.b16 %v6532
    %v7267 = vunpack.c.l.b16 %v6533
    %v7268 = vunpack.c.h.b16 %v6533
    %v7269 = vunpack.c.l.b16 %v6534
    %v7270 = vunpack.c.h.b16 %v6534
    %v7271 = vunpack.c.l.b16 %v6535
    %v7272 = vunpack.c.h.b16 %v6535
    %v7273 = vunpack.c.l.b16 %v6536
    %v7274 = vunpack.c.h.b16 %v6536
    %v7275 = vunpack.c.l.b16 %v6537
    %v7276 = vunpack.c.h.b16 %v6537
    %v7277 = vunpack.c.l.b16 %v6538
    %v7278 = vunpack.c.h.b16 %v6538
    %v7279 = vunpack.c.l.b16 %v6539
    %v7280 = vunpack.c.h.b16 %v6539
    %v7281 = vunpack.c.l.b16 %v6540
    %v7282 = vunpack.c.h.b16 %v6540
    %v7283 = vunpack.c.l.b16 %v6541
    %v7284 = vunpack.c.h.b16 %v6541
    %v7285 = vunpack.c.l.b16 %v6542
    %v7286 = vunpack.c.h.b16 %v6542
    %v7287 = vunpack.c.l.b16 %v6543
    %v7288 = vunpack.c.h.b16 %v6543
    %v7289 = vunpack.c.l.b16 %v6544
    %v7290 = vunpack.c.h.b16 %v6544
    %v7291 = vunpack.c.l.b16 %v6545
    %v7292 = vunpack.c.h.b16 %v6545
    %v7293 = vunpack.c.l.b16 %v6546
    %v7294 = vunpack.c.h.b16 %v6546
    %v7295 = vunpack.c.l.b16 %v6547
    %v7296 = vunpack.c.h.b16 %v6547
    %v7297 = vunpack.c.l.b16 %v6548
    %v7298 = vunpack.c.h.b16 %v6548
    %v7299 = vunpack.c.l.b16 %v6549
    %v7300 = vunpack.c.h.b16 %v6549
    %v7301 = vunpack.c.l.b16 %v6550
    %v7302 = vunpack.c.h.b16 %v6550
    %v7303 = vunpack.c.l.b16 %v6551
    %v7304 = vunpack.c.h.b16 %v6551
    %v7305 = vunpack.c.l.b16 %v6552
    %v7306 = vunpack.c.h.b16 %v6552
    %v7307 = vunpack.c.l.b16 %v6553
    %v7308 = vunpack.c.h.b16 %v6553
    %v7309 = vunpack.c.l.b16 %v6554
    %v7310 = vunpack.c.h.b16 %v6554
    %v7311 = vunpack.c.l.b16 %v6555
    %v7312 = vunpack.c.h.b16 %v6555
    %v7313 = vunpack.c.l.b16 %v6556
    %v7314 = vunpack.c.h.b16 %v6556
    %v7315 = vunpack.c.l.b16 %v6557
    %v7316 = vunpack.c.h.b16 %v6557
    %v7317 = vunpack.c.l.b16 %v6558
    %v7318 = vunpack.c.h.b16 %v6558
    %v7319 = vunpack.c.l.b16 %v6559
    %v7320 = vunpack.c.h.b16 %v6559
    %v7321 = vunpack.c.l.b16 %v6560
    %v7322 = vunpack.c.h.b16 %v6560
    %v7323 = vunpack.c.l.b16 %v6561
    %v7324 = vunpack.c.h.b16 %v6561
    %v7325 = vunpack.c.l.b16 %v6562
    %v7326 = vunpack.c.h.b16 %v6562
    %v7327 = vunpack.c.l.b16 %v6563
    %v7328 = vunpack.c.h.b16 %v6563
    %v7329 = vunpack.c.l.b16 %v6564
    %v7330 = vunpack.c.h.b16 %v6564
    %v7331 = vunpack.c.l.b16 %v6565
    %v7332 = vunpack.c.h.b16 %v6565
    %v7333 = vunpack.c.l.b16 %v6566
    %v7334 = vunpack.c.h.b16 %v6566
    %v7335 = vunpack.c.l.b16 %v6567
    %v7336 = vunpack.c.h.b16 %v6567
    %v7337 = vunpack.c.l.b16 %v6568
    %v7338 = vunpack.c.h.b16 %v6568
    %v7339 = vunpack.c.l.b16 %v6569
    %v7340 = vunpack.c.h.b16 %v6569
    %v7341 = vunpack.c.l.b16 %v6570
    %v7342 = vunpack.c.h.b16 %v6570
    %v7343 = vunpack.c.l.b16 %v6571
    %v7344 = vunpack.c.h.b16 %v6571
    %v7345 = vunpack.c.l.b16 %v6572
    %v7346 = vunpack.c.h.b16 %v6572
    %v7347 = vunpack.c.l.b16 %v6573
    %v7348 = vunpack.c.h.b16 %v6573
    %v7349 = vunpack.c.l.b16 %v6574
    %v7350 = vunpack.c.h.b16 %v6574
    %v7351 = vunpack.c.l.b16 %v6575
    %v7352 = vunpack.c.h.b16 %v6575
    %v7353 = vunpack.c.l.b16 %v6576
    %v7354 = vunpack.c.h.b16 %v6576
    %v7355 = vunpack.c.l.b16 %v6577
    %v7356 = vunpack.c.h.b16 %v6577
    %v7357 = vunpack.c.l.b16 %v6578
    %v7358 = vunpack.c.h.b16 %v6578
    %v7359 = vunpack.c.l.b16 %v6579
    %v7360 = vunpack.c.h.b16 %v6579
    %v7361 = vunpack.c.l.b16 %v6580
    %v7362 = vunpack.c.h.b16 %v6580
    %v7363 = vunpack.c.l.b16 %v6581
    %v7364 = vunpack.c.h.b16 %v6581
    %v7365 = vunpack.c.l.b16 %v6582
    %v7366 = vunpack.c.h.b16 %v6582
    %v7367 = vunpack.c.l.b16 %v6583
    %v7368 = vunpack.c.h.b16 %v6583
    %v7369 = vunpack.c.l.b16 %v6584
    %v7370 = vunpack.c.h.b16 %v6584
    %v7371 = vunpack.c.l.b16 %v6585
    %v7372 = vunpack.c.h.b16 %v6585
    %v7373 = vunpack.c.l.b16 %v6586
    %v7374 = vunpack.c.h.b16 %v6586
    %v7375 = vunpack.c.l.b16 %v6587
    %v7376 = vunpack.c.h.b16 %v6587
    %v7377 = vunpack.c.l.b16 %v6588
    %v7378 = vunpack.c.h.b16 %v6588
    %v7379 = vunpack.c.l.b16 %v6589
    %v7380 = vunpack.c.h.b16 %v6589
    %v7381 = vunpack.c.l.b16 %v6590
    %v7382 = vunpack.c.h.b16 %v6590
    %v7383 = vunpack.c.l.b16 %v6591
    %v7384 = vunpack.c.h.b16 %v6591
    %v7385 = vunpack.c.l.b16 %v6592
    %v7386 = vunpack.c.h.b16 %v6592
    %v7387 = vunpack.c.l.b16 %v6593
    %v7388 = vunpack.c.h.b16 %v6593
    %v7389 = vunpack.c.l.b16 %v6594
    %v7390 = vunpack.c.h.b16 %v6594
    %v7391 = vunpack.c.l.b16 %v6595
    %v7392 = vunpack.c.h.b16 %v6595
    %v7393 = vunpack.c.l.b16 %v6596
    %v7394 = vunpack.c.h.b16 %v6596
    %v7395 = vpack.c.b16 %v6887, %v6883
    %v7396 = vpack.c.b16 %v6888, %v6884
    %v7397 = vpack.c.b16 %v6889, %v6885
    %v7398 = vpack.c.b16 %v6890, %v6886
    %v7399 = vpack.c.b16 %v6895, %v6891
    %v7400 = vpack.c.b16 %v6896, %v6892
    %v7401 = vpack.c.b16 %v6897, %v6893
    %v7402 = vpack.c.b16 %v6898, %v6894
    %v7403 = vpack.c.b16 %v6903, %v6899
    %v7404 = vpack.c.b16 %v6904, %v6900
    %v7405 = vpack.c.b16 %v6905, %v6901
    %v7406 = vpack.c.b16 %v6906, %v6902
    %v7407 = vpack.c.b16 %v6911, %v6907
    %v7408 = vpack.c.b16 %v6912, %v6908
    %v7409 = vpack.c.b16 %v6913, %v6909
    %v7410 = vpack.c.b16 %v6914, %v6910
    %v7411 = vpack.c.b16 %v6919, %v6915
    %v7412 = vpack.c.b16 %v6920, %v6916
    %v7413 = vpack.c.b16 %v6921, %v6917
    %v7414 = vpack.c.b16 %v6922, %v6918
    %v7415 = vpack.c.b16 %v6927, %v6923
    %v7416 = vpack.c.b16 %v6928, %v6924
    %v7417 = vpack.c.b16 %v6929, %v6925
    %v7418 = vpack.c.b16 %v6930, %v6926
    %v7419 = vpack.c.b16 %v6935, %v6931
    %v7420 = vpack.c.b16 %v6936, %v6932
    %v7421 = vpack.c.b16 %v6937, %v6933
    %v7422 = vpack.c.b16 %v6938, %v6934
    %v7423 = vpack.c.b16 %v6943, %v6939
    %v7424 = vpack.c.b16 %v6944, %v6940
    %v7425 = vpack.c.b16 %v6945, %v6941
    %v7426 = vpack.c.b16 %v6946, %v6942
    %v7427 = vpack.c.b16 %v6951, %v6947
    %v7428 = vpack.c.b16 %v6952, %v6948
    %v7429 = vpack.c.b16 %v6953, %v6949
    %v7430 = vpack.c.b16 %v6954, %v6950
    %v7431 = vpack.c.b16 %v6959, %v6955
    %v7432 = vpack.c.b16 %v6960, %v6956
    %v7433 = vpack.c.b16 %v6961, %v6957
    %v7434 = vpack.c.b16 %v6962, %v6958
    %v7435 = vpack.c.b16 %v6967, %v6963
    %v7436 = vpack.c.b16 %v6968, %v6964
    %v7437 = vpack.c.b16 %v6969, %v6965
    %v7438 = vpack.c.b16 %v6970, %v6966
    %v7439 = vpack.c.b16 %v6975, %v6971
    %v7440 = vpack.c.b16 %v6976, %v6972
    %v7441 = vpack.c.b16 %v6977, %v6973
    %v7442 = vpack.c.b16 %v6978, %v6974
    %v7443 = vpack.c.b16 %v6983, %v6979
    %v7444 = vpack.c.b16 %v6984, %v6980
    %v7445 = vpack.c.b16 %v6985, %v6981
    %v7446 = vpack.c.b16 %v6986, %v6982
    %v7447 = vpack.c.b16 %v6991, %v6987
    %v7448 = vpack.c.b16 %v6992, %v6988
    %v7449 = vpack.c.b16 %v6993, %v6989
    %v7450 = vpack.c.b16 %v6994, %v6990
    %v7451 = vpack.c.b16 %v6999, %v6995
    %v7452 = vpack.c.b16 %v7000, %v6996
    %v7453 = vpack.c.b16 %v7001, %v6997
    %v7454 = vpack.c.b16 %v7002, %v6998
    %v7455 = vpack.c.b16 %v7007, %v7003
    %v7456 = vpack.c.b16 %v7008, %v7004
    %v7457 = vpack.c.b16 %v7009, %v7005
    %v7458 = vpack.c.b16 %v7010, %v7006
    %v7459 = vpack.c.b16 %v7015, %v7011
    %v7460 = vpack.c.b16 %v7016, %v7012
    %v7461 = vpack.c.b16 %v7017, %v7013
    %v7462 = vpack.c.b16 %v7018, %v7014
    %v7463 = vpack.c.b16 %v7023, %v7019
    %v7464 = vpack.c.b16 %v7024, %v7020
    %v7465 = vpack.c.b16 %v7025, %v7021
    %v7466 = vpack.c.b16 %v7026, %v7022
    %v7467 = vpack.c.b16 %v7031, %v7027
    %v7468 = vpack.c.b16 %v7032, %v7028
    %v7469 = vpack.c.b16 %v7033, %v7029
    %v7470 = vpack.c.b16 %v7034, %v7030
    %v7471 = vpack.c.b16 %v7039, %v7035
    %v7472 = vpack.c.b16 %v7040, %v7036
    %v7473 = vpack.c.b16 %v7041, %v7037
    %v7474 = vpack.c.b16 %v7042, %v7038
    %v7475 = vpack.c.b16 %v7047, %v7043
    %v7476 = vpack.c.b16 %v7048, %v7044
    %v7477 = vpack.c.b16 %v7049, %v7045
    %v7478 = vpack.c.b16 %v7050, %v7046
    %v7479 = vpack.c.b16 %v7055, %v7051
    %v7480 = vpack.c.b16 %v7056, %v7052
    %v7481 = vpack.c.b16 %v7057, %v7053
    %v7482 = vpack.c.b16 %v7058, %v7054
    %v7483 = vpack.c.b16 %v7063, %v7059
    %v7484 = vpack.c.b16 %v7064, %v7060
    %v7485 = vpack.c.b16 %v7065, %v7061
    %v7486 = vpack.c.b16 %v7066, %v7062
    %v7487 = vpack.c.b16 %v7071, %v7067
    %v7488 = vpack.c.b16 %v7072, %v7068
    %v7489 = vpack.c.b16 %v7073, %v7069
    %v7490 = vpack.c.b16 %v7074, %v7070
    %v7491 = vpack.c.b16 %v7079, %v7075
    %v7492 = vpack.c.b16 %v7080, %v7076
    %v7493 = vpack.c.b16 %v7081, %v7077
    %v7494 = vpack.c.b16 %v7082, %v7078
    %v7495 = vpack.c.b16 %v7087, %v7083
    %v7496 = vpack.c.b16 %v7088, %v7084
    %v7497 = vpack.c.b16 %v7089, %v7085
    %v7498 = vpack.c.b16 %v7090, %v7086
    %v7499 = vpack.c.b16 %v7095, %v7091
    %v7500 = vpack.c.b16 %v7096, %v7092
    %v7501 = vpack.c.b16 %v7097, %v7093
    %v7502 = vpack.c.b16 %v7098, %v7094
    %v7503 = vpack.c.b16 %v7103, %v7099
    %v7504 = vpack.c.b16 %v7104, %v7100
    %v7505 = vpack.c.b16 %v7105, %v7101
    %v7506 = vpack.c.b16 %v7106, %v7102
    %v7507 = vpack.c.b16 %v7111, %v7107
    %v7508 = vpack.c.b16 %v7112, %v7108
    %v7509 = vpack.c.b16 %v7113, %v7109
    %v7510 = vpack.c.b16 %v7114, %v7110
    %v7511 = vpack.c.b16 %v7119, %v7115
    %v7512 = vpack.c.b16 %v7120, %v7116
    %v7513 = vpack.c.b16 %v7121, %v7117
    %v7514 = vpack.c.b16 %v7122, %v7118
    %v7515 = vpack.c.b16 %v7127, %v7123
    %v7516 = vpack.c.b16 %v7128, %v7124
    %v7517 = vpack.c.b16 %v7129, %v7125
    %v7518 = vpack.c.b16 %v7130, %v7126
    %v7519 = vpack.c.b16 %v7135, %v7131
    %v7520 = vpack.c.b16 %v7136, %v7132
    %v7521 = vpack.c.b16 %v7137, %v7133
    %v7522 = vpack.c.b16 %v7138, %v7134
    %v7523 = vpack.c.b16 %v7143, %v7139
    %v7524 = vpack.c.b16 %v7144, %v7140
    %v7525 = vpack.c.b16 %v7145, %v7141
    %v7526 = vpack.c.b16 %v7146, %v7142
    %v7527 = vpack.c.b16 %v7151, %v7147
    %v7528 = vpack.c.b16 %v7152, %v7148
    %v7529 = vpack.c.b16 %v7153, %v7149
    %v7530 = vpack.c.b16 %v7154, %v7150
    %v7531 = vpack.c.b16 %v7159, %v7155
    %v7532 = vpack.c.b16 %v7160, %v7156
    %v7533 = vpack.c.b16 %v7161, %v7157
    %v7534 = vpack.c.b16 %v7162, %v7158
    %v7535 = vpack.c.b16 %v7167, %v7163
    %v7536 = vpack.c.b16 %v7168, %v7164
    %v7537 = vpack.c.b16 %v7169, %v7165
    %v7538 = vpack.c.b16 %v7170, %v7166
    %v7539 = vpack.c.b16 %v7175, %v7171
    %v7540 = vpack.c.b16 %v7176, %v7172
    %v7541 = vpack.c.b16 %v7177, %v7173
    %v7542 = vpack.c.b16 %v7178, %v7174
    %v7543 = vpack.c.b16 %v7183, %v7179
    %v7544 = vpack.c.b16 %v7184, %v7180
    %v7545 = vpack.c.b16 %v7185, %v7181
    %v7546 = vpack.c.b16 %v7186, %v7182
    %v7547 = vpack.c.b16 %v7191, %v7187
    %v7548 = vpack.c.b16 %v7192, %v7188
    %v7549 = vpack.c.b16 %v7193, %v7189
    %v7550 = vpack.c.b16 %v7194, %v7190
    %v7551 = vpack.c.b16 %v7199, %v7195
    %v7552 = vpack.c.b16 %v7200, %v7196
    %v7553 = vpack.c.b16 %v7201, %v7197
    %v7554 = vpack.c.b16 %v7202, %v7198
    %v7555 = vpack.c.b16 %v7207, %v7203
    %v7556 = vpack.c.b16 %v7208, %v7204
    %v7557 = vpack.c.b16 %v7209, %v7205
    %v7558 = vpack.c.b16 %v7210, %v7206
    %v7559 = vpack.c.b16 %v7215, %v7211
    %v7560 = vpack.c.b16 %v7216, %v7212
    %v7561 = vpack.c.b16 %v7217, %v7213
    %v7562 = vpack.c.b16 %v7218, %v7214
    %v7563 = vpack.c.b16 %v7223, %v7219
    %v7564 = vpack.c.b16 %v7224, %v7220
    %v7565 = vpack.c.b16 %v7225, %v7221
    %v7566 = vpack.c.b16 %v7226, %v7222
    %v7567 = vpack.c.b16 %v7231, %v7227
    %v7568 = vpack.c.b16 %v7232, %v7228
    %v7569 = vpack.c.b16 %v7233, %v7229
    %v7570 = vpack.c.b16 %v7234, %v7230
    %v7571 = vpack.c.b16 %v7239, %v7235
    %v7572 = vpack.c.b16 %v7240, %v7236
    %v7573 = vpack.c.b16 %v7241, %v7237
    %v7574 = vpack.c.b16 %v7242, %v7238
    %v7575 = vpack.c.b16 %v7247, %v7243
    %v7576 = vpack.c.b16 %v7248, %v7244
    %v7577 = vpack.c.b16 %v7249, %v7245
    %v7578 = vpack.c.b16 %v7250, %v7246
    %v7579 = vpack.c.b16 %v7255, %v7251
    %v7580 = vpack.c.b16 %v7256, %v7252
    %v7581 = vpack.c.b16 %v7257, %v7253
    %v7582 = vpack.c.b16 %v7258, %v7254
    %v7583 = vpack.c.b16 %v7263, %v7259
    %v7584 = vpack.c.b16 %v7264, %v7260
    %v7585 = vpack.c.b16 %v7265, %v7261
    %v7586 = vpack.c.b16 %v7266, %v7262
    %v7587 = vpack.c.b16 %v7271, %v7267
    %v7588 = vpack.c.b16 %v7272, %v7268
    %v7589 = vpack.c.b16 %v7273, %v7269
    %v7590 = vpack.c.b16 %v7274, %v7270
    %v7591 = vpack.c.b16 %v7279, %v7275
    %v7592 = vpack.c.b16 %v7280, %v7276
    %v7593 = vpack.c.b16 %v7281, %v7277
    %v7594 = vpack.c.b16 %v7282, %v7278
    %v7595 = vpack.c.b16 %v7287, %v7283
    %v7596 = vpack.c.b16 %v7288, %v7284
    %v7597 = vpack.c.b16 %v7289, %v7285
    %v7598 = vpack.c.b16 %v7290, %v7286
    %v7599 = vpack.c.b16 %v7295, %v7291
    %v7600 = vpack.c.b16 %v7296, %v7292
    %v7601 = vpack.c.b16 %v7297, %v7293
    %v7602 = vpack.c.b16 %v7298, %v7294
    %v7603 = vpack.c.b16 %v7303, %v7299
    %v7604 = vpack.c.b16 %v7304, %v7300
    %v7605 = vpack.c.b16 %v7305, %v7301
    %v7606 = vpack.c.b16 %v7306, %v7302
    %v7607 = vpack.c.b16 %v7311, %v7307
    %v7608 = vpack.c.b16 %v7312, %v7308
    %v7609 = vpack.c.b16 %v7313, %v7309
    %v7610 = vpack.c.b16 %v7314, %v7310
    %v7611 = vpack.c.b16 %v7319, %v7315
    %v7612 = vpack.c.b16 %v7320, %v7316
    %v7613 = vpack.c.b16 %v7321, %v7317
    %v7614 = vpack.c.b16 %v7322, %v7318
    %v7615 = vpack.c.b16 %v7327, %v7323
    %v7616 = vpack.c.b16 %v7328, %v7324
    %v7617 = vpack.c.b16 %v7329, %v7325
    %v7618 = vpack.c.b16 %v7330, %v7326
    %v7619 = vpack.c.b16 %v7335, %v7331
    %v7620 = vpack.c.b16 %v7336, %v7332
    %v7621 = vpack.c.b16 %v7337, %v7333
    %v7622 = vpack.c.b16 %v7338, %v7334
    %v7623 = vpack.c.b16 %v7343, %v7339
    %v7624 = vpack.c.b16 %v7344, %v7340
    %v7625 = vpack.c.b16 %v7345, %v7341
    %v7626 = vpack.c.b16 %v7346, %v7342
    %v7627 = vpack.c.b16 %v7351, %v7347
    %v7628 = vpack.c.b16 %v7352, %v7348
    %v7629 = vpack.c.b16 %v7353, %v7349
    %v7630 = vpack.c.b16 %v7354, %v7350
    %v7631 = vpack.c.b16 %v7359, %v7355
    %v7632 = vpack.c.b16 %v7360, %v7356
    %v7633 = vpack.c.b16 %v7361, %v7357
    %v7634 = vpack.c.b16 %v7362, %v7358
    %v7635 = vpack.c.b16 %v7367, %v7363
    %v7636 = vpack.c.b16 %v7368, %v7364
    %v7637 = vpack.c.b16 %v7369, %v7365
    %v7638 = vpack.c.b16 %v7370, %v7366
    %v7639 = vpack.c.b16 %v7375, %v7371
    %v7640 = vpack.c.b16 %v7376, %v7372
    %v7641 = vpack.c.b16 %v7377, %v7373
    %v7642 = vpack.c.b16 %v7378, %v7374
    %v7643 = vpack.c.b16 %v7383, %v7379
    %v7644 = vpack.c.b16 %v7384, %v7380
    %v7645 = vpack.c.b16 %v7385, %v7381
    %v7646 = vpack.c.b16 %v7386, %v7382
    %v7647 = vpack.c.b16 %v7391, %v7387
    %v7648 = vpack.c.b16 %v7392, %v7388
    %v7649 = vpack.c.b16 %v7393, %v7389
    %v7650 = vpack.c.b16 %v7394, %v7390
    %7907 = vmatprep.subr.bf16.mxu0 %v7396
    %7908 = vmatpush1.bf16.msra.mxu0 %v7395
    %7909 = vmatprep.subr.bf16.mxu0 %v7400
    %7910 = vmatpush1.bf16.msra.mxu0 %v7399
    %7911 = vmatprep.subr.bf16.mxu0 %v7404
    %7912 = vmatpush1.bf16.msra.mxu0 %v7403
    %7913 = vmatprep.subr.bf16.mxu0 %v7408
    %7914 = vmatpush1.bf16.msra.mxu0 %v7407
    %7915 = vmatprep.subr.bf16.mxu0 %v7412
    %7916 = vmatpush1.bf16.msra.mxu0 %v7411
    %7917 = vmatprep.subr.bf16.mxu0 %v7416
    %7918 = vmatpush1.bf16.msra.mxu0 %v7415
    %7919 = vmatprep.subr.bf16.mxu0 %v7420
    %7920 = vmatpush1.bf16.msra.mxu0 %v7419
    %7921 = vmatprep.subr.bf16.mxu0 %v7424
    %7922 = vmatpush1.bf16.msra.mxu0 %v7423
    %7923 = vmatprep.subr.bf16.mxu0 %v7428
    %7924 = vmatpush1.bf16.msra.mxu0 %v7427
    %7925 = vmatprep.subr.bf16.mxu0 %v7432
    %7926 = vmatpush1.bf16.msra.mxu0 %v7431
    %7927 = vmatprep.subr.bf16.mxu0 %v7436
    %7928 = vmatpush1.bf16.msra.mxu0 %v7435
    %7929 = vmatprep.subr.bf16.mxu0 %v7440
    %7930 = vmatpush1.bf16.msra.mxu0 %v7439
    %7931 = vmatprep.subr.bf16.mxu0 %v7444
    %7932 = vmatpush1.bf16.msra.mxu0 %v7443
    %7933 = vmatprep.subr.bf16.mxu0 %v7448
    %7934 = vmatpush1.bf16.msra.mxu0 %v7447
    %7935 = vmatprep.subr.bf16.mxu0 %v7452
    %7936 = vmatpush1.bf16.msra.mxu0 %v7451
    %7937 = vmatprep.subr.bf16.mxu0 %v7456
    %7938 = vmatpush1.bf16.msra.mxu0 %v7455
    %7939 = vmatprep.mubr.bf16.mxu0 %v6598
    %7940 = vmatmul.mubr.bf16.gmra.mrb[0].mxu0 %v6597
    %v7941 = vpop.f32.mrb[0].mxu0
    %v7942 = vadd.f32 %v6610, %v7941
    %v7943 = vpop.f32.mrb[0].mxu0
    %v7944 = vadd.f32 %v6614, %v7943
    %v7945 = vpop.f32.mrb[0].mxu0
    %v7946 = vpop.f32.mrb[0].mxu0
    %7947 = vdwg.mxu0
    %7948 = vmatprep.subr.bf16.mxu0 %v7460
    %7949 = vmatpush1.bf16.msra.mxu0 %v7459
    %7950 = vmatprep.subr.bf16.mxu0 %v7464
    %7951 = vmatpush1.bf16.msra.mxu0 %v7463
    %7952 = vmatprep.subr.bf16.mxu0 %v7468
    %7953 = vmatpush1.bf16.msra.mxu0 %v7467
    %7954 = vmatprep.subr.bf16.mxu0 %v7472
    %7955 = vmatpush1.bf16.msra.mxu0 %v7471
    %7956 = vmatprep.subr.bf16.mxu0 %v7476
    %7957 = vmatpush1.bf16.msra.mxu0 %v7475
    %7958 = vmatprep.subr.bf16.mxu0 %v7480
    %7959 = vmatpush1.bf16.msra.mxu0 %v7479
    %7960 = vmatprep.subr.bf16.mxu0 %v7484
    %7961 = vmatpush1.bf16.msra.mxu0 %v7483
    %7962 = vmatprep.subr.bf16.mxu0 %v7488
    %7963 = vmatpush1.bf16.msra.mxu0 %v7487
    %7964 = vmatprep.subr.bf16.mxu0 %v7492
    %7965 = vmatpush1.bf16.msra.mxu0 %v7491
    %7966 = vmatprep.subr.bf16.mxu0 %v7496
    %7967 = vmatpush1.bf16.msra.mxu0 %v7495
    %7968 = vmatprep.subr.bf16.mxu0 %v7500
    %7969 = vmatpush1.bf16.msra.mxu0 %v7499
    %7970 = vmatprep.subr.bf16.mxu0 %v7504
    %7971 = vmatpush1.bf16.msra.mxu0 %v7503
    %7972 = vmatprep.subr.bf16.mxu0 %v7508
    %7973 = vmatpush1.bf16.msra.mxu0 %v7507
    %7974 = vmatprep.subr.bf16.mxu0 %v7512
    %7975 = vmatpush1.bf16.msra.mxu0 %v7511
    %7976 = vmatprep.subr.bf16.mxu0 %v7516
    %7977 = vmatpush1.bf16.msra.mxu0 %v7515
    %7978 = vmatprep.subr.bf16.mxu0 %v7520
    %7979 = vmatpush1.bf16.msra.mxu0 %v7519
    %7980 = vmatprep.mubr.bf16.mxu0 %v6600
    %7981 = vmatmul.mubr.bf16.gmra.mrb[0].mxu0 %v6599
    %v7982 = vpop.f32.mrb[0].mxu0
    %v7983 = vadd.f32 %v7942, %v7982
    %v7984 = vpop.f32.mrb[0].mxu0
    %v7985 = vadd.f32 %v7944, %v7984
    %v7986 = vpop.f32.mrb[0].mxu0
    %v7987 = vpop.f32.mrb[0].mxu0
    %7988 = vdwg.mxu0
    %7989 = vmatprep.subr.bf16.mxu0 %v7524
    %7990 = vmatpush1.bf16.msra.mxu0 %v7523
    %7991 = vmatprep.subr.bf16.mxu0 %v7528
    %7992 = vmatpush1.bf16.msra.mxu0 %v7527
    %7993 = vmatprep.subr.bf16.mxu0 %v7532
    %7994 = vmatpush1.bf16.msra.mxu0 %v7531
    %7995 = vmatprep.subr.bf16.mxu0 %v7536
    %7996 = vmatpush1.bf16.msra.mxu0 %v7535
    %7997 = vmatprep.subr.bf16.mxu0 %v7540
    %7998 = vmatpush1.bf16.msra.mxu0 %v7539
    %7999 = vmatprep.subr.bf16.mxu0 %v7544
    %8000 = vmatpush1.bf16.msra.mxu0 %v7543
    %8001 = vmatprep.subr.bf16.mxu0 %v7548
    %8002 = vmatpush1.bf16.msra.mxu0 %v7547
    %8003 = vmatprep.subr.bf16.mxu0 %v7552
    %8004 = vmatpush1.bf16.msra.mxu0 %v7551
    %8005 = vmatprep.subr.bf16.mxu0 %v7556
    %8006 = vmatpush1.bf16.msra.mxu0 %v7555
    %8007 = vmatprep.subr.bf16.mxu0 %v7560
    %8008 = vmatpush1.bf16.msra.mxu0 %v7559
    %8009 = vmatprep.subr.bf16.mxu0 %v7564
    %8010 = vmatpush1.bf16.msra.mxu0 %v7563
    %8011 = vmatprep.subr.bf16.mxu0 %v7568
    %8012 = vmatpush1.bf16.msra.mxu0 %v7567
    %8013 = vmatprep.subr.bf16.mxu0 %v7572
    %8014 = vmatpush1.bf16.msra.mxu0 %v7571
    %8015 = vmatprep.subr.bf16.mxu0 %v7576
    %8016 = vmatpush1.bf16.msra.mxu0 %v7575
    %8017 = vmatprep.subr.bf16.mxu0 %v7580
    %8018 = vmatpush1.bf16.msra.mxu0 %v7579
    %8019 = vmatprep.subr.bf16.mxu0 %v7584
    %8020 = vmatpush1.bf16.msra.mxu0 %v7583
    %8021 = vmatprep.mubr.bf16.mxu0 %v6602
    %8022 = vmatmul.mubr.bf16.gmra.mrb[0].mxu0 %v6601
    %v8023 = vpop.f32.mrb[0].mxu0
    %v8024 = vadd.f32 %v7983, %v8023
    %v8025 = vpop.f32.mrb[0].mxu0
    %v8026 = vadd.f32 %v7985, %v8025
    %v8027 = vpop.f32.mrb[0].mxu0
    %v8028 = vpop.f32.mrb[0].mxu0
    %8029 = vdwg.mxu0
    %8030 = vmatprep.subr.bf16.mxu0 %v7588
    %8031 = vmatpush1.bf16.msra.mxu0 %v7587
    %8032 = vmatprep.subr.bf16.mxu0 %v7592
    %8033 = vmatpush1.bf16.msra.mxu0 %v7591
    %8034 = vmatprep.subr.bf16.mxu0 %v7596
    %8035 = vmatpush1.bf16.msra.mxu0 %v7595
    %8036 = vmatprep.subr.bf16.mxu0 %v7600
    %8037 = vmatpush1.bf16.msra.mxu0 %v7599
    %8038 = vmatprep.subr.bf16.mxu0 %v7604
    %8039 = vmatpush1.bf16.msra.mxu0 %v7603
    %8040 = vmatprep.subr.bf16.mxu0 %v7608
    %8041 = vmatpush1.bf16.msra.mxu0 %v7607
    %8042 = vmatprep.subr.bf16.mxu0 %v7612
    %8043 = vmatpush1.bf16.msra.mxu0 %v7611
    %8044 = vmatprep.subr.bf16.mxu0 %v7616
    %8045 = vmatpush1.bf16.msra.mxu0 %v7615
    %8046 = vmatprep.subr.bf16.mxu0 %v7620
    %8047 = vmatpush1.bf16.msra.mxu0 %v7619
    %8048 = vmatprep.subr.bf16.mxu0 %v7624
    %8049 = vmatpush1.bf16.msra.mxu0 %v7623
    %8050 = vmatprep.subr.bf16.mxu0 %v7628
    %8051 = vmatpush1.bf16.msra.mxu0 %v7627
    %8052 = vmatprep.subr.bf16.mxu0 %v7632
    %8053 = vmatpush1.bf16.msra.mxu0 %v7631
    %8054 = vmatprep.subr.bf16.mxu0 %v7636
    %8055 = vmatpush1.bf16.msra.mxu0 %v7635
    %8056 = vmatprep.subr.bf16.mxu0 %v7640
    %8057 = vmatpush1.bf16.msra.mxu0 %v7639
    %8058 = vmatprep.subr.bf16.mxu0 %v7644
    %8059 = vmatpush1.bf16.msra.mxu0 %v7643
    %8060 = vmatprep.subr.bf16.mxu0 %v7648
    %8061 = vmatpush1.bf16.msra.mxu0 %v7647
    %8062 = vmatprep.mubr.bf16.mxu0 %v6604
    %8063 = vmatmul.mubr.bf16.gmra.mrb[0].mxu0 %v6603
    %v8064 = vpop.f32.mrb[0].mxu0
    %v8065 = vadd.f32 %v8024, %v8064
    %v8066 = vpop.f32.mrb[0].mxu0
    %v8067 = vadd.f32 %v8026, %v8066
    %v8068 = vpop.f32.mrb[0].mxu0
    %v8069 = vpop.f32.mrb[0].mxu0
    %8070 = vdwg.mxu0
    %8071 = vmatprep.subr.bf16.mxu0 %v7398
    %8072 = vmatpush1.bf16.msra.mxu0 %v7397
    %8073 = vmatprep.subr.bf16.mxu0 %v7402
    %8074 = vmatpush1.bf16.msra.mxu0 %v7401
    %8075 = vmatprep.subr.bf16.mxu0 %v7406
    %8076 = vmatpush1.bf16.msra.mxu0 %v7405
    %8077 = vmatprep.subr.bf16.mxu0 %v7410
    %8078 = vmatpush1.bf16.msra.mxu0 %v7409
    %8079 = vmatprep.subr.bf16.mxu0 %v7414
    %8080 = vmatpush1.bf16.msra.mxu0 %v7413
    %8081 = vmatprep.subr.bf16.mxu0 %v7418
    %8082 = vmatpush1.bf16.msra.mxu0 %v7417
    %8083 = vmatprep.subr.bf16.mxu0 %v7422
    %8084 = vmatpush1.bf16.msra.mxu0 %v7421
    %8085 = vmatprep.subr.bf16.mxu0 %v7426
    %8086 = vmatpush1.bf16.msra.mxu0 %v7425
    %8087 = vmatprep.subr.bf16.mxu0 %v7430
    %8088 = vmatpush1.bf16.msra.mxu0 %v7429
    %8089 = vmatprep.subr.bf16.mxu0 %v7434
    %8090 = vmatpush1.bf16.msra.mxu0 %v7433
    %8091 = vmatprep.subr.bf16.mxu0 %v7438
    %8092 = vmatpush1.bf16.msra.mxu0 %v7437
    %8093 = vmatprep.subr.bf16.mxu0 %v7442
    %8094 = vmatpush1.bf16.msra.mxu0 %v7441
    %8095 = vmatprep.subr.bf16.mxu0 %v7446
    %8096 = vmatpush1.bf16.msra.mxu0 %v7445
    %8097 = vmatprep.subr.bf16.mxu0 %v7450
    %8098 = vmatpush1.bf16.msra.mxu0 %v7449
    %8099 = vmatprep.subr.bf16.mxu0 %v7454
    %8100 = vmatpush1.bf16.msra.mxu0 %v7453
    %8101 = vmatprep.subr.bf16.mxu0 %v7458
    %8102 = vmatpush1.bf16.msra.mxu0 %v7457
    %8103 = vmatprep.mubr.bf16.mxu0 %v6598
    %8104 = vmatmul.mubr.bf16.gmra.mrb[0].mxu0 %v6597
    %v8105 = vpop.f32.mrb[0].mxu0
    %v8106 = vadd.f32 %v6618, %v8105
    %v8107 = vpop.f32.mrb[0].mxu0
    %v8108 = vadd.f32 %v6622, %v8107
    %v8109 = vpop.f32.mrb[0].mxu0
    %v8110 = vpop.f32.mrb[0].mxu0
    %8111 = vdwg.mxu0
    %8112 = vmatprep.subr.bf16.mxu0 %v7462
    %8113 = vmatpush1.bf16.msra.mxu0 %v7461
    %8114 = vmatprep.subr.bf16.mxu0 %v7466
    %8115 = vmatpush1.bf16.msra.mxu0 %v7465
    %8116 = vmatprep.subr.bf16.mxu0 %v7470
    %8117 = vmatpush1.bf16.msra.mxu0 %v7469
    %8118 = vmatprep.subr.bf16.mxu0 %v7474
    %8119 = vmatpush1.bf16.msra.mxu0 %v7473
    %8120 = vmatprep.subr.bf16.mxu0 %v7478
    %8121 = vmatpush1.bf16.msra.mxu0 %v7477
    %8122 = vmatprep.subr.bf16.mxu0 %v7482
    %8123 = vmatpush1.bf16.msra.mxu0 %v7481
    %8124 = vmatprep.subr.bf16.mxu0 %v7486
    %8125 = vmatpush1.bf16.msra.mxu0 %v7485
    %8126 = vmatprep.subr.bf16.mxu0 %v7490
    %8127 = vmatpush1.bf16.msra.mxu0 %v7489
    %8128 = vmatprep.subr.bf16.mxu0 %v7494
    %8129 = vmatpush1.bf16.msra.mxu0 %v7493
    %8130 = vmatprep.subr.bf16.mxu0 %v7498
    %8131 = vmatpush1.bf16.msra.mxu0 %v7497
    %8132 = vmatprep.subr.bf16.mxu0 %v7502
    %8133 = vmatpush1.bf16.msra.mxu0 %v7501
    %8134 = vmatprep.subr.bf16.mxu0 %v7506
    %8135 = vmatpush1.bf16.msra.mxu0 %v7505
    %8136 = vmatprep.subr.bf16.mxu0 %v7510
    %8137 = vmatpush1.bf16.msra.mxu0 %v7509
    %8138 = vmatprep.subr.bf16.mxu0 %v7514
    %8139 = vmatpush1.bf16.msra.mxu0 %v7513
    %8140 = vmatprep.subr.bf16.mxu0 %v7518
    %8141 = vmatpush1.bf16.msra.mxu0 %v7517
    %8142 = vmatprep.subr.bf16.mxu0 %v7522
    %8143 = vmatpush1.bf16.msra.mxu0 %v7521
    %8144 = vmatprep.mubr.bf16.mxu0 %v6600
    %8145 = vmatmul.mubr.bf16.gmra.mrb[0].mxu0 %v6599
    %v8146 = vpop.f32.mrb[0].mxu0
    %v8147 = vadd.f32 %v8106, %v8146
    %v8148 = vpop.f32.mrb[0].mxu0
    %v8149 = vadd.f32 %v8108, %v8148
    %v8150 = vpop.f32.mrb[0].mxu0
    %v8151 = vpop.f32.mrb[0].mxu0
    %8152 = vdwg.mxu0
    %8153 = vmatprep.subr.bf16.mxu0 %v7526
    %8154 = vmatpush1.bf16.msra.mxu0 %v7525
    %8155 = vmatprep.subr.bf16.mxu0 %v7530
    %8156 = vmatpush1.bf16.msra.mxu0 %v7529
    %8157 = vmatprep.subr.bf16.mxu0 %v7534
    %8158 = vmatpush1.bf16.msra.mxu0 %v7533
    %8159 = vmatprep.subr.bf16.mxu0 %v7538
    %8160 = vmatpush1.bf16.msra.mxu0 %v7537
    %8161 = vmatprep.subr.bf16.mxu0 %v7542
    %8162 = vmatpush1.bf16.msra.mxu0 %v7541
    %8163 = vmatprep.subr.bf16.mxu0 %v7546
    %8164 = vmatpush1.bf16.msra.mxu0 %v7545
    %8165 = vmatprep.subr.bf16.mxu0 %v7550
    %8166 = vmatpush1.bf16.msra.mxu0 %v7549
    %8167 = vmatprep.subr.bf16.mxu0 %v7554
    %8168 = vmatpush1.bf16.msra.mxu0 %v7553
    %8169 = vmatprep.subr.bf16.mxu0 %v7558
    %8170 = vmatpush1.bf16.msra.mxu0 %v7557
    %8171 = vmatprep.subr.bf16.mxu0 %v7562
    %8172 = vmatpush1.bf16.msra.mxu0 %v7561
    %8173 = vmatprep.subr.bf16.mxu0 %v7566
    %8174 = vmatpush1.bf16.msra.mxu0 %v7565
    %8175 = vmatprep.subr.bf16.mxu0 %v7570
    %8176 = vmatpush1.bf16.msra.mxu0 %v7569
    %8177 = vmatprep.subr.bf16.mxu0 %v7574
    %8178 = vmatpush1.bf16.msra.mxu0 %v7573
    %8179 = vmatprep.subr.bf16.mxu0 %v7578
    %8180 = vmatpush1.bf16.msra.mxu0 %v7577
    %8181 = vmatprep.subr.bf16.mxu0 %v7582
    %8182 = vmatpush1.bf16.msra.mxu0 %v7581
    %8183 = vmatprep.subr.bf16.mxu0 %v7586
    %8184 = vmatpush1.bf16.msra.mxu0 %v7585
    %8185 = vmatprep.mubr.bf16.mxu0 %v6602
    %8186 = vmatmul.mubr.bf16.gmra.mrb[0].mxu0 %v6601
    %v8187 = vpop.f32.mrb[0].mxu0
    %v8188 = vadd.f32 %v8147, %v8187
    %v8189 = vpop.f32.mrb[0].mxu0
    %v8190 = vadd.f32 %v8149, %v8189
    %v8191 = vpop.f32.mrb[0].mxu0
    %v8192 = vpop.f32.mrb[0].mxu0
    %8193 = vdwg.mxu0
    %8194 = vmatprep.subr.bf16.mxu0 %v7590
    %8195 = vmatpush1.bf16.msra.mxu0 %v7589
    %8196 = vmatprep.subr.bf16.mxu0 %v7594
    %8197 = vmatpush1.bf16.msra.mxu0 %v7593
    %8198 = vmatprep.subr.bf16.mxu0 %v7598
    %8199 = vmatpush1.bf16.msra.mxu0 %v7597
    %8200 = vmatprep.subr.bf16.mxu0 %v7602
    %8201 = vmatpush1.bf16.msra.mxu0 %v7601
    %8202 = vmatprep.subr.bf16.mxu0 %v7606
    %8203 = vmatpush1.bf16.msra.mxu0 %v7605
    %8204 = vmatprep.subr.bf16.mxu0 %v7610
    %8205 = vmatpush1.bf16.msra.mxu0 %v7609
    %8206 = vmatprep.subr.bf16.mxu0 %v7614
    %8207 = vmatpush1.bf16.msra.mxu0 %v7613
    %8208 = vmatprep.subr.bf16.mxu0 %v7618
    %8209 = vmatpush1.bf16.msra.mxu0 %v7617
    %8210 = vmatprep.subr.bf16.mxu0 %v7622
    %8211 = vmatpush1.bf16.msra.mxu0 %v7621
    %8212 = vmatprep.subr.bf16.mxu0 %v7626
    %8213 = vmatpush1.bf16.msra.mxu0 %v7625
    %8214 = vmatprep.subr.bf16.mxu0 %v7630
    %8215 = vmatpush1.bf16.msra.mxu0 %v7629
    %8216 = vmatprep.subr.bf16.mxu0 %v7634
    %8217 = vmatpush1.bf16.msra.mxu0 %v7633
    %8218 = vmatprep.subr.bf16.mxu0 %v7638
    %8219 = vmatpush1.bf16.msra.mxu0 %v7637
    %8220 = vmatprep.subr.bf16.mxu0 %v7642
    %8221 = vmatpush1.bf16.msra.mxu0 %v7641
    %8222 = vmatprep.subr.bf16.mxu0 %v7646
    %8223 = vmatpush1.bf16.msra.mxu0 %v7645
    %8224 = vmatprep.subr.bf16.mxu0 %v7650
    %8225 = vmatpush1.bf16.msra.mxu0 %v7649
    %8226 = vmatprep.mubr.bf16.mxu0 %v6604
    %8227 = vmatmul.mubr.bf16.gmra.mrb[0].mxu0 %v6603
    %v8228 = vpop.f32.mrb[0].mxu0
    %v8229 = vadd.f32 %v8188, %v8228
    %v8230 = vpop.f32.mrb[0].mxu0
    %v8231 = vadd.f32 %v8190, %v8230
    %v8232 = vpop.f32.mrb[0].mxu0
    %v8233 = vpop.f32.mrb[0].mxu0
    %8234 = vdwg.mxu0
    %v8235 = vmax.f32 %v8065, 0.0
    %v8236 = vmax.f32 %v8067, 0.0
    %v8237 = vmax.f32 %v8229, 0.0
    %v8238 = vmax.f32 %v8231, 0.0
    %v8239 = vld [vmem:[#allocation26] sm:$0xf]
    %v8240 = vld [vmem:[#allocation26 + $0x4] sm:$0xf]
    %v8241 = vld [vmem:[#allocation26 + $0x8] sm:$0xf]
    %v8242 = vld [vmem:[#allocation26 + $0xc] sm:$0xf]
    %v8243 = vld [vmem:[#allocation26 + $0x10] sm:$0xf]
    %v8244 = vld [vmem:[#allocation26 + $0x14] sm:$0xf]
    %v8245 = vld [vmem:[#allocation26 + $0x18] sm:$0xf]
    %v8246 = vld [vmem:[#allocation26 + $0x1c] sm:$0xf]
    %v8247 = vld [vmem:[#allocation26 + $0x20] sm:$0xf]
    %v8248 = vld [vmem:[#allocation26 + $0x24] sm:$0xf]
    %v8249 = vld [vmem:[#allocation26 + $0x28] sm:$0xf]
    %v8250 = vld [vmem:[#allocation26 + $0x2c] sm:$0xf]
    %v8251 = vld [vmem:[#allocation26 + $0x30] sm:$0xf]
    %v8252 = vld [vmem:[#allocation26 + $0x34] sm:$0xf]
    %v8253 = vld [vmem:[#allocation26 + $0x38] sm:$0xf]
    %v8254 = vld [vmem:[#allocation26 + $0x3c] sm:$0xf]
    %v8255 = vld [vmem:[#allocation26 + $0x40] sm:$0xf]
    %v8256 = vld [vmem:[#allocation26 + $0x44] sm:$0xf]
    %v8257 = vld [vmem:[#allocation26 + $0x48] sm:$0xf]
    %v8258 = vld [vmem:[#allocation26 + $0x4c] sm:$0xf]
    %v8259 = vld [vmem:[#allocation26 + $0x50] sm:$0xf]
    %v8260 = vld [vmem:[#allocation26 + $0x54] sm:$0xf]
    %v8261 = vld [vmem:[#allocation26 + $0x58] sm:$0xf]
    %v8262 = vld [vmem:[#allocation26 + $0x5c] sm:$0xf]
    %v8263 = vld [vmem:[#allocation26 + $0x60] sm:$0xf]
    %v8264 = vld [vmem:[#allocation26 + $0x64] sm:$0xf]
    %v8265 = vld [vmem:[#allocation26 + $0x68] sm:$0xf]
    %v8266 = vld [vmem:[#allocation26 + $0x6c] sm:$0xf]
    %v8267 = vld [vmem:[#allocation26 + $0x70] sm:$0xf]
    %v8268 = vld [vmem:[#allocation26 + $0x74] sm:$0xf]
    %v8269 = vld [vmem:[#allocation26 + $0x78] sm:$0xf]
    %v8270 = vld [vmem:[#allocation26 + $0x7c] sm:$0xf]
    %v8271 = vld [vmem:[#allocation26 + $0x80] sm:$0xf]
    %v8272 = vld [vmem:[#allocation26 + $0x84] sm:$0xf]
    %v8273 = vld [vmem:[#allocation26 + $0x88] sm:$0xf]
    %v8274 = vld [vmem:[#allocation26 + $0x8c] sm:$0xf]
    %v8275 = vld [vmem:[#allocation26 + $0x90] sm:$0xf]
    %v8276 = vld [vmem:[#allocation26 + $0x94] sm:$0xf]
    %v8277 = vld [vmem:[#allocation26 + $0x98] sm:$0xf]
    %v8278 = vld [vmem:[#allocation26 + $0x9c] sm:$0xf]
    %v8279 = vld [vmem:[#allocation26 + $0xa0] sm:$0xf]
    %v8280 = vld [vmem:[#allocation26 + $0xa4] sm:$0xf]
    %v8281 = vld [vmem:[#allocation26 + $0xa8] sm:$0xf]
    %v8282 = vld [vmem:[#allocation26 + $0xac] sm:$0xf]
    %v8283 = vld [vmem:[#allocation26 + $0xb0] sm:$0xf]
    %v8284 = vld [vmem:[#allocation26 + $0xb4] sm:$0xf]
    %v8285 = vld [vmem:[#allocation26 + $0xb8] sm:$0xf]
    %v8286 = vld [vmem:[#allocation26 + $0xbc] sm:$0xf]
    %v8287 = vld [vmem:[#allocation26 + $0xc0] sm:$0xf]
    %v8288 = vld [vmem:[#allocation26 + $0xc4] sm:$0xf]
    %v8289 = vld [vmem:[#allocation26 + $0xc8] sm:$0xf]
    %v8290 = vld [vmem:[#allocation26 + $0xcc] sm:$0xf]
    %v8291 = vld [vmem:[#allocation26 + $0xd0] sm:$0xf]
    %v8292 = vld [vmem:[#allocation26 + $0xd4] sm:$0xf]
    %v8293 = vld [vmem:[#allocation26 + $0xd8] sm:$0xf]
    %v8294 = vld [vmem:[#allocation26 + $0xdc] sm:$0xf]
    %v8295 = vld [vmem:[#allocation26 + $0xe0] sm:$0xf]
    %v8296 = vld [vmem:[#allocation26 + $0xe4] sm:$0xf]
    %v8297 = vld [vmem:[#allocation26 + $0xe8] sm:$0xf]
    %v8298 = vld [vmem:[#allocation26 + $0xec] sm:$0xf]
    %v8299 = vld [vmem:[#allocation26 + $0xf0] sm:$0xf]
    %v8300 = vld [vmem:[#allocation26 + $0xf4] sm:$0xf]
    %v8301 = vld [vmem:[#allocation26 + $0xf8] sm:$0xf]
    %v8302 = vld [vmem:[#allocation26 + $0xfc] sm:$0xf]
    %v8303 = vpack.c.bf16 %v8235, %v8235
    %v8304 = vpack.c.bf16 %v8236, %v8236
    %v8305 = vpack.c.bf16 %v8237, %v8237
    %v8306 = vpack.c.bf16 %v8238, %v8238
    %v8307 = vld [vmem:[#allocation28] sm:$0x1]
    %v8309 = vlaneseq
    %v8310 = vshrl.u32 %v8309, 7
    %v8311 = vsub.s32 0, %v8310
    %v8312 = vrot.slane %v8307, %v8311
    %v8378 = vunpack.c.l.b16 %v8239
    %v8379 = vunpack.c.l.b16 %v8240
    %v8380 = vunpack.c.l.b16 %v8241
    %v8381 = vunpack.c.l.b16 %v8242
    %v8382 = vunpack.c.l.b16 %v8243
    %v8383 = vunpack.c.l.b16 %v8244
    %v8384 = vunpack.c.l.b16 %v8245
    %v8385 = vunpack.c.l.b16 %v8246
    %v8386 = vunpack.c.l.b16 %v8247
    %v8387 = vunpack.c.l.b16 %v8248
    %v8388 = vunpack.c.l.b16 %v8249
    %v8389 = vunpack.c.l.b16 %v8250
    %v8390 = vunpack.c.l.b16 %v8251
    %v8391 = vunpack.c.l.b16 %v8252
    %v8392 = vunpack.c.l.b16 %v8253
    %v8393 = vunpack.c.l.b16 %v8254
    %v8394 = vunpack.c.l.b16 %v8255
    %v8395 = vunpack.c.l.b16 %v8256
    %v8396 = vunpack.c.l.b16 %v8257
    %v8397 = vunpack.c.l.b16 %v8258
    %v8398 = vunpack.c.l.b16 %v8259
    %v8399 = vunpack.c.l.b16 %v8260
    %v8400 = vunpack.c.l.b16 %v8261
    %v8401 = vunpack.c.l.b16 %v8262
    %v8402 = vunpack.c.l.b16 %v8263
    %v8403 = vunpack.c.l.b16 %v8264
    %v8404 = vunpack.c.l.b16 %v8265
    %v8405 = vunpack.c.l.b16 %v8266
    %v8406 = vunpack.c.l.b16 %v8267
    %v8407 = vunpack.c.l.b16 %v8268
    %v8408 = vunpack.c.l.b16 %v8269
    %v8409 = vunpack.c.l.b16 %v8270
    %v8410 = vunpack.c.l.b16 %v8271
    %v8411 = vunpack.c.l.b16 %v8272
    %v8412 = vunpack.c.l.b16 %v8273
    %v8413 = vunpack.c.l.b16 %v8274
    %v8414 = vunpack.c.l.b16 %v8275
    %v8415 = vunpack.c.l.b16 %v8276
    %v8416 = vunpack.c.l.b16 %v8277
    %v8417 = vunpack.c.l.b16 %v8278
    %v8418 = vunpack.c.l.b16 %v8279
    %v8419 = vunpack.c.l.b16 %v8280
    %v8420 = vunpack.c.l.b16 %v8281
    %v8421 = vunpack.c.l.b16 %v8282
    %v8422 = vunpack.c.l.b16 %v8283
    %v8423 = vunpack.c.l.b16 %v8284
    %v8424 = vunpack.c.l.b16 %v8285
    %v8425 = vunpack.c.l.b16 %v8286
    %v8426 = vunpack.c.l.b16 %v8287
    %v8427 = vunpack.c.l.b16 %v8288
    %v8428 = vunpack.c.l.b16 %v8289
    %v8429 = vunpack.c.l.b16 %v8290
    %v8430 = vunpack.c.l.b16 %v8291
    %v8431 = vunpack.c.l.b16 %v8292
    %v8432 = vunpack.c.l.b16 %v8293
    %v8433 = vunpack.c.l.b16 %v8294
    %v8434 = vunpack.c.l.b16 %v8295
    %v8435 = vunpack.c.l.b16 %v8296
    %v8436 = vunpack.c.l.b16 %v8297
    %v8437 = vunpack.c.l.b16 %v8298
    %v8438 = vunpack.c.l.b16 %v8299
    %v8439 = vunpack.c.l.b16 %v8300
    %v8440 = vunpack.c.l.b16 %v8301
    %v8441 = vunpack.c.l.b16 %v8302
    %v8442 = vpack.c.b16 %v8379, %v8378
    %v8443 = vpack.c.b16 %v8381, %v8380
    %v8444 = vpack.c.b16 %v8383, %v8382
    %v8445 = vpack.c.b16 %v8385, %v8384
    %v8446 = vpack.c.b16 %v8387, %v8386
    %v8447 = vpack.c.b16 %v8389, %v8388
    %v8448 = vpack.c.b16 %v8391, %v8390
    %v8449 = vpack.c.b16 %v8393, %v8392
    %v8450 = vpack.c.b16 %v8395, %v8394
    %v8451 = vpack.c.b16 %v8397, %v8396
    %v8452 = vpack.c.b16 %v8399, %v8398
    %v8453 = vpack.c.b16 %v8401, %v8400
    %v8454 = vpack.c.b16 %v8403, %v8402
    %v8455 = vpack.c.b16 %v8405, %v8404
    %v8456 = vpack.c.b16 %v8407, %v8406
    %v8457 = vpack.c.b16 %v8409, %v8408
    %v8458 = vpack.c.b16 %v8411, %v8410
    %v8459 = vpack.c.b16 %v8413, %v8412
    %v8460 = vpack.c.b16 %v8415, %v8414
    %v8461 = vpack.c.b16 %v8417, %v8416
    %v8462 = vpack.c.b16 %v8419, %v8418
    %v8463 = vpack.c.b16 %v8421, %v8420
    %v8464 = vpack.c.b16 %v8423, %v8422
    %v8465 = vpack.c.b16 %v8425, %v8424
    %v8466 = vpack.c.b16 %v8427, %v8426
    %v8467 = vpack.c.b16 %v8429, %v8428
    %v8468 = vpack.c.b16 %v8431, %v8430
    %v8469 = vpack.c.b16 %v8433, %v8432
    %v8470 = vpack.c.b16 %v8435, %v8434
    %v8471 = vpack.c.b16 %v8437, %v8436
    %v8472 = vpack.c.b16 %v8439, %v8438
    %v8473 = vpack.c.b16 %v8441, %v8440
    %8506 = vmatprep.subr.bf16.mxu0 0
    %8507 = vmatpush1.bf16.msra.mxu0 %v8442
    %8508 = vmatprep.subr.bf16.mxu0 0
    %8509 = vmatpush1.bf16.msra.mxu0 %v8443
    %8510 = vmatprep.subr.bf16.mxu0 0
    %8511 = vmatpush1.bf16.msra.mxu0 %v8444
    %8512 = vmatprep.subr.bf16.mxu0 0
    %8513 = vmatpush1.bf16.msra.mxu0 %v8445
    %8514 = vmatprep.subr.bf16.mxu0 0
    %8515 = vmatpush1.bf16.msra.mxu0 %v8446
    %8516 = vmatprep.subr.bf16.mxu0 0
    %8517 = vmatpush1.bf16.msra.mxu0 %v8447
    %8518 = vmatprep.subr.bf16.mxu0 0
    %8519 = vmatpush1.bf16.msra.mxu0 %v8448
    %8520 = vmatprep.subr.bf16.mxu0 0
    %8521 = vmatpush1.bf16.msra.mxu0 %v8449
    %8522 = vmatprep.subr.bf16.mxu0 0
    %8523 = vmatpush1.bf16.msra.mxu0 %v8450
    %8524 = vmatprep.subr.bf16.mxu0 0
    %8525 = vmatpush1.bf16.msra.mxu0 %v8451
    %8526 = vmatprep.subr.bf16.mxu0 0
    %8527 = vmatpush1.bf16.msra.mxu0 %v8452
    %8528 = vmatprep.subr.bf16.mxu0 0
    %8529 = vmatpush1.bf16.msra.mxu0 %v8453
    %8530 = vmatprep.subr.bf16.mxu0 0
    %8531 = vmatpush1.bf16.msra.mxu0 %v8454
    %8532 = vmatprep.subr.bf16.mxu0 0
    %8533 = vmatpush1.bf16.msra.mxu0 %v8455
    %8534 = vmatprep.subr.bf16.mxu0 0
    %8535 = vmatpush1.bf16.msra.mxu0 %v8456
    %8536 = vmatprep.subr.bf16.mxu0 0
    %8537 = vmatpush1.bf16.msra.mxu0 %v8457
    %8538 = vmatprep.mubr.bf16.mxu0 %v8304
    %8539 = vmatmul.mubr.bf16.gmra.mrb[0].mxu0 %v8303
    %v8540 = vpop.f32.mrb[0].mxu0
    %v8541 = vadd.f32 %v8312, %v8540
    %v8542 = vpop.f32.mrb[0].mxu0
    %v8543 = vpop.f32.mrb[0].mxu0
    %v8544 = vpop.f32.mrb[0].mxu0
    %8545 = vdwg.mxu0
    %8546 = vmatprep.subr.bf16.mxu0 0
    %8547 = vmatpush1.bf16.msra.mxu0 %v8458
    %8548 = vmatprep.subr.bf16.mxu0 0
    %8549 = vmatpush1.bf16.msra.mxu0 %v8459
    %8550 = vmatprep.subr.bf16.mxu0 0
    %8551 = vmatpush1.bf16.msra.mxu0 %v8460
    %8552 = vmatprep.subr.bf16.mxu0 0
    %8553 = vmatpush1.bf16.msra.mxu0 %v8461
    %8554 = vmatprep.subr.bf16.mxu0 0
    %8555 = vmatpush1.bf16.msra.mxu0 %v8462
    %8556 = vmatprep.subr.bf16.mxu0 0
    %8557 = vmatpush1.bf16.msra.mxu0 %v8463
    %8558 = vmatprep.subr.bf16.mxu0 0
    %8559 = vmatpush1.bf16.msra.mxu0 %v8464
    %8560 = vmatprep.subr.bf16.mxu0 0
    %8561 = vmatpush1.bf16.msra.mxu0 %v8465
    %8562 = vmatprep.subr.bf16.mxu0 0
    %8563 = vmatpush1.bf16.msra.mxu0 %v8466
    %8564 = vmatprep.subr.bf16.mxu0 0
    %8565 = vmatpush1.bf16.msra.mxu0 %v8467
    %8566 = vmatprep.subr.bf16.mxu0 0
    %8567 = vmatpush1.bf16.msra.mxu0 %v8468
    %8568 = vmatprep.subr.bf16.mxu0 0
    %8569 = vmatpush1.bf16.msra.mxu0 %v8469
    %8570 = vmatprep.subr.bf16.mxu0 0
    %8571 = vmatpush1.bf16.msra.mxu0 %v8470
    %8572 = vmatprep.subr.bf16.mxu0 0
    %8573 = vmatpush1.bf16.msra.mxu0 %v8471
    %8574 = vmatprep.subr.bf16.mxu0 0
    %8575 = vmatpush1.bf16.msra.mxu0 %v8472
    %8576 = vmatprep.subr.bf16.mxu0 0
    %8577 = vmatpush1.bf16.msra.mxu0 %v8473
    %8578 = vmatprep.mubr.bf16.mxu0 %v8306
    %8579 = vmatmul.mubr.bf16.gmra.mrb[0].mxu0 %v8305
    %v8580 = vpop.f32.mrb[0].mxu0
    %v8581 = vadd.f32 %v8541, %v8580
    %v8582 = vpop.f32.mrb[0].mxu0
    %v8583 = vpop.f32.mrb[0].mxu0
    %v8584 = vpop.f32.mrb[0].mxu0
    %8585 = vdwg.mxu0
    %8586 = vst [vmem:[#allocation29] sm:$0x3] %v8581
    // Predicated region
    $region154: #{gin_forward.1} parent=1 // pred_check
      _
    $region155: #{gin_forward.1} parent=1 // pred_check_branch
      %8588 = sbr.rel (0) target = $region157
    $region156: #{gin_forward.1} parent=1 // pred_region
      %s8590 = ssub.s32 32, 32
      %8591 = vsyncadd [#allocation4], %s8590
      %s8593 = sshll.u32 [#allocation29], 4
      %s8594 = int_to_ptr.vmem [resolvable:$true] %s8593
      %8596 = dma.vmem_to_hbm [thread:$0]  %s8594, 32, %s21, [#allocation4]
    $region157: #{gin_forward.1} parent=1 // pred_fallthru
      _
    // Predicated region
    $region158: #{gin_forward.1} parent=1 // pred_check
      _
    $region159: #{gin_forward.1} parent=1 // pred_check_branch
      %8598 = sbr.rel (0) target = $region161
    $region160: #{gin_forward.1} parent=1 // pred_region
      %8599 = dma.done [#allocation4], 32
    $region161: #{gin_forward.1} parent=1 // pred_fallthru
      _
    %8600 = vsyncpa [#allocation3], 1
    %8601 = vsyncpa [#allocation6], 1
    %8602 = vsyncpa [#allocation9], 1
    %8603 = vsyncpa [#allocation12], 1
    %8604 = vsyncpa [#allocation15], 1
    %8605 = vsyncpa [#allocation18], 1
    %8606 = vsyncpa [#allocation21], 1
    %8607 = vsyncpa [#allocation24], 1
    %8608 = vsyncpa [#allocation27], 1
    %8609 = vsyncpa [#allocation4], 1

</llo_original>
